<compile_context>
chip_gen: v5e
topology: v5e:2x2
jax: 0.10.0
libtpu: 0.0.40
codegen_flags: <defaults>
</compile_context>

<pallas_src>
import functools

import jax
import jax.numpy as jnp
import numpy as np
from jax import lax
from jax.experimental import pallas as pl
from jax.experimental.pallas import tpu as pltpu

# Module hyperparameters (from modeltrain/main2.py)
HIDDEN_DIM = 256
INPUT_DIM = 9
NUM_LAYERS = 2
OUTPUT_DIM = 1


def gru_net_kernel(gi0_ref,         # (CHUNK, Bt, 3H) stream dtype : hoisted layer-0 input pre-activations
                   whh0_ref,        # (H, 3H)  compute dtype : layer-0 recurrent weights (transposed)
                   bhh0n_ref,       # (1, H)   f32 : layer-0 n-gate hidden bias
                   wih1_ref,        # (H, 3H)  compute dtype : layer-1 input weights (transposed)
                   whh1_ref,        # (H, 3H)  compute dtype : layer-1 recurrent weights (transposed)
                   b1i_ref,         # (1, 3H)  f32 : b_ih1 with r/z hidden biases folded in
                   bhh1n_ref,       # (1, H)   f32 : layer-1 n-gate hidden bias
                   wfc_ref,         # (H, out) f32
                   bfc_ref,         # (1, out) f32
                   out_ref,         # (Bt, out) f32
                   h0_ref, h1_ref,  # (Bt, H) f32 scratch, persists across chunks
                   *, hidden, chunk, seq_len, n_chunks, unroll, needs_mask):
    H = hidden
    Bt = h0_ref.shape[0]
    c = pl.program_id(1)             # time-chunk axis (axis 0 = batch tiles, "parallel")

    @pl.when(c == 0)
    def _():
        h0_ref[...] = jnp.zeros_like(h0_ref)
        h1_ref[...] = jnp.zeros_like(h1_ref)

    # Loop-invariant operands: load once per chunk.  Biases are pre-broadcast here so
    # the unrolled step body contains no broadcast_in_dim (JAX does not CSE it).
    whh0 = whh0_ref[...]
    wih1 = wih1_ref[...]
    whh1 = whh1_ref[...]
    bhh0_n = jnp.broadcast_to(bhh0n_ref[...], (Bt, H))
    b1_i = jnp.broadcast_to(b1i_ref[...], (Bt, 3 * H))
    bhh1_n = jnp.broadcast_to(bhh1n_ref[...], (Bt, H))

    def step(i, carry):
        h0, h1 = carry

        # ---- layer 0: input projection hoisted to the wrapper; recurrent matmul only ----
        gi0 = gi0_ref[i].astype(jnp.float32)       # (Bt, 3H), includes b_ih0 + b_hh0[r,z]
        gh0 = jnp.dot(h0.astype(whh0.dtype), whh0,
                      preferred_element_type=jnp.float32)          # (Bt, 3H)
        r0 = lax.logistic(gi0[:, :H] + gh0[:, :H])
        z0 = lax.logistic(gi0[:, H:2 * H] + gh0[:, H:2 * H])
        n0 = jnp.tanh(gi0[:, 2 * H:] + r0 * (gh0[:, 2 * H:] + bhh0_n))
        h0_new = (1.0 - z0) * n0 + z0 * h0

        # ---- layer 1: two zero-block-free dots (no lane concat, no wasted MXU cols) ----
        gi1 = jnp.dot(h0_new.astype(wih1.dtype), wih1,
                      preferred_element_type=jnp.float32) + b1_i   # (Bt, 3H)
        gh1 = jnp.dot(h1.astype(whh1.dtype), whh1,
                      preferred_element_type=jnp.float32)          # (Bt, 3H)
        r1 = lax.logistic(gi1[:, :H] + gh1[:, :H])
        z1 = lax.logistic(gi1[:, H:2 * H] + gh1[:, H:2 * H])
        n1 = jnp.tanh(gi1[:, 2 * H:] + r1 * (gh1[:, 2 * H:] + bhh1_n))
        h1_new = (1.0 - z1) * n1 + z1 * h1

        if needs_mask:
            # Padded tail timesteps of the last chunk: keep the carry unchanged.
            valid = (c * chunk + i) < seq_len
            h0_new = jnp.where(valid, h0_new, h0)
            h1_new = jnp.where(valid, h1_new, h1)
        return h0_new, h1_new

    # Static trip count + bounded partial unroll: cross-timestep MXU/EUP overlap
    # without vreg spills or compile-time blow-up for long sequences.
    h0, h1 = lax.fori_loop(0, chunk, step, (h0_ref[...], h1_ref[...]), unroll=unroll)
    h0_ref[...] = h0
    h1_ref[...] = h1

    # Final Linear on the last timestep's top-layer hidden state.
    @pl.when(c == n_chunks - 1)
    def _():
        out_ref[...] = (jnp.dot(h1, wfc_ref[...], preferred_element_type=jnp.float32)
                        + bfc_ref[...])


def _round_up(x, m):
    return ((x + m - 1) // m) * m


def gru_net_forward(x, params, *, hidden=HIDDEN_DIM, output_dim=OUTPUT_DIM,
                    chunk=128, unroll=8, batch_tile=128,
                    compute_dtype=jnp.bfloat16, stream_dtype=None):
    """x: (B, T, D_in) float32 (PyTorch batch_first). Returns (B, output_dim) f32."""
    B, T, _ = x.shape
    if T < 1:
        raise ValueError("GRUNet forward requires at least one timestep (T >= 1).")
    H = hidden
    if stream_dtype is None:
        stream_dtype = compute_dtype
    (wih0, whh0, bih0, bhh0, wih1, whh1, bih1, bhh1, wfc, bfc) = params

    # ---------- offline parameter prep (plain JAX glue, outside the recurrence) ----------
    # Layer 0: hoist the input projection; fold b_ih0 and the r/z parts of b_hh0 in.
    # The n-gate hidden bias stays separate (PyTorch applies it inside r * (W_hn h + b_hn)).
    bias_i0 = bih0 + jnp.concatenate([bhh0[:2 * H], jnp.zeros((H,), bhh0.dtype)])
    gi0 = jnp.einsum("btd,gd->btg", x, wih0) + bias_i0             # (B, T, 3H) f32
    bhh0_n = bhh0[2 * H:].reshape(1, H).astype(jnp.float32)
    whh0_t = whh0.T.astype(compute_dtype)                           # (H, 3H)

    # Layer 1: keep input/recurrent matmuls separate (no zero blocks, no concat);
    # fold the r/z hidden biases into the input-side bias.
    wih1_t = wih1.T.astype(compute_dtype)                           # (H, 3H)
    whh1_t = whh1.T.astype(compute_dtype)                           # (H, 3H)
    b1_i = (bih1 + jnp.concatenate([bhh1[:2 * H], jnp.zeros((H,), bhh1.dtype)])
            ).reshape(1, 3 * H).astype(jnp.float32)
    bhh1_n = bhh1[2 * H:].reshape(1, H).astype(jnp.float32)

    wfc_t = wfc.T.astype(jnp.float32)                               # (H, out)
    bfc_2d = bfc.reshape(1, -1).astype(jnp.float32)

    # ---------- layout: time-major, batch tiled to multiples of 8 rows ----------
    B_tile = min(_round_up(B, 8), _round_up(batch_tile, 8))
    B_pad = _round_up(max(B, 8), B_tile)
    n_btiles = B_pad // B_tile

    # Cap the chunk so one (chunk, B_tile, 3H) gi0 block stays <= ~8 MiB: two
    # double-buffered copies then stay well under v5e's 16 MiB scoped-VMEM default
    # and leave room for two cores' working sets on v7x.
    stream_bytes = jnp.dtype(stream_dtype).itemsize
    max_chunk = max(1, (8 * 2 ** 20) // (B_tile * 3 * H * stream_bytes))
    chunk_eff = max(1, min(chunk, T, max_chunk))
    n_chunks = -(-T // chunk_eff)
    T_pad = n_chunks * chunk_eff
    needs_mask = T_pad != T
    unroll_eff = max(1, min(unroll, chunk_eff))

    gi0_tm = jnp.transpose(gi0, (1, 0, 2))                          # (T, B, 3H)
    gi0_tm = jnp.pad(gi0_tm, ((0, T_pad - T), (0, B_pad - B), (0, 0)))
    gi0_tm = gi0_tm.astype(stream_dtype)

    def invariant_spec(a):
        nd = a.ndim
        # Loop-invariant operand: single VMEM copy, no double-buffering.
        return pl.BlockSpec(a.shape, lambda b, c: (0,) * nd,
                            pipeline_mode=pl.Buffered(1))

    grid_spec = pltpu.PrefetchScalarGridSpec(
        num_scalar_prefetch=0,
        grid=(n_btiles, n_chunks),
        in_specs=[
            pl.BlockSpec((chunk_eff, B_tile, 3 * H), lambda b, c: (c, b, 0)),  # gi0 chunk
            invariant_spec(whh0_t), invariant_spec(bhh0_n),
            invariant_spec(wih1_t), invariant_spec(whh1_t),
            invariant_spec(b1_i), invariant_spec(bhh1_n),
            invariant_spec(wfc_t), invariant_spec(bfc_2d),
        ],
        out_specs=pl.BlockSpec((B_tile, output_dim), lambda b, c: (b, 0)),
        scratch_shapes=[
            pltpu.VMEM((B_tile, H), jnp.float32),   # layer-0 hidden state
            pltpu.VMEM((B_tile, H), jnp.float32),   # layer-1 hidden state
        ],
    )

    # Explicit scoped-VMEM limit only when the footprint would cross the smallest
    # (v5e, 16 MiB) default; otherwise leave the compiler default alone.
    gi0_block_bytes = chunk_eff * B_tile * 3 * H * stream_bytes
    weight_bytes = ((whh0_t.size + wih1_t.size + whh1_t.size)
                    * jnp.dtype(compute_dtype).itemsize
                    + (bhh0_n.size + b1_i.size + bhh1_n.size
                       + wfc_t.size + bfc_2d.size) * 4)
    est_bytes = 2 * gi0_block_bytes + weight_bytes + 2 * B_tile * H * 4 + (2 << 20)
    vmem_limit = None if est_bytes <= 12 * 2 ** 20 else min(2 * est_bytes, 100 * 2 ** 20)

    kernel = functools.partial(
        gru_net_kernel, hidden=H, chunk=chunk_eff, seq_len=T,
        n_chunks=n_chunks, unroll=unroll_eff, needs_mask=needs_mask)

    out = pl.pallas_call(
        kernel,
        out_shape=jax.ShapeDtypeStruct((B_pad, output_dim), jnp.float32),
        grid_spec=grid_spec,
        compiler_params=pltpu.CompilerParams(
            # Batch tiles are independent (fills v6e/v7x MXU rows, feeds v7x's 2nd
            # TensorCore when B spans >= 2 tiles); the time recurrence is sequential.
            dimension_semantics=("parallel", "arbitrary"),
            vmem_limit_bytes=vmem_limit),
    )(gi0_tm, whh0_t, bhh0_n, wih1_t, whh1_t, b1_i, bhh1_n, wfc_t, bfc_2d)
    return out[:B]


def init_params(key, input_dim=INPUT_DIM, hidden=HIDDEN_DIM, output_dim=OUTPUT_DIM):
    """Deterministic init mimicking PyTorch's U(-1/sqrt(H), 1/sqrt(H))."""
    ks = jax.random.split(key, 12)
    bound = 1.0 / np.sqrt(hidden)
    u = lambda k, shape: jax.random.uniform(k, shape, jnp.float32, -bound, bound)
    wih0 = u(ks[0], (3 * hidden, input_dim))
    whh0 = u(ks[1], (3 * hidden, hidden))
    bih0 = u(ks[2], (3 * hidden,))
    bhh0 = u(ks[3], (3 * hidden,))
    wih1 = u(ks[4], (3 * hidden, hidden))
    whh1 = u(ks[5], (3 * hidden, hidden))
    bih1 = u(ks[6], (3 * hidden,))
    bhh1 = u(ks[7], (3 * hidden,))
    wfc = u(ks[8], (output_dim, hidden))
    bfc = u(ks[9], (output_dim,))
    return (wih0, whh0, bih0, bhh0, wih1, whh1, bih1, bhh1, wfc, bfc)


def gru_net_reference(x, params, *, hidden=HIDDEN_DIM):
    """Pure-JAX f32 reference of the PyTorch forward pass for validation."""
    (wih0, whh0, bih0, bhh0, wih1, whh1, bih1, bhh1, wfc, bfc) = params
    B, T, _ = x.shape

    def cell(x_t, h, wih, whh, bih, bhh):
        gi = x_t @ wih.T + bih
        gh = h @ whh.T + bhh
        i_r, i_z, i_n = jnp.split(gi, 3, axis=-1)
        h_r, h_z, h_n = jnp.split(gh, 3, axis=-1)
        r = jax.nn.sigmoid(i_r + h_r)
        z = jax.nn.sigmoid(i_z + h_z)
        n = jnp.tanh(i_n + r * h_n)
        return (1.0 - z) * n + z * h

    def step(carry, x_t):
        h0, h1 = carry
        h0 = cell(x_t, h0, wih0, whh0, bih0, bhh0)
        h1 = cell(h0, h1, wih1, whh1, bih1, bhh1)
        return (h0, h1), h1

    h0 = jnp.zeros((B, hidden), jnp.float32)
    h1 = jnp.zeros((B, hidden), jnp.float32)
    (_, h1_last), _ = jax.lax.scan(step, (h0, h1), jnp.transpose(x, (1, 0, 2)))
    return h1_last @ wfc.T + bfc


if __name__ == "__main__":
    key = jax.random.PRNGKey(0)
    k_x, k_x2, k_p = jax.random.split(key, 3)

    B, T = 2, 8
    x = jax.random.normal(k_x, (B, T, INPUT_DIM), jnp.float32)
    params = init_params(k_p)

    ref = jax.block_until_ready(gru_net_reference(x, params))

    # 1) Exact-semantics check: f32 weights + f32 gi0 stream inside the kernel.
    fwd_f32 = jax.jit(functools.partial(gru_net_forward, compute_dtype=jnp.float32))
    out_f32 = jax.block_until_ready(fwd_f32(x, params))
    np.testing.assert_allclose(np.asarray(out_f32), np.asarray(ref), rtol=1e-4, atol=1e-4)

    # 2) Exact-semantics check of the multi-chunk static-trip path (ragged last chunk,
    #    masked tail timesteps), still in f32.
    T2 = 37
    x2 = jax.random.normal(k_x2, (B, T2, INPUT_DIM), jnp.float32)
    ref2 = jax.block_until_ready(gru_net_reference(x2, params))
    fwd_f32_chunked = jax.jit(functools.partial(
        gru_net_forward, compute_dtype=jnp.float32, chunk=16, unroll=4))
    out2 = jax.block_until_ready(fwd_f32_chunked(x2, params))
    np.testing.assert_allclose(np.asarray(out2), np.asarray(ref2), rtol=1e-4, atol=1e-4)

    # 3) Default performance path: bf16 weights + bf16 gi0 stream, f32 MXU accumulation.
    #    Loose tolerance only reflects the deliberate bf16 casts; exact semantics are
    #    already validated by the f32 paths above.
    fwd = jax.jit(gru_net_forward)
    out = jax.block_until_ready(fwd(x, params))
    np.testing.assert_allclose(np.asarray(out), np.asarray(ref), rtol=1e-1, atol=1e-1)

    assert out.shape == (B, OUTPUT_DIM)
    print("KERNEL_OK")
</pallas_src>

<mosaic_0001>
module attributes {stable_mosaic.version = 11 : i64} {
  func.func @gru_net_kernel(%arg0: i32, %arg1: i32, %arg2: memref<8x8x768xf32, #tpu.memory_space<vmem>>, %arg3: memref<256x768xf32, #tpu.memory_space<vmem>>, %arg4: memref<1x256xf32, #tpu.memory_space<vmem>>, %arg5: memref<256x768xf32, #tpu.memory_space<vmem>>, %arg6: memref<256x768xf32, #tpu.memory_space<vmem>>, %arg7: memref<1x768xf32, #tpu.memory_space<vmem>>, %arg8: memref<1x256xf32, #tpu.memory_space<vmem>>, %arg9: memref<256x1xf32, #tpu.memory_space<vmem>>, %arg10: memref<1x1xf32, #tpu.memory_space<vmem>>, %arg11: memref<8x1xf32, #tpu.memory_space<vmem>>, %arg12: memref<8x256xf32, #tpu.memory_space<vmem>>, %arg13: memref<8x256xf32, #tpu.memory_space<vmem>>) attributes {dimension_semantics = [#tpu.dimension_semantics<parallel>, #tpu.dimension_semantics<arbitrary>], iteration_bounds = array<i64: 1, 1>, scalar_prefetch = 0 : i64, scratch_operands = 2 : i64, tpu.core_type = #tpu.core_type<tc>, window_params = [{transform_indices = @transform_0, window_bounds = array<i64: 8, 8, 768>}, {pipeline_mode = #tpu.pipeline_mode<synchronous>, transform_indices = @transform_1, window_bounds = array<i64: 256, 768>}, {pipeline_mode = #tpu.pipeline_mode<synchronous>, transform_indices = @transform_2, window_bounds = array<i64: 1, 256>}, {pipeline_mode = #tpu.pipeline_mode<synchronous>, transform_indices = @transform_3, window_bounds = array<i64: 256, 768>}, {pipeline_mode = #tpu.pipeline_mode<synchronous>, transform_indices = @transform_4, window_bounds = array<i64: 256, 768>}, {pipeline_mode = #tpu.pipeline_mode<synchronous>, transform_indices = @transform_5, window_bounds = array<i64: 1, 768>}, {pipeline_mode = #tpu.pipeline_mode<synchronous>, transform_indices = @transform_6, window_bounds = array<i64: 1, 256>}, {pipeline_mode = #tpu.pipeline_mode<synchronous>, transform_indices = @transform_7, window_bounds = array<i64: 256, 1>}, {pipeline_mode = #tpu.pipeline_mode<synchronous>, transform_indices = @transform_8, window_bounds = array<i64: 1, 1>}, {transform_indices = @transform_9, window_bounds = array<i64: 8, 1>}]} {
    %c0_i32 = arith.constant 0 : i32
    %0 = arith.cmpi eq, %arg1, %c0_i32 : i32
    %1 = arith.extui %0 : i1 to i32
    %c0_i32_0 = arith.constant 0 : i32
    %2 = arith.cmpi ne, %1, %c0_i32_0 : i32
    scf.if %2 {
      %cst_110 = arith.constant 0.000000e+00 : f32
      %510 = vector.broadcast %cst_110 : f32 to vector<8x256xf32>
      %c0_111 = arith.constant 0 : index
      %c0_112 = arith.constant 0 : index
      %511 = vector.load %arg12[%c0_111, %c0_112] : memref<8x256xf32, #tpu.memory_space<vmem>>, vector<8x256xf32>
      tpu.vector_store %arg12[%c0_111, %c0_112], %510 {strides = array<i32>} : memref<8x256xf32, #tpu.memory_space<vmem>>, vector<8x256xf32>,
      %cst_113 = arith.constant 0.000000e+00 : f32
      %512 = vector.broadcast %cst_113 : f32 to vector<8x256xf32>
      %c0_114 = arith.constant 0 : index
      %c0_115 = arith.constant 0 : index
      %513 = vector.load %arg13[%c0_114, %c0_115] : memref<8x256xf32, #tpu.memory_space<vmem>>, vector<8x256xf32>
      tpu.vector_store %arg13[%c0_114, %c0_115], %512 {strides = array<i32>} : memref<8x256xf32, #tpu.memory_space<vmem>>, vector<8x256xf32>,
    } else {
    }
    %c0 = arith.constant 0 : index
    %c0_1 = arith.constant 0 : index
    %3 = vector.load %arg3[%c0, %c0_1] : memref<256x768xf32, #tpu.memory_space<vmem>>, vector<256x768xf32>
    %c0_2 = arith.constant 0 : index
    %c0_3 = arith.constant 0 : index
    %4 = vector.load %arg5[%c0_2, %c0_3] : memref<256x768xf32, #tpu.memory_space<vmem>>, vector<256x768xf32>
    %c0_4 = arith.constant 0 : index
    %c0_5 = arith.constant 0 : index
    %5 = vector.load %arg6[%c0_4, %c0_5] : memref<256x768xf32, #tpu.memory_space<vmem>>, vector<256x768xf32>
    %c0_6 = arith.constant 0 : index
    %c0_7 = arith.constant 0 : index
    %6 = vector.load %arg4[%c0_6, %c0_7] : memref<1x256xf32, #tpu.memory_space<vmem>>, vector<1x256xf32>
    %7 = vector.shape_cast %6 : vector<1x256xf32> to vector<1x256xf32>
    %8 = vector.broadcast %7 : vector<1x256xf32> to vector<8x256xf32>
    %c0_8 = arith.constant 0 : index
    %c0_9 = arith.constant 0 : index
    %9 = vector.load %arg7[%c0_8, %c0_9] : memref<1x768xf32, #tpu.memory_space<vmem>>, vector<1x768xf32>
    %10 = vector.shape_cast %9 : vector<1x768xf32> to vector<1x768xf32>
    %11 = vector.broadcast %10 : vector<1x768xf32> to vector<8x768xf32>
    %c0_10 = arith.constant 0 : index
    %c0_11 = arith.constant 0 : index
    %12 = vector.load %arg8[%c0_10, %c0_11] : memref<1x256xf32, #tpu.memory_space<vmem>>, vector<1x256xf32>
    %13 = vector.shape_cast %12 : vector<1x256xf32> to vector<1x256xf32>
    %14 = vector.broadcast %13 : vector<1x256xf32> to vector<8x256xf32>
    %c0_12 = arith.constant 0 : index
    %c0_13 = arith.constant 0 : index
    %15 = vector.load %arg12[%c0_12, %c0_13] : memref<8x256xf32, #tpu.memory_space<vmem>>, vector<8x256xf32>
    %c0_14 = arith.constant 0 : index
    %c0_15 = arith.constant 0 : index
    %16 = vector.load %arg13[%c0_14, %c0_15] : memref<8x256xf32, #tpu.memory_space<vmem>>, vector<8x256xf32>
    %c0_i32_16 = arith.constant 0 : i32
    %17 = arith.index_cast %c0_i32_16 : i32 to index
    %c0_17 = arith.constant 0 : index
    %c0_18 = arith.constant 0 : index
    %18 = vector.load %arg2[%17, %c0_17, %c0_18] : memref<8x8x768xf32, #tpu.memory_space<vmem>>, vector<1x8x768xf32>
    %19 = vector.shape_cast %18 : vector<1x8x768xf32> to vector<8x768xf32>
    %cst = arith.constant dense<0.000000e+00> : vector<8x768xf32>
    %20 = tpu.matmul %15, %3, %cst {dimension_numbers = #tpu.dot_dimension_numbers<[1], [0], [0], [1], [0, 0, 1, 1], [], []>} : vector<8x256xf32>, vector<256x768xf32>, vector<8x768xf32> -> vector<8x768xf32>
    %21 = vector.extract_strided_slice %19 {offsets = [0, 0], sizes = [8, 256], strides = [1, 1]} : vector<8x768xf32> to vector<8x256xf32>
    %22 = vector.extract_strided_slice %20 {offsets = [0, 0], sizes = [8, 256], strides = [1, 1]} : vector<8x768xf32> to vector<8x256xf32>
    %23 = arith.addf %21, %22 : vector<8x256xf32>
    %24 = arith.negf %23 : vector<8x256xf32>
    %25 = math.exp %24 : vector<8x256xf32>
    %cst_19 = arith.constant 1.000000e+00 : f32
    %26 = vector.broadcast %cst_19 : f32 to vector<8x256xf32>
    %27 = arith.addf %26, %25 : vector<8x256xf32>
    %28 = arith.divf %26, %27 : vector<8x256xf32>
    %29 = vector.extract_strided_slice %19 {offsets = [0, 256], sizes = [8, 256], strides = [1, 1]} : vector<8x768xf32> to vector<8x256xf32>
    %30 = vector.extract_strided_slice %20 {offsets = [0, 256], sizes = [8, 256], strides = [1, 1]} : vector<8x768xf32> to vector<8x256xf32>
    %31 = arith.addf %29, %30 : vector<8x256xf32>
    %32 = arith.negf %31 : vector<8x256xf32>
    %33 = math.exp %32 : vector<8x256xf32>
    %cst_20 = arith.constant 1.000000e+00 : f32
    %34 = vector.broadcast %cst_20 : f32 to vector<8x256xf32>
    %35 = arith.addf %34, %33 : vector<8x256xf32>
    %36 = arith.divf %34, %35 : vector<8x256xf32>
    %37 = vector.extract_strided_slice %19 {offsets = [0, 512], sizes = [8, 256], strides = [1, 1]} : vector<8x768xf32> to vector<8x256xf32>
    %38 = vector.extract_strided_slice %20 {offsets = [0, 512], sizes = [8, 256], strides = [1, 1]} : vector<8x768xf32> to vector<8x256xf32>
    %39 = arith.addf %38, %8 : vector<8x256xf32>
    %40 = arith.mulf %28, %39 : vector<8x256xf32>
    %41 = arith.addf %37, %40 : vector<8x256xf32>
    %42 = math.tanh %41 : vector<8x256xf32>
    %cst_21 = arith.constant 1.000000e+00 : f32
    %43 = vector.broadcast %cst_21 : f32 to vector<8x256xf32>
    %44 = arith.subf %43, %36 : vector<8x256xf32>
    %45 = arith.mulf %44, %42 : vector<8x256xf32>
    %46 = arith.mulf %36, %15 : vector<8x256xf32>
    %47 = arith.addf %45, %46 : vector<8x256xf32>
    %cst_22 = arith.constant dense<0.000000e+00> : vector<8x768xf32>
    %48 = tpu.matmul %47, %4, %cst_22 {dimension_numbers = #tpu.dot_dimension_numbers<[1], [0], [0], [1], [0, 0, 1, 1], [], []>} : vector<8x256xf32>, vector<256x768xf32>, vector<8x768xf32> -> vector<8x768xf32>
    %49 = arith.addf %48, %11 : vector<8x768xf32>
    %cst_23 = arith.constant dense<0.000000e+00> : vector<8x768xf32>
    %50 = tpu.matmul %16, %5, %cst_23 {dimension_numbers = #tpu.dot_dimension_numbers<[1], [0], [0], [1], [0, 0, 1, 1], [], []>} : vector<8x256xf32>, vector<256x768xf32>, vector<8x768xf32> -> vector<8x768xf32>
    %51 = vector.extract_strided_slice %49 {offsets = [0, 0], sizes = [8, 256], strides = [1, 1]} : vector<8x768xf32> to vector<8x256xf32>
    %52 = vector.extract_strided_slice %50 {offsets = [0, 0], sizes = [8, 256], strides = [1, 1]} : vector<8x768xf32> to vector<8x256xf32>
    %53 = arith.addf %51, %52 : vector<8x256xf32>
    %54 = arith.negf %53 : vector<8x256xf32>
    %55 = math.exp %54 : vector<8x256xf32>
    %cst_24 = arith.constant 1.000000e+00 : f32
    %56 = vector.broadcast %cst_24 : f32 to vector<8x256xf32>
    %57 = arith.addf %56, %55 : vector<8x256xf32>
    %58 = arith.divf %56, %57 : vector<8x256xf32>
    %59 = vector.extract_strided_slice %49 {offsets = [0, 256], sizes = [8, 256], strides = [1, 1]} : vector<8x768xf32> to vector<8x256xf32>
    %60 = vector.extract_strided_slice %50 {offsets = [0, 256], sizes = [8, 256], strides = [1, 1]} : vector<8x768xf32> to vector<8x256xf32>
    %61 = arith.addf %59, %60 : vector<8x256xf32>
    %62 = arith.negf %61 : vector<8x256xf32>
    %63 = math.exp %62 : vector<8x256xf32>
    %cst_25 = arith.constant 1.000000e+00 : f32
    %64 = vector.broadcast %cst_25 : f32 to vector<8x256xf32>
    %65 = arith.addf %64, %63 : vector<8x256xf32>
    %66 = arith.divf %64, %65 : vector<8x256xf32>
    %67 = vector.extract_strided_slice %49 {offsets = [0, 512], sizes = [8, 256], strides = [1, 1]} : vector<8x768xf32> to vector<8x256xf32>
    %68 = vector.extract_strided_slice %50 {offsets = [0, 512], sizes = [8, 256], strides = [1, 1]} : vector<8x768xf32> to vector<8x256xf32>
    %69 = arith.addf %68, %14 : vector<8x256xf32>
    %70 = arith.mulf %58, %69 : vector<8x256xf32>
    %71 = arith.addf %67, %70 : vector<8x256xf32>
    %72 = math.tanh %71 : vector<8x256xf32>
    %cst_26 = arith.constant 1.000000e+00 : f32
    %73 = vector.broadcast %cst_26 : f32 to vector<8x256xf32>
    %74 = arith.subf %73, %66 : vector<8x256xf32>
    %75 = arith.mulf %74, %72 : vector<8x256xf32>
    %76 = arith.mulf %66, %16 : vector<8x256xf32>
    %77 = arith.addf %75, %76 : vector<8x256xf32>
    %c1_i32 = arith.constant 1 : i32
    %78 = arith.index_cast %c1_i32 : i32 to index
    %c0_27 = arith.constant 0 : index
    %c0_28 = arith.constant 0 : index
    %79 = vector.load %arg2[%78, %c0_27, %c0_28] : memref<8x8x768xf32, #tpu.memory_space<vmem>>, vector<1x8x768xf32>
    %80 = vector.shape_cast %79 : vector<1x8x768xf32> to vector<8x768xf32>
    %cst_29 = arith.constant dense<0.000000e+00> : vector<8x768xf32>
    %81 = tpu.matmul %47, %3, %cst_29 {dimension_numbers = #tpu.dot_dimension_numbers<[1], [0], [0], [1], [0, 0, 1, 1], [], []>} : vector<8x256xf32>, vector<256x768xf32>, vector<8x768xf32> -> vector<8x768xf32>
    %82 = vector.extract_strided_slice %80 {offsets = [0, 0], sizes = [8, 256], strides = [1, 1]} : vector<8x768xf32> to vector<8x256xf32>
    %83 = vector.extract_strided_slice %81 {offsets = [0, 0], sizes = [8, 256], strides = [1, 1]} : vector<8x768xf32> to vector<8x256xf32>
    %84 = arith.addf %82, %83 : vector<8x256xf32>
    %85 = arith.negf %84 : vector<8x256xf32>
    %86 = math.exp %85 : vector<8x256xf32>
    %cst_30 = arith.constant 1.000000e+00 : f32
    %87 = vector.broadcast %cst_30 : f32 to vector<8x256xf32>
    %88 = arith.addf %87, %86 : vector<8x256xf32>
    %89 = arith.divf %87, %88 : vector<8x256xf32>
    %90 = vector.extract_strided_slice %80 {offsets = [0, 256], sizes = [8, 256], strides = [1, 1]} : vector<8x768xf32> to vector<8x256xf32>
    %91 = vector.extract_strided_slice %81 {offsets = [0, 256], sizes = [8, 256], strides = [1, 1]} : vector<8x768xf32> to vector<8x256xf32>
    %92 = arith.addf %90, %91 : vector<8x256xf32>
    %93 = arith.negf %92 : vector<8x256xf32>
    %94 = math.exp %93 : vector<8x256xf32>
    %cst_31 = arith.constant 1.000000e+00 : f32
    %95 = vector.broadcast %cst_31 : f32 to vector<8x256xf32>
    %96 = arith.addf %95, %94 : vector<8x256xf32>
    %97 = arith.divf %95, %96 : vector<8x256xf32>
    %98 = vector.extract_strided_slice %80 {offsets = [0, 512], sizes = [8, 256], strides = [1, 1]} : vector<8x768xf32> to vector<8x256xf32>
    %99 = vector.extract_strided_slice %81 {offsets = [0, 512], sizes = [8, 256], strides = [1, 1]} : vector<8x768xf32> to vector<8x256xf32>
    %100 = arith.addf %99, %8 : vector<8x256xf32>
    %101 = arith.mulf %89, %100 : vector<8x256xf32>
    %102 = arith.addf %98, %101 : vector<8x256xf32>
    %103 = math.tanh %102 : vector<8x256xf32>
    %cst_32 = arith.constant 1.000000e+00 : f32
    %104 = vector.broadcast %cst_32 : f32 to vector<8x256xf32>
    %105 = arith.subf %104, %97 : vector<8x256xf32>
    %106 = arith.mulf %105, %103 : vector<8x256xf32>
    %107 = arith.mulf %97, %47 : vector<8x256xf32>
    %108 = arith.addf %106, %107 : vector<8x256xf32>
    %cst_33 = arith.constant dense<0.000000e+00> : vector<8x768xf32>
    %109 = tpu.matmul %108, %4, %cst_33 {dimension_numbers = #tpu.dot_dimension_numbers<[1], [0], [0], [1], [0, 0, 1, 1], [], []>} : vector<8x256xf32>, vector<256x768xf32>, vector<8x768xf32> -> vector<8x768xf32>
    %110 = arith.addf %109, %11 : vector<8x768xf32>
    %cst_34 = arith.constant dense<0.000000e+00> : vector<8x768xf32>
    %111 = tpu.matmul %77, %5, %cst_34 {dimension_numbers = #tpu.dot_dimension_numbers<[1], [0], [0], [1], [0, 0, 1, 1], [], []>} : vector<8x256xf32>, vector<256x768xf32>, vector<8x768xf32> -> vector<8x768xf32>
    %112 = vector.extract_strided_slice %110 {offsets = [0, 0], sizes = [8, 256], strides = [1, 1]} : vector<8x768xf32> to vector<8x256xf32>
    %113 = vector.extract_strided_slice %111 {offsets = [0, 0], sizes = [8, 256], strides = [1, 1]} : vector<8x768xf32> to vector<8x256xf32>
    %114 = arith.addf %112, %113 : vector<8x256xf32>
    %115 = arith.negf %114 : vector<8x256xf32>
    %116 = math.exp %115 : vector<8x256xf32>
    %cst_35 = arith.constant 1.000000e+00 : f32
    %117 = vector.broadcast %cst_35 : f32 to vector<8x256xf32>
    %118 = arith.addf %117, %116 : vector<8x256xf32>
    %119 = arith.divf %117, %118 : vector<8x256xf32>
    %120 = vector.extract_strided_slice %110 {offsets = [0, 256], sizes = [8, 256], strides = [1, 1]} : vector<8x768xf32> to vector<8x256xf32>
    %121 = vector.extract_strided_slice %111 {offsets = [0, 256], sizes = [8, 256], strides = [1, 1]} : vector<8x768xf32> to vector<8x256xf32>
    %122 = arith.addf %120, %121 : vector<8x256xf32>
    %123 = arith.negf %122 : vector<8x256xf32>
    %124 = math.exp %123 : vector<8x256xf32>
    %cst_36 = arith.constant 1.000000e+00 : f32
    %125 = vector.broadcast %cst_36 : f32 to vector<8x256xf32>
    %126 = arith.addf %125, %124 : vector<8x256xf32>
    %127 = arith.divf %125, %126 : vector<8x256xf32>
    %128 = vector.extract_strided_slice %110 {offsets = [0, 512], sizes = [8, 256], strides = [1, 1]} : vector<8x768xf32> to vector<8x256xf32>
    %129 = vector.extract_strided_slice %111 {offsets = [0, 512], sizes = [8, 256], strides = [1, 1]} : vector<8x768xf32> to vector<8x256xf32>
    %130 = arith.addf %129, %14 : vector<8x256xf32>
    %131 = arith.mulf %119, %130 : vector<8x256xf32>
    %132 = arith.addf %128, %131 : vector<8x256xf32>
    %133 = math.tanh %132 : vector<8x256xf32>
    %cst_37 = arith.constant 1.000000e+00 : f32
    %134 = vector.broadcast %cst_37 : f32 to vector<8x256xf32>
    %135 = arith.subf %134, %127 : vector<8x256xf32>
    %136 = arith.mulf %135, %133 : vector<8x256xf32>
    %137 = arith.mulf %127, %77 : vector<8x256xf32>
    %138 = arith.addf %136, %137 : vector<8x256xf32>
    %c2_i32 = arith.constant 2 : i32
    %139 = arith.index_cast %c2_i32 : i32 to index
    %c0_38 = arith.constant 0 : index
    %c0_39 = arith.constant 0 : index
    %140 = vector.load %arg2[%139, %c0_38, %c0_39] : memref<8x8x768xf32, #tpu.memory_space<vmem>>, vector<1x8x768xf32>
    %141 = vector.shape_cast %140 : vector<1x8x768xf32> to vector<8x768xf32>
    %cst_40 = arith.constant dense<0.000000e+00> : vector<8x768xf32>
    %142 = tpu.matmul %108, %3, %cst_40 {dimension_numbers = #tpu.dot_dimension_numbers<[1], [0], [0], [1], [0, 0, 1, 1], [], []>} : vector<8x256xf32>, vector<256x768xf32>, vector<8x768xf32> -> vector<8x768xf32>
    %143 = vector.extract_strided_slice %141 {offsets = [0, 0], sizes = [8, 256], strides = [1, 1]} : vector<8x768xf32> to vector<8x256xf32>
    %144 = vector.extract_strided_slice %142 {offsets = [0, 0], sizes = [8, 256], strides = [1, 1]} : vector<8x768xf32> to vector<8x256xf32>
    %145 = arith.addf %143, %144 : vector<8x256xf32>
    %146 = arith.negf %145 : vector<8x256xf32>
    %147 = math.exp %146 : vector<8x256xf32>
    %cst_41 = arith.constant 1.000000e+00 : f32
    %148 = vector.broadcast %cst_41 : f32 to vector<8x256xf32>
    %149 = arith.addf %148, %147 : vector<8x256xf32>
    %150 = arith.divf %148, %149 : vector<8x256xf32>
    %151 = vector.extract_strided_slice %141 {offsets = [0, 256], sizes = [8, 256], strides = [1, 1]} : vector<8x768xf32> to vector<8x256xf32>
    %152 = vector.extract_strided_slice %142 {offsets = [0, 256], sizes = [8, 256], strides = [1, 1]} : vector<8x768xf32> to vector<8x256xf32>
    %153 = arith.addf %151, %152 : vector<8x256xf32>
    %154 = arith.negf %153 : vector<8x256xf32>
    %155 = math.exp %154 : vector<8x256xf32>
    %cst_42 = arith.constant 1.000000e+00 : f32
    %156 = vector.broadcast %cst_42 : f32 to vector<8x256xf32>
    %157 = arith.addf %156, %155 : vector<8x256xf32>
    %158 = arith.divf %156, %157 : vector<8x256xf32>
    %159 = vector.extract_strided_slice %141 {offsets = [0, 512], sizes = [8, 256], strides = [1, 1]} : vector<8x768xf32> to vector<8x256xf32>
    %160 = vector.extract_strided_slice %142 {offsets = [0, 512], sizes = [8, 256], strides = [1, 1]} : vector<8x768xf32> to vector<8x256xf32>
    %161 = arith.addf %160, %8 : vector<8x256xf32>
    %162 = arith.mulf %150, %161 : vector<8x256xf32>
    %163 = arith.addf %159, %162 : vector<8x256xf32>
    %164 = math.tanh %163 : vector<8x256xf32>
    %cst_43 = arith.constant 1.000000e+00 : f32
    %165 = vector.broadcast %cst_43 : f32 to vector<8x256xf32>
    %166 = arith.subf %165, %158 : vector<8x256xf32>
    %167 = arith.mulf %166, %164 : vector<8x256xf32>
    %168 = arith.mulf %158, %108 : vector<8x256xf32>
    %169 = arith.addf %167, %168 : vector<8x256xf32>
    %cst_44 = arith.constant dense<0.000000e+00> : vector<8x768xf32>
    %170 = tpu.matmul %169, %4, %cst_44 {dimension_numbers = #tpu.dot_dimension_numbers<[1], [0], [0], [1], [0, 0, 1, 1], [], []>} : vector<8x256xf32>, vector<256x768xf32>, vector<8x768xf32> -> vector<8x768xf32>
    %171 = arith.addf %170, %11 : vector<8x768xf32>
    %cst_45 = arith.constant dense<0.000000e+00> : vector<8x768xf32>
    %172 = tpu.matmul %138, %5, %cst_45 {dimension_numbers = #tpu.dot_dimension_numbers<[1], [0], [0], [1], [0, 0, 1, 1], [], []>} : vector<8x256xf32>, vector<256x768xf32>, vector<8x768xf32> -> vector<8x768xf32>
    %173 = vector.extract_strided_slice %171 {offsets = [0, 0], sizes = [8, 256], strides = [1, 1]} : vector<8x768xf32> to vector<8x256xf32>
    %174 = vector.extract_strided_slice %172 {offsets = [0, 0], sizes = [8, 256], strides = [1, 1]} : vector<8x768xf32> to vector<8x256xf32>
    %175 = arith.addf %173, %174 : vector<8x256xf32>
    %176 = arith.negf %175 : vector<8x256xf32>
    %177 = math.exp %176 : vector<8x256xf32>
    %cst_46 = arith.constant 1.000000e+00 : f32
    %178 = vector.broadcast %cst_46 : f32 to vector<8x256xf32>
    %179 = arith.addf %178, %177 : vector<8x256xf32>
    %180 = arith.divf %178, %179 : vector<8x256xf32>
    %181 = vector.extract_strided_slice %171 {offsets = [0, 256], sizes = [8, 256], strides = [1, 1]} : vector<8x768xf32> to vector<8x256xf32>
    %182 = vector.extract_strided_slice %172 {offsets = [0, 256], sizes = [8, 256], strides = [1, 1]} : vector<8x768xf32> to vector<8x256xf32>
    %183 = arith.addf %181, %182 : vector<8x256xf32>
    %184 = arith.negf %183 : vector<8x256xf32>
    %185 = math.exp %184 : vector<8x256xf32>
    %cst_47 = arith.constant 1.000000e+00 : f32
    %186 = vector.broadcast %cst_47 : f32 to vector<8x256xf32>
    %187 = arith.addf %186, %185 : vector<8x256xf32>
    %188 = arith.divf %186, %187 : vector<8x256xf32>
    %189 = vector.extract_strided_slice %171 {offsets = [0, 512], sizes = [8, 256], strides = [1, 1]} : vector<8x768xf32> to vector<8x256xf32>
    %190 = vector.extract_strided_slice %172 {offsets = [0, 512], sizes = [8, 256], strides = [1, 1]} : vector<8x768xf32> to vector<8x256xf32>
    %191 = arith.addf %190, %14 : vector<8x256xf32>
    %192 = arith.mulf %180, %191 : vector<8x256xf32>
    %193 = arith.addf %189, %192 : vector<8x256xf32>
    %194 = math.tanh %193 : vector<8x256xf32>
    %cst_48 = arith.constant 1.000000e+00 : f32
    %195 = vector.broadcast %cst_48 : f32 to vector<8x256xf32>
    %196 = arith.subf %195, %188 : vector<8x256xf32>
    %197 = arith.mulf %196, %194 : vector<8x256xf32>
    %198 = arith.mulf %188, %138 : vector<8x256xf32>
    %199 = arith.addf %197, %198 : vector<8x256xf32>
    %c3_i32 = arith.constant 3 : i32
    %200 = arith.index_cast %c3_i32 : i32 to index
    %c0_49 = arith.constant 0 : index
    %c0_50 = arith.constant 0 : index
    %201 = vector.load %arg2[%200, %c0_49, %c0_50] : memref<8x8x768xf32, #tpu.memory_space<vmem>>, vector<1x8x768xf32>
    %202 = vector.shape_cast %201 : vector<1x8x768xf32> to vector<8x768xf32>
    %cst_51 = arith.constant dense<0.000000e+00> : vector<8x768xf32>
    %203 = tpu.matmul %169, %3, %cst_51 {dimension_numbers = #tpu.dot_dimension_numbers<[1], [0], [0], [1], [0, 0, 1, 1], [], []>} : vector<8x256xf32>, vector<256x768xf32>, vector<8x768xf32> -> vector<8x768xf32>
    %204 = vector.extract_strided_slice %202 {offsets = [0, 0], sizes = [8, 256], strides = [1, 1]} : vector<8x768xf32> to vector<8x256xf32>
    %205 = vector.extract_strided_slice %203 {offsets = [0, 0], sizes = [8, 256], strides = [1, 1]} : vector<8x768xf32> to vector<8x256xf32>
    %206 = arith.addf %204, %205 : vector<8x256xf32>
    %207 = arith.negf %206 : vector<8x256xf32>
    %208 = math.exp %207 : vector<8x256xf32>
    %cst_52 = arith.constant 1.000000e+00 : f32
    %209 = vector.broadcast %cst_52 : f32 to vector<8x256xf32>
    %210 = arith.addf %209, %208 : vector<8x256xf32>
    %211 = arith.divf %209, %210 : vector<8x256xf32>
    %212 = vector.extract_strided_slice %202 {offsets = [0, 256], sizes = [8, 256], strides = [1, 1]} : vector<8x768xf32> to vector<8x256xf32>
    %213 = vector.extract_strided_slice %203 {offsets = [0, 256], sizes = [8, 256], strides = [1, 1]} : vector<8x768xf32> to vector<8x256xf32>
    %214 = arith.addf %212, %213 : vector<8x256xf32>
    %215 = arith.negf %214 : vector<8x256xf32>
    %216 = math.exp %215 : vector<8x256xf32>
    %cst_53 = arith.constant 1.000000e+00 : f32
    %217 = vector.broadcast %cst_53 : f32 to vector<8x256xf32>
    %218 = arith.addf %217, %216 : vector<8x256xf32>
    %219 = arith.divf %217, %218 : vector<8x256xf32>
    %220 = vector.extract_strided_slice %202 {offsets = [0, 512], sizes = [8, 256], strides = [1, 1]} : vector<8x768xf32> to vector<8x256xf32>
    %221 = vector.extract_strided_slice %203 {offsets = [0, 512], sizes = [8, 256], strides = [1, 1]} : vector<8x768xf32> to vector<8x256xf32>
    %222 = arith.addf %221, %8 : vector<8x256xf32>
    %223 = arith.mulf %211, %222 : vector<8x256xf32>
    %224 = arith.addf %220, %223 : vector<8x256xf32>
    %225 = math.tanh %224 : vector<8x256xf32>
    %cst_54 = arith.constant 1.000000e+00 : f32
    %226 = vector.broadcast %cst_54 : f32 to vector<8x256xf32>
    %227 = arith.subf %226, %219 : vector<8x256xf32>
    %228 = arith.mulf %227, %225 : vector<8x256xf32>
    %229 = arith.mulf %219, %169 : vector<8x256xf32>
    %230 = arith.addf %228, %229 : vector<8x256xf32>
    %cst_55 = arith.constant dense<0.000000e+00> : vector<8x768xf32>
    %231 = tpu.matmul %230, %4, %cst_55 {dimension_numbers = #tpu.dot_dimension_numbers<[1], [0], [0], [1], [0, 0, 1, 1], [], []>} : vector<8x256xf32>, vector<256x768xf32>, vector<8x768xf32> -> vector<8x768xf32>
    %232 = arith.addf %231, %11 : vector<8x768xf32>
    %cst_56 = arith.constant dense<0.000000e+00> : vector<8x768xf32>
    %233 = tpu.matmul %199, %5, %cst_56 {dimension_numbers = #tpu.dot_dimension_numbers<[1], [0], [0], [1], [0, 0, 1, 1], [], []>} : vector<8x256xf32>, vector<256x768xf32>, vector<8x768xf32> -> vector<8x768xf32>
    %234 = vector.extract_strided_slice %232 {offsets = [0, 0], sizes = [8, 256], strides = [1, 1]} : vector<8x768xf32> to vector<8x256xf32>
    %235 = vector.extract_strided_slice %233 {offsets = [0, 0], sizes = [8, 256], strides = [1, 1]} : vector<8x768xf32> to vector<8x256xf32>
    %236 = arith.addf %234, %235 : vector<8x256xf32>
    %237 = arith.negf %236 : vector<8x256xf32>
    %238 = math.exp %237 : vector<8x256xf32>
    %cst_57 = arith.constant 1.000000e+00 : f32
    %239 = vector.broadcast %cst_57 : f32 to vector<8x256xf32>
    %240 = arith.addf %239, %238 : vector<8x256xf32>
    %241 = arith.divf %239, %240 : vector<8x256xf32>
    %242 = vector.extract_strided_slice %232 {offsets = [0, 256], sizes = [8, 256], strides = [1, 1]} : vector<8x768xf32> to vector<8x256xf32>
    %243 = vector.extract_strided_slice %233 {offsets = [0, 256], sizes = [8, 256], strides = [1, 1]} : vector<8x768xf32> to vector<8x256xf32>
    %244 = arith.addf %242, %243 : vector<8x256xf32>
    %245 = arith.negf %244 : vector<8x256xf32>
    %246 = math.exp %245 : vector<8x256xf32>
    %cst_58 = arith.constant 1.000000e+00 : f32
    %247 = vector.broadcast %cst_58 : f32 to vector<8x256xf32>
    %248 = arith.addf %247, %246 : vector<8x256xf32>
    %249 = arith.divf %247, %248 : vector<8x256xf32>
    %250 = vector.extract_strided_slice %232 {offsets = [0, 512], sizes = [8, 256], strides = [1, 1]} : vector<8x768xf32> to vector<8x256xf32>
    %251 = vector.extract_strided_slice %233 {offsets = [0, 512], sizes = [8, 256], strides = [1, 1]} : vector<8x768xf32> to vector<8x256xf32>
    %252 = arith.addf %251, %14 : vector<8x256xf32>
    %253 = arith.mulf %241, %252 : vector<8x256xf32>
    %254 = arith.addf %250, %253 : vector<8x256xf32>
    %255 = math.tanh %254 : vector<8x256xf32>
    %cst_59 = arith.constant 1.000000e+00 : f32
    %256 = vector.broadcast %cst_59 : f32 to vector<8x256xf32>
    %257 = arith.subf %256, %249 : vector<8x256xf32>
    %258 = arith.mulf %257, %255 : vector<8x256xf32>
    %259 = arith.mulf %249, %199 : vector<8x256xf32>
    %260 = arith.addf %258, %259 : vector<8x256xf32>
    %c4_i32 = arith.constant 4 : i32
    %261 = arith.index_cast %c4_i32 : i32 to index
    %c0_60 = arith.constant 0 : index
    %c0_61 = arith.constant 0 : index
    %262 = vector.load %arg2[%261, %c0_60, %c0_61] : memref<8x8x768xf32, #tpu.memory_space<vmem>>, vector<1x8x768xf32>
    %263 = vector.shape_cast %262 : vector<1x8x768xf32> to vector<8x768xf32>
    %cst_62 = arith.constant dense<0.000000e+00> : vector<8x768xf32>
    %264 = tpu.matmul %230, %3, %cst_62 {dimension_numbers = #tpu.dot_dimension_numbers<[1], [0], [0], [1], [0, 0, 1, 1], [], []>} : vector<8x256xf32>, vector<256x768xf32>, vector<8x768xf32> -> vector<8x768xf32>
    %265 = vector.extract_strided_slice %263 {offsets = [0, 0], sizes = [8, 256], strides = [1, 1]} : vector<8x768xf32> to vector<8x256xf32>
    %266 = vector.extract_strided_slice %264 {offsets = [0, 0], sizes = [8, 256], strides = [1, 1]} : vector<8x768xf32> to vector<8x256xf32>
    %267 = arith.addf %265, %266 : vector<8x256xf32>
    %268 = arith.negf %267 : vector<8x256xf32>
    %269 = math.exp %268 : vector<8x256xf32>
    %cst_63 = arith.constant 1.000000e+00 : f32
    %270 = vector.broadcast %cst_63 : f32 to vector<8x256xf32>
    %271 = arith.addf %270, %269 : vector<8x256xf32>
    %272 = arith.divf %270, %271 : vector<8x256xf32>
    %273 = vector.extract_strided_slice %263 {offsets = [0, 256], sizes = [8, 256], strides = [1, 1]} : vector<8x768xf32> to vector<8x256xf32>
    %274 = vector.extract_strided_slice %264 {offsets = [0, 256], sizes = [8, 256], strides = [1, 1]} : vector<8x768xf32> to vector<8x256xf32>
    %275 = arith.addf %273, %274 : vector<8x256xf32>
    %276 = arith.negf %275 : vector<8x256xf32>
    %277 = math.exp %276 : vector<8x256xf32>
    %cst_64 = arith.constant 1.000000e+00 : f32
    %278 = vector.broadcast %cst_64 : f32 to vector<8x256xf32>
    %279 = arith.addf %278, %277 : vector<8x256xf32>
    %280 = arith.divf %278, %279 : vector<8x256xf32>
    %281 = vector.extract_strided_slice %263 {offsets = [0, 512], sizes = [8, 256], strides = [1, 1]} : vector<8x768xf32> to vector<8x256xf32>
    %282 = vector.extract_strided_slice %264 {offsets = [0, 512], sizes = [8, 256], strides = [1, 1]} : vector<8x768xf32> to vector<8x256xf32>
    %283 = arith.addf %282, %8 : vector<8x256xf32>
    %284 = arith.mulf %272, %283 : vector<8x256xf32>
    %285 = arith.addf %281, %284 : vector<8x256xf32>
    %286 = math.tanh %285 : vector<8x256xf32>
    %cst_65 = arith.constant 1.000000e+00 : f32
    %287 = vector.broadcast %cst_65 : f32 to vector<8x256xf32>
    %288 = arith.subf %287, %280 : vector<8x256xf32>
    %289 = arith.mulf %288, %286 : vector<8x256xf32>
    %290 = arith.mulf %280, %230 : vector<8x256xf32>
    %291 = arith.addf %289, %290 : vector<8x256xf32>
    %cst_66 = arith.constant dense<0.000000e+00> : vector<8x768xf32>
    %292 = tpu.matmul %291, %4, %cst_66 {dimension_numbers = #tpu.dot_dimension_numbers<[1], [0], [0], [1], [0, 0, 1, 1], [], []>} : vector<8x256xf32>, vector<256x768xf32>, vector<8x768xf32> -> vector<8x768xf32>
    %293 = arith.addf %292, %11 : vector<8x768xf32>
    %cst_67 = arith.constant dense<0.000000e+00> : vector<8x768xf32>
    %294 = tpu.matmul %260, %5, %cst_67 {dimension_numbers = #tpu.dot_dimension_numbers<[1], [0], [0], [1], [0, 0, 1, 1], [], []>} : vector<8x256xf32>, vector<256x768xf32>, vector<8x768xf32> -> vector<8x768xf32>
    %295 = vector.extract_strided_slice %293 {offsets = [0, 0], sizes = [8, 256], strides = [1, 1]} : vector<8x768xf32> to vector<8x256xf32>
    %296 = vector.extract_strided_slice %294 {offsets = [0, 0], sizes = [8, 256], strides = [1, 1]} : vector<8x768xf32> to vector<8x256xf32>
    %297 = arith.addf %295, %296 : vector<8x256xf32>
    %298 = arith.negf %297 : vector<8x256xf32>
    %299 = math.exp %298 : vector<8x256xf32>
    %cst_68 = arith.constant 1.000000e+00 : f32
    %300 = vector.broadcast %cst_68 : f32 to vector<8x256xf32>
    %301 = arith.addf %300, %299 : vector<8x256xf32>
    %302 = arith.divf %300, %301 : vector<8x256xf32>
    %303 = vector.extract_strided_slice %293 {offsets = [0, 256], sizes = [8, 256], strides = [1, 1]} : vector<8x768xf32> to vector<8x256xf32>
    %304 = vector.extract_strided_slice %294 {offsets = [0, 256], sizes = [8, 256], strides = [1, 1]} : vector<8x768xf32> to vector<8x256xf32>
    %305 = arith.addf %303, %304 : vector<8x256xf32>
    %306 = arith.negf %305 : vector<8x256xf32>
    %307 = math.exp %306 : vector<8x256xf32>
    %cst_69 = arith.constant 1.000000e+00 : f32
    %308 = vector.broadcast %cst_69 : f32 to vector<8x256xf32>
    %309 = arith.addf %308, %307 : vector<8x256xf32>
    %310 = arith.divf %308, %309 : vector<8x256xf32>
    %311 = vector.extract_strided_slice %293 {offsets = [0, 512], sizes = [8, 256], strides = [1, 1]} : vector<8x768xf32> to vector<8x256xf32>
    %312 = vector.extract_strided_slice %294 {offsets = [0, 512], sizes = [8, 256], strides = [1, 1]} : vector<8x768xf32> to vector<8x256xf32>
    %313 = arith.addf %312, %14 : vector<8x256xf32>
    %314 = arith.mulf %302, %313 : vector<8x256xf32>
    %315 = arith.addf %311, %314 : vector<8x256xf32>
    %316 = math.tanh %315 : vector<8x256xf32>
    %cst_70 = arith.constant 1.000000e+00 : f32
    %317 = vector.broadcast %cst_70 : f32 to vector<8x256xf32>
    %318 = arith.subf %317, %310 : vector<8x256xf32>
    %319 = arith.mulf %318, %316 : vector<8x256xf32>
    %320 = arith.mulf %310, %260 : vector<8x256xf32>
    %321 = arith.addf %319, %320 : vector<8x256xf32>
    %c5_i32 = arith.constant 5 : i32
    %322 = arith.index_cast %c5_i32 : i32 to index
    %c0_71 = arith.constant 0 : index
    %c0_72 = arith.constant 0 : index
    %323 = vector.load %arg2[%322, %c0_71, %c0_72] : memref<8x8x768xf32, #tpu.memory_space<vmem>>, vector<1x8x768xf32>
    %324 = vector.shape_cast %323 : vector<1x8x768xf32> to vector<8x768xf32>
    %cst_73 = arith.constant dense<0.000000e+00> : vector<8x768xf32>
    %325 = tpu.matmul %291, %3, %cst_73 {dimension_numbers = #tpu.dot_dimension_numbers<[1], [0], [0], [1], [0, 0, 1, 1], [], []>} : vector<8x256xf32>, vector<256x768xf32>, vector<8x768xf32> -> vector<8x768xf32>
    %326 = vector.extract_strided_slice %324 {offsets = [0, 0], sizes = [8, 256], strides = [1, 1]} : vector<8x768xf32> to vector<8x256xf32>
    %327 = vector.extract_strided_slice %325 {offsets = [0, 0], sizes = [8, 256], strides = [1, 1]} : vector<8x768xf32> to vector<8x256xf32>
    %328 = arith.addf %326, %327 : vector<8x256xf32>
    %329 = arith.negf %328 : vector<8x256xf32>
    %330 = math.exp %329 : vector<8x256xf32>
    %cst_74 = arith.constant 1.000000e+00 : f32
    %331 = vector.broadcast %cst_74 : f32 to vector<8x256xf32>
    %332 = arith.addf %331, %330 : vector<8x256xf32>
    %333 = arith.divf %331, %332 : vector<8x256xf32>
    %334 = vector.extract_strided_slice %324 {offsets = [0, 256], sizes = [8, 256], strides = [1, 1]} : vector<8x768xf32> to vector<8x256xf32>
    %335 = vector.extract_strided_slice %325 {offsets = [0, 256], sizes = [8, 256], strides = [1, 1]} : vector<8x768xf32> to vector<8x256xf32>
    %336 = arith.addf %334, %335 : vector<8x256xf32>
    %337 = arith.negf %336 : vector<8x256xf32>
    %338 = math.exp %337 : vector<8x256xf32>
    %cst_75 = arith.constant 1.000000e+00 : f32
    %339 = vector.broadcast %cst_75 : f32 to vector<8x256xf32>
    %340 = arith.addf %339, %338 : vector<8x256xf32>
    %341 = arith.divf %339, %340 : vector<8x256xf32>
    %342 = vector.extract_strided_slice %324 {offsets = [0, 512], sizes = [8, 256], strides = [1, 1]} : vector<8x768xf32> to vector<8x256xf32>
    %343 = vector.extract_strided_slice %325 {offsets = [0, 512], sizes = [8, 256], strides = [1, 1]} : vector<8x768xf32> to vector<8x256xf32>
    %344 = arith.addf %343, %8 : vector<8x256xf32>
    %345 = arith.mulf %333, %344 : vector<8x256xf32>
    %346 = arith.addf %342, %345 : vector<8x256xf32>
    %347 = math.tanh %346 : vector<8x256xf32>
    %cst_76 = arith.constant 1.000000e+00 : f32
    %348 = vector.broadcast %cst_76 : f32 to vector<8x256xf32>
    %349 = arith.subf %348, %341 : vector<8x256xf32>
    %350 = arith.mulf %349, %347 : vector<8x256xf32>
    %351 = arith.mulf %341, %291 : vector<8x256xf32>
    %352 = arith.addf %350, %351 : vector<8x256xf32>
    %cst_77 = arith.constant dense<0.000000e+00> : vector<8x768xf32>
    %353 = tpu.matmul %352, %4, %cst_77 {dimension_numbers = #tpu.dot_dimension_numbers<[1], [0], [0], [1], [0, 0, 1, 1], [], []>} : vector<8x256xf32>, vector<256x768xf32>, vector<8x768xf32> -> vector<8x768xf32>
    %354 = arith.addf %353, %11 : vector<8x768xf32>
    %cst_78 = arith.constant dense<0.000000e+00> : vector<8x768xf32>
    %355 = tpu.matmul %321, %5, %cst_78 {dimension_numbers = #tpu.dot_dimension_numbers<[1], [0], [0], [1], [0, 0, 1, 1], [], []>} : vector<8x256xf32>, vector<256x768xf32>, vector<8x768xf32> -> vector<8x768xf32>
    %356 = vector.extract_strided_slice %354 {offsets = [0, 0], sizes = [8, 256], strides = [1, 1]} : vector<8x768xf32> to vector<8x256xf32>
    %357 = vector.extract_strided_slice %355 {offsets = [0, 0], sizes = [8, 256], strides = [1, 1]} : vector<8x768xf32> to vector<8x256xf32>
    %358 = arith.addf %356, %357 : vector<8x256xf32>
    %359 = arith.negf %358 : vector<8x256xf32>
    %360 = math.exp %359 : vector<8x256xf32>
    %cst_79 = arith.constant 1.000000e+00 : f32
    %361 = vector.broadcast %cst_79 : f32 to vector<8x256xf32>
    %362 = arith.addf %361, %360 : vector<8x256xf32>
    %363 = arith.divf %361, %362 : vector<8x256xf32>
    %364 = vector.extract_strided_slice %354 {offsets = [0, 256], sizes = [8, 256], strides = [1, 1]} : vector<8x768xf32> to vector<8x256xf32>
    %365 = vector.extract_strided_slice %355 {offsets = [0, 256], sizes = [8, 256], strides = [1, 1]} : vector<8x768xf32> to vector<8x256xf32>
    %366 = arith.addf %364, %365 : vector<8x256xf32>
    %367 = arith.negf %366 : vector<8x256xf32>
    %368 = math.exp %367 : vector<8x256xf32>
    %cst_80 = arith.constant 1.000000e+00 : f32
    %369 = vector.broadcast %cst_80 : f32 to vector<8x256xf32>
    %370 = arith.addf %369, %368 : vector<8x256xf32>
    %371 = arith.divf %369, %370 : vector<8x256xf32>
    %372 = vector.extract_strided_slice %354 {offsets = [0, 512], sizes = [8, 256], strides = [1, 1]} : vector<8x768xf32> to vector<8x256xf32>
    %373 = vector.extract_strided_slice %355 {offsets = [0, 512], sizes = [8, 256], strides = [1, 1]} : vector<8x768xf32> to vector<8x256xf32>
    %374 = arith.addf %373, %14 : vector<8x256xf32>
    %375 = arith.mulf %363, %374 : vector<8x256xf32>
    %376 = arith.addf %372, %375 : vector<8x256xf32>
    %377 = math.tanh %376 : vector<8x256xf32>
    %cst_81 = arith.constant 1.000000e+00 : f32
    %378 = vector.broadcast %cst_81 : f32 to vector<8x256xf32>
    %379 = arith.subf %378, %371 : vector<8x256xf32>
    %380 = arith.mulf %379, %377 : vector<8x256xf32>
    %381 = arith.mulf %371, %321 : vector<8x256xf32>
    %382 = arith.addf %380, %381 : vector<8x256xf32>
    %c6_i32 = arith.constant 6 : i32
    %383 = arith.index_cast %c6_i32 : i32 to index
    %c0_82 = arith.constant 0 : index
    %c0_83 = arith.constant 0 : index
    %384 = vector.load %arg2[%383, %c0_82, %c0_83] : memref<8x8x768xf32, #tpu.memory_space<vmem>>, vector<1x8x768xf32>
    %385 = vector.shape_cast %384 : vector<1x8x768xf32> to vector<8x768xf32>
    %cst_84 = arith.constant dense<0.000000e+00> : vector<8x768xf32>
    %386 = tpu.matmul %352, %3, %cst_84 {dimension_numbers = #tpu.dot_dimension_numbers<[1], [0], [0], [1], [0, 0, 1, 1], [], []>} : vector<8x256xf32>, vector<256x768xf32>, vector<8x768xf32> -> vector<8x768xf32>
    %387 = vector.extract_strided_slice %385 {offsets = [0, 0], sizes = [8, 256], strides = [1, 1]} : vector<8x768xf32> to vector<8x256xf32>
    %388 = vector.extract_strided_slice %386 {offsets = [0, 0], sizes = [8, 256], strides = [1, 1]} : vector<8x768xf32> to vector<8x256xf32>
    %389 = arith.addf %387, %388 : vector<8x256xf32>
    %390 = arith.negf %389 : vector<8x256xf32>
    %391 = math.exp %390 : vector<8x256xf32>
    %cst_85 = arith.constant 1.000000e+00 : f32
    %392 = vector.broadcast %cst_85 : f32 to vector<8x256xf32>
    %393 = arith.addf %392, %391 : vector<8x256xf32>
    %394 = arith.divf %392, %393 : vector<8x256xf32>
    %395 = vector.extract_strided_slice %385 {offsets = [0, 256], sizes = [8, 256], strides = [1, 1]} : vector<8x768xf32> to vector<8x256xf32>
    %396 = vector.extract_strided_slice %386 {offsets = [0, 256], sizes = [8, 256], strides = [1, 1]} : vector<8x768xf32> to vector<8x256xf32>
    %397 = arith.addf %395, %396 : vector<8x256xf32>
    %398 = arith.negf %397 : vector<8x256xf32>
    %399 = math.exp %398 : vector<8x256xf32>
    %cst_86 = arith.constant 1.000000e+00 : f32
    %400 = vector.broadcast %cst_86 : f32 to vector<8x256xf32>
    %401 = arith.addf %400, %399 : vector<8x256xf32>
    %402 = arith.divf %400, %401 : vector<8x256xf32>
    %403 = vector.extract_strided_slice %385 {offsets = [0, 512], sizes = [8, 256], strides = [1, 1]} : vector<8x768xf32> to vector<8x256xf32>
    %404 = vector.extract_strided_slice %386 {offsets = [0, 512], sizes = [8, 256], strides = [1, 1]} : vector<8x768xf32> to vector<8x256xf32>
    %405 = arith.addf %404, %8 : vector<8x256xf32>
    %406 = arith.mulf %394, %405 : vector<8x256xf32>
    %407 = arith.addf %403, %406 : vector<8x256xf32>
    %408 = math.tanh %407 : vector<8x256xf32>
    %cst_87 = arith.constant 1.000000e+00 : f32
    %409 = vector.broadcast %cst_87 : f32 to vector<8x256xf32>
    %410 = arith.subf %409, %402 : vector<8x256xf32>
    %411 = arith.mulf %410, %408 : vector<8x256xf32>
    %412 = arith.mulf %402, %352 : vector<8x256xf32>
    %413 = arith.addf %411, %412 : vector<8x256xf32>
    %cst_88 = arith.constant dense<0.000000e+00> : vector<8x768xf32>
    %414 = tpu.matmul %413, %4, %cst_88 {dimension_numbers = #tpu.dot_dimension_numbers<[1], [0], [0], [1], [0, 0, 1, 1], [], []>} : vector<8x256xf32>, vector<256x768xf32>, vector<8x768xf32> -> vector<8x768xf32>
    %415 = arith.addf %414, %11 : vector<8x768xf32>
    %cst_89 = arith.constant dense<0.000000e+00> : vector<8x768xf32>
    %416 = tpu.matmul %382, %5, %cst_89 {dimension_numbers = #tpu.dot_dimension_numbers<[1], [0], [0], [1], [0, 0, 1, 1], [], []>} : vector<8x256xf32>, vector<256x768xf32>, vector<8x768xf32> -> vector<8x768xf32>
    %417 = vector.extract_strided_slice %415 {offsets = [0, 0], sizes = [8, 256], strides = [1, 1]} : vector<8x768xf32> to vector<8x256xf32>
    %418 = vector.extract_strided_slice %416 {offsets = [0, 0], sizes = [8, 256], strides = [1, 1]} : vector<8x768xf32> to vector<8x256xf32>
    %419 = arith.addf %417, %418 : vector<8x256xf32>
    %420 = arith.negf %419 : vector<8x256xf32>
    %421 = math.exp %420 : vector<8x256xf32>
    %cst_90 = arith.constant 1.000000e+00 : f32
    %422 = vector.broadcast %cst_90 : f32 to vector<8x256xf32>
    %423 = arith.addf %422, %421 : vector<8x256xf32>
    %424 = arith.divf %422, %423 : vector<8x256xf32>
    %425 = vector.extract_strided_slice %415 {offsets = [0, 256], sizes = [8, 256], strides = [1, 1]} : vector<8x768xf32> to vector<8x256xf32>
    %426 = vector.extract_strided_slice %416 {offsets = [0, 256], sizes = [8, 256], strides = [1, 1]} : vector<8x768xf32> to vector<8x256xf32>
    %427 = arith.addf %425, %426 : vector<8x256xf32>
    %428 = arith.negf %427 : vector<8x256xf32>
    %429 = math.exp %428 : vector<8x256xf32>
    %cst_91 = arith.constant 1.000000e+00 : f32
    %430 = vector.broadcast %cst_91 : f32 to vector<8x256xf32>
    %431 = arith.addf %430, %429 : vector<8x256xf32>
    %432 = arith.divf %430, %431 : vector<8x256xf32>
    %433 = vector.extract_strided_slice %415 {offsets = [0, 512], sizes = [8, 256], strides = [1, 1]} : vector<8x768xf32> to vector<8x256xf32>
    %434 = vector.extract_strided_slice %416 {offsets = [0, 512], sizes = [8, 256], strides = [1, 1]} : vector<8x768xf32> to vector<8x256xf32>
    %435 = arith.addf %434, %14 : vector<8x256xf32>
    %436 = arith.mulf %424, %435 : vector<8x256xf32>
    %437 = arith.addf %433, %436 : vector<8x256xf32>
    %438 = math.tanh %437 : vector<8x256xf32>
    %cst_92 = arith.constant 1.000000e+00 : f32
    %439 = vector.broadcast %cst_92 : f32 to vector<8x256xf32>
    %440 = arith.subf %439, %432 : vector<8x256xf32>
    %441 = arith.mulf %440, %438 : vector<8x256xf32>
    %442 = arith.mulf %432, %382 : vector<8x256xf32>
    %443 = arith.addf %441, %442 : vector<8x256xf32>
    %c7_i32 = arith.constant 7 : i32
    %444 = arith.index_cast %c7_i32 : i32 to index
    %c0_93 = arith.constant 0 : index
    %c0_94 = arith.constant 0 : index
    %445 = vector.load %arg2[%444, %c0_93, %c0_94] : memref<8x8x768xf32, #tpu.memory_space<vmem>>, vector<1x8x768xf32>
    %446 = vector.shape_cast %445 : vector<1x8x768xf32> to vector<8x768xf32>
    %cst_95 = arith.constant dense<0.000000e+00> : vector<8x768xf32>
    %447 = tpu.matmul %413, %3, %cst_95 {dimension_numbers = #tpu.dot_dimension_numbers<[1], [0], [0], [1], [0, 0, 1, 1], [], []>} : vector<8x256xf32>, vector<256x768xf32>, vector<8x768xf32> -> vector<8x768xf32>
    %448 = vector.extract_strided_slice %446 {offsets = [0, 0], sizes = [8, 256], strides = [1, 1]} : vector<8x768xf32> to vector<8x256xf32>
    %449 = vector.extract_strided_slice %447 {offsets = [0, 0], sizes = [8, 256], strides = [1, 1]} : vector<8x768xf32> to vector<8x256xf32>
    %450 = arith.addf %448, %449 : vector<8x256xf32>
    %451 = arith.negf %450 : vector<8x256xf32>
    %452 = math.exp %451 : vector<8x256xf32>
    %cst_96 = arith.constant 1.000000e+00 : f32
    %453 = vector.broadcast %cst_96 : f32 to vector<8x256xf32>
    %454 = arith.addf %453, %452 : vector<8x256xf32>
    %455 = arith.divf %453, %454 : vector<8x256xf32>
    %456 = vector.extract_strided_slice %446 {offsets = [0, 256], sizes = [8, 256], strides = [1, 1]} : vector<8x768xf32> to vector<8x256xf32>
    %457 = vector.extract_strided_slice %447 {offsets = [0, 256], sizes = [8, 256], strides = [1, 1]} : vector<8x768xf32> to vector<8x256xf32>
    %458 = arith.addf %456, %457 : vector<8x256xf32>
    %459 = arith.negf %458 : vector<8x256xf32>
    %460 = math.exp %459 : vector<8x256xf32>
    %cst_97 = arith.constant 1.000000e+00 : f32
    %461 = vector.broadcast %cst_97 : f32 to vector<8x256xf32>
    %462 = arith.addf %461, %460 : vector<8x256xf32>
    %463 = arith.divf %461, %462 : vector<8x256xf32>
    %464 = vector.extract_strided_slice %446 {offsets = [0, 512], sizes = [8, 256], strides = [1, 1]} : vector<8x768xf32> to vector<8x256xf32>
    %465 = vector.extract_strided_slice %447 {offsets = [0, 512], sizes = [8, 256], strides = [1, 1]} : vector<8x768xf32> to vector<8x256xf32>
    %466 = arith.addf %465, %8 : vector<8x256xf32>
    %467 = arith.mulf %455, %466 : vector<8x256xf32>
    %468 = arith.addf %464, %467 : vector<8x256xf32>
    %469 = math.tanh %468 : vector<8x256xf32>
    %cst_98 = arith.constant 1.000000e+00 : f32
    %470 = vector.broadcast %cst_98 : f32 to vector<8x256xf32>
    %471 = arith.subf %470, %463 : vector<8x256xf32>
    %472 = arith.mulf %471, %469 : vector<8x256xf32>
    %473 = arith.mulf %463, %413 : vector<8x256xf32>
    %474 = arith.addf %472, %473 : vector<8x256xf32>
    %cst_99 = arith.constant dense<0.000000e+00> : vector<8x768xf32>
    %475 = tpu.matmul %474, %4, %cst_99 {dimension_numbers = #tpu.dot_dimension_numbers<[1], [0], [0], [1], [0, 0, 1, 1], [], []>} : vector<8x256xf32>, vector<256x768xf32>, vector<8x768xf32> -> vector<8x768xf32>
    %476 = arith.addf %475, %11 : vector<8x768xf32>
    %cst_100 = arith.constant dense<0.000000e+00> : vector<8x768xf32>
    %477 = tpu.matmul %443, %5, %cst_100 {dimension_numbers = #tpu.dot_dimension_numbers<[1], [0], [0], [1], [0, 0, 1, 1], [], []>} : vector<8x256xf32>, vector<256x768xf32>, vector<8x768xf32> -> vector<8x768xf32>
    %478 = vector.extract_strided_slice %476 {offsets = [0, 0], sizes = [8, 256], strides = [1, 1]} : vector<8x768xf32> to vector<8x256xf32>
    %479 = vector.extract_strided_slice %477 {offsets = [0, 0], sizes = [8, 256], strides = [1, 1]} : vector<8x768xf32> to vector<8x256xf32>
    %480 = arith.addf %478, %479 : vector<8x256xf32>
    %481 = arith.negf %480 : vector<8x256xf32>
    %482 = math.exp %481 : vector<8x256xf32>
    %cst_101 = arith.constant 1.000000e+00 : f32
    %483 = vector.broadcast %cst_101 : f32 to vector<8x256xf32>
    %484 = arith.addf %483, %482 : vector<8x256xf32>
    %485 = arith.divf %483, %484 : vector<8x256xf32>
    %486 = vector.extract_strided_slice %476 {offsets = [0, 256], sizes = [8, 256], strides = [1, 1]} : vector<8x768xf32> to vector<8x256xf32>
    %487 = vector.extract_strided_slice %477 {offsets = [0, 256], sizes = [8, 256], strides = [1, 1]} : vector<8x768xf32> to vector<8x256xf32>
    %488 = arith.addf %486, %487 : vector<8x256xf32>
    %489 = arith.negf %488 : vector<8x256xf32>
    %490 = math.exp %489 : vector<8x256xf32>
    %cst_102 = arith.constant 1.000000e+00 : f32
    %491 = vector.broadcast %cst_102 : f32 to vector<8x256xf32>
    %492 = arith.addf %491, %490 : vector<8x256xf32>
    %493 = arith.divf %491, %492 : vector<8x256xf32>
    %494 = vector.extract_strided_slice %476 {offsets = [0, 512], sizes = [8, 256], strides = [1, 1]} : vector<8x768xf32> to vector<8x256xf32>
    %495 = vector.extract_strided_slice %477 {offsets = [0, 512], sizes = [8, 256], strides = [1, 1]} : vector<8x768xf32> to vector<8x256xf32>
    %496 = arith.addf %495, %14 : vector<8x256xf32>
    %497 = arith.mulf %485, %496 : vector<8x256xf32>
    %498 = arith.addf %494, %497 : vector<8x256xf32>
    %499 = math.tanh %498 : vector<8x256xf32>
    %cst_103 = arith.constant 1.000000e+00 : f32
    %500 = vector.broadcast %cst_103 : f32 to vector<8x256xf32>
    %501 = arith.subf %500, %493 : vector<8x256xf32>
    %502 = arith.mulf %501, %499 : vector<8x256xf32>
    %503 = arith.mulf %493, %443 : vector<8x256xf32>
    %504 = arith.addf %502, %503 : vector<8x256xf32>
    %c8_i32 = arith.constant 8 : i32
    %c0_104 = arith.constant 0 : index
    %c0_105 = arith.constant 0 : index
    %505 = vector.load %arg12[%c0_104, %c0_105] : memref<8x256xf32, #tpu.memory_space<vmem>>, vector<8x256xf32>
    tpu.vector_store %arg12[%c0_104, %c0_105], %474 {strides = array<i32>} : memref<8x256xf32, #tpu.memory_space<vmem>>, vector<8x256xf32>,
    %c0_106 = arith.constant 0 : index
    %c0_107 = arith.constant 0 : index
    %506 = vector.load %arg13[%c0_106, %c0_107] : memref<8x256xf32, #tpu.memory_space<vmem>>, vector<8x256xf32>
    tpu.vector_store %arg13[%c0_106, %c0_107], %504 {strides = array<i32>} : memref<8x256xf32, #tpu.memory_space<vmem>>, vector<8x256xf32>,
    %c0_i32_108 = arith.constant 0 : i32
    %507 = arith.cmpi eq, %arg1, %c0_i32_108 : i32
    %508 = arith.extui %507 : i1 to i32
    %c0_i32_109 = arith.constant 0 : i32
    %509 = arith.cmpi ne, %508, %c0_i32_109 : i32
    scf.if %509 {
      %c0_110 = arith.constant 0 : index
      %c0_111 = arith.constant 0 : index
      %510 = vector.load %arg9[%c0_110, %c0_111] : memref<256x1xf32, #tpu.memory_space<vmem>>, vector<256x1xf32>
      %cst_112 = arith.constant dense<0.000000e+00> : vector<8x1xf32>
      %511 = tpu.matmul %504, %510, %cst_112 {dimension_numbers = #tpu.dot_dimension_numbers<[1], [0], [0], [1], [0, 0, 1, 1], [], []>} : vector<8x256xf32>, vector<256x1xf32>, vector<8x1xf32> -> vector<8x1xf32>
      %c0_113 = arith.constant 0 : index
      %c0_114 = arith.constant 0 : index
      %512 = vector.load %arg10[%c0_113, %c0_114] : memref<1x1xf32, #tpu.memory_space<vmem>>, vector<1x1xf32>
      %513 = vector.broadcast %512 : vector<1x1xf32> to vector<8x1xf32>
      %514 = arith.addf %511, %513 : vector<8x1xf32>
      %c0_115 = arith.constant 0 : index
      %c0_116 = arith.constant 0 : index
      %515 = vector.load %arg11[%c0_115, %c0_116] : memref<8x1xf32, #tpu.memory_space<vmem>>, vector<8x1xf32>
      tpu.vector_store %arg11[%c0_115, %c0_116], %514 {strides = array<i32>} : memref<8x1xf32, #tpu.memory_space<vmem>>, vector<8x1xf32>,
    } else {
    }
    return
  }
  func.func @transform_0(%arg0: i32, %arg1: i32) -> (i32, i32, i32) {
    %c0_i32 = arith.constant 0 : i32
    %c0_i32_0 = arith.constant 0 : i32
    return %arg1, %arg0, %c0_i32 : i32, i32, i32
  }
  func.func @transform_1(%arg0: i32, %arg1: i32) -> (i32, i32) {
    %c0_i32 = arith.constant 0 : i32
    %c0_i32_0 = arith.constant 0 : i32
    %c0_i32_1 = arith.constant 0 : i32
    return %c0_i32, %c0_i32_0 : i32, i32
  }
  func.func @transform_2(%arg0: i32, %arg1: i32) -> (i32, i32) {
    %c0_i32 = arith.constant 0 : i32
    %c0_i32_0 = arith.constant 0 : i32
    %c0_i32_1 = arith.constant 0 : i32
    return %c0_i32, %c0_i32_0 : i32, i32
  }
  func.func @transform_3(%arg0: i32, %arg1: i32) -> (i32, i32) {
    %c0_i32 = arith.constant 0 : i32
    %c0_i32_0 = arith.constant 0 : i32
    %c0_i32_1 = arith.constant 0 : i32
    return %c0_i32, %c0_i32_0 : i32, i32
  }
  func.func @transform_4(%arg0: i32, %arg1: i32) -> (i32, i32) {
    %c0_i32 = arith.constant 0 : i32
    %c0_i32_0 = arith.constant 0 : i32
    %c0_i32_1 = arith.constant 0 : i32
    return %c0_i32, %c0_i32_0 : i32, i32
  }
  func.func @transform_5(%arg0: i32, %arg1: i32) -> (i32, i32) {
    %c0_i32 = arith.constant 0 : i32
    %c0_i32_0 = arith.constant 0 : i32
    %c0_i32_1 = arith.constant 0 : i32
    return %c0_i32, %c0_i32_0 : i32, i32
  }
  func.func @transform_6(%arg0: i32, %arg1: i32) -> (i32, i32) {
    %c0_i32 = arith.constant 0 : i32
    %c0_i32_0 = arith.constant 0 : i32
    %c0_i32_1 = arith.constant 0 : i32
    return %c0_i32, %c0_i32_0 : i32, i32
  }
  func.func @transform_7(%arg0: i32, %arg1: i32) -> (i32, i32) {
    %c0_i32 = arith.constant 0 : i32
    %c0_i32_0 = arith.constant 0 : i32
    %c0_i32_1 = arith.constant 0 : i32
    return %c0_i32, %c0_i32_0 : i32, i32
  }
  func.func @transform_8(%arg0: i32, %arg1: i32) -> (i32, i32) {
    %c0_i32 = arith.constant 0 : i32
    %c0_i32_0 = arith.constant 0 : i32
    %c0_i32_1 = arith.constant 0 : i32
    return %c0_i32, %c0_i32_0 : i32, i32
  }
  func.func @transform_9(%arg0: i32, %arg1: i32) -> (i32, i32) {
    %c0_i32 = arith.constant 0 : i32
    %c0_i32_0 = arith.constant 0 : i32
    return %arg0, %c0_i32 : i32, i32
  }
}

</mosaic_0001>

<llo_original>
// kernel: gru_net_forward.1
$region0: #{gru_net_forward.1}
  #allocation0 [shape = 'u32[]', space=smem, size = 0x4, offset = 0x4, fixed_abs, tag = 'smem constant byte address 0x4 - core index']
  #allocation1 [shape = 'u32[72,128]{1,0:T(1,128)}', space=vmem, size = 0x9000, scoped, tag = 'internal scratch']
  #allocation2 [shape = 'f32[8,256]{1,0:T(8,128)}', space=vmem, size = 0x2000, scoped, tag = 'scratch operand']
  #allocation3 [shape = 'f32[8,256]{1,0:T(8,128)}', space=vmem, size = 0x2000, scoped, tag = 'scratch operand']
  #allocation4 [shape = 'f32[1,1]{1,0:T(1,128)S(1)}', space=vmem, size = 0x200, scoped, tag = 'scoped memory for gru_net_forward.1']
  %s0 = inlined_call_operand.vmem [shape: f32[8,8,768], index: 0, kind: input, shape index: {}]
  %s1 = inlined_call_operand.vmem [shape: f32[256,768], index: 1, kind: input, shape index: {}]
  %s2 = inlined_call_operand.vmem [shape: f32[1,256], index: 2, kind: input, shape index: {}]
  %s3 = inlined_call_operand.vmem [shape: f32[256,768], index: 3, kind: input, shape index: {}]
  %s4 = inlined_call_operand.vmem [shape: f32[256,768], index: 4, kind: input, shape index: {}]
  %s5 = inlined_call_operand.vmem [shape: f32[1,768], index: 5, kind: input, shape index: {}]
  %s6 = inlined_call_operand.vmem [shape: f32[1,256], index: 6, kind: input, shape index: {}]
  %s7 = inlined_call_operand.vmem [shape: f32[256,1], index: 7, kind: input, shape index: {}]
  %s8 = inlined_call_operand.<no memory space> [shape: f32[1,1], index: 8, kind: input, shape index: {}]
  %s9 = inlined_call_operand.vmem [shape: f32[8,1], index: 9, kind: output, shape index: {}]
  %s10 = sld [smem:[#allocation0]]
  $region54: #{gru_net_forward.1} parent=0
    _
  %s12 = ssub.s32 1, %s10
  %s13 = scalar_select 0, %s12, %s10
  %v14 = vstv %s8
  %15 = vst [vmem:[#allocation4] sm:$0x1] %v14
  // Predicated region
  $region2: #{gru_net_forward.1} parent=0 // pred_check
    _
  $region3: #{gru_net_forward.1} parent=0 // pred_check_branch
    %17 = sbr.rel (0) target = $region5
  $region4: #{gru_net_forward.1} parent=0 // pred_region
    _
  $region5: #{gru_net_forward.1} parent=0 // pred_fallthru
    _
  // Predicated region
  $region6: #{gru_net_forward.1} parent=0 // pred_check
    _
  $region7: #{gru_net_forward.1} parent=0 // pred_check_branch
    %19 = sbr.rel (0) target = $region9
  $region8: #{gru_net_forward.1} parent=0 // pred_region
    _
  $region9: #{gru_net_forward.1} parent=0 // pred_fallthru
    _
  // Predicated region
  $region10: #{gru_net_forward.1} parent=0 // pred_check
    _
  $region11: #{gru_net_forward.1} parent=0 // pred_check_branch
    %21 = sbr.rel (0) target = $region13
  $region12: #{gru_net_forward.1} parent=0 // pred_region
    _
  $region13: #{gru_net_forward.1} parent=0 // pred_fallthru
    _
  // Predicated region
  $region14: #{gru_net_forward.1} parent=0 // pred_check
    _
  $region15: #{gru_net_forward.1} parent=0 // pred_check_branch
    %23 = sbr.rel (0) target = $region17
  $region16: #{gru_net_forward.1} parent=0 // pred_region
    _
  $region17: #{gru_net_forward.1} parent=0 // pred_fallthru
    _
  // Predicated region
  $region18: #{gru_net_forward.1} parent=0 // pred_check
    _
  $region19: #{gru_net_forward.1} parent=0 // pred_check_branch
    %25 = sbr.rel (0) target = $region21
  $region20: #{gru_net_forward.1} parent=0 // pred_region
    _
  $region21: #{gru_net_forward.1} parent=0 // pred_fallthru
    _
  // Predicated region
  $region22: #{gru_net_forward.1} parent=0 // pred_check
    _
  $region23: #{gru_net_forward.1} parent=0 // pred_check_branch
    %27 = sbr.rel (0) target = $region25
  $region24: #{gru_net_forward.1} parent=0 // pred_region
    _
  $region25: #{gru_net_forward.1} parent=0 // pred_fallthru
    _
  // Predicated region
  $region26: #{gru_net_forward.1} parent=0 // pred_check
    _
  $region27: #{gru_net_forward.1} parent=0 // pred_check_branch
    %29 = sbr.rel (0) target = $region29
  $region28: #{gru_net_forward.1} parent=0 // pred_region
    _
  $region29: #{gru_net_forward.1} parent=0 // pred_fallthru
    _
  // Predicated region
  $region30: #{gru_net_forward.1} parent=0 // pred_check
    _
  $region31: #{gru_net_forward.1} parent=0 // pred_check_branch
    %31 = sbr.rel (0) target = $region33
  $region32: #{gru_net_forward.1} parent=0 // pred_region
    _
  $region33: #{gru_net_forward.1} parent=0 // pred_fallthru
    _
  // Predicated region
  $region34: #{gru_net_forward.1} parent=0 // pred_check
    _
  $region35: #{gru_net_forward.1} parent=0 // pred_check_branch
    %33 = sbr.rel (0) target = $region37
  $region36: #{gru_net_forward.1} parent=0 // pred_region
    _
  $region37: #{gru_net_forward.1} parent=0 // pred_fallthru
    _
  %p34 = scmp.eq.s32.totalorder 0, 0
  // Predicated region
  $region38: #{gru_net_forward.1} parent=0 // pred_check
    %p35 = pneg %p34
  $region39: #{gru_net_forward.1} parent=0 // pred_check_branch
    %37 = sbr.rel (%p35) target = $region41
  $region40: #{gru_net_forward.1} parent=0 // pred_region
    %38 = vst [vmem:[#allocation2] sm:$0xff] 0.0
    %39 = vst [vmem:[#allocation2 + $0x8] sm:$0xff] 0.0
    %40 = vst [vmem:[#allocation3] sm:$0xff] 0.0
    %41 = vst [vmem:[#allocation3 + $0x8] sm:$0xff] 0.0
  $region41: #{gru_net_forward.1} parent=0 // pred_fallthru
    _
  %v42 = vld [vmem:[%s1] sm:$0xff]
  %v43 = vld [vmem:[%s1 + $0x8] sm:$0xff]
  %v44 = vld [vmem:[%s1 + $0x10] sm:$0xff]
  %v45 = vld [vmem:[%s1 + $0x18] sm:$0xff]
  %v46 = vld [vmem:[%s1 + $0x20] sm:$0xff]
  %v47 = vld [vmem:[%s1 + $0x28] sm:$0xff]
  %v48 = vld [vmem:[%s1 + $0x30] sm:$0xff]
  %v49 = vld [vmem:[%s1 + $0x38] sm:$0xff]
  %v50 = vld [vmem:[%s1 + $0x40] sm:$0xff]
  %v51 = vld [vmem:[%s1 + $0x48] sm:$0xff]
  %v52 = vld [vmem:[%s1 + $0x50] sm:$0xff]
  %v53 = vld [vmem:[%s1 + $0x58] sm:$0xff]
  %v54 = vld [vmem:[%s1 + $0x60] sm:$0xff]
  %v55 = vld [vmem:[%s1 + $0x68] sm:$0xff]
  %v56 = vld [vmem:[%s1 + $0x70] sm:$0xff]
  %v57 = vld [vmem:[%s1 + $0x78] sm:$0xff]
  %v58 = vld [vmem:[%s1 + $0x80] sm:$0xff]
  %v59 = vld [vmem:[%s1 + $0x88] sm:$0xff]
  %v60 = vld [vmem:[%s1 + $0x90] sm:$0xff]
  %v61 = vld [vmem:[%s1 + $0x98] sm:$0xff]
  %v62 = vld [vmem:[%s1 + $0xa0] sm:$0xff]
  %v63 = vld [vmem:[%s1 + $0xa8] sm:$0xff]
  %v64 = vld [vmem:[%s1 + $0xb0] sm:$0xff]
  %v65 = vld [vmem:[%s1 + $0xb8] sm:$0xff]
  %v66 = vld [vmem:[%s1 + $0xc0] sm:$0xff]
  %v67 = vld [vmem:[%s1 + $0xc8] sm:$0xff]
  %v68 = vld [vmem:[%s1 + $0xd0] sm:$0xff]
  %v69 = vld [vmem:[%s1 + $0xd8] sm:$0xff]
  %v70 = vld [vmem:[%s1 + $0xe0] sm:$0xff]
  %v71 = vld [vmem:[%s1 + $0xe8] sm:$0xff]
  %v72 = vld [vmem:[%s1 + $0xf0] sm:$0xff]
  %v73 = vld [vmem:[%s1 + $0xf8] sm:$0xff]
  %v74 = vld [vmem:[%s1 + $0x100] sm:$0xff]
  %v75 = vld [vmem:[%s1 + $0x108] sm:$0xff]
  %v76 = vld [vmem:[%s1 + $0x110] sm:$0xff]
  %v77 = vld [vmem:[%s1 + $0x118] sm:$0xff]
  %v78 = vld [vmem:[%s1 + $0x120] sm:$0xff]
  %v79 = vld [vmem:[%s1 + $0x128] sm:$0xff]
  %v80 = vld [vmem:[%s1 + $0x130] sm:$0xff]
  %v81 = vld [vmem:[%s1 + $0x138] sm:$0xff]
  %v82 = vld [vmem:[%s1 + $0x140] sm:$0xff]
  %v83 = vld [vmem:[%s1 + $0x148] sm:$0xff]
  %v84 = vld [vmem:[%s1 + $0x150] sm:$0xff]
  %v85 = vld [vmem:[%s1 + $0x158] sm:$0xff]
  %v86 = vld [vmem:[%s1 + $0x160] sm:$0xff]
  %v87 = vld [vmem:[%s1 + $0x168] sm:$0xff]
  %v88 = vld [vmem:[%s1 + $0x170] sm:$0xff]
  %v89 = vld [vmem:[%s1 + $0x178] sm:$0xff]
  %v90 = vld [vmem:[%s1 + $0x180] sm:$0xff]
  %v91 = vld [vmem:[%s1 + $0x188] sm:$0xff]
  %v92 = vld [vmem:[%s1 + $0x190] sm:$0xff]
  %v93 = vld [vmem:[%s1 + $0x198] sm:$0xff]
  %v94 = vld [vmem:[%s1 + $0x1a0] sm:$0xff]
  %v95 = vld [vmem:[%s1 + $0x1a8] sm:$0xff]
  %v96 = vld [vmem:[%s1 + $0x1b0] sm:$0xff]
  %v97 = vld [vmem:[%s1 + $0x1b8] sm:$0xff]
  %v98 = vld [vmem:[%s1 + $0x1c0] sm:$0xff]
  %v99 = vld [vmem:[%s1 + $0x1c8] sm:$0xff]
  %v100 = vld [vmem:[%s1 + $0x1d0] sm:$0xff]
  %v101 = vld [vmem:[%s1 + $0x1d8] sm:$0xff]
  %v102 = vld [vmem:[%s1 + $0x1e0] sm:$0xff]
  %v103 = vld [vmem:[%s1 + $0x1e8] sm:$0xff]
  %v104 = vld [vmem:[%s1 + $0x1f0] sm:$0xff]
  %v105 = vld [vmem:[%s1 + $0x1f8] sm:$0xff]
  %v106 = vld [vmem:[%s1 + $0x200] sm:$0xff]
  %v107 = vld [vmem:[%s1 + $0x208] sm:$0xff]
  %v108 = vld [vmem:[%s1 + $0x210] sm:$0xff]
  %v109 = vld [vmem:[%s1 + $0x218] sm:$0xff]
  %v110 = vld [vmem:[%s1 + $0x220] sm:$0xff]
  %v111 = vld [vmem:[%s1 + $0x228] sm:$0xff]
  %v112 = vld [vmem:[%s1 + $0x230] sm:$0xff]
  %v113 = vld [vmem:[%s1 + $0x238] sm:$0xff]
  %v114 = vld [vmem:[%s1 + $0x240] sm:$0xff]
  %v115 = vld [vmem:[%s1 + $0x248] sm:$0xff]
  %v116 = vld [vmem:[%s1 + $0x250] sm:$0xff]
  %v117 = vld [vmem:[%s1 + $0x258] sm:$0xff]
  %v118 = vld [vmem:[%s1 + $0x260] sm:$0xff]
  %v119 = vld [vmem:[%s1 + $0x268] sm:$0xff]
  %v120 = vld [vmem:[%s1 + $0x270] sm:$0xff]
  %v121 = vld [vmem:[%s1 + $0x278] sm:$0xff]
  %v122 = vld [vmem:[%s1 + $0x280] sm:$0xff]
  %v123 = vld [vmem:[%s1 + $0x288] sm:$0xff]
  %v124 = vld [vmem:[%s1 + $0x290] sm:$0xff]
  %v125 = vld [vmem:[%s1 + $0x298] sm:$0xff]
  %v126 = vld [vmem:[%s1 + $0x2a0] sm:$0xff]
  %v127 = vld [vmem:[%s1 + $0x2a8] sm:$0xff]
  %v128 = vld [vmem:[%s1 + $0x2b0] sm:$0xff]
  %v129 = vld [vmem:[%s1 + $0x2b8] sm:$0xff]
  %v130 = vld [vmem:[%s1 + $0x2c0] sm:$0xff]
  %v131 = vld [vmem:[%s1 + $0x2c8] sm:$0xff]
  %v132 = vld [vmem:[%s1 + $0x2d0] sm:$0xff]
  %v133 = vld [vmem:[%s1 + $0x2d8] sm:$0xff]
  %v134 = vld [vmem:[%s1 + $0x2e0] sm:$0xff]
  %v135 = vld [vmem:[%s1 + $0x2e8] sm:$0xff]
  %v136 = vld [vmem:[%s1 + $0x2f0] sm:$0xff]
  %v137 = vld [vmem:[%s1 + $0x2f8] sm:$0xff]
  %v138 = vld [vmem:[%s1 + $0x300] sm:$0xff]
  %v139 = vld [vmem:[%s1 + $0x308] sm:$0xff]
  %v140 = vld [vmem:[%s1 + $0x310] sm:$0xff]
  %v141 = vld [vmem:[%s1 + $0x318] sm:$0xff]
  %v142 = vld [vmem:[%s1 + $0x320] sm:$0xff]
  %v143 = vld [vmem:[%s1 + $0x328] sm:$0xff]
  %v144 = vld [vmem:[%s1 + $0x330] sm:$0xff]
  %v145 = vld [vmem:[%s1 + $0x338] sm:$0xff]
  %v146 = vld [vmem:[%s1 + $0x340] sm:$0xff]
  %v147 = vld [vmem:[%s1 + $0x348] sm:$0xff]
  %v148 = vld [vmem:[%s1 + $0x350] sm:$0xff]
  %v149 = vld [vmem:[%s1 + $0x358] sm:$0xff]
  %v150 = vld [vmem:[%s1 + $0x360] sm:$0xff]
  %v151 = vld [vmem:[%s1 + $0x368] sm:$0xff]
  %v152 = vld [vmem:[%s1 + $0x370] sm:$0xff]
  %v153 = vld [vmem:[%s1 + $0x378] sm:$0xff]
  %v154 = vld [vmem:[%s1 + $0x380] sm:$0xff]
  %v155 = vld [vmem:[%s1 + $0x388] sm:$0xff]
  %v156 = vld [vmem:[%s1 + $0x390] sm:$0xff]
  %v157 = vld [vmem:[%s1 + $0x398] sm:$0xff]
  %v158 = vld [vmem:[%s1 + $0x3a0] sm:$0xff]
  %v159 = vld [vmem:[%s1 + $0x3a8] sm:$0xff]
  %v160 = vld [vmem:[%s1 + $0x3b0] sm:$0xff]
  %v161 = vld [vmem:[%s1 + $0x3b8] sm:$0xff]
  %v162 = vld [vmem:[%s1 + $0x3c0] sm:$0xff]
  %v163 = vld [vmem:[%s1 + $0x3c8] sm:$0xff]
  %v164 = vld [vmem:[%s1 + $0x3d0] sm:$0xff]
  %v165 = vld [vmem:[%s1 + $0x3d8] sm:$0xff]
  %v166 = vld [vmem:[%s1 + $0x3e0] sm:$0xff]
  %v167 = vld [vmem:[%s1 + $0x3e8] sm:$0xff]
  %v168 = vld [vmem:[%s1 + $0x3f0] sm:$0xff]
  %v169 = vld [vmem:[%s1 + $0x3f8] sm:$0xff]
  %v170 = vld [vmem:[%s1 + $0x400] sm:$0xff]
  %v171 = vld [vmem:[%s1 + $0x408] sm:$0xff]
  %v172 = vld [vmem:[%s1 + $0x410] sm:$0xff]
  %v173 = vld [vmem:[%s1 + $0x418] sm:$0xff]
  %v174 = vld [vmem:[%s1 + $0x420] sm:$0xff]
  %v175 = vld [vmem:[%s1 + $0x428] sm:$0xff]
  %v176 = vld [vmem:[%s1 + $0x430] sm:$0xff]
  %v177 = vld [vmem:[%s1 + $0x438] sm:$0xff]
  %v178 = vld [vmem:[%s1 + $0x440] sm:$0xff]
  %v179 = vld [vmem:[%s1 + $0x448] sm:$0xff]
  %v180 = vld [vmem:[%s1 + $0x450] sm:$0xff]
  %v181 = vld [vmem:[%s1 + $0x458] sm:$0xff]
  %v182 = vld [vmem:[%s1 + $0x460] sm:$0xff]
  %v183 = vld [vmem:[%s1 + $0x468] sm:$0xff]
  %v184 = vld [vmem:[%s1 + $0x470] sm:$0xff]
  %v185 = vld [vmem:[%s1 + $0x478] sm:$0xff]
  %v186 = vld [vmem:[%s1 + $0x480] sm:$0xff]
  %v187 = vld [vmem:[%s1 + $0x488] sm:$0xff]
  %v188 = vld [vmem:[%s1 + $0x490] sm:$0xff]
  %v189 = vld [vmem:[%s1 + $0x498] sm:$0xff]
  %v190 = vld [vmem:[%s1 + $0x4a0] sm:$0xff]
  %v191 = vld [vmem:[%s1 + $0x4a8] sm:$0xff]
  %v192 = vld [vmem:[%s1 + $0x4b0] sm:$0xff]
  %v193 = vld [vmem:[%s1 + $0x4b8] sm:$0xff]
  %v194 = vld [vmem:[%s1 + $0x4c0] sm:$0xff]
  %v195 = vld [vmem:[%s1 + $0x4c8] sm:$0xff]
  %v196 = vld [vmem:[%s1 + $0x4d0] sm:$0xff]
  %v197 = vld [vmem:[%s1 + $0x4d8] sm:$0xff]
  %v198 = vld [vmem:[%s1 + $0x4e0] sm:$0xff]
  %v199 = vld [vmem:[%s1 + $0x4e8] sm:$0xff]
  %v200 = vld [vmem:[%s1 + $0x4f0] sm:$0xff]
  %v201 = vld [vmem:[%s1 + $0x4f8] sm:$0xff]
  %v202 = vld [vmem:[%s1 + $0x500] sm:$0xff]
  %v203 = vld [vmem:[%s1 + $0x508] sm:$0xff]
  %v204 = vld [vmem:[%s1 + $0x510] sm:$0xff]
  %v205 = vld [vmem:[%s1 + $0x518] sm:$0xff]
  %v206 = vld [vmem:[%s1 + $0x520] sm:$0xff]
  %v207 = vld [vmem:[%s1 + $0x528] sm:$0xff]
  %v208 = vld [vmem:[%s1 + $0x530] sm:$0xff]
  %v209 = vld [vmem:[%s1 + $0x538] sm:$0xff]
  %v210 = vld [vmem:[%s1 + $0x540] sm:$0xff]
  %v211 = vld [vmem:[%s1 + $0x548] sm:$0xff]
  %v212 = vld [vmem:[%s1 + $0x550] sm:$0xff]
  %v213 = vld [vmem:[%s1 + $0x558] sm:$0xff]
  %v214 = vld [vmem:[%s1 + $0x560] sm:$0xff]
  %v215 = vld [vmem:[%s1 + $0x568] sm:$0xff]
  %v216 = vld [vmem:[%s1 + $0x570] sm:$0xff]
  %v217 = vld [vmem:[%s1 + $0x578] sm:$0xff]
  %v218 = vld [vmem:[%s1 + $0x580] sm:$0xff]
  %v219 = vld [vmem:[%s1 + $0x588] sm:$0xff]
  %v220 = vld [vmem:[%s1 + $0x590] sm:$0xff]
  %v221 = vld [vmem:[%s1 + $0x598] sm:$0xff]
  %v222 = vld [vmem:[%s1 + $0x5a0] sm:$0xff]
  %v223 = vld [vmem:[%s1 + $0x5a8] sm:$0xff]
  %v224 = vld [vmem:[%s1 + $0x5b0] sm:$0xff]
  %v225 = vld [vmem:[%s1 + $0x5b8] sm:$0xff]
  %v226 = vld [vmem:[%s1 + $0x5c0] sm:$0xff]
  %v227 = vld [vmem:[%s1 + $0x5c8] sm:$0xff]
  %v228 = vld [vmem:[%s1 + $0x5d0] sm:$0xff]
  %v229 = vld [vmem:[%s1 + $0x5d8] sm:$0xff]
  %v230 = vld [vmem:[%s1 + $0x5e0] sm:$0xff]
  %v231 = vld [vmem:[%s1 + $0x5e8] sm:$0xff]
  %v232 = vld [vmem:[%s1 + $0x5f0] sm:$0xff]
  %v233 = vld [vmem:[%s1 + $0x5f8] sm:$0xff]
  %v234 = vld [vmem:[%s3] sm:$0xff]
  %v235 = vld [vmem:[%s3 + $0x8] sm:$0xff]
  %v236 = vld [vmem:[%s3 + $0x10] sm:$0xff]
  %v237 = vld [vmem:[%s3 + $0x18] sm:$0xff]
  %v238 = vld [vmem:[%s3 + $0x20] sm:$0xff]
  %v239 = vld [vmem:[%s3 + $0x28] sm:$0xff]
  %v240 = vld [vmem:[%s3 + $0x30] sm:$0xff]
  %v241 = vld [vmem:[%s3 + $0x38] sm:$0xff]
  %v242 = vld [vmem:[%s3 + $0x40] sm:$0xff]
  %v243 = vld [vmem:[%s3 + $0x48] sm:$0xff]
  %v244 = vld [vmem:[%s3 + $0x50] sm:$0xff]
  %v245 = vld [vmem:[%s3 + $0x58] sm:$0xff]
  %v246 = vld [vmem:[%s3 + $0x60] sm:$0xff]
  %v247 = vld [vmem:[%s3 + $0x68] sm:$0xff]
  %v248 = vld [vmem:[%s3 + $0x70] sm:$0xff]
  %v249 = vld [vmem:[%s3 + $0x78] sm:$0xff]
  %v250 = vld [vmem:[%s3 + $0x80] sm:$0xff]
  %v251 = vld [vmem:[%s3 + $0x88] sm:$0xff]
  %v252 = vld [vmem:[%s3 + $0x90] sm:$0xff]
  %v253 = vld [vmem:[%s3 + $0x98] sm:$0xff]
  %v254 = vld [vmem:[%s3 + $0xa0] sm:$0xff]
  %v255 = vld [vmem:[%s3 + $0xa8] sm:$0xff]
  %v256 = vld [vmem:[%s3 + $0xb0] sm:$0xff]
  %v257 = vld [vmem:[%s3 + $0xb8] sm:$0xff]
  %v258 = vld [vmem:[%s3 + $0xc0] sm:$0xff]
  %v259 = vld [vmem:[%s3 + $0xc8] sm:$0xff]
  %v260 = vld [vmem:[%s3 + $0xd0] sm:$0xff]
  %v261 = vld [vmem:[%s3 + $0xd8] sm:$0xff]
  %v262 = vld [vmem:[%s3 + $0xe0] sm:$0xff]
  %v263 = vld [vmem:[%s3 + $0xe8] sm:$0xff]
  %v264 = vld [vmem:[%s3 + $0xf0] sm:$0xff]
  %v265 = vld [vmem:[%s3 + $0xf8] sm:$0xff]
  %v266 = vld [vmem:[%s3 + $0x100] sm:$0xff]
  %v267 = vld [vmem:[%s3 + $0x108] sm:$0xff]
  %v268 = vld [vmem:[%s3 + $0x110] sm:$0xff]
  %v269 = vld [vmem:[%s3 + $0x118] sm:$0xff]
  %v270 = vld [vmem:[%s3 + $0x120] sm:$0xff]
  %v271 = vld [vmem:[%s3 + $0x128] sm:$0xff]
  %v272 = vld [vmem:[%s3 + $0x130] sm:$0xff]
  %v273 = vld [vmem:[%s3 + $0x138] sm:$0xff]
  %v274 = vld [vmem:[%s3 + $0x140] sm:$0xff]
  %v275 = vld [vmem:[%s3 + $0x148] sm:$0xff]
  %v276 = vld [vmem:[%s3 + $0x150] sm:$0xff]
  %v277 = vld [vmem:[%s3 + $0x158] sm:$0xff]
  %v278 = vld [vmem:[%s3 + $0x160] sm:$0xff]
  %v279 = vld [vmem:[%s3 + $0x168] sm:$0xff]
  %v280 = vld [vmem:[%s3 + $0x170] sm:$0xff]
  %v281 = vld [vmem:[%s3 + $0x178] sm:$0xff]
  %v282 = vld [vmem:[%s3 + $0x180] sm:$0xff]
  %v283 = vld [vmem:[%s3 + $0x188] sm:$0xff]
  %v284 = vld [vmem:[%s3 + $0x190] sm:$0xff]
  %v285 = vld [vmem:[%s3 + $0x198] sm:$0xff]
  %v286 = vld [vmem:[%s3 + $0x1a0] sm:$0xff]
  %v287 = vld [vmem:[%s3 + $0x1a8] sm:$0xff]
  %v288 = vld [vmem:[%s3 + $0x1b0] sm:$0xff]
  %v289 = vld [vmem:[%s3 + $0x1b8] sm:$0xff]
  %v290 = vld [vmem:[%s3 + $0x1c0] sm:$0xff]
  %v291 = vld [vmem:[%s3 + $0x1c8] sm:$0xff]
  %v292 = vld [vmem:[%s3 + $0x1d0] sm:$0xff]
  %v293 = vld [vmem:[%s3 + $0x1d8] sm:$0xff]
  %v294 = vld [vmem:[%s3 + $0x1e0] sm:$0xff]
  %v295 = vld [vmem:[%s3 + $0x1e8] sm:$0xff]
  %v296 = vld [vmem:[%s3 + $0x1f0] sm:$0xff]
  %v297 = vld [vmem:[%s3 + $0x1f8] sm:$0xff]
  %v298 = vld [vmem:[%s3 + $0x200] sm:$0xff]
  %v299 = vld [vmem:[%s3 + $0x208] sm:$0xff]
  %v300 = vld [vmem:[%s3 + $0x210] sm:$0xff]
  %v301 = vld [vmem:[%s3 + $0x218] sm:$0xff]
  %v302 = vld [vmem:[%s3 + $0x220] sm:$0xff]
  %v303 = vld [vmem:[%s3 + $0x228] sm:$0xff]
  %v304 = vld [vmem:[%s3 + $0x230] sm:$0xff]
  %v305 = vld [vmem:[%s3 + $0x238] sm:$0xff]
  %v306 = vld [vmem:[%s3 + $0x240] sm:$0xff]
  %v307 = vld [vmem:[%s3 + $0x248] sm:$0xff]
  %v308 = vld [vmem:[%s3 + $0x250] sm:$0xff]
  %v309 = vld [vmem:[%s3 + $0x258] sm:$0xff]
  %v310 = vld [vmem:[%s3 + $0x260] sm:$0xff]
  %v311 = vld [vmem:[%s3 + $0x268] sm:$0xff]
  %v312 = vld [vmem:[%s3 + $0x270] sm:$0xff]
  %v313 = vld [vmem:[%s3 + $0x278] sm:$0xff]
  %v314 = vld [vmem:[%s3 + $0x280] sm:$0xff]
  %v315 = vld [vmem:[%s3 + $0x288] sm:$0xff]
  %v316 = vld [vmem:[%s3 + $0x290] sm:$0xff]
  %v317 = vld [vmem:[%s3 + $0x298] sm:$0xff]
  %v318 = vld [vmem:[%s3 + $0x2a0] sm:$0xff]
  %v319 = vld [vmem:[%s3 + $0x2a8] sm:$0xff]
  %v320 = vld [vmem:[%s3 + $0x2b0] sm:$0xff]
  %v321 = vld [vmem:[%s3 + $0x2b8] sm:$0xff]
  %v322 = vld [vmem:[%s3 + $0x2c0] sm:$0xff]
  %v323 = vld [vmem:[%s3 + $0x2c8] sm:$0xff]
  %v324 = vld [vmem:[%s3 + $0x2d0] sm:$0xff]
  %v325 = vld [vmem:[%s3 + $0x2d8] sm:$0xff]
  %v326 = vld [vmem:[%s3 + $0x2e0] sm:$0xff]
  %v327 = vld [vmem:[%s3 + $0x2e8] sm:$0xff]
  %v328 = vld [vmem:[%s3 + $0x2f0] sm:$0xff]
  %v329 = vld [vmem:[%s3 + $0x2f8] sm:$0xff]
  %v330 = vld [vmem:[%s3 + $0x300] sm:$0xff]
  %v331 = vld [vmem:[%s3 + $0x308] sm:$0xff]
  %v332 = vld [vmem:[%s3 + $0x310] sm:$0xff]
  %v333 = vld [vmem:[%s3 + $0x318] sm:$0xff]
  %v334 = vld [vmem:[%s3 + $0x320] sm:$0xff]
  %v335 = vld [vmem:[%s3 + $0x328] sm:$0xff]
  %v336 = vld [vmem:[%s3 + $0x330] sm:$0xff]
  %v337 = vld [vmem:[%s3 + $0x338] sm:$0xff]
  %v338 = vld [vmem:[%s3 + $0x340] sm:$0xff]
  %v339 = vld [vmem:[%s3 + $0x348] sm:$0xff]
  %v340 = vld [vmem:[%s3 + $0x350] sm:$0xff]
  %v341 = vld [vmem:[%s3 + $0x358] sm:$0xff]
  %v342 = vld [vmem:[%s3 + $0x360] sm:$0xff]
  %v343 = vld [vmem:[%s3 + $0x368] sm:$0xff]
  %v344 = vld [vmem:[%s3 + $0x370] sm:$0xff]
  %v345 = vld [vmem:[%s3 + $0x378] sm:$0xff]
  %v346 = vld [vmem:[%s3 + $0x380] sm:$0xff]
  %v347 = vld [vmem:[%s3 + $0x388] sm:$0xff]
  %v348 = vld [vmem:[%s3 + $0x390] sm:$0xff]
  %v349 = vld [vmem:[%s3 + $0x398] sm:$0xff]
  %v350 = vld [vmem:[%s3 + $0x3a0] sm:$0xff]
  %v351 = vld [vmem:[%s3 + $0x3a8] sm:$0xff]
  %v352 = vld [vmem:[%s3 + $0x3b0] sm:$0xff]
  %v353 = vld [vmem:[%s3 + $0x3b8] sm:$0xff]
  %v354 = vld [vmem:[%s3 + $0x3c0] sm:$0xff]
  %v355 = vld [vmem:[%s3 + $0x3c8] sm:$0xff]
  %v356 = vld [vmem:[%s3 + $0x3d0] sm:$0xff]
  %v357 = vld [vmem:[%s3 + $0x3d8] sm:$0xff]
  %v358 = vld [vmem:[%s3 + $0x3e0] sm:$0xff]
  %v359 = vld [vmem:[%s3 + $0x3e8] sm:$0xff]
  %v360 = vld [vmem:[%s3 + $0x3f0] sm:$0xff]
  %v361 = vld [vmem:[%s3 + $0x3f8] sm:$0xff]
  %v362 = vld [vmem:[%s3 + $0x400] sm:$0xff]
  %v363 = vld [vmem:[%s3 + $0x408] sm:$0xff]
  %v364 = vld [vmem:[%s3 + $0x410] sm:$0xff]
  %v365 = vld [vmem:[%s3 + $0x418] sm:$0xff]
  %v366 = vld [vmem:[%s3 + $0x420] sm:$0xff]
  %v367 = vld [vmem:[%s3 + $0x428] sm:$0xff]
  %v368 = vld [vmem:[%s3 + $0x430] sm:$0xff]
  %v369 = vld [vmem:[%s3 + $0x438] sm:$0xff]
  %v370 = vld [vmem:[%s3 + $0x440] sm:$0xff]
  %v371 = vld [vmem:[%s3 + $0x448] sm:$0xff]
  %v372 = vld [vmem:[%s3 + $0x450] sm:$0xff]
  %v373 = vld [vmem:[%s3 + $0x458] sm:$0xff]
  %v374 = vld [vmem:[%s3 + $0x460] sm:$0xff]
  %v375 = vld [vmem:[%s3 + $0x468] sm:$0xff]
  %v376 = vld [vmem:[%s3 + $0x470] sm:$0xff]
  %v377 = vld [vmem:[%s3 + $0x478] sm:$0xff]
  %v378 = vld [vmem:[%s3 + $0x480] sm:$0xff]
  %v379 = vld [vmem:[%s3 + $0x488] sm:$0xff]
  %v380 = vld [vmem:[%s3 + $0x490] sm:$0xff]
  %v381 = vld [vmem:[%s3 + $0x498] sm:$0xff]
  %v382 = vld [vmem:[%s3 + $0x4a0] sm:$0xff]
  %v383 = vld [vmem:[%s3 + $0x4a8] sm:$0xff]
  %v384 = vld [vmem:[%s3 + $0x4b0] sm:$0xff]
  %v385 = vld [vmem:[%s3 + $0x4b8] sm:$0xff]
  %v386 = vld [vmem:[%s3 + $0x4c0] sm:$0xff]
  %v387 = vld [vmem:[%s3 + $0x4c8] sm:$0xff]
  %v388 = vld [vmem:[%s3 + $0x4d0] sm:$0xff]
  %v389 = vld [vmem:[%s3 + $0x4d8] sm:$0xff]
  %v390 = vld [vmem:[%s3 + $0x4e0] sm:$0xff]
  %v391 = vld [vmem:[%s3 + $0x4e8] sm:$0xff]
  %v392 = vld [vmem:[%s3 + $0x4f0] sm:$0xff]
  %v393 = vld [vmem:[%s3 + $0x4f8] sm:$0xff]
  %v394 = vld [vmem:[%s3 + $0x500] sm:$0xff]
  %v395 = vld [vmem:[%s3 + $0x508] sm:$0xff]
  %v396 = vld [vmem:[%s3 + $0x510] sm:$0xff]
  %v397 = vld [vmem:[%s3 + $0x518] sm:$0xff]
  %v398 = vld [vmem:[%s3 + $0x520] sm:$0xff]
  %v399 = vld [vmem:[%s3 + $0x528] sm:$0xff]
  %v400 = vld [vmem:[%s3 + $0x530] sm:$0xff]
  %v401 = vld [vmem:[%s3 + $0x538] sm:$0xff]
  %v402 = vld [vmem:[%s3 + $0x540] sm:$0xff]
  %v403 = vld [vmem:[%s3 + $0x548] sm:$0xff]
  %v404 = vld [vmem:[%s3 + $0x550] sm:$0xff]
  %v405 = vld [vmem:[%s3 + $0x558] sm:$0xff]
  %v406 = vld [vmem:[%s3 + $0x560] sm:$0xff]
  %v407 = vld [vmem:[%s3 + $0x568] sm:$0xff]
  %v408 = vld [vmem:[%s3 + $0x570] sm:$0xff]
  %v409 = vld [vmem:[%s3 + $0x578] sm:$0xff]
  %v410 = vld [vmem:[%s3 + $0x580] sm:$0xff]
  %v411 = vld [vmem:[%s3 + $0x588] sm:$0xff]
  %v412 = vld [vmem:[%s3 + $0x590] sm:$0xff]
  %v413 = vld [vmem:[%s3 + $0x598] sm:$0xff]
  %v414 = vld [vmem:[%s3 + $0x5a0] sm:$0xff]
  %v415 = vld [vmem:[%s3 + $0x5a8] sm:$0xff]
  %v416 = vld [vmem:[%s3 + $0x5b0] sm:$0xff]
  %v417 = vld [vmem:[%s3 + $0x5b8] sm:$0xff]
  %v418 = vld [vmem:[%s3 + $0x5c0] sm:$0xff]
  %v419 = vld [vmem:[%s3 + $0x5c8] sm:$0xff]
  %v420 = vld [vmem:[%s3 + $0x5d0] sm:$0xff]
  %v421 = vld [vmem:[%s3 + $0x5d8] sm:$0xff]
  %v422 = vld [vmem:[%s3 + $0x5e0] sm:$0xff]
  %v423 = vld [vmem:[%s3 + $0x5e8] sm:$0xff]
  %v424 = vld [vmem:[%s3 + $0x5f0] sm:$0xff]
  %v425 = vld [vmem:[%s3 + $0x5f8] sm:$0xff]
  %v426 = vld [vmem:[%s4] sm:$0xff]
  %v427 = vld [vmem:[%s4 + $0x8] sm:$0xff]
  %v428 = vld [vmem:[%s4 + $0x10] sm:$0xff]
  %v429 = vld [vmem:[%s4 + $0x18] sm:$0xff]
  %v430 = vld [vmem:[%s4 + $0x20] sm:$0xff]
  %v431 = vld [vmem:[%s4 + $0x28] sm:$0xff]
  %v432 = vld [vmem:[%s4 + $0x30] sm:$0xff]
  %v433 = vld [vmem:[%s4 + $0x38] sm:$0xff]
  %v434 = vld [vmem:[%s4 + $0x40] sm:$0xff]
  %v435 = vld [vmem:[%s4 + $0x48] sm:$0xff]
  %v436 = vld [vmem:[%s4 + $0x50] sm:$0xff]
  %v437 = vld [vmem:[%s4 + $0x58] sm:$0xff]
  %v438 = vld [vmem:[%s4 + $0x60] sm:$0xff]
  %v439 = vld [vmem:[%s4 + $0x68] sm:$0xff]
  %v440 = vld [vmem:[%s4 + $0x70] sm:$0xff]
  %v441 = vld [vmem:[%s4 + $0x78] sm:$0xff]
  %v442 = vld [vmem:[%s4 + $0x80] sm:$0xff]
  %v443 = vld [vmem:[%s4 + $0x88] sm:$0xff]
  %v444 = vld [vmem:[%s4 + $0x90] sm:$0xff]
  %v445 = vld [vmem:[%s4 + $0x98] sm:$0xff]
  %v446 = vld [vmem:[%s4 + $0xa0] sm:$0xff]
  %v447 = vld [vmem:[%s4 + $0xa8] sm:$0xff]
  %v448 = vld [vmem:[%s4 + $0xb0] sm:$0xff]
  %v449 = vld [vmem:[%s4 + $0xb8] sm:$0xff]
  %v450 = vld [vmem:[%s4 + $0xc0] sm:$0xff]
  %v451 = vld [vmem:[%s4 + $0xc8] sm:$0xff]
  %v452 = vld [vmem:[%s4 + $0xd0] sm:$0xff]
  %v453 = vld [vmem:[%s4 + $0xd8] sm:$0xff]
  %v454 = vld [vmem:[%s4 + $0xe0] sm:$0xff]
  %v455 = vld [vmem:[%s4 + $0xe8] sm:$0xff]
  %v456 = vld [vmem:[%s4 + $0xf0] sm:$0xff]
  %v457 = vld [vmem:[%s4 + $0xf8] sm:$0xff]
  %v458 = vld [vmem:[%s4 + $0x100] sm:$0xff]
  %v459 = vld [vmem:[%s4 + $0x108] sm:$0xff]
  %v460 = vld [vmem:[%s4 + $0x110] sm:$0xff]
  %v461 = vld [vmem:[%s4 + $0x118] sm:$0xff]
  %v462 = vld [vmem:[%s4 + $0x120] sm:$0xff]
  %v463 = vld [vmem:[%s4 + $0x128] sm:$0xff]
  %v464 = vld [vmem:[%s4 + $0x130] sm:$0xff]
  %v465 = vld [vmem:[%s4 + $0x138] sm:$0xff]
  %v466 = vld [vmem:[%s4 + $0x140] sm:$0xff]
  %v467 = vld [vmem:[%s4 + $0x148] sm:$0xff]
  %v468 = vld [vmem:[%s4 + $0x150] sm:$0xff]
  %v469 = vld [vmem:[%s4 + $0x158] sm:$0xff]
  %v470 = vld [vmem:[%s4 + $0x160] sm:$0xff]
  %v471 = vld [vmem:[%s4 + $0x168] sm:$0xff]
  %v472 = vld [vmem:[%s4 + $0x170] sm:$0xff]
  %v473 = vld [vmem:[%s4 + $0x178] sm:$0xff]
  %v474 = vld [vmem:[%s4 + $0x180] sm:$0xff]
  %v475 = vld [vmem:[%s4 + $0x188] sm:$0xff]
  %v476 = vld [vmem:[%s4 + $0x190] sm:$0xff]
  %v477 = vld [vmem:[%s4 + $0x198] sm:$0xff]
  %v478 = vld [vmem:[%s4 + $0x1a0] sm:$0xff]
  %v479 = vld [vmem:[%s4 + $0x1a8] sm:$0xff]
  %v480 = vld [vmem:[%s4 + $0x1b0] sm:$0xff]
  %v481 = vld [vmem:[%s4 + $0x1b8] sm:$0xff]
  %v482 = vld [vmem:[%s4 + $0x1c0] sm:$0xff]
  %v483 = vld [vmem:[%s4 + $0x1c8] sm:$0xff]
  %v484 = vld [vmem:[%s4 + $0x1d0] sm:$0xff]
  %v485 = vld [vmem:[%s4 + $0x1d8] sm:$0xff]
  %v486 = vld [vmem:[%s4 + $0x1e0] sm:$0xff]
  %v487 = vld [vmem:[%s4 + $0x1e8] sm:$0xff]
  %v488 = vld [vmem:[%s4 + $0x1f0] sm:$0xff]
  %v489 = vld [vmem:[%s4 + $0x1f8] sm:$0xff]
  %v490 = vld [vmem:[%s4 + $0x200] sm:$0xff]
  %v491 = vld [vmem:[%s4 + $0x208] sm:$0xff]
  %v492 = vld [vmem:[%s4 + $0x210] sm:$0xff]
  %v493 = vld [vmem:[%s4 + $0x218] sm:$0xff]
  %v494 = vld [vmem:[%s4 + $0x220] sm:$0xff]
  %v495 = vld [vmem:[%s4 + $0x228] sm:$0xff]
  %v496 = vld [vmem:[%s4 + $0x230] sm:$0xff]
  %v497 = vld [vmem:[%s4 + $0x238] sm:$0xff]
  %v498 = vld [vmem:[%s4 + $0x240] sm:$0xff]
  %v499 = vld [vmem:[%s4 + $0x248] sm:$0xff]
  %v500 = vld [vmem:[%s4 + $0x250] sm:$0xff]
  %v501 = vld [vmem:[%s4 + $0x258] sm:$0xff]
  %v502 = vld [vmem:[%s4 + $0x260] sm:$0xff]
  %v503 = vld [vmem:[%s4 + $0x268] sm:$0xff]
  %v504 = vld [vmem:[%s4 + $0x270] sm:$0xff]
  %v505 = vld [vmem:[%s4 + $0x278] sm:$0xff]
  %v506 = vld [vmem:[%s4 + $0x280] sm:$0xff]
  %v507 = vld [vmem:[%s4 + $0x288] sm:$0xff]
  %v508 = vld [vmem:[%s4 + $0x290] sm:$0xff]
  %v509 = vld [vmem:[%s4 + $0x298] sm:$0xff]
  %v510 = vld [vmem:[%s4 + $0x2a0] sm:$0xff]
  %v511 = vld [vmem:[%s4 + $0x2a8] sm:$0xff]
  %v512 = vld [vmem:[%s4 + $0x2b0] sm:$0xff]
  %v513 = vld [vmem:[%s4 + $0x2b8] sm:$0xff]
  %v514 = vld [vmem:[%s4 + $0x2c0] sm:$0xff]
  %v515 = vld [vmem:[%s4 + $0x2c8] sm:$0xff]
  %v516 = vld [vmem:[%s4 + $0x2d0] sm:$0xff]
  %v517 = vld [vmem:[%s4 + $0x2d8] sm:$0xff]
  %v518 = vld [vmem:[%s4 + $0x2e0] sm:$0xff]
  %v519 = vld [vmem:[%s4 + $0x2e8] sm:$0xff]
  %v520 = vld [vmem:[%s4 + $0x2f0] sm:$0xff]
  %v521 = vld [vmem:[%s4 + $0x2f8] sm:$0xff]
  %v522 = vld [vmem:[%s4 + $0x300] sm:$0xff]
  %v523 = vld [vmem:[%s4 + $0x308] sm:$0xff]
  %v524 = vld [vmem:[%s4 + $0x310] sm:$0xff]
  %v525 = vld [vmem:[%s4 + $0x318] sm:$0xff]
  %v526 = vld [vmem:[%s4 + $0x320] sm:$0xff]
  %v527 = vld [vmem:[%s4 + $0x328] sm:$0xff]
  %v528 = vld [vmem:[%s4 + $0x330] sm:$0xff]
  %v529 = vld [vmem:[%s4 + $0x338] sm:$0xff]
  %v530 = vld [vmem:[%s4 + $0x340] sm:$0xff]
  %v531 = vld [vmem:[%s4 + $0x348] sm:$0xff]
  %v532 = vld [vmem:[%s4 + $0x350] sm:$0xff]
  %v533 = vld [vmem:[%s4 + $0x358] sm:$0xff]
  %v534 = vld [vmem:[%s4 + $0x360] sm:$0xff]
  %v535 = vld [vmem:[%s4 + $0x368] sm:$0xff]
  %v536 = vld [vmem:[%s4 + $0x370] sm:$0xff]
  %v537 = vld [vmem:[%s4 + $0x378] sm:$0xff]
  %v538 = vld [vmem:[%s4 + $0x380] sm:$0xff]
  %v539 = vld [vmem:[%s4 + $0x388] sm:$0xff]
  %v540 = vld [vmem:[%s4 + $0x390] sm:$0xff]
  %v541 = vld [vmem:[%s4 + $0x398] sm:$0xff]
  %v542 = vld [vmem:[%s4 + $0x3a0] sm:$0xff]
  %v543 = vld [vmem:[%s4 + $0x3a8] sm:$0xff]
  %v544 = vld [vmem:[%s4 + $0x3b0] sm:$0xff]
  %v545 = vld [vmem:[%s4 + $0x3b8] sm:$0xff]
  %v546 = vld [vmem:[%s4 + $0x3c0] sm:$0xff]
  %v547 = vld [vmem:[%s4 + $0x3c8] sm:$0xff]
  %v548 = vld [vmem:[%s4 + $0x3d0] sm:$0xff]
  %v549 = vld [vmem:[%s4 + $0x3d8] sm:$0xff]
  %v550 = vld [vmem:[%s4 + $0x3e0] sm:$0xff]
  %v551 = vld [vmem:[%s4 + $0x3e8] sm:$0xff]
  %v552 = vld [vmem:[%s4 + $0x3f0] sm:$0xff]
  %v553 = vld [vmem:[%s4 + $0x3f8] sm:$0xff]
  %v554 = vld [vmem:[%s4 + $0x400] sm:$0xff]
  %v555 = vld [vmem:[%s4 + $0x408] sm:$0xff]
  %v556 = vld [vmem:[%s4 + $0x410] sm:$0xff]
  %v557 = vld [vmem:[%s4 + $0x418] sm:$0xff]
  %v558 = vld [vmem:[%s4 + $0x420] sm:$0xff]
  %v559 = vld [vmem:[%s4 + $0x428] sm:$0xff]
  %v560 = vld [vmem:[%s4 + $0x430] sm:$0xff]
  %v561 = vld [vmem:[%s4 + $0x438] sm:$0xff]
  %v562 = vld [vmem:[%s4 + $0x440] sm:$0xff]
  %v563 = vld [vmem:[%s4 + $0x448] sm:$0xff]
  %v564 = vld [vmem:[%s4 + $0x450] sm:$0xff]
  %v565 = vld [vmem:[%s4 + $0x458] sm:$0xff]
  %v566 = vld [vmem:[%s4 + $0x460] sm:$0xff]
  %v567 = vld [vmem:[%s4 + $0x468] sm:$0xff]
  %v568 = vld [vmem:[%s4 + $0x470] sm:$0xff]
  %v569 = vld [vmem:[%s4 + $0x478] sm:$0xff]
  %v570 = vld [vmem:[%s4 + $0x480] sm:$0xff]
  %v571 = vld [vmem:[%s4 + $0x488] sm:$0xff]
  %v572 = vld [vmem:[%s4 + $0x490] sm:$0xff]
  %v573 = vld [vmem:[%s4 + $0x498] sm:$0xff]
  %v574 = vld [vmem:[%s4 + $0x4a0] sm:$0xff]
  %v575 = vld [vmem:[%s4 + $0x4a8] sm:$0xff]
  %v576 = vld [vmem:[%s4 + $0x4b0] sm:$0xff]
  %v577 = vld [vmem:[%s4 + $0x4b8] sm:$0xff]
  %v578 = vld [vmem:[%s4 + $0x4c0] sm:$0xff]
  %v579 = vld [vmem:[%s4 + $0x4c8] sm:$0xff]
  %v580 = vld [vmem:[%s4 + $0x4d0] sm:$0xff]
  %v581 = vld [vmem:[%s4 + $0x4d8] sm:$0xff]
  %v582 = vld [vmem:[%s4 + $0x4e0] sm:$0xff]
  %v583 = vld [vmem:[%s4 + $0x4e8] sm:$0xff]
  %v584 = vld [vmem:[%s4 + $0x4f0] sm:$0xff]
  %v585 = vld [vmem:[%s4 + $0x4f8] sm:$0xff]
  %v586 = vld [vmem:[%s4 + $0x500] sm:$0xff]
  %v587 = vld [vmem:[%s4 + $0x508] sm:$0xff]
  %v588 = vld [vmem:[%s4 + $0x510] sm:$0xff]
  %v589 = vld [vmem:[%s4 + $0x518] sm:$0xff]
  %v590 = vld [vmem:[%s4 + $0x520] sm:$0xff]
  %v591 = vld [vmem:[%s4 + $0x528] sm:$0xff]
  %v592 = vld [vmem:[%s4 + $0x530] sm:$0xff]
  %v593 = vld [vmem:[%s4 + $0x538] sm:$0xff]
  %v594 = vld [vmem:[%s4 + $0x540] sm:$0xff]
  %v595 = vld [vmem:[%s4 + $0x548] sm:$0xff]
  %v596 = vld [vmem:[%s4 + $0x550] sm:$0xff]
  %v597 = vld [vmem:[%s4 + $0x558] sm:$0xff]
  %v598 = vld [vmem:[%s4 + $0x560] sm:$0xff]
  %v599 = vld [vmem:[%s4 + $0x568] sm:$0xff]
  %v600 = vld [vmem:[%s4 + $0x570] sm:$0xff]
  %v601 = vld [vmem:[%s4 + $0x578] sm:$0xff]
  %v602 = vld [vmem:[%s4 + $0x580] sm:$0xff]
  %v603 = vld [vmem:[%s4 + $0x588] sm:$0xff]
  %v604 = vld [vmem:[%s4 + $0x590] sm:$0xff]
  %v605 = vld [vmem:[%s4 + $0x598] sm:$0xff]
  %v606 = vld [vmem:[%s4 + $0x5a0] sm:$0xff]
  %v607 = vld [vmem:[%s4 + $0x5a8] sm:$0xff]
  %v608 = vld [vmem:[%s4 + $0x5b0] sm:$0xff]
  %v609 = vld [vmem:[%s4 + $0x5b8] sm:$0xff]
  %v610 = vld [vmem:[%s4 + $0x5c0] sm:$0xff]
  %v611 = vld [vmem:[%s4 + $0x5c8] sm:$0xff]
  %v612 = vld [vmem:[%s4 + $0x5d0] sm:$0xff]
  %v613 = vld [vmem:[%s4 + $0x5d8] sm:$0xff]
  %v614 = vld [vmem:[%s4 + $0x5e0] sm:$0xff]
  %v615 = vld [vmem:[%s4 + $0x5e8] sm:$0xff]
  %v616 = vld [vmem:[%s4 + $0x5f0] sm:$0xff]
  %v617 = vld [vmem:[%s4 + $0x5f8] sm:$0xff]
  %v618 = vld [vmem:[%s2] sm:$0x3]
  %v620 = vperm.slane %v618, 0
  %v621 = vperm.slane %v618, 1
  %v624 = vld [vmem:[%s5] sm:$0x3f]
  %v626 = vperm.slane %v624, 0
  %v627 = vperm.slane %v624, 1
  %v628 = vperm.slane %v624, 2
  %v629 = vperm.slane %v624, 3
  %v630 = vperm.slane %v624, 4
  %v631 = vperm.slane %v624, 5
  %v638 = vld [vmem:[%s6] sm:$0x3]
  %v640 = vperm.slane %v638, 0
  %v641 = vperm.slane %v638, 1
  %v644 = vld [vmem:[#allocation2] sm:$0xff]
  %v645 = vld [vmem:[#allocation2 + $0x8] sm:$0xff]
  %v646 = vld [vmem:[#allocation3] sm:$0xff]
  %v647 = vld [vmem:[#allocation3 + $0x8] sm:$0xff]
  %v648 = vld [vmem:[%s0] sm:$0xff]
  %v649 = vld [vmem:[%s0 + $0x8] sm:$0xff]
  %v650 = vld [vmem:[%s0 + $0x10] sm:$0xff]
  %v651 = vld [vmem:[%s0 + $0x18] sm:$0xff]
  %v652 = vld [vmem:[%s0 + $0x20] sm:$0xff]
  %v653 = vld [vmem:[%s0 + $0x28] sm:$0xff]
  %654 = vmatpush.msra.mxu0 %v132
  %655 = vmatpush.msra.mxu0 %v126
  %656 = vmatpush.msra.mxu0 %v120
  %657 = vmatpush.msra.mxu0 %v114
  %658 = vmatpush.msra.mxu0 %v108
  %659 = vmatpush.msra.mxu0 %v102
  %660 = vmatpush.msra.mxu0 %v96
  %661 = vmatpush.msra.mxu0 %v90
  %662 = vmatpush.msra.mxu0 %v84
  %663 = vmatpush.msra.mxu0 %v78
  %664 = vmatpush.msra.mxu0 %v72
  %665 = vmatpush.msra.mxu0 %v66
  %666 = vmatpush.msra.mxu0 %v60
  %667 = vmatpush.msra.mxu0 %v54
  %668 = vmatpush.msra.mxu0 %v48
  %669 = vmatpush.msra.mxu0 %v42
  %670 = vmatmul.f32.gmra.mxu0 %v644
  %v671 = vpop.f32.mrf.mxu0
  %v672 = vadd.f32 0.0, %v671
  %673 = vdwg.mxu0
  %674 = vmatpush.msra.mxu0 %v228
  %675 = vmatpush.msra.mxu0 %v222
  %676 = vmatpush.msra.mxu0 %v216
  %677 = vmatpush.msra.mxu0 %v210
  %678 = vmatpush.msra.mxu0 %v204
  %679 = vmatpush.msra.mxu0 %v198
  %680 = vmatpush.msra.mxu0 %v192
  %681 = vmatpush.msra.mxu0 %v186
  %682 = vmatpush.msra.mxu0 %v180
  %683 = vmatpush.msra.mxu0 %v174
  %684 = vmatpush.msra.mxu0 %v168
  %685 = vmatpush.msra.mxu0 %v162
  %686 = vmatpush.msra.mxu0 %v156
  %687 = vmatpush.msra.mxu0 %v150
  %688 = vmatpush.msra.mxu0 %v144
  %689 = vmatpush.msra.mxu0 %v138
  %690 = vmatmul.f32.gmra.mxu0 %v645
  %v691 = vpop.f32.mrf.mxu0
  %v692 = vadd.f32 %v672, %v691
  %693 = vdwg.mxu0
  %694 = vmatpush.msra.mxu0 %v133
  %695 = vmatpush.msra.mxu0 %v127
  %696 = vmatpush.msra.mxu0 %v121
  %697 = vmatpush.msra.mxu0 %v115
  %698 = vmatpush.msra.mxu0 %v109
  %699 = vmatpush.msra.mxu0 %v103
  %700 = vmatpush.msra.mxu0 %v97
  %701 = vmatpush.msra.mxu0 %v91
  %702 = vmatpush.msra.mxu0 %v85
  %703 = vmatpush.msra.mxu0 %v79
  %704 = vmatpush.msra.mxu0 %v73
  %705 = vmatpush.msra.mxu0 %v67
  %706 = vmatpush.msra.mxu0 %v61
  %707 = vmatpush.msra.mxu0 %v55
  %708 = vmatpush.msra.mxu0 %v49
  %709 = vmatpush.msra.mxu0 %v43
  %710 = vmatmul.f32.gmra.mxu0 %v644
  %v711 = vpop.f32.mrf.mxu0
  %v712 = vadd.f32 0.0, %v711
  %713 = vdwg.mxu0
  %714 = vmatpush.msra.mxu0 %v229
  %715 = vmatpush.msra.mxu0 %v223
  %716 = vmatpush.msra.mxu0 %v217
  %717 = vmatpush.msra.mxu0 %v211
  %718 = vmatpush.msra.mxu0 %v205
  %719 = vmatpush.msra.mxu0 %v199
  %720 = vmatpush.msra.mxu0 %v193
  %721 = vmatpush.msra.mxu0 %v187
  %722 = vmatpush.msra.mxu0 %v181
  %723 = vmatpush.msra.mxu0 %v175
  %724 = vmatpush.msra.mxu0 %v169
  %725 = vmatpush.msra.mxu0 %v163
  %726 = vmatpush.msra.mxu0 %v157
  %727 = vmatpush.msra.mxu0 %v151
  %728 = vmatpush.msra.mxu0 %v145
  %729 = vmatpush.msra.mxu0 %v139
  %730 = vmatmul.f32.gmra.mxu0 %v645
  %v731 = vpop.f32.mrf.mxu0
  %v732 = vadd.f32 %v712, %v731
  %733 = vdwg.mxu0
  %734 = vmatpush.msra.mxu0 %v134
  %735 = vmatpush.msra.mxu0 %v128
  %736 = vmatpush.msra.mxu0 %v122
  %737 = vmatpush.msra.mxu0 %v116
  %738 = vmatpush.msra.mxu0 %v110
  %739 = vmatpush.msra.mxu0 %v104
  %740 = vmatpush.msra.mxu0 %v98
  %741 = vmatpush.msra.mxu0 %v92
  %742 = vmatpush.msra.mxu0 %v86
  %743 = vmatpush.msra.mxu0 %v80
  %744 = vmatpush.msra.mxu0 %v74
  %745 = vmatpush.msra.mxu0 %v68
  %746 = vmatpush.msra.mxu0 %v62
  %747 = vmatpush.msra.mxu0 %v56
  %748 = vmatpush.msra.mxu0 %v50
  %749 = vmatpush.msra.mxu0 %v44
  %750 = vmatmul.f32.gmra.mxu0 %v644
  %v751 = vpop.f32.mrf.mxu0
  %v752 = vadd.f32 0.0, %v751
  %753 = vdwg.mxu0
  %754 = vmatpush.msra.mxu0 %v230
  %755 = vmatpush.msra.mxu0 %v224
  %756 = vmatpush.msra.mxu0 %v218
  %757 = vmatpush.msra.mxu0 %v212
  %758 = vmatpush.msra.mxu0 %v206
  %759 = vmatpush.msra.mxu0 %v200
  %760 = vmatpush.msra.mxu0 %v194
  %761 = vmatpush.msra.mxu0 %v188
  %762 = vmatpush.msra.mxu0 %v182
  %763 = vmatpush.msra.mxu0 %v176
  %764 = vmatpush.msra.mxu0 %v170
  %765 = vmatpush.msra.mxu0 %v164
  %766 = vmatpush.msra.mxu0 %v158
  %767 = vmatpush.msra.mxu0 %v152
  %768 = vmatpush.msra.mxu0 %v146
  %769 = vmatpush.msra.mxu0 %v140
  %770 = vmatmul.f32.gmra.mxu0 %v645
  %v771 = vpop.f32.mrf.mxu0
  %v772 = vadd.f32 %v752, %v771
  %773 = vdwg.mxu0
  %774 = vmatpush.msra.mxu0 %v135
  %775 = vmatpush.msra.mxu0 %v129
  %776 = vmatpush.msra.mxu0 %v123
  %777 = vmatpush.msra.mxu0 %v117
  %778 = vmatpush.msra.mxu0 %v111
  %779 = vmatpush.msra.mxu0 %v105
  %780 = vmatpush.msra.mxu0 %v99
  %781 = vmatpush.msra.mxu0 %v93
  %782 = vmatpush.msra.mxu0 %v87
  %783 = vmatpush.msra.mxu0 %v81
  %784 = vmatpush.msra.mxu0 %v75
  %785 = vmatpush.msra.mxu0 %v69
  %786 = vmatpush.msra.mxu0 %v63
  %787 = vmatpush.msra.mxu0 %v57
  %788 = vmatpush.msra.mxu0 %v51
  %789 = vmatpush.msra.mxu0 %v45
  %790 = vmatmul.f32.gmra.mxu0 %v644
  %v791 = vpop.f32.mrf.mxu0
  %v792 = vadd.f32 0.0, %v791
  %793 = vdwg.mxu0
  %794 = vmatpush.msra.mxu0 %v231
  %795 = vmatpush.msra.mxu0 %v225
  %796 = vmatpush.msra.mxu0 %v219
  %797 = vmatpush.msra.mxu0 %v213
  %798 = vmatpush.msra.mxu0 %v207
  %799 = vmatpush.msra.mxu0 %v201
  %800 = vmatpush.msra.mxu0 %v195
  %801 = vmatpush.msra.mxu0 %v189
  %802 = vmatpush.msra.mxu0 %v183
  %803 = vmatpush.msra.mxu0 %v177
  %804 = vmatpush.msra.mxu0 %v171
  %805 = vmatpush.msra.mxu0 %v165
  %806 = vmatpush.msra.mxu0 %v159
  %807 = vmatpush.msra.mxu0 %v153
  %808 = vmatpush.msra.mxu0 %v147
  %809 = vmatpush.msra.mxu0 %v141
  %810 = vmatmul.f32.gmra.mxu0 %v645
  %v811 = vpop.f32.mrf.mxu0
  %v812 = vadd.f32 %v792, %v811
  %813 = vdwg.mxu0
  %814 = vmatpush.msra.mxu0 %v136
  %815 = vmatpush.msra.mxu0 %v130
  %816 = vmatpush.msra.mxu0 %v124
  %817 = vmatpush.msra.mxu0 %v118
  %818 = vmatpush.msra.mxu0 %v112
  %819 = vmatpush.msra.mxu0 %v106
  %820 = vmatpush.msra.mxu0 %v100
  %821 = vmatpush.msra.mxu0 %v94
  %822 = vmatpush.msra.mxu0 %v88
  %823 = vmatpush.msra.mxu0 %v82
  %824 = vmatpush.msra.mxu0 %v76
  %825 = vmatpush.msra.mxu0 %v70
  %826 = vmatpush.msra.mxu0 %v64
  %827 = vmatpush.msra.mxu0 %v58
  %828 = vmatpush.msra.mxu0 %v52
  %829 = vmatpush.msra.mxu0 %v46
  %830 = vmatmul.f32.gmra.mxu0 %v644
  %v831 = vpop.f32.mrf.mxu0
  %v832 = vadd.f32 0.0, %v831
  %833 = vdwg.mxu0
  %834 = vmatpush.msra.mxu0 %v232
  %835 = vmatpush.msra.mxu0 %v226
  %836 = vmatpush.msra.mxu0 %v220
  %837 = vmatpush.msra.mxu0 %v214
  %838 = vmatpush.msra.mxu0 %v208
  %839 = vmatpush.msra.mxu0 %v202
  %840 = vmatpush.msra.mxu0 %v196
  %841 = vmatpush.msra.mxu0 %v190
  %842 = vmatpush.msra.mxu0 %v184
  %843 = vmatpush.msra.mxu0 %v178
  %844 = vmatpush.msra.mxu0 %v172
  %845 = vmatpush.msra.mxu0 %v166
  %846 = vmatpush.msra.mxu0 %v160
  %847 = vmatpush.msra.mxu0 %v154
  %848 = vmatpush.msra.mxu0 %v148
  %849 = vmatpush.msra.mxu0 %v142
  %850 = vmatmul.f32.gmra.mxu0 %v645
  %v851 = vpop.f32.mrf.mxu0
  %v852 = vadd.f32 %v832, %v851
  %853 = vdwg.mxu0
  %854 = vmatpush.msra.mxu0 %v137
  %855 = vmatpush.msra.mxu0 %v131
  %856 = vmatpush.msra.mxu0 %v125
  %857 = vmatpush.msra.mxu0 %v119
  %858 = vmatpush.msra.mxu0 %v113
  %859 = vmatpush.msra.mxu0 %v107
  %860 = vmatpush.msra.mxu0 %v101
  %861 = vmatpush.msra.mxu0 %v95
  %862 = vmatpush.msra.mxu0 %v89
  %863 = vmatpush.msra.mxu0 %v83
  %864 = vmatpush.msra.mxu0 %v77
  %865 = vmatpush.msra.mxu0 %v71
  %866 = vmatpush.msra.mxu0 %v65
  %867 = vmatpush.msra.mxu0 %v59
  %868 = vmatpush.msra.mxu0 %v53
  %869 = vmatpush.msra.mxu0 %v47
  %870 = vmatmul.f32.gmra.mxu0 %v644
  %v871 = vpop.f32.mrf.mxu0
  %v872 = vadd.f32 0.0, %v871
  %873 = vdwg.mxu0
  %874 = vmatpush.msra.mxu0 %v233
  %875 = vmatpush.msra.mxu0 %v227
  %876 = vmatpush.msra.mxu0 %v221
  %877 = vmatpush.msra.mxu0 %v215
  %878 = vmatpush.msra.mxu0 %v209
  %879 = vmatpush.msra.mxu0 %v203
  %880 = vmatpush.msra.mxu0 %v197
  %881 = vmatpush.msra.mxu0 %v191
  %882 = vmatpush.msra.mxu0 %v185
  %883 = vmatpush.msra.mxu0 %v179
  %884 = vmatpush.msra.mxu0 %v173
  %885 = vmatpush.msra.mxu0 %v167
  %886 = vmatpush.msra.mxu0 %v161
  %887 = vmatpush.msra.mxu0 %v155
  %888 = vmatpush.msra.mxu0 %v149
  %889 = vmatpush.msra.mxu0 %v143
  %890 = vmatmul.f32.gmra.mxu0 %v645
  %v891 = vpop.f32.mrf.mxu0
  %v892 = vadd.f32 %v872, %v891
  %893 = vdwg.mxu0
  %v894 = vadd.f32 %v648, %v692
  %v895 = vadd.f32 %v649, %v732
  %v896 = vxor.u32 %v894, 2147483648
  %v897 = vxor.u32 %v895, 2147483648
  %v898 = vmul.f32 %v896, 1.442695
  %v899 = vpow.pop %v898
  %v900 = vmul.f32 %v897, 1.442695
  %v901 = vpow.pop %v900
  %v902 = vadd.f32 %v899, 1.0
  %v903 = vadd.f32 %v901, 1.0
  %v904 = vrcp.pop %v902
  %v905 = vmul.f32 %v902, %v904
  %v906 = vsub.f32 1.0, %v905
  %v907 = vmul.f32 %v904, %v906
  %v908 = vadd.f32 %v904, %v907
  %vm909 = vweird.f32 %v902
  %vm910 = vweird.f32 %v904
  %vm911 = vmor %vm909, %vm910
  %v912 = vsel %vm911, %v904, %v908
  %v913 = vand.u32 2147483647, %v902
  %vm914 = vcmp.eq.f32.partialorder %v913, 8.507059e+37
  %v915 = vand.u32 %v902, 2147483648
  %v916 = vor.u32 1.1754944e-38, %v915
  %v917 = vsel %vm914, %v916, %v912
  %v918 = vmul.f32 1.0, %v917
  %v919 = vrcp.pop %v903
  %v920 = vmul.f32 %v903, %v919
  %v921 = vsub.f32 1.0, %v920
  %v922 = vmul.f32 %v919, %v921
  %v923 = vadd.f32 %v919, %v922
  %vm924 = vweird.f32 %v903
  %vm925 = vweird.f32 %v919
  %vm926 = vmor %vm924, %vm925
  %v927 = vsel %vm926, %v919, %v923
  %v928 = vand.u32 2147483647, %v903
  %vm929 = vcmp.eq.f32.partialorder %v928, 8.507059e+37
  %v930 = vand.u32 %v903, 2147483648
  %v931 = vor.u32 1.1754944e-38, %v930
  %v932 = vsel %vm929, %v931, %v927
  %v933 = vmul.f32 1.0, %v932
  %v934 = vadd.f32 %v650, %v772
  %v935 = vadd.f32 %v651, %v812
  %v936 = vxor.u32 %v934, 2147483648
  %v937 = vxor.u32 %v935, 2147483648
  %v938 = vmul.f32 %v936, 1.442695
  %v939 = vpow.pop %v938
  %v940 = vmul.f32 %v937, 1.442695
  %v941 = vpow.pop %v940
  %v942 = vadd.f32 %v939, 1.0
  %v943 = vadd.f32 %v941, 1.0
  %v944 = vrcp.pop %v942
  %v945 = vmul.f32 %v942, %v944
  %v946 = vsub.f32 1.0, %v945
  %v947 = vmul.f32 %v944, %v946
  %v948 = vadd.f32 %v944, %v947
  %vm949 = vweird.f32 %v942
  %vm950 = vweird.f32 %v944
  %vm951 = vmor %vm949, %vm950
  %v952 = vsel %vm951, %v944, %v948
  %v953 = vand.u32 2147483647, %v942
  %vm954 = vcmp.eq.f32.partialorder %v953, 8.507059e+37
  %v955 = vand.u32 %v942, 2147483648
  %v956 = vor.u32 1.1754944e-38, %v955
  %v957 = vsel %vm954, %v956, %v952
  %v958 = vmul.f32 1.0, %v957
  %v959 = vrcp.pop %v943
  %v960 = vmul.f32 %v943, %v959
  %v961 = vsub.f32 1.0, %v960
  %v962 = vmul.f32 %v959, %v961
  %v963 = vadd.f32 %v959, %v962
  %vm964 = vweird.f32 %v943
  %vm965 = vweird.f32 %v959
  %vm966 = vmor %vm964, %vm965
  %v967 = vsel %vm966, %v959, %v963
  %v968 = vand.u32 2147483647, %v943
  %vm969 = vcmp.eq.f32.partialorder %v968, 8.507059e+37
  %v970 = vand.u32 %v943, 2147483648
  %v971 = vor.u32 1.1754944e-38, %v970
  %v972 = vsel %vm969, %v971, %v967
  %v973 = vmul.f32 1.0, %v972
  %v974 = vadd.f32 %v852, %v620
  %v975 = vadd.f32 %v892, %v621
  %v976 = vmul.f32 %v918, %v974
  %v977 = vmul.f32 %v933, %v975
  %v978 = vadd.f32 %v652, %v976
  %v979 = vadd.f32 %v653, %v977
  %v980 = vtanh.pop %v978
  %v981 = vtanh.pop %v979
  %v982 = vsub.f32 1.0, %v958
  %v983 = vsub.f32 1.0, %v973
  %v984 = vmul.f32 %v982, %v980
  %v985 = vmul.f32 %v983, %v981
  %v986 = vmul.f32 %v958, %v644
  %v987 = vmul.f32 %v973, %v645
  %v988 = vadd.f32 %v984, %v986
  %v989 = vadd.f32 %v985, %v987
  %990 = vmatpush.msra.mxu0 %v324
  %991 = vmatpush.msra.mxu0 %v318
  %992 = vmatpush.msra.mxu0 %v312
  %993 = vmatpush.msra.mxu0 %v306
  %994 = vmatpush.msra.mxu0 %v300
  %995 = vmatpush.msra.mxu0 %v294
  %996 = vmatpush.msra.mxu0 %v288
  %997 = vmatpush.msra.mxu0 %v282
  %998 = vmatpush.msra.mxu0 %v276
  %999 = vmatpush.msra.mxu0 %v270
  %1000 = vmatpush.msra.mxu0 %v264
  %1001 = vmatpush.msra.mxu0 %v258
  %1002 = vmatpush.msra.mxu0 %v252
  %1003 = vmatpush.msra.mxu0 %v246
  %1004 = vmatpush.msra.mxu0 %v240
  %1005 = vmatpush.msra.mxu0 %v234
  %1006 = vmatmul.f32.gmra.mxu0 %v988
  %v1007 = vpop.f32.mrf.mxu0
  %v1008 = vadd.f32 %v626, %v1007
  %1009 = vdwg.mxu0
  %1010 = vmatpush.msra.mxu0 %v420
  %1011 = vmatpush.msra.mxu0 %v414
  %1012 = vmatpush.msra.mxu0 %v408
  %1013 = vmatpush.msra.mxu0 %v402
  %1014 = vmatpush.msra.mxu0 %v396
  %1015 = vmatpush.msra.mxu0 %v390
  %1016 = vmatpush.msra.mxu0 %v384
  %1017 = vmatpush.msra.mxu0 %v378
  %1018 = vmatpush.msra.mxu0 %v372
  %1019 = vmatpush.msra.mxu0 %v366
  %1020 = vmatpush.msra.mxu0 %v360
  %1021 = vmatpush.msra.mxu0 %v354
  %1022 = vmatpush.msra.mxu0 %v348
  %1023 = vmatpush.msra.mxu0 %v342
  %1024 = vmatpush.msra.mxu0 %v336
  %1025 = vmatpush.msra.mxu0 %v330
  %1026 = vmatmul.f32.gmra.mxu0 %v989
  %v1027 = vpop.f32.mrf.mxu0
  %v1028 = vadd.f32 %v1008, %v1027
  %1029 = vdwg.mxu0
  %1030 = vmatpush.msra.mxu0 %v325
  %1031 = vmatpush.msra.mxu0 %v319
  %1032 = vmatpush.msra.mxu0 %v313
  %1033 = vmatpush.msra.mxu0 %v307
  %1034 = vmatpush.msra.mxu0 %v301
  %1035 = vmatpush.msra.mxu0 %v295
  %1036 = vmatpush.msra.mxu0 %v289
  %1037 = vmatpush.msra.mxu0 %v283
  %1038 = vmatpush.msra.mxu0 %v277
  %1039 = vmatpush.msra.mxu0 %v271
  %1040 = vmatpush.msra.mxu0 %v265
  %1041 = vmatpush.msra.mxu0 %v259
  %1042 = vmatpush.msra.mxu0 %v253
  %1043 = vmatpush.msra.mxu0 %v247
  %1044 = vmatpush.msra.mxu0 %v241
  %1045 = vmatpush.msra.mxu0 %v235
  %1046 = vmatmul.f32.gmra.mxu0 %v988
  %v1047 = vpop.f32.mrf.mxu0
  %v1048 = vadd.f32 %v627, %v1047
  %1049 = vdwg.mxu0
  %1050 = vmatpush.msra.mxu0 %v421
  %1051 = vmatpush.msra.mxu0 %v415
  %1052 = vmatpush.msra.mxu0 %v409
  %1053 = vmatpush.msra.mxu0 %v403
  %1054 = vmatpush.msra.mxu0 %v397
  %1055 = vmatpush.msra.mxu0 %v391
  %1056 = vmatpush.msra.mxu0 %v385
  %1057 = vmatpush.msra.mxu0 %v379
  %1058 = vmatpush.msra.mxu0 %v373
  %1059 = vmatpush.msra.mxu0 %v367
  %1060 = vmatpush.msra.mxu0 %v361
  %1061 = vmatpush.msra.mxu0 %v355
  %1062 = vmatpush.msra.mxu0 %v349
  %1063 = vmatpush.msra.mxu0 %v343
  %1064 = vmatpush.msra.mxu0 %v337
  %1065 = vmatpush.msra.mxu0 %v331
  %1066 = vmatmul.f32.gmra.mxu0 %v989
  %v1067 = vpop.f32.mrf.mxu0
  %v1068 = vadd.f32 %v1048, %v1067
  %1069 = vdwg.mxu0
  %1070 = vmatpush.msra.mxu0 %v326
  %1071 = vmatpush.msra.mxu0 %v320
  %1072 = vmatpush.msra.mxu0 %v314
  %1073 = vmatpush.msra.mxu0 %v308
  %1074 = vmatpush.msra.mxu0 %v302
  %1075 = vmatpush.msra.mxu0 %v296
  %1076 = vmatpush.msra.mxu0 %v290
  %1077 = vmatpush.msra.mxu0 %v284
  %1078 = vmatpush.msra.mxu0 %v278
  %1079 = vmatpush.msra.mxu0 %v272
  %1080 = vmatpush.msra.mxu0 %v266
  %1081 = vmatpush.msra.mxu0 %v260
  %1082 = vmatpush.msra.mxu0 %v254
  %1083 = vmatpush.msra.mxu0 %v248
  %1084 = vmatpush.msra.mxu0 %v242
  %1085 = vmatpush.msra.mxu0 %v236
  %1086 = vmatmul.f32.gmra.mxu0 %v988
  %v1087 = vpop.f32.mrf.mxu0
  %v1088 = vadd.f32 %v628, %v1087
  %1089 = vdwg.mxu0
  %1090 = vmatpush.msra.mxu0 %v422
  %1091 = vmatpush.msra.mxu0 %v416
  %1092 = vmatpush.msra.mxu0 %v410
  %1093 = vmatpush.msra.mxu0 %v404
  %1094 = vmatpush.msra.mxu0 %v398
  %1095 = vmatpush.msra.mxu0 %v392
  %1096 = vmatpush.msra.mxu0 %v386
  %1097 = vmatpush.msra.mxu0 %v380
  %1098 = vmatpush.msra.mxu0 %v374
  %1099 = vmatpush.msra.mxu0 %v368
  %1100 = vmatpush.msra.mxu0 %v362
  %1101 = vmatpush.msra.mxu0 %v356
  %1102 = vmatpush.msra.mxu0 %v350
  %1103 = vmatpush.msra.mxu0 %v344
  %1104 = vmatpush.msra.mxu0 %v338
  %1105 = vmatpush.msra.mxu0 %v332
  %1106 = vmatmul.f32.gmra.mxu0 %v989
  %v1107 = vpop.f32.mrf.mxu0
  %v1108 = vadd.f32 %v1088, %v1107
  %1109 = vdwg.mxu0
  %1110 = vmatpush.msra.mxu0 %v327
  %1111 = vmatpush.msra.mxu0 %v321
  %1112 = vmatpush.msra.mxu0 %v315
  %1113 = vmatpush.msra.mxu0 %v309
  %1114 = vmatpush.msra.mxu0 %v303
  %1115 = vmatpush.msra.mxu0 %v297
  %1116 = vmatpush.msra.mxu0 %v291
  %1117 = vmatpush.msra.mxu0 %v285
  %1118 = vmatpush.msra.mxu0 %v279
  %1119 = vmatpush.msra.mxu0 %v273
  %1120 = vmatpush.msra.mxu0 %v267
  %1121 = vmatpush.msra.mxu0 %v261
  %1122 = vmatpush.msra.mxu0 %v255
  %1123 = vmatpush.msra.mxu0 %v249
  %1124 = vmatpush.msra.mxu0 %v243
  %1125 = vmatpush.msra.mxu0 %v237
  %1126 = vmatmul.f32.gmra.mxu0 %v988
  %v1127 = vpop.f32.mrf.mxu0
  %v1128 = vadd.f32 %v629, %v1127
  %1129 = vdwg.mxu0
  %1130 = vmatpush.msra.mxu0 %v423
  %1131 = vmatpush.msra.mxu0 %v417
  %1132 = vmatpush.msra.mxu0 %v411
  %1133 = vmatpush.msra.mxu0 %v405
  %1134 = vmatpush.msra.mxu0 %v399
  %1135 = vmatpush.msra.mxu0 %v393
  %1136 = vmatpush.msra.mxu0 %v387
  %1137 = vmatpush.msra.mxu0 %v381
  %1138 = vmatpush.msra.mxu0 %v375
  %1139 = vmatpush.msra.mxu0 %v369
  %1140 = vmatpush.msra.mxu0 %v363
  %1141 = vmatpush.msra.mxu0 %v357
  %1142 = vmatpush.msra.mxu0 %v351
  %1143 = vmatpush.msra.mxu0 %v345
  %1144 = vmatpush.msra.mxu0 %v339
  %1145 = vmatpush.msra.mxu0 %v333
  %1146 = vmatmul.f32.gmra.mxu0 %v989
  %v1147 = vpop.f32.mrf.mxu0
  %v1148 = vadd.f32 %v1128, %v1147
  %1149 = vdwg.mxu0
  %1150 = vmatpush.msra.mxu0 %v328
  %1151 = vmatpush.msra.mxu0 %v322
  %1152 = vmatpush.msra.mxu0 %v316
  %1153 = vmatpush.msra.mxu0 %v310
  %1154 = vmatpush.msra.mxu0 %v304
  %1155 = vmatpush.msra.mxu0 %v298
  %1156 = vmatpush.msra.mxu0 %v292
  %1157 = vmatpush.msra.mxu0 %v286
  %1158 = vmatpush.msra.mxu0 %v280
  %1159 = vmatpush.msra.mxu0 %v274
  %1160 = vmatpush.msra.mxu0 %v268
  %1161 = vmatpush.msra.mxu0 %v262
  %1162 = vmatpush.msra.mxu0 %v256
  %1163 = vmatpush.msra.mxu0 %v250
  %1164 = vmatpush.msra.mxu0 %v244
  %1165 = vmatpush.msra.mxu0 %v238
  %1166 = vmatmul.f32.gmra.mxu0 %v988
  %v1167 = vpop.f32.mrf.mxu0
  %v1168 = vadd.f32 %v630, %v1167
  %1169 = vdwg.mxu0
  %1170 = vmatpush.msra.mxu0 %v424
  %1171 = vmatpush.msra.mxu0 %v418
  %1172 = vmatpush.msra.mxu0 %v412
  %1173 = vmatpush.msra.mxu0 %v406
  %1174 = vmatpush.msra.mxu0 %v400
  %1175 = vmatpush.msra.mxu0 %v394
  %1176 = vmatpush.msra.mxu0 %v388
  %1177 = vmatpush.msra.mxu0 %v382
  %1178 = vmatpush.msra.mxu0 %v376
  %1179 = vmatpush.msra.mxu0 %v370
  %1180 = vmatpush.msra.mxu0 %v364
  %1181 = vmatpush.msra.mxu0 %v358
  %1182 = vmatpush.msra.mxu0 %v352
  %1183 = vmatpush.msra.mxu0 %v346
  %1184 = vmatpush.msra.mxu0 %v340
  %1185 = vmatpush.msra.mxu0 %v334
  %1186 = vmatmul.f32.gmra.mxu0 %v989
  %v1187 = vpop.f32.mrf.mxu0
  %v1188 = vadd.f32 %v1168, %v1187
  %1189 = vdwg.mxu0
  %1190 = vmatpush.msra.mxu0 %v329
  %1191 = vmatpush.msra.mxu0 %v323
  %1192 = vmatpush.msra.mxu0 %v317
  %1193 = vmatpush.msra.mxu0 %v311
  %1194 = vmatpush.msra.mxu0 %v305
  %1195 = vmatpush.msra.mxu0 %v299
  %1196 = vmatpush.msra.mxu0 %v293
  %1197 = vmatpush.msra.mxu0 %v287
  %1198 = vmatpush.msra.mxu0 %v281
  %1199 = vmatpush.msra.mxu0 %v275
  %1200 = vmatpush.msra.mxu0 %v269
  %1201 = vmatpush.msra.mxu0 %v263
  %1202 = vmatpush.msra.mxu0 %v257
  %1203 = vmatpush.msra.mxu0 %v251
  %1204 = vmatpush.msra.mxu0 %v245
  %1205 = vmatpush.msra.mxu0 %v239
  %1206 = vmatmul.f32.gmra.mxu0 %v988
  %v1207 = vpop.f32.mrf.mxu0
  %v1208 = vadd.f32 %v631, %v1207
  %1209 = vdwg.mxu0
  %1210 = vmatpush.msra.mxu0 %v425
  %1211 = vmatpush.msra.mxu0 %v419
  %1212 = vmatpush.msra.mxu0 %v413
  %1213 = vmatpush.msra.mxu0 %v407
  %1214 = vmatpush.msra.mxu0 %v401
  %1215 = vmatpush.msra.mxu0 %v395
  %1216 = vmatpush.msra.mxu0 %v389
  %1217 = vmatpush.msra.mxu0 %v383
  %1218 = vmatpush.msra.mxu0 %v377
  %1219 = vmatpush.msra.mxu0 %v371
  %1220 = vmatpush.msra.mxu0 %v365
  %1221 = vmatpush.msra.mxu0 %v359
  %1222 = vmatpush.msra.mxu0 %v353
  %1223 = vmatpush.msra.mxu0 %v347
  %1224 = vmatpush.msra.mxu0 %v341
  %1225 = vmatpush.msra.mxu0 %v335
  %1226 = vmatmul.f32.gmra.mxu0 %v989
  %v1227 = vpop.f32.mrf.mxu0
  %v1228 = vadd.f32 %v1208, %v1227
  %1229 = vdwg.mxu0
  %1230 = vmatpush.msra.mxu0 %v516
  %1231 = vmatpush.msra.mxu0 %v510
  %1232 = vmatpush.msra.mxu0 %v504
  %1233 = vmatpush.msra.mxu0 %v498
  %1234 = vmatpush.msra.mxu0 %v492
  %1235 = vmatpush.msra.mxu0 %v486
  %1236 = vmatpush.msra.mxu0 %v480
  %1237 = vmatpush.msra.mxu0 %v474
  %1238 = vmatpush.msra.mxu0 %v468
  %1239 = vmatpush.msra.mxu0 %v462
  %1240 = vmatpush.msra.mxu0 %v456
  %1241 = vmatpush.msra.mxu0 %v450
  %1242 = vmatpush.msra.mxu0 %v444
  %1243 = vmatpush.msra.mxu0 %v438
  %1244 = vmatpush.msra.mxu0 %v432
  %1245 = vmatpush.msra.mxu0 %v426
  %1246 = vmatmul.f32.gmra.mxu0 %v646
  %v1247 = vpop.f32.mrf.mxu0
  %v1248 = vadd.f32 0.0, %v1247
  %1249 = vdwg.mxu0
  %1250 = vmatpush.msra.mxu0 %v612
  %1251 = vmatpush.msra.mxu0 %v606
  %1252 = vmatpush.msra.mxu0 %v600
  %1253 = vmatpush.msra.mxu0 %v594
  %1254 = vmatpush.msra.mxu0 %v588
  %1255 = vmatpush.msra.mxu0 %v582
  %1256 = vmatpush.msra.mxu0 %v576
  %1257 = vmatpush.msra.mxu0 %v570
  %1258 = vmatpush.msra.mxu0 %v564
  %1259 = vmatpush.msra.mxu0 %v558
  %1260 = vmatpush.msra.mxu0 %v552
  %1261 = vmatpush.msra.mxu0 %v546
  %1262 = vmatpush.msra.mxu0 %v540
  %1263 = vmatpush.msra.mxu0 %v534
  %1264 = vmatpush.msra.mxu0 %v528
  %1265 = vmatpush.msra.mxu0 %v522
  %1266 = vmatmul.f32.gmra.mxu0 %v647
  %v1267 = vpop.f32.mrf.mxu0
  %v1268 = vadd.f32 %v1248, %v1267
  %1269 = vdwg.mxu0
  %1270 = vmatpush.msra.mxu0 %v517
  %1271 = vmatpush.msra.mxu0 %v511
  %1272 = vmatpush.msra.mxu0 %v505
  %1273 = vmatpush.msra.mxu0 %v499
  %1274 = vmatpush.msra.mxu0 %v493
  %1275 = vmatpush.msra.mxu0 %v487
  %1276 = vmatpush.msra.mxu0 %v481
  %1277 = vmatpush.msra.mxu0 %v475
  %1278 = vmatpush.msra.mxu0 %v469
  %1279 = vmatpush.msra.mxu0 %v463
  %1280 = vmatpush.msra.mxu0 %v457
  %1281 = vmatpush.msra.mxu0 %v451
  %1282 = vmatpush.msra.mxu0 %v445
  %1283 = vmatpush.msra.mxu0 %v439
  %1284 = vmatpush.msra.mxu0 %v433
  %1285 = vmatpush.msra.mxu0 %v427
  %1286 = vmatmul.f32.gmra.mxu0 %v646
  %v1287 = vpop.f32.mrf.mxu0
  %v1288 = vadd.f32 0.0, %v1287
  %1289 = vdwg.mxu0
  %1290 = vmatpush.msra.mxu0 %v613
  %1291 = vmatpush.msra.mxu0 %v607
  %1292 = vmatpush.msra.mxu0 %v601
  %1293 = vmatpush.msra.mxu0 %v595
  %1294 = vmatpush.msra.mxu0 %v589
  %1295 = vmatpush.msra.mxu0 %v583
  %1296 = vmatpush.msra.mxu0 %v577
  %1297 = vmatpush.msra.mxu0 %v571
  %1298 = vmatpush.msra.mxu0 %v565
  %1299 = vmatpush.msra.mxu0 %v559
  %1300 = vmatpush.msra.mxu0 %v553
  %1301 = vmatpush.msra.mxu0 %v547
  %1302 = vmatpush.msra.mxu0 %v541
  %1303 = vmatpush.msra.mxu0 %v535
  %1304 = vmatpush.msra.mxu0 %v529
  %1305 = vmatpush.msra.mxu0 %v523
  %1306 = vmatmul.f32.gmra.mxu0 %v647
  %v1307 = vpop.f32.mrf.mxu0
  %v1308 = vadd.f32 %v1288, %v1307
  %1309 = vdwg.mxu0
  %1310 = vmatpush.msra.mxu0 %v518
  %1311 = vmatpush.msra.mxu0 %v512
  %1312 = vmatpush.msra.mxu0 %v506
  %1313 = vmatpush.msra.mxu0 %v500
  %1314 = vmatpush.msra.mxu0 %v494
  %1315 = vmatpush.msra.mxu0 %v488
  %1316 = vmatpush.msra.mxu0 %v482
  %1317 = vmatpush.msra.mxu0 %v476
  %1318 = vmatpush.msra.mxu0 %v470
  %1319 = vmatpush.msra.mxu0 %v464
  %1320 = vmatpush.msra.mxu0 %v458
  %1321 = vmatpush.msra.mxu0 %v452
  %1322 = vmatpush.msra.mxu0 %v446
  %1323 = vmatpush.msra.mxu0 %v440
  %1324 = vmatpush.msra.mxu0 %v434
  %1325 = vmatpush.msra.mxu0 %v428
  %1326 = vmatmul.f32.gmra.mxu0 %v646
  %v1327 = vpop.f32.mrf.mxu0
  %v1328 = vadd.f32 0.0, %v1327
  %1329 = vdwg.mxu0
  %1330 = vmatpush.msra.mxu0 %v614
  %1331 = vmatpush.msra.mxu0 %v608
  %1332 = vmatpush.msra.mxu0 %v602
  %1333 = vmatpush.msra.mxu0 %v596
  %1334 = vmatpush.msra.mxu0 %v590
  %1335 = vmatpush.msra.mxu0 %v584
  %1336 = vmatpush.msra.mxu0 %v578
  %1337 = vmatpush.msra.mxu0 %v572
  %1338 = vmatpush.msra.mxu0 %v566
  %1339 = vmatpush.msra.mxu0 %v560
  %1340 = vmatpush.msra.mxu0 %v554
  %1341 = vmatpush.msra.mxu0 %v548
  %1342 = vmatpush.msra.mxu0 %v542
  %1343 = vmatpush.msra.mxu0 %v536
  %1344 = vmatpush.msra.mxu0 %v530
  %1345 = vmatpush.msra.mxu0 %v524
  %1346 = vmatmul.f32.gmra.mxu0 %v647
  %v1347 = vpop.f32.mrf.mxu0
  %v1348 = vadd.f32 %v1328, %v1347
  %1349 = vdwg.mxu0
  %1350 = vmatpush.msra.mxu0 %v519
  %1351 = vmatpush.msra.mxu0 %v513
  %1352 = vmatpush.msra.mxu0 %v507
  %1353 = vmatpush.msra.mxu0 %v501
  %1354 = vmatpush.msra.mxu0 %v495
  %1355 = vmatpush.msra.mxu0 %v489
  %1356 = vmatpush.msra.mxu0 %v483
  %1357 = vmatpush.msra.mxu0 %v477
  %1358 = vmatpush.msra.mxu0 %v471
  %1359 = vmatpush.msra.mxu0 %v465
  %1360 = vmatpush.msra.mxu0 %v459
  %1361 = vmatpush.msra.mxu0 %v453
  %1362 = vmatpush.msra.mxu0 %v447
  %1363 = vmatpush.msra.mxu0 %v441
  %1364 = vmatpush.msra.mxu0 %v435
  %1365 = vmatpush.msra.mxu0 %v429
  %1366 = vmatmul.f32.gmra.mxu0 %v646
  %v1367 = vpop.f32.mrf.mxu0
  %v1368 = vadd.f32 0.0, %v1367
  %1369 = vdwg.mxu0
  %1370 = vmatpush.msra.mxu0 %v615
  %1371 = vmatpush.msra.mxu0 %v609
  %1372 = vmatpush.msra.mxu0 %v603
  %1373 = vmatpush.msra.mxu0 %v597
  %1374 = vmatpush.msra.mxu0 %v591
  %1375 = vmatpush.msra.mxu0 %v585
  %1376 = vmatpush.msra.mxu0 %v579
  %1377 = vmatpush.msra.mxu0 %v573
  %1378 = vmatpush.msra.mxu0 %v567
  %1379 = vmatpush.msra.mxu0 %v561
  %1380 = vmatpush.msra.mxu0 %v555
  %1381 = vmatpush.msra.mxu0 %v549
  %1382 = vmatpush.msra.mxu0 %v543
  %1383 = vmatpush.msra.mxu0 %v537
  %1384 = vmatpush.msra.mxu0 %v531
  %1385 = vmatpush.msra.mxu0 %v525
  %1386 = vmatmul.f32.gmra.mxu0 %v647
  %v1387 = vpop.f32.mrf.mxu0
  %v1388 = vadd.f32 %v1368, %v1387
  %1389 = vdwg.mxu0
  %1390 = vmatpush.msra.mxu0 %v520
  %1391 = vmatpush.msra.mxu0 %v514
  %1392 = vmatpush.msra.mxu0 %v508
  %1393 = vmatpush.msra.mxu0 %v502
  %1394 = vmatpush.msra.mxu0 %v496
  %1395 = vmatpush.msra.mxu0 %v490
  %1396 = vmatpush.msra.mxu0 %v484
  %1397 = vmatpush.msra.mxu0 %v478
  %1398 = vmatpush.msra.mxu0 %v472
  %1399 = vmatpush.msra.mxu0 %v466
  %1400 = vmatpush.msra.mxu0 %v460
  %1401 = vmatpush.msra.mxu0 %v454
  %1402 = vmatpush.msra.mxu0 %v448
  %1403 = vmatpush.msra.mxu0 %v442
  %1404 = vmatpush.msra.mxu0 %v436
  %1405 = vmatpush.msra.mxu0 %v430
  %1406 = vmatmul.f32.gmra.mxu0 %v646
  %v1407 = vpop.f32.mrf.mxu0
  %v1408 = vadd.f32 0.0, %v1407
  %1409 = vdwg.mxu0
  %1410 = vmatpush.msra.mxu0 %v616
  %1411 = vmatpush.msra.mxu0 %v610
  %1412 = vmatpush.msra.mxu0 %v604
  %1413 = vmatpush.msra.mxu0 %v598
  %1414 = vmatpush.msra.mxu0 %v592
  %1415 = vmatpush.msra.mxu0 %v586
  %1416 = vmatpush.msra.mxu0 %v580
  %1417 = vmatpush.msra.mxu0 %v574
  %1418 = vmatpush.msra.mxu0 %v568
  %1419 = vmatpush.msra.mxu0 %v562
  %1420 = vmatpush.msra.mxu0 %v556
  %1421 = vmatpush.msra.mxu0 %v550
  %1422 = vmatpush.msra.mxu0 %v544
  %1423 = vmatpush.msra.mxu0 %v538
  %1424 = vmatpush.msra.mxu0 %v532
  %1425 = vmatpush.msra.mxu0 %v526
  %1426 = vmatmul.f32.gmra.mxu0 %v647
  %v1427 = vpop.f32.mrf.mxu0
  %v1428 = vadd.f32 %v1408, %v1427
  %1429 = vdwg.mxu0
  %1430 = vmatpush.msra.mxu0 %v521
  %1431 = vmatpush.msra.mxu0 %v515
  %1432 = vmatpush.msra.mxu0 %v509
  %1433 = vmatpush.msra.mxu0 %v503
  %1434 = vmatpush.msra.mxu0 %v497
  %1435 = vmatpush.msra.mxu0 %v491
  %1436 = vmatpush.msra.mxu0 %v485
  %1437 = vmatpush.msra.mxu0 %v479
  %1438 = vmatpush.msra.mxu0 %v473
  %1439 = vmatpush.msra.mxu0 %v467
  %1440 = vmatpush.msra.mxu0 %v461
  %1441 = vmatpush.msra.mxu0 %v455
  %1442 = vmatpush.msra.mxu0 %v449
  %1443 = vmatpush.msra.mxu0 %v443
  %1444 = vmatpush.msra.mxu0 %v437
  %1445 = vmatpush.msra.mxu0 %v431
  %1446 = vmatmul.f32.gmra.mxu0 %v646
  %v1447 = vpop.f32.mrf.mxu0
  %v1448 = vadd.f32 0.0, %v1447
  %1449 = vdwg.mxu0
  %1450 = vmatpush.msra.mxu0 %v617
  %1451 = vmatpush.msra.mxu0 %v611
  %1452 = vmatpush.msra.mxu0 %v605
  %1453 = vmatpush.msra.mxu0 %v599
  %1454 = vmatpush.msra.mxu0 %v593
  %1455 = vmatpush.msra.mxu0 %v587
  %1456 = vmatpush.msra.mxu0 %v581
  %1457 = vmatpush.msra.mxu0 %v575
  %1458 = vmatpush.msra.mxu0 %v569
  %1459 = vmatpush.msra.mxu0 %v563
  %1460 = vmatpush.msra.mxu0 %v557
  %1461 = vmatpush.msra.mxu0 %v551
  %1462 = vmatpush.msra.mxu0 %v545
  %1463 = vmatpush.msra.mxu0 %v539
  %1464 = vmatpush.msra.mxu0 %v533
  %1465 = vmatpush.msra.mxu0 %v527
  %1466 = vmatmul.f32.gmra.mxu0 %v647
  %v1467 = vpop.f32.mrf.mxu0
  %v1468 = vadd.f32 %v1448, %v1467
  %1469 = vdwg.mxu0
  %v1470 = vadd.f32 %v1028, %v1268
  %v1471 = vadd.f32 %v1068, %v1308
  %v1472 = vxor.u32 %v1470, 2147483648
  %v1473 = vxor.u32 %v1471, 2147483648
  %v1474 = vmul.f32 %v1472, 1.442695
  %v1475 = vpow.pop %v1474
  %v1476 = vmul.f32 %v1473, 1.442695
  %v1477 = vpow.pop %v1476
  %v1478 = vadd.f32 %v1475, 1.0
  %v1479 = vadd.f32 %v1477, 1.0
  %v1480 = vrcp.pop %v1478
  %v1481 = vmul.f32 %v1478, %v1480
  %v1482 = vsub.f32 1.0, %v1481
  %v1483 = vmul.f32 %v1480, %v1482
  %v1484 = vadd.f32 %v1480, %v1483
  %vm1485 = vweird.f32 %v1478
  %vm1486 = vweird.f32 %v1480
  %vm1487 = vmor %vm1485, %vm1486
  %v1488 = vsel %vm1487, %v1480, %v1484
  %v1489 = vand.u32 2147483647, %v1478
  %vm1490 = vcmp.eq.f32.partialorder %v1489, 8.507059e+37
  %v1491 = vand.u32 %v1478, 2147483648
  %v1492 = vor.u32 1.1754944e-38, %v1491
  %v1493 = vsel %vm1490, %v1492, %v1488
  %v1494 = vmul.f32 1.0, %v1493
  %v1495 = vrcp.pop %v1479
  %v1496 = vmul.f32 %v1479, %v1495
  %v1497 = vsub.f32 1.0, %v1496
  %v1498 = vmul.f32 %v1495, %v1497
  %v1499 = vadd.f32 %v1495, %v1498
  %vm1500 = vweird.f32 %v1479
  %vm1501 = vweird.f32 %v1495
  %vm1502 = vmor %vm1500, %vm1501
  %v1503 = vsel %vm1502, %v1495, %v1499
  %v1504 = vand.u32 2147483647, %v1479
  %vm1505 = vcmp.eq.f32.partialorder %v1504, 8.507059e+37
  %v1506 = vand.u32 %v1479, 2147483648
  %v1507 = vor.u32 1.1754944e-38, %v1506
  %v1508 = vsel %vm1505, %v1507, %v1503
  %v1509 = vmul.f32 1.0, %v1508
  %v1510 = vadd.f32 %v1108, %v1348
  %v1511 = vadd.f32 %v1148, %v1388
  %v1512 = vxor.u32 %v1510, 2147483648
  %v1513 = vxor.u32 %v1511, 2147483648
  %v1514 = vmul.f32 %v1512, 1.442695
  %v1515 = vpow.pop %v1514
  %v1516 = vmul.f32 %v1513, 1.442695
  %v1517 = vpow.pop %v1516
  %v1518 = vadd.f32 %v1515, 1.0
  %v1519 = vadd.f32 %v1517, 1.0
  %v1520 = vrcp.pop %v1518
  %v1521 = vmul.f32 %v1518, %v1520
  %v1522 = vsub.f32 1.0, %v1521
  %v1523 = vmul.f32 %v1520, %v1522
  %v1524 = vadd.f32 %v1520, %v1523
  %vm1525 = vweird.f32 %v1518
  %vm1526 = vweird.f32 %v1520
  %vm1527 = vmor %vm1525, %vm1526
  %v1528 = vsel %vm1527, %v1520, %v1524
  %v1529 = vand.u32 2147483647, %v1518
  %vm1530 = vcmp.eq.f32.partialorder %v1529, 8.507059e+37
  %v1531 = vand.u32 %v1518, 2147483648
  %v1532 = vor.u32 1.1754944e-38, %v1531
  %v1533 = vsel %vm1530, %v1532, %v1528
  %v1534 = vmul.f32 1.0, %v1533
  %v1535 = vrcp.pop %v1519
  %v1536 = vmul.f32 %v1519, %v1535
  %v1537 = vsub.f32 1.0, %v1536
  %v1538 = vmul.f32 %v1535, %v1537
  %v1539 = vadd.f32 %v1535, %v1538
  %vm1540 = vweird.f32 %v1519
  %vm1541 = vweird.f32 %v1535
  %vm1542 = vmor %vm1540, %vm1541
  %v1543 = vsel %vm1542, %v1535, %v1539
  %v1544 = vand.u32 2147483647, %v1519
  %vm1545 = vcmp.eq.f32.partialorder %v1544, 8.507059e+37
  %v1546 = vand.u32 %v1519, 2147483648
  %v1547 = vor.u32 1.1754944e-38, %v1546
  %v1548 = vsel %vm1545, %v1547, %v1543
  %v1549 = vmul.f32 1.0, %v1548
  %v1550 = vadd.f32 %v1428, %v640
  %v1551 = vadd.f32 %v1468, %v641
  %v1552 = vmul.f32 %v1494, %v1550
  %v1553 = vmul.f32 %v1509, %v1551
  %v1554 = vadd.f32 %v1188, %v1552
  %v1555 = vadd.f32 %v1228, %v1553
  %v1556 = vtanh.pop %v1554
  %v1557 = vtanh.pop %v1555
  %v1558 = vsub.f32 1.0, %v1534
  %v1559 = vsub.f32 1.0, %v1549
  %v1560 = vmul.f32 %v1558, %v1556
  %v1561 = vmul.f32 %v1559, %v1557
  %v1562 = vmul.f32 %v1534, %v646
  %v1563 = vmul.f32 %v1549, %v647
  %v1564 = vadd.f32 %v1560, %v1562
  %v1565 = vadd.f32 %v1561, %v1563
  %s1566 = scalar_lea.vmem %s0, 48
  %v1567 = vld [vmem:[%s1566] sm:$0xff]
  %v1568 = vld [vmem:[%s1566 + $0x8] sm:$0xff]
  %v1569 = vld [vmem:[%s1566 + $0x10] sm:$0xff]
  %v1570 = vld [vmem:[%s1566 + $0x18] sm:$0xff]
  %v1571 = vld [vmem:[%s1566 + $0x20] sm:$0xff]
  %v1572 = vld [vmem:[%s1566 + $0x28] sm:$0xff]
  %1573 = vmatpush.msra.mxu0 %v132
  %1574 = vmatpush.msra.mxu0 %v126
  %1575 = vmatpush.msra.mxu0 %v120
  %1576 = vmatpush.msra.mxu0 %v114
  %1577 = vmatpush.msra.mxu0 %v108
  %1578 = vmatpush.msra.mxu0 %v102
  %1579 = vmatpush.msra.mxu0 %v96
  %1580 = vmatpush.msra.mxu0 %v90
  %1581 = vmatpush.msra.mxu0 %v84
  %1582 = vmatpush.msra.mxu0 %v78
  %1583 = vmatpush.msra.mxu0 %v72
  %1584 = vmatpush.msra.mxu0 %v66
  %1585 = vmatpush.msra.mxu0 %v60
  %1586 = vmatpush.msra.mxu0 %v54
  %1587 = vmatpush.msra.mxu0 %v48
  %1588 = vmatpush.msra.mxu0 %v42
  %1589 = vmatmul.f32.gmra.mxu0 %v988
  %v1590 = vpop.f32.mrf.mxu0
  %v1591 = vadd.f32 0.0, %v1590
  %1592 = vdwg.mxu0
  %1593 = vmatpush.msra.mxu0 %v228
  %1594 = vmatpush.msra.mxu0 %v222
  %1595 = vmatpush.msra.mxu0 %v216
  %1596 = vmatpush.msra.mxu0 %v210
  %1597 = vmatpush.msra.mxu0 %v204
  %1598 = vmatpush.msra.mxu0 %v198
  %1599 = vmatpush.msra.mxu0 %v192
  %1600 = vmatpush.msra.mxu0 %v186
  %1601 = vmatpush.msra.mxu0 %v180
  %1602 = vmatpush.msra.mxu0 %v174
  %1603 = vmatpush.msra.mxu0 %v168
  %1604 = vmatpush.msra.mxu0 %v162
  %1605 = vmatpush.msra.mxu0 %v156
  %1606 = vmatpush.msra.mxu0 %v150
  %1607 = vmatpush.msra.mxu0 %v144
  %1608 = vmatpush.msra.mxu0 %v138
  %1609 = vmatmul.f32.gmra.mxu0 %v989
  %v1610 = vpop.f32.mrf.mxu0
  %v1611 = vadd.f32 %v1591, %v1610
  %1612 = vdwg.mxu0
  %1613 = vmatpush.msra.mxu0 %v133
  %1614 = vmatpush.msra.mxu0 %v127
  %1615 = vmatpush.msra.mxu0 %v121
  %1616 = vmatpush.msra.mxu0 %v115
  %1617 = vmatpush.msra.mxu0 %v109
  %1618 = vmatpush.msra.mxu0 %v103
  %1619 = vmatpush.msra.mxu0 %v97
  %1620 = vmatpush.msra.mxu0 %v91
  %1621 = vmatpush.msra.mxu0 %v85
  %1622 = vmatpush.msra.mxu0 %v79
  %1623 = vmatpush.msra.mxu0 %v73
  %1624 = vmatpush.msra.mxu0 %v67
  %1625 = vmatpush.msra.mxu0 %v61
  %1626 = vmatpush.msra.mxu0 %v55
  %1627 = vmatpush.msra.mxu0 %v49
  %1628 = vmatpush.msra.mxu0 %v43
  %1629 = vmatmul.f32.gmra.mxu0 %v988
  %v1630 = vpop.f32.mrf.mxu0
  %v1631 = vadd.f32 0.0, %v1630
  %1632 = vdwg.mxu0
  %1633 = vmatpush.msra.mxu0 %v229
  %1634 = vmatpush.msra.mxu0 %v223
  %1635 = vmatpush.msra.mxu0 %v217
  %1636 = vmatpush.msra.mxu0 %v211
  %1637 = vmatpush.msra.mxu0 %v205
  %1638 = vmatpush.msra.mxu0 %v199
  %1639 = vmatpush.msra.mxu0 %v193
  %1640 = vmatpush.msra.mxu0 %v187
  %1641 = vmatpush.msra.mxu0 %v181
  %1642 = vmatpush.msra.mxu0 %v175
  %1643 = vmatpush.msra.mxu0 %v169
  %1644 = vmatpush.msra.mxu0 %v163
  %1645 = vmatpush.msra.mxu0 %v157
  %1646 = vmatpush.msra.mxu0 %v151
  %1647 = vmatpush.msra.mxu0 %v145
  %1648 = vmatpush.msra.mxu0 %v139
  %1649 = vmatmul.f32.gmra.mxu0 %v989
  %v1650 = vpop.f32.mrf.mxu0
  %v1651 = vadd.f32 %v1631, %v1650
  %1652 = vdwg.mxu0
  %1653 = vmatpush.msra.mxu0 %v134
  %1654 = vmatpush.msra.mxu0 %v128
  %1655 = vmatpush.msra.mxu0 %v122
  %1656 = vmatpush.msra.mxu0 %v116
  %1657 = vmatpush.msra.mxu0 %v110
  %1658 = vmatpush.msra.mxu0 %v104
  %1659 = vmatpush.msra.mxu0 %v98
  %1660 = vmatpush.msra.mxu0 %v92
  %1661 = vmatpush.msra.mxu0 %v86
  %1662 = vmatpush.msra.mxu0 %v80
  %1663 = vmatpush.msra.mxu0 %v74
  %1664 = vmatpush.msra.mxu0 %v68
  %1665 = vmatpush.msra.mxu0 %v62
  %1666 = vmatpush.msra.mxu0 %v56
  %1667 = vmatpush.msra.mxu0 %v50
  %1668 = vmatpush.msra.mxu0 %v44
  %1669 = vmatmul.f32.gmra.mxu0 %v988
  %v1670 = vpop.f32.mrf.mxu0
  %v1671 = vadd.f32 0.0, %v1670
  %1672 = vdwg.mxu0
  %1673 = vmatpush.msra.mxu0 %v230
  %1674 = vmatpush.msra.mxu0 %v224
  %1675 = vmatpush.msra.mxu0 %v218
  %1676 = vmatpush.msra.mxu0 %v212
  %1677 = vmatpush.msra.mxu0 %v206
  %1678 = vmatpush.msra.mxu0 %v200
  %1679 = vmatpush.msra.mxu0 %v194
  %1680 = vmatpush.msra.mxu0 %v188
  %1681 = vmatpush.msra.mxu0 %v182
  %1682 = vmatpush.msra.mxu0 %v176
  %1683 = vmatpush.msra.mxu0 %v170
  %1684 = vmatpush.msra.mxu0 %v164
  %1685 = vmatpush.msra.mxu0 %v158
  %1686 = vmatpush.msra.mxu0 %v152
  %1687 = vmatpush.msra.mxu0 %v146
  %1688 = vmatpush.msra.mxu0 %v140
  %1689 = vmatmul.f32.gmra.mxu0 %v989
  %v1690 = vpop.f32.mrf.mxu0
  %v1691 = vadd.f32 %v1671, %v1690
  %1692 = vdwg.mxu0
  %1693 = vmatpush.msra.mxu0 %v135
  %1694 = vmatpush.msra.mxu0 %v129
  %1695 = vmatpush.msra.mxu0 %v123
  %1696 = vmatpush.msra.mxu0 %v117
  %1697 = vmatpush.msra.mxu0 %v111
  %1698 = vmatpush.msra.mxu0 %v105
  %1699 = vmatpush.msra.mxu0 %v99
  %1700 = vmatpush.msra.mxu0 %v93
  %1701 = vmatpush.msra.mxu0 %v87
  %1702 = vmatpush.msra.mxu0 %v81
  %1703 = vmatpush.msra.mxu0 %v75
  %1704 = vmatpush.msra.mxu0 %v69
  %1705 = vmatpush.msra.mxu0 %v63
  %1706 = vmatpush.msra.mxu0 %v57
  %1707 = vmatpush.msra.mxu0 %v51
  %1708 = vmatpush.msra.mxu0 %v45
  %1709 = vmatmul.f32.gmra.mxu0 %v988
  %v1710 = vpop.f32.mrf.mxu0
  %v1711 = vadd.f32 0.0, %v1710
  %1712 = vdwg.mxu0
  %1713 = vmatpush.msra.mxu0 %v231
  %1714 = vmatpush.msra.mxu0 %v225
  %1715 = vmatpush.msra.mxu0 %v219
  %1716 = vmatpush.msra.mxu0 %v213
  %1717 = vmatpush.msra.mxu0 %v207
  %1718 = vmatpush.msra.mxu0 %v201
  %1719 = vmatpush.msra.mxu0 %v195
  %1720 = vmatpush.msra.mxu0 %v189
  %1721 = vmatpush.msra.mxu0 %v183
  %1722 = vmatpush.msra.mxu0 %v177
  %1723 = vmatpush.msra.mxu0 %v171
  %1724 = vmatpush.msra.mxu0 %v165
  %1725 = vmatpush.msra.mxu0 %v159
  %1726 = vmatpush.msra.mxu0 %v153
  %1727 = vmatpush.msra.mxu0 %v147
  %1728 = vmatpush.msra.mxu0 %v141
  %1729 = vmatmul.f32.gmra.mxu0 %v989
  %v1730 = vpop.f32.mrf.mxu0
  %v1731 = vadd.f32 %v1711, %v1730
  %1732 = vdwg.mxu0
  %1733 = vmatpush.msra.mxu0 %v136
  %1734 = vmatpush.msra.mxu0 %v130
  %1735 = vmatpush.msra.mxu0 %v124
  %1736 = vmatpush.msra.mxu0 %v118
  %1737 = vmatpush.msra.mxu0 %v112
  %1738 = vmatpush.msra.mxu0 %v106
  %1739 = vmatpush.msra.mxu0 %v100
  %1740 = vmatpush.msra.mxu0 %v94
  %1741 = vmatpush.msra.mxu0 %v88
  %1742 = vmatpush.msra.mxu0 %v82
  %1743 = vmatpush.msra.mxu0 %v76
  %1744 = vmatpush.msra.mxu0 %v70
  %1745 = vmatpush.msra.mxu0 %v64
  %1746 = vmatpush.msra.mxu0 %v58
  %1747 = vmatpush.msra.mxu0 %v52
  %1748 = vmatpush.msra.mxu0 %v46
  %1749 = vmatmul.f32.gmra.mxu0 %v988
  %v1750 = vpop.f32.mrf.mxu0
  %v1751 = vadd.f32 0.0, %v1750
  %1752 = vdwg.mxu0
  %1753 = vmatpush.msra.mxu0 %v232
  %1754 = vmatpush.msra.mxu0 %v226
  %1755 = vmatpush.msra.mxu0 %v220
  %1756 = vmatpush.msra.mxu0 %v214
  %1757 = vmatpush.msra.mxu0 %v208
  %1758 = vmatpush.msra.mxu0 %v202
  %1759 = vmatpush.msra.mxu0 %v196
  %1760 = vmatpush.msra.mxu0 %v190
  %1761 = vmatpush.msra.mxu0 %v184
  %1762 = vmatpush.msra.mxu0 %v178
  %1763 = vmatpush.msra.mxu0 %v172
  %1764 = vmatpush.msra.mxu0 %v166
  %1765 = vmatpush.msra.mxu0 %v160
  %1766 = vmatpush.msra.mxu0 %v154
  %1767 = vmatpush.msra.mxu0 %v148
  %1768 = vmatpush.msra.mxu0 %v142
  %1769 = vmatmul.f32.gmra.mxu0 %v989
  %v1770 = vpop.f32.mrf.mxu0
  %v1771 = vadd.f32 %v1751, %v1770
  %1772 = vdwg.mxu0
  %1773 = vmatpush.msra.mxu0 %v137
  %1774 = vmatpush.msra.mxu0 %v131
  %1775 = vmatpush.msra.mxu0 %v125
  %1776 = vmatpush.msra.mxu0 %v119
  %1777 = vmatpush.msra.mxu0 %v113
  %1778 = vmatpush.msra.mxu0 %v107
  %1779 = vmatpush.msra.mxu0 %v101
  %1780 = vmatpush.msra.mxu0 %v95
  %1781 = vmatpush.msra.mxu0 %v89
  %1782 = vmatpush.msra.mxu0 %v83
  %1783 = vmatpush.msra.mxu0 %v77
  %1784 = vmatpush.msra.mxu0 %v71
  %1785 = vmatpush.msra.mxu0 %v65
  %1786 = vmatpush.msra.mxu0 %v59
  %1787 = vmatpush.msra.mxu0 %v53
  %1788 = vmatpush.msra.mxu0 %v47
  %1789 = vmatmul.f32.gmra.mxu0 %v988
  %v1790 = vpop.f32.mrf.mxu0
  %v1791 = vadd.f32 0.0, %v1790
  %1792 = vdwg.mxu0
  %1793 = vmatpush.msra.mxu0 %v233
  %1794 = vmatpush.msra.mxu0 %v227
  %1795 = vmatpush.msra.mxu0 %v221
  %1796 = vmatpush.msra.mxu0 %v215
  %1797 = vmatpush.msra.mxu0 %v209
  %1798 = vmatpush.msra.mxu0 %v203
  %1799 = vmatpush.msra.mxu0 %v197
  %1800 = vmatpush.msra.mxu0 %v191
  %1801 = vmatpush.msra.mxu0 %v185
  %1802 = vmatpush.msra.mxu0 %v179
  %1803 = vmatpush.msra.mxu0 %v173
  %1804 = vmatpush.msra.mxu0 %v167
  %1805 = vmatpush.msra.mxu0 %v161
  %1806 = vmatpush.msra.mxu0 %v155
  %1807 = vmatpush.msra.mxu0 %v149
  %1808 = vmatpush.msra.mxu0 %v143
  %1809 = vmatmul.f32.gmra.mxu0 %v989
  %v1810 = vpop.f32.mrf.mxu0
  %v1811 = vadd.f32 %v1791, %v1810
  %1812 = vdwg.mxu0
  %v1813 = vadd.f32 %v1567, %v1611
  %v1814 = vadd.f32 %v1568, %v1651
  %v1815 = vxor.u32 %v1813, 2147483648
  %v1816 = vxor.u32 %v1814, 2147483648
  %v1817 = vmul.f32 %v1815, 1.442695
  %v1818 = vpow.pop %v1817
  %v1819 = vmul.f32 %v1816, 1.442695
  %v1820 = vpow.pop %v1819
  %v1821 = vadd.f32 %v1818, 1.0
  %v1822 = vadd.f32 %v1820, 1.0
  %v1823 = vrcp.pop %v1821
  %v1824 = vmul.f32 %v1821, %v1823
  %v1825 = vsub.f32 1.0, %v1824
  %v1826 = vmul.f32 %v1823, %v1825
  %v1827 = vadd.f32 %v1823, %v1826
  %vm1828 = vweird.f32 %v1821
  %vm1829 = vweird.f32 %v1823
  %vm1830 = vmor %vm1828, %vm1829
  %v1831 = vsel %vm1830, %v1823, %v1827
  %v1832 = vand.u32 2147483647, %v1821
  %vm1833 = vcmp.eq.f32.partialorder %v1832, 8.507059e+37
  %v1834 = vand.u32 %v1821, 2147483648
  %v1835 = vor.u32 1.1754944e-38, %v1834
  %v1836 = vsel %vm1833, %v1835, %v1831
  %v1837 = vmul.f32 1.0, %v1836
  %v1838 = vrcp.pop %v1822
  %v1839 = vmul.f32 %v1822, %v1838
  %v1840 = vsub.f32 1.0, %v1839
  %v1841 = vmul.f32 %v1838, %v1840
  %v1842 = vadd.f32 %v1838, %v1841
  %vm1843 = vweird.f32 %v1822
  %vm1844 = vweird.f32 %v1838
  %vm1845 = vmor %vm1843, %vm1844
  %v1846 = vsel %vm1845, %v1838, %v1842
  %v1847 = vand.u32 2147483647, %v1822
  %vm1848 = vcmp.eq.f32.partialorder %v1847, 8.507059e+37
  %v1849 = vand.u32 %v1822, 2147483648
  %v1850 = vor.u32 1.1754944e-38, %v1849
  %v1851 = vsel %vm1848, %v1850, %v1846
  %v1852 = vmul.f32 1.0, %v1851
  %v1853 = vadd.f32 %v1569, %v1691
  %v1854 = vadd.f32 %v1570, %v1731
  %v1855 = vxor.u32 %v1853, 2147483648
  %v1856 = vxor.u32 %v1854, 2147483648
  %v1857 = vmul.f32 %v1855, 1.442695
  %v1858 = vpow.pop %v1857
  %v1859 = vmul.f32 %v1856, 1.442695
  %v1860 = vpow.pop %v1859
  %v1861 = vadd.f32 %v1858, 1.0
  %v1862 = vadd.f32 %v1860, 1.0
  %v1863 = vrcp.pop %v1861
  %v1864 = vmul.f32 %v1861, %v1863
  %v1865 = vsub.f32 1.0, %v1864
  %v1866 = vmul.f32 %v1863, %v1865
  %v1867 = vadd.f32 %v1863, %v1866
  %vm1868 = vweird.f32 %v1861
  %vm1869 = vweird.f32 %v1863
  %vm1870 = vmor %vm1868, %vm1869
  %v1871 = vsel %vm1870, %v1863, %v1867
  %v1872 = vand.u32 2147483647, %v1861
  %vm1873 = vcmp.eq.f32.partialorder %v1872, 8.507059e+37
  %v1874 = vand.u32 %v1861, 2147483648
  %v1875 = vor.u32 1.1754944e-38, %v1874
  %v1876 = vsel %vm1873, %v1875, %v1871
  %v1877 = vmul.f32 1.0, %v1876
  %v1878 = vrcp.pop %v1862
  %v1879 = vmul.f32 %v1862, %v1878
  %v1880 = vsub.f32 1.0, %v1879
  %v1881 = vmul.f32 %v1878, %v1880
  %v1882 = vadd.f32 %v1878, %v1881
  %vm1883 = vweird.f32 %v1862
  %vm1884 = vweird.f32 %v1878
  %vm1885 = vmor %vm1883, %vm1884
  %v1886 = vsel %vm1885, %v1878, %v1882
  %v1887 = vand.u32 2147483647, %v1862
  %vm1888 = vcmp.eq.f32.partialorder %v1887, 8.507059e+37
  %v1889 = vand.u32 %v1862, 2147483648
  %v1890 = vor.u32 1.1754944e-38, %v1889
  %v1891 = vsel %vm1888, %v1890, %v1886
  %v1892 = vmul.f32 1.0, %v1891
  %v1893 = vadd.f32 %v1771, %v620
  %v1894 = vadd.f32 %v1811, %v621
  %v1895 = vmul.f32 %v1837, %v1893
  %v1896 = vmul.f32 %v1852, %v1894
  %v1897 = vadd.f32 %v1571, %v1895
  %v1898 = vadd.f32 %v1572, %v1896
  %v1899 = vtanh.pop %v1897
  %v1900 = vtanh.pop %v1898
  %v1901 = vsub.f32 1.0, %v1877
  %v1902 = vsub.f32 1.0, %v1892
  %v1903 = vmul.f32 %v1901, %v1899
  %v1904 = vmul.f32 %v1902, %v1900
  %v1905 = vmul.f32 %v1877, %v988
  %v1906 = vmul.f32 %v1892, %v989
  %v1907 = vadd.f32 %v1903, %v1905
  %v1908 = vadd.f32 %v1904, %v1906
  %1909 = vmatpush.msra.mxu0 %v324
  %1910 = vmatpush.msra.mxu0 %v318
  %1911 = vmatpush.msra.mxu0 %v312
  %1912 = vmatpush.msra.mxu0 %v306
  %1913 = vmatpush.msra.mxu0 %v300
  %1914 = vmatpush.msra.mxu0 %v294
  %1915 = vmatpush.msra.mxu0 %v288
  %1916 = vmatpush.msra.mxu0 %v282
  %1917 = vmatpush.msra.mxu0 %v276
  %1918 = vmatpush.msra.mxu0 %v270
  %1919 = vmatpush.msra.mxu0 %v264
  %1920 = vmatpush.msra.mxu0 %v258
  %1921 = vmatpush.msra.mxu0 %v252
  %1922 = vmatpush.msra.mxu0 %v246
  %1923 = vmatpush.msra.mxu0 %v240
  %1924 = vmatpush.msra.mxu0 %v234
  %1925 = vmatmul.f32.gmra.mxu0 %v1907
  %v1926 = vpop.f32.mrf.mxu0
  %v1927 = vadd.f32 %v626, %v1926
  %1928 = vdwg.mxu0
  %1929 = vmatpush.msra.mxu0 %v420
  %1930 = vmatpush.msra.mxu0 %v414
  %1931 = vmatpush.msra.mxu0 %v408
  %1932 = vmatpush.msra.mxu0 %v402
  %1933 = vmatpush.msra.mxu0 %v396
  %1934 = vmatpush.msra.mxu0 %v390
  %1935 = vmatpush.msra.mxu0 %v384
  %1936 = vmatpush.msra.mxu0 %v378
  %1937 = vmatpush.msra.mxu0 %v372
  %1938 = vmatpush.msra.mxu0 %v366
  %1939 = vmatpush.msra.mxu0 %v360
  %1940 = vmatpush.msra.mxu0 %v354
  %1941 = vmatpush.msra.mxu0 %v348
  %1942 = vmatpush.msra.mxu0 %v342
  %1943 = vmatpush.msra.mxu0 %v336
  %1944 = vmatpush.msra.mxu0 %v330
  %1945 = vmatmul.f32.gmra.mxu0 %v1908
  %v1946 = vpop.f32.mrf.mxu0
  %v1947 = vadd.f32 %v1927, %v1946
  %1948 = vdwg.mxu0
  %1949 = vmatpush.msra.mxu0 %v325
  %1950 = vmatpush.msra.mxu0 %v319
  %1951 = vmatpush.msra.mxu0 %v313
  %1952 = vmatpush.msra.mxu0 %v307
  %1953 = vmatpush.msra.mxu0 %v301
  %1954 = vmatpush.msra.mxu0 %v295
  %1955 = vmatpush.msra.mxu0 %v289
  %1956 = vmatpush.msra.mxu0 %v283
  %1957 = vmatpush.msra.mxu0 %v277
  %1958 = vmatpush.msra.mxu0 %v271
  %1959 = vmatpush.msra.mxu0 %v265
  %1960 = vmatpush.msra.mxu0 %v259
  %1961 = vmatpush.msra.mxu0 %v253
  %1962 = vmatpush.msra.mxu0 %v247
  %1963 = vmatpush.msra.mxu0 %v241
  %1964 = vmatpush.msra.mxu0 %v235
  %1965 = vmatmul.f32.gmra.mxu0 %v1907
  %v1966 = vpop.f32.mrf.mxu0
  %v1967 = vadd.f32 %v627, %v1966
  %1968 = vdwg.mxu0
  %1969 = vmatpush.msra.mxu0 %v421
  %1970 = vmatpush.msra.mxu0 %v415
  %1971 = vmatpush.msra.mxu0 %v409
  %1972 = vmatpush.msra.mxu0 %v403
  %1973 = vmatpush.msra.mxu0 %v397
  %1974 = vmatpush.msra.mxu0 %v391
  %1975 = vmatpush.msra.mxu0 %v385
  %1976 = vmatpush.msra.mxu0 %v379
  %1977 = vmatpush.msra.mxu0 %v373
  %1978 = vmatpush.msra.mxu0 %v367
  %1979 = vmatpush.msra.mxu0 %v361
  %1980 = vmatpush.msra.mxu0 %v355
  %1981 = vmatpush.msra.mxu0 %v349
  %1982 = vmatpush.msra.mxu0 %v343
  %1983 = vmatpush.msra.mxu0 %v337
  %1984 = vmatpush.msra.mxu0 %v331
  %1985 = vmatmul.f32.gmra.mxu0 %v1908
  %v1986 = vpop.f32.mrf.mxu0
  %v1987 = vadd.f32 %v1967, %v1986
  %1988 = vdwg.mxu0
  %1989 = vmatpush.msra.mxu0 %v326
  %1990 = vmatpush.msra.mxu0 %v320
  %1991 = vmatpush.msra.mxu0 %v314
  %1992 = vmatpush.msra.mxu0 %v308
  %1993 = vmatpush.msra.mxu0 %v302
  %1994 = vmatpush.msra.mxu0 %v296
  %1995 = vmatpush.msra.mxu0 %v290
  %1996 = vmatpush.msra.mxu0 %v284
  %1997 = vmatpush.msra.mxu0 %v278
  %1998 = vmatpush.msra.mxu0 %v272
  %1999 = vmatpush.msra.mxu0 %v266
  %2000 = vmatpush.msra.mxu0 %v260
  %2001 = vmatpush.msra.mxu0 %v254
  %2002 = vmatpush.msra.mxu0 %v248
  %2003 = vmatpush.msra.mxu0 %v242
  %2004 = vmatpush.msra.mxu0 %v236
  %2005 = vmatmul.f32.gmra.mxu0 %v1907
  %v2006 = vpop.f32.mrf.mxu0
  %v2007 = vadd.f32 %v628, %v2006
  %2008 = vdwg.mxu0
  %2009 = vmatpush.msra.mxu0 %v422
  %2010 = vmatpush.msra.mxu0 %v416
  %2011 = vmatpush.msra.mxu0 %v410
  %2012 = vmatpush.msra.mxu0 %v404
  %2013 = vmatpush.msra.mxu0 %v398
  %2014 = vmatpush.msra.mxu0 %v392
  %2015 = vmatpush.msra.mxu0 %v386
  %2016 = vmatpush.msra.mxu0 %v380
  %2017 = vmatpush.msra.mxu0 %v374
  %2018 = vmatpush.msra.mxu0 %v368
  %2019 = vmatpush.msra.mxu0 %v362
  %2020 = vmatpush.msra.mxu0 %v356
  %2021 = vmatpush.msra.mxu0 %v350
  %2022 = vmatpush.msra.mxu0 %v344
  %2023 = vmatpush.msra.mxu0 %v338
  %2024 = vmatpush.msra.mxu0 %v332
  %2025 = vmatmul.f32.gmra.mxu0 %v1908
  %v2026 = vpop.f32.mrf.mxu0
  %v2027 = vadd.f32 %v2007, %v2026
  %2028 = vdwg.mxu0
  %2029 = vmatpush.msra.mxu0 %v327
  %2030 = vmatpush.msra.mxu0 %v321
  %2031 = vmatpush.msra.mxu0 %v315
  %2032 = vmatpush.msra.mxu0 %v309
  %2033 = vmatpush.msra.mxu0 %v303
  %2034 = vmatpush.msra.mxu0 %v297
  %2035 = vmatpush.msra.mxu0 %v291
  %2036 = vmatpush.msra.mxu0 %v285
  %2037 = vmatpush.msra.mxu0 %v279
  %2038 = vmatpush.msra.mxu0 %v273
  %2039 = vmatpush.msra.mxu0 %v267
  %2040 = vmatpush.msra.mxu0 %v261
  %2041 = vmatpush.msra.mxu0 %v255
  %2042 = vmatpush.msra.mxu0 %v249
  %2043 = vmatpush.msra.mxu0 %v243
  %2044 = vmatpush.msra.mxu0 %v237
  %2045 = vmatmul.f32.gmra.mxu0 %v1907
  %v2046 = vpop.f32.mrf.mxu0
  %v2047 = vadd.f32 %v629, %v2046
  %2048 = vdwg.mxu0
  %2049 = vmatpush.msra.mxu0 %v423
  %2050 = vmatpush.msra.mxu0 %v417
  %2051 = vmatpush.msra.mxu0 %v411
  %2052 = vmatpush.msra.mxu0 %v405
  %2053 = vmatpush.msra.mxu0 %v399
  %2054 = vmatpush.msra.mxu0 %v393
  %2055 = vmatpush.msra.mxu0 %v387
  %2056 = vmatpush.msra.mxu0 %v381
  %2057 = vmatpush.msra.mxu0 %v375
  %2058 = vmatpush.msra.mxu0 %v369
  %2059 = vmatpush.msra.mxu0 %v363
  %2060 = vmatpush.msra.mxu0 %v357
  %2061 = vmatpush.msra.mxu0 %v351
  %2062 = vmatpush.msra.mxu0 %v345
  %2063 = vmatpush.msra.mxu0 %v339
  %2064 = vmatpush.msra.mxu0 %v333
  %2065 = vmatmul.f32.gmra.mxu0 %v1908
  %v2066 = vpop.f32.mrf.mxu0
  %v2067 = vadd.f32 %v2047, %v2066
  %2068 = vdwg.mxu0
  %2069 = vmatpush.msra.mxu0 %v328
  %2070 = vmatpush.msra.mxu0 %v322
  %2071 = vmatpush.msra.mxu0 %v316
  %2072 = vmatpush.msra.mxu0 %v310
  %2073 = vmatpush.msra.mxu0 %v304
  %2074 = vmatpush.msra.mxu0 %v298
  %2075 = vmatpush.msra.mxu0 %v292
  %2076 = vmatpush.msra.mxu0 %v286
  %2077 = vmatpush.msra.mxu0 %v280
  %2078 = vmatpush.msra.mxu0 %v274
  %2079 = vmatpush.msra.mxu0 %v268
  %2080 = vmatpush.msra.mxu0 %v262
  %2081 = vmatpush.msra.mxu0 %v256
  %2082 = vmatpush.msra.mxu0 %v250
  %2083 = vmatpush.msra.mxu0 %v244
  %2084 = vmatpush.msra.mxu0 %v238
  %2085 = vmatmul.f32.gmra.mxu0 %v1907
  %v2086 = vpop.f32.mrf.mxu0
  %v2087 = vadd.f32 %v630, %v2086
  %2088 = vdwg.mxu0
  %2089 = vmatpush.msra.mxu0 %v424
  %2090 = vmatpush.msra.mxu0 %v418
  %2091 = vmatpush.msra.mxu0 %v412
  %2092 = vmatpush.msra.mxu0 %v406
  %2093 = vmatpush.msra.mxu0 %v400
  %2094 = vmatpush.msra.mxu0 %v394
  %2095 = vmatpush.msra.mxu0 %v388
  %2096 = vmatpush.msra.mxu0 %v382
  %2097 = vmatpush.msra.mxu0 %v376
  %2098 = vmatpush.msra.mxu0 %v370
  %2099 = vmatpush.msra.mxu0 %v364
  %2100 = vmatpush.msra.mxu0 %v358
  %2101 = vmatpush.msra.mxu0 %v352
  %2102 = vmatpush.msra.mxu0 %v346
  %2103 = vmatpush.msra.mxu0 %v340
  %2104 = vmatpush.msra.mxu0 %v334
  %2105 = vmatmul.f32.gmra.mxu0 %v1908
  %v2106 = vpop.f32.mrf.mxu0
  %v2107 = vadd.f32 %v2087, %v2106
  %2108 = vdwg.mxu0
  %2109 = vmatpush.msra.mxu0 %v329
  %2110 = vmatpush.msra.mxu0 %v323
  %2111 = vmatpush.msra.mxu0 %v317
  %2112 = vmatpush.msra.mxu0 %v311
  %2113 = vmatpush.msra.mxu0 %v305
  %2114 = vmatpush.msra.mxu0 %v299
  %2115 = vmatpush.msra.mxu0 %v293
  %2116 = vmatpush.msra.mxu0 %v287
  %2117 = vmatpush.msra.mxu0 %v281
  %2118 = vmatpush.msra.mxu0 %v275
  %2119 = vmatpush.msra.mxu0 %v269
  %2120 = vmatpush.msra.mxu0 %v263
  %2121 = vmatpush.msra.mxu0 %v257
  %2122 = vmatpush.msra.mxu0 %v251
  %2123 = vmatpush.msra.mxu0 %v245
  %2124 = vmatpush.msra.mxu0 %v239
  %2125 = vmatmul.f32.gmra.mxu0 %v1907
  %v2126 = vpop.f32.mrf.mxu0
  %v2127 = vadd.f32 %v631, %v2126
  %2128 = vdwg.mxu0
  %2129 = vmatpush.msra.mxu0 %v425
  %2130 = vmatpush.msra.mxu0 %v419
  %2131 = vmatpush.msra.mxu0 %v413
  %2132 = vmatpush.msra.mxu0 %v407
  %2133 = vmatpush.msra.mxu0 %v401
  %2134 = vmatpush.msra.mxu0 %v395
  %2135 = vmatpush.msra.mxu0 %v389
  %2136 = vmatpush.msra.mxu0 %v383
  %2137 = vmatpush.msra.mxu0 %v377
  %2138 = vmatpush.msra.mxu0 %v371
  %2139 = vmatpush.msra.mxu0 %v365
  %2140 = vmatpush.msra.mxu0 %v359
  %2141 = vmatpush.msra.mxu0 %v353
  %2142 = vmatpush.msra.mxu0 %v347
  %2143 = vmatpush.msra.mxu0 %v341
  %2144 = vmatpush.msra.mxu0 %v335
  %2145 = vmatmul.f32.gmra.mxu0 %v1908
  %v2146 = vpop.f32.mrf.mxu0
  %v2147 = vadd.f32 %v2127, %v2146
  %2148 = vdwg.mxu0
  %2149 = vmatpush.msra.mxu0 %v516
  %2150 = vmatpush.msra.mxu0 %v510
  %2151 = vmatpush.msra.mxu0 %v504
  %2152 = vmatpush.msra.mxu0 %v498
  %2153 = vmatpush.msra.mxu0 %v492
  %2154 = vmatpush.msra.mxu0 %v486
  %2155 = vmatpush.msra.mxu0 %v480
  %2156 = vmatpush.msra.mxu0 %v474
  %2157 = vmatpush.msra.mxu0 %v468
  %2158 = vmatpush.msra.mxu0 %v462
  %2159 = vmatpush.msra.mxu0 %v456
  %2160 = vmatpush.msra.mxu0 %v450
  %2161 = vmatpush.msra.mxu0 %v444
  %2162 = vmatpush.msra.mxu0 %v438
  %2163 = vmatpush.msra.mxu0 %v432
  %2164 = vmatpush.msra.mxu0 %v426
  %2165 = vmatmul.f32.gmra.mxu0 %v1564
  %v2166 = vpop.f32.mrf.mxu0
  %v2167 = vadd.f32 0.0, %v2166
  %2168 = vdwg.mxu0
  %2169 = vmatpush.msra.mxu0 %v612
  %2170 = vmatpush.msra.mxu0 %v606
  %2171 = vmatpush.msra.mxu0 %v600
  %2172 = vmatpush.msra.mxu0 %v594
  %2173 = vmatpush.msra.mxu0 %v588
  %2174 = vmatpush.msra.mxu0 %v582
  %2175 = vmatpush.msra.mxu0 %v576
  %2176 = vmatpush.msra.mxu0 %v570
  %2177 = vmatpush.msra.mxu0 %v564
  %2178 = vmatpush.msra.mxu0 %v558
  %2179 = vmatpush.msra.mxu0 %v552
  %2180 = vmatpush.msra.mxu0 %v546
  %2181 = vmatpush.msra.mxu0 %v540
  %2182 = vmatpush.msra.mxu0 %v534
  %2183 = vmatpush.msra.mxu0 %v528
  %2184 = vmatpush.msra.mxu0 %v522
  %2185 = vmatmul.f32.gmra.mxu0 %v1565
  %v2186 = vpop.f32.mrf.mxu0
  %v2187 = vadd.f32 %v2167, %v2186
  %2188 = vdwg.mxu0
  %2189 = vmatpush.msra.mxu0 %v517
  %2190 = vmatpush.msra.mxu0 %v511
  %2191 = vmatpush.msra.mxu0 %v505
  %2192 = vmatpush.msra.mxu0 %v499
  %2193 = vmatpush.msra.mxu0 %v493
  %2194 = vmatpush.msra.mxu0 %v487
  %2195 = vmatpush.msra.mxu0 %v481
  %2196 = vmatpush.msra.mxu0 %v475
  %2197 = vmatpush.msra.mxu0 %v469
  %2198 = vmatpush.msra.mxu0 %v463
  %2199 = vmatpush.msra.mxu0 %v457
  %2200 = vmatpush.msra.mxu0 %v451
  %2201 = vmatpush.msra.mxu0 %v445
  %2202 = vmatpush.msra.mxu0 %v439
  %2203 = vmatpush.msra.mxu0 %v433
  %2204 = vmatpush.msra.mxu0 %v427
  %2205 = vmatmul.f32.gmra.mxu0 %v1564
  %v2206 = vpop.f32.mrf.mxu0
  %v2207 = vadd.f32 0.0, %v2206
  %2208 = vdwg.mxu0
  %2209 = vmatpush.msra.mxu0 %v613
  %2210 = vmatpush.msra.mxu0 %v607
  %2211 = vmatpush.msra.mxu0 %v601
  %2212 = vmatpush.msra.mxu0 %v595
  %2213 = vmatpush.msra.mxu0 %v589
  %2214 = vmatpush.msra.mxu0 %v583
  %2215 = vmatpush.msra.mxu0 %v577
  %2216 = vmatpush.msra.mxu0 %v571
  %2217 = vmatpush.msra.mxu0 %v565
  %2218 = vmatpush.msra.mxu0 %v559
  %2219 = vmatpush.msra.mxu0 %v553
  %2220 = vmatpush.msra.mxu0 %v547
  %2221 = vmatpush.msra.mxu0 %v541
  %2222 = vmatpush.msra.mxu0 %v535
  %2223 = vmatpush.msra.mxu0 %v529
  %2224 = vmatpush.msra.mxu0 %v523
  %2225 = vmatmul.f32.gmra.mxu0 %v1565
  %v2226 = vpop.f32.mrf.mxu0
  %v2227 = vadd.f32 %v2207, %v2226
  %2228 = vdwg.mxu0
  %2229 = vmatpush.msra.mxu0 %v518
  %2230 = vmatpush.msra.mxu0 %v512
  %2231 = vmatpush.msra.mxu0 %v506
  %2232 = vmatpush.msra.mxu0 %v500
  %2233 = vmatpush.msra.mxu0 %v494
  %2234 = vmatpush.msra.mxu0 %v488
  %2235 = vmatpush.msra.mxu0 %v482
  %2236 = vmatpush.msra.mxu0 %v476
  %2237 = vmatpush.msra.mxu0 %v470
  %2238 = vmatpush.msra.mxu0 %v464
  %2239 = vmatpush.msra.mxu0 %v458
  %2240 = vmatpush.msra.mxu0 %v452
  %2241 = vmatpush.msra.mxu0 %v446
  %2242 = vmatpush.msra.mxu0 %v440
  %2243 = vmatpush.msra.mxu0 %v434
  %2244 = vmatpush.msra.mxu0 %v428
  %2245 = vmatmul.f32.gmra.mxu0 %v1564
  %v2246 = vpop.f32.mrf.mxu0
  %v2247 = vadd.f32 0.0, %v2246
  %2248 = vdwg.mxu0
  %2249 = vmatpush.msra.mxu0 %v614
  %2250 = vmatpush.msra.mxu0 %v608
  %2251 = vmatpush.msra.mxu0 %v602
  %2252 = vmatpush.msra.mxu0 %v596
  %2253 = vmatpush.msra.mxu0 %v590
  %2254 = vmatpush.msra.mxu0 %v584
  %2255 = vmatpush.msra.mxu0 %v578
  %2256 = vmatpush.msra.mxu0 %v572
  %2257 = vmatpush.msra.mxu0 %v566
  %2258 = vmatpush.msra.mxu0 %v560
  %2259 = vmatpush.msra.mxu0 %v554
  %2260 = vmatpush.msra.mxu0 %v548
  %2261 = vmatpush.msra.mxu0 %v542
  %2262 = vmatpush.msra.mxu0 %v536
  %2263 = vmatpush.msra.mxu0 %v530
  %2264 = vmatpush.msra.mxu0 %v524
  %2265 = vmatmul.f32.gmra.mxu0 %v1565
  %v2266 = vpop.f32.mrf.mxu0
  %v2267 = vadd.f32 %v2247, %v2266
  %2268 = vdwg.mxu0
  %2269 = vmatpush.msra.mxu0 %v519
  %2270 = vmatpush.msra.mxu0 %v513
  %2271 = vmatpush.msra.mxu0 %v507
  %2272 = vmatpush.msra.mxu0 %v501
  %2273 = vmatpush.msra.mxu0 %v495
  %2274 = vmatpush.msra.mxu0 %v489
  %2275 = vmatpush.msra.mxu0 %v483
  %2276 = vmatpush.msra.mxu0 %v477
  %2277 = vmatpush.msra.mxu0 %v471
  %2278 = vmatpush.msra.mxu0 %v465
  %2279 = vmatpush.msra.mxu0 %v459
  %2280 = vmatpush.msra.mxu0 %v453
  %2281 = vmatpush.msra.mxu0 %v447
  %2282 = vmatpush.msra.mxu0 %v441
  %2283 = vmatpush.msra.mxu0 %v435
  %2284 = vmatpush.msra.mxu0 %v429
  %2285 = vmatmul.f32.gmra.mxu0 %v1564
  %v2286 = vpop.f32.mrf.mxu0
  %v2287 = vadd.f32 0.0, %v2286
  %2288 = vdwg.mxu0
  %2289 = vmatpush.msra.mxu0 %v615
  %2290 = vmatpush.msra.mxu0 %v609
  %2291 = vmatpush.msra.mxu0 %v603
  %2292 = vmatpush.msra.mxu0 %v597
  %2293 = vmatpush.msra.mxu0 %v591
  %2294 = vmatpush.msra.mxu0 %v585
  %2295 = vmatpush.msra.mxu0 %v579
  %2296 = vmatpush.msra.mxu0 %v573
  %2297 = vmatpush.msra.mxu0 %v567
  %2298 = vmatpush.msra.mxu0 %v561
  %2299 = vmatpush.msra.mxu0 %v555
  %2300 = vmatpush.msra.mxu0 %v549
  %2301 = vmatpush.msra.mxu0 %v543
  %2302 = vmatpush.msra.mxu0 %v537
  %2303 = vmatpush.msra.mxu0 %v531
  %2304 = vmatpush.msra.mxu0 %v525
  %2305 = vmatmul.f32.gmra.mxu0 %v1565
  %v2306 = vpop.f32.mrf.mxu0
  %v2307 = vadd.f32 %v2287, %v2306
  %2308 = vdwg.mxu0
  %2309 = vmatpush.msra.mxu0 %v520
  %2310 = vmatpush.msra.mxu0 %v514
  %2311 = vmatpush.msra.mxu0 %v508
  %2312 = vmatpush.msra.mxu0 %v502
  %2313 = vmatpush.msra.mxu0 %v496
  %2314 = vmatpush.msra.mxu0 %v490
  %2315 = vmatpush.msra.mxu0 %v484
  %2316 = vmatpush.msra.mxu0 %v478
  %2317 = vmatpush.msra.mxu0 %v472
  %2318 = vmatpush.msra.mxu0 %v466
  %2319 = vmatpush.msra.mxu0 %v460
  %2320 = vmatpush.msra.mxu0 %v454
  %2321 = vmatpush.msra.mxu0 %v448
  %2322 = vmatpush.msra.mxu0 %v442
  %2323 = vmatpush.msra.mxu0 %v436
  %2324 = vmatpush.msra.mxu0 %v430
  %2325 = vmatmul.f32.gmra.mxu0 %v1564
  %v2326 = vpop.f32.mrf.mxu0
  %v2327 = vadd.f32 0.0, %v2326
  %2328 = vdwg.mxu0
  %2329 = vmatpush.msra.mxu0 %v616
  %2330 = vmatpush.msra.mxu0 %v610
  %2331 = vmatpush.msra.mxu0 %v604
  %2332 = vmatpush.msra.mxu0 %v598
  %2333 = vmatpush.msra.mxu0 %v592
  %2334 = vmatpush.msra.mxu0 %v586
  %2335 = vmatpush.msra.mxu0 %v580
  %2336 = vmatpush.msra.mxu0 %v574
  %2337 = vmatpush.msra.mxu0 %v568
  %2338 = vmatpush.msra.mxu0 %v562
  %2339 = vmatpush.msra.mxu0 %v556
  %2340 = vmatpush.msra.mxu0 %v550
  %2341 = vmatpush.msra.mxu0 %v544
  %2342 = vmatpush.msra.mxu0 %v538
  %2343 = vmatpush.msra.mxu0 %v532
  %2344 = vmatpush.msra.mxu0 %v526
  %2345 = vmatmul.f32.gmra.mxu0 %v1565
  %v2346 = vpop.f32.mrf.mxu0
  %v2347 = vadd.f32 %v2327, %v2346
  %2348 = vdwg.mxu0
  %2349 = vmatpush.msra.mxu0 %v521
  %2350 = vmatpush.msra.mxu0 %v515
  %2351 = vmatpush.msra.mxu0 %v509
  %2352 = vmatpush.msra.mxu0 %v503
  %2353 = vmatpush.msra.mxu0 %v497
  %2354 = vmatpush.msra.mxu0 %v491
  %2355 = vmatpush.msra.mxu0 %v485
  %2356 = vmatpush.msra.mxu0 %v479
  %2357 = vmatpush.msra.mxu0 %v473
  %2358 = vmatpush.msra.mxu0 %v467
  %2359 = vmatpush.msra.mxu0 %v461
  %2360 = vmatpush.msra.mxu0 %v455
  %2361 = vmatpush.msra.mxu0 %v449
  %2362 = vmatpush.msra.mxu0 %v443
  %2363 = vmatpush.msra.mxu0 %v437
  %2364 = vmatpush.msra.mxu0 %v431
  %2365 = vmatmul.f32.gmra.mxu0 %v1564
  %v2366 = vpop.f32.mrf.mxu0
  %v2367 = vadd.f32 0.0, %v2366
  %2368 = vdwg.mxu0
  %2369 = vmatpush.msra.mxu0 %v617
  %2370 = vmatpush.msra.mxu0 %v611
  %2371 = vmatpush.msra.mxu0 %v605
  %2372 = vmatpush.msra.mxu0 %v599
  %2373 = vmatpush.msra.mxu0 %v593
  %2374 = vmatpush.msra.mxu0 %v587
  %2375 = vmatpush.msra.mxu0 %v581
  %2376 = vmatpush.msra.mxu0 %v575
  %2377 = vmatpush.msra.mxu0 %v569
  %2378 = vmatpush.msra.mxu0 %v563
  %2379 = vmatpush.msra.mxu0 %v557
  %2380 = vmatpush.msra.mxu0 %v551
  %2381 = vmatpush.msra.mxu0 %v545
  %2382 = vmatpush.msra.mxu0 %v539
  %2383 = vmatpush.msra.mxu0 %v533
  %2384 = vmatpush.msra.mxu0 %v527
  %2385 = vmatmul.f32.gmra.mxu0 %v1565
  %v2386 = vpop.f32.mrf.mxu0
  %v2387 = vadd.f32 %v2367, %v2386
  %2388 = vdwg.mxu0
  %v2389 = vadd.f32 %v1947, %v2187
  %v2390 = vadd.f32 %v1987, %v2227
  %v2391 = vxor.u32 %v2389, 2147483648
  %v2392 = vxor.u32 %v2390, 2147483648
  %v2393 = vmul.f32 %v2391, 1.442695
  %v2394 = vpow.pop %v2393
  %v2395 = vmul.f32 %v2392, 1.442695
  %v2396 = vpow.pop %v2395
  %v2397 = vadd.f32 %v2394, 1.0
  %v2398 = vadd.f32 %v2396, 1.0
  %v2399 = vrcp.pop %v2397
  %v2400 = vmul.f32 %v2397, %v2399
  %v2401 = vsub.f32 1.0, %v2400
  %v2402 = vmul.f32 %v2399, %v2401
  %v2403 = vadd.f32 %v2399, %v2402
  %vm2404 = vweird.f32 %v2397
  %vm2405 = vweird.f32 %v2399
  %vm2406 = vmor %vm2404, %vm2405
  %v2407 = vsel %vm2406, %v2399, %v2403
  %v2408 = vand.u32 2147483647, %v2397
  %vm2409 = vcmp.eq.f32.partialorder %v2408, 8.507059e+37
  %v2410 = vand.u32 %v2397, 2147483648
  %v2411 = vor.u32 1.1754944e-38, %v2410
  %v2412 = vsel %vm2409, %v2411, %v2407
  %v2413 = vmul.f32 1.0, %v2412
  %v2414 = vrcp.pop %v2398
  %v2415 = vmul.f32 %v2398, %v2414
  %v2416 = vsub.f32 1.0, %v2415
  %v2417 = vmul.f32 %v2414, %v2416
  %v2418 = vadd.f32 %v2414, %v2417
  %vm2419 = vweird.f32 %v2398
  %vm2420 = vweird.f32 %v2414
  %vm2421 = vmor %vm2419, %vm2420
  %v2422 = vsel %vm2421, %v2414, %v2418
  %v2423 = vand.u32 2147483647, %v2398
  %vm2424 = vcmp.eq.f32.partialorder %v2423, 8.507059e+37
  %v2425 = vand.u32 %v2398, 2147483648
  %v2426 = vor.u32 1.1754944e-38, %v2425
  %v2427 = vsel %vm2424, %v2426, %v2422
  %v2428 = vmul.f32 1.0, %v2427
  %v2429 = vadd.f32 %v2027, %v2267
  %v2430 = vadd.f32 %v2067, %v2307
  %v2431 = vxor.u32 %v2429, 2147483648
  %v2432 = vxor.u32 %v2430, 2147483648
  %v2433 = vmul.f32 %v2431, 1.442695
  %v2434 = vpow.pop %v2433
  %v2435 = vmul.f32 %v2432, 1.442695
  %v2436 = vpow.pop %v2435
  %v2437 = vadd.f32 %v2434, 1.0
  %v2438 = vadd.f32 %v2436, 1.0
  %v2439 = vrcp.pop %v2437
  %v2440 = vmul.f32 %v2437, %v2439
  %v2441 = vsub.f32 1.0, %v2440
  %v2442 = vmul.f32 %v2439, %v2441
  %v2443 = vadd.f32 %v2439, %v2442
  %vm2444 = vweird.f32 %v2437
  %vm2445 = vweird.f32 %v2439
  %vm2446 = vmor %vm2444, %vm2445
  %v2447 = vsel %vm2446, %v2439, %v2443
  %v2448 = vand.u32 2147483647, %v2437
  %vm2449 = vcmp.eq.f32.partialorder %v2448, 8.507059e+37
  %v2450 = vand.u32 %v2437, 2147483648
  %v2451 = vor.u32 1.1754944e-38, %v2450
  %v2452 = vsel %vm2449, %v2451, %v2447
  %v2453 = vmul.f32 1.0, %v2452
  %v2454 = vrcp.pop %v2438
  %v2455 = vmul.f32 %v2438, %v2454
  %v2456 = vsub.f32 1.0, %v2455
  %v2457 = vmul.f32 %v2454, %v2456
  %v2458 = vadd.f32 %v2454, %v2457
  %vm2459 = vweird.f32 %v2438
  %vm2460 = vweird.f32 %v2454
  %vm2461 = vmor %vm2459, %vm2460
  %v2462 = vsel %vm2461, %v2454, %v2458
  %v2463 = vand.u32 2147483647, %v2438
  %vm2464 = vcmp.eq.f32.partialorder %v2463, 8.507059e+37
  %v2465 = vand.u32 %v2438, 2147483648
  %v2466 = vor.u32 1.1754944e-38, %v2465
  %v2467 = vsel %vm2464, %v2466, %v2462
  %v2468 = vmul.f32 1.0, %v2467
  %v2469 = vadd.f32 %v2347, %v640
  %v2470 = vadd.f32 %v2387, %v641
  %v2471 = vmul.f32 %v2413, %v2469
  %v2472 = vmul.f32 %v2428, %v2470
  %v2473 = vadd.f32 %v2107, %v2471
  %v2474 = vadd.f32 %v2147, %v2472
  %v2475 = vtanh.pop %v2473
  %v2476 = vtanh.pop %v2474
  %v2477 = vsub.f32 1.0, %v2453
  %v2478 = vsub.f32 1.0, %v2468
  %v2479 = vmul.f32 %v2477, %v2475
  %v2480 = vmul.f32 %v2478, %v2476
  %v2481 = vmul.f32 %v2453, %v1564
  %v2482 = vmul.f32 %v2468, %v1565
  %v2483 = vadd.f32 %v2479, %v2481
  %v2484 = vadd.f32 %v2480, %v2482
  %s2485 = scalar_lea.vmem %s0, 96
  %v2486 = vld [vmem:[%s2485] sm:$0xff]
  %v2487 = vld [vmem:[%s2485 + $0x8] sm:$0xff]
  %v2488 = vld [vmem:[%s2485 + $0x10] sm:$0xff]
  %v2489 = vld [vmem:[%s2485 + $0x18] sm:$0xff]
  %v2490 = vld [vmem:[%s2485 + $0x20] sm:$0xff]
  %v2491 = vld [vmem:[%s2485 + $0x28] sm:$0xff]
  %2492 = vmatpush.msra.mxu0 %v132
  %2493 = vmatpush.msra.mxu0 %v126
  %2494 = vmatpush.msra.mxu0 %v120
  %2495 = vmatpush.msra.mxu0 %v114
  %2496 = vmatpush.msra.mxu0 %v108
  %2497 = vmatpush.msra.mxu0 %v102
  %2498 = vmatpush.msra.mxu0 %v96
  %2499 = vmatpush.msra.mxu0 %v90
  %2500 = vmatpush.msra.mxu0 %v84
  %2501 = vmatpush.msra.mxu0 %v78
  %2502 = vmatpush.msra.mxu0 %v72
  %2503 = vmatpush.msra.mxu0 %v66
  %2504 = vmatpush.msra.mxu0 %v60
  %2505 = vmatpush.msra.mxu0 %v54
  %2506 = vmatpush.msra.mxu0 %v48
  %2507 = vmatpush.msra.mxu0 %v42
  %2508 = vmatmul.f32.gmra.mxu0 %v1907
  %v2509 = vpop.f32.mrf.mxu0
  %v2510 = vadd.f32 0.0, %v2509
  %2511 = vdwg.mxu0
  %2512 = vmatpush.msra.mxu0 %v228
  %2513 = vmatpush.msra.mxu0 %v222
  %2514 = vmatpush.msra.mxu0 %v216
  %2515 = vmatpush.msra.mxu0 %v210
  %2516 = vmatpush.msra.mxu0 %v204
  %2517 = vmatpush.msra.mxu0 %v198
  %2518 = vmatpush.msra.mxu0 %v192
  %2519 = vmatpush.msra.mxu0 %v186
  %2520 = vmatpush.msra.mxu0 %v180
  %2521 = vmatpush.msra.mxu0 %v174
  %2522 = vmatpush.msra.mxu0 %v168
  %2523 = vmatpush.msra.mxu0 %v162
  %2524 = vmatpush.msra.mxu0 %v156
  %2525 = vmatpush.msra.mxu0 %v150
  %2526 = vmatpush.msra.mxu0 %v144
  %2527 = vmatpush.msra.mxu0 %v138
  %2528 = vmatmul.f32.gmra.mxu0 %v1908
  %v2529 = vpop.f32.mrf.mxu0
  %v2530 = vadd.f32 %v2510, %v2529
  %2531 = vdwg.mxu0
  %2532 = vmatpush.msra.mxu0 %v133
  %2533 = vmatpush.msra.mxu0 %v127
  %2534 = vmatpush.msra.mxu0 %v121
  %2535 = vmatpush.msra.mxu0 %v115
  %2536 = vmatpush.msra.mxu0 %v109
  %2537 = vmatpush.msra.mxu0 %v103
  %2538 = vmatpush.msra.mxu0 %v97
  %2539 = vmatpush.msra.mxu0 %v91
  %2540 = vmatpush.msra.mxu0 %v85
  %2541 = vmatpush.msra.mxu0 %v79
  %2542 = vmatpush.msra.mxu0 %v73
  %2543 = vmatpush.msra.mxu0 %v67
  %2544 = vmatpush.msra.mxu0 %v61
  %2545 = vmatpush.msra.mxu0 %v55
  %2546 = vmatpush.msra.mxu0 %v49
  %2547 = vmatpush.msra.mxu0 %v43
  %2548 = vmatmul.f32.gmra.mxu0 %v1907
  %v2549 = vpop.f32.mrf.mxu0
  %v2550 = vadd.f32 0.0, %v2549
  %2551 = vdwg.mxu0
  %2552 = vmatpush.msra.mxu0 %v229
  %2553 = vmatpush.msra.mxu0 %v223
  %2554 = vmatpush.msra.mxu0 %v217
  %2555 = vmatpush.msra.mxu0 %v211
  %2556 = vmatpush.msra.mxu0 %v205
  %2557 = vmatpush.msra.mxu0 %v199
  %2558 = vmatpush.msra.mxu0 %v193
  %2559 = vmatpush.msra.mxu0 %v187
  %2560 = vmatpush.msra.mxu0 %v181
  %2561 = vmatpush.msra.mxu0 %v175
  %2562 = vmatpush.msra.mxu0 %v169
  %2563 = vmatpush.msra.mxu0 %v163
  %2564 = vmatpush.msra.mxu0 %v157
  %2565 = vmatpush.msra.mxu0 %v151
  %2566 = vmatpush.msra.mxu0 %v145
  %2567 = vmatpush.msra.mxu0 %v139
  %2568 = vmatmul.f32.gmra.mxu0 %v1908
  %v2569 = vpop.f32.mrf.mxu0
  %v2570 = vadd.f32 %v2550, %v2569
  %2571 = vdwg.mxu0
  %2572 = vmatpush.msra.mxu0 %v134
  %2573 = vmatpush.msra.mxu0 %v128
  %2574 = vmatpush.msra.mxu0 %v122
  %2575 = vmatpush.msra.mxu0 %v116
  %2576 = vmatpush.msra.mxu0 %v110
  %2577 = vmatpush.msra.mxu0 %v104
  %2578 = vmatpush.msra.mxu0 %v98
  %2579 = vmatpush.msra.mxu0 %v92
  %2580 = vmatpush.msra.mxu0 %v86
  %2581 = vmatpush.msra.mxu0 %v80
  %2582 = vmatpush.msra.mxu0 %v74
  %2583 = vmatpush.msra.mxu0 %v68
  %2584 = vmatpush.msra.mxu0 %v62
  %2585 = vmatpush.msra.mxu0 %v56
  %2586 = vmatpush.msra.mxu0 %v50
  %2587 = vmatpush.msra.mxu0 %v44
  %2588 = vmatmul.f32.gmra.mxu0 %v1907
  %v2589 = vpop.f32.mrf.mxu0
  %v2590 = vadd.f32 0.0, %v2589
  %2591 = vdwg.mxu0
  %2592 = vmatpush.msra.mxu0 %v230
  %2593 = vmatpush.msra.mxu0 %v224
  %2594 = vmatpush.msra.mxu0 %v218
  %2595 = vmatpush.msra.mxu0 %v212
  %2596 = vmatpush.msra.mxu0 %v206
  %2597 = vmatpush.msra.mxu0 %v200
  %2598 = vmatpush.msra.mxu0 %v194
  %2599 = vmatpush.msra.mxu0 %v188
  %2600 = vmatpush.msra.mxu0 %v182
  %2601 = vmatpush.msra.mxu0 %v176
  %2602 = vmatpush.msra.mxu0 %v170
  %2603 = vmatpush.msra.mxu0 %v164
  %2604 = vmatpush.msra.mxu0 %v158
  %2605 = vmatpush.msra.mxu0 %v152
  %2606 = vmatpush.msra.mxu0 %v146
  %2607 = vmatpush.msra.mxu0 %v140
  %2608 = vmatmul.f32.gmra.mxu0 %v1908
  %v2609 = vpop.f32.mrf.mxu0
  %v2610 = vadd.f32 %v2590, %v2609
  %2611 = vdwg.mxu0
  %2612 = vmatpush.msra.mxu0 %v135
  %2613 = vmatpush.msra.mxu0 %v129
  %2614 = vmatpush.msra.mxu0 %v123
  %2615 = vmatpush.msra.mxu0 %v117
  %2616 = vmatpush.msra.mxu0 %v111
  %2617 = vmatpush.msra.mxu0 %v105
  %2618 = vmatpush.msra.mxu0 %v99
  %2619 = vmatpush.msra.mxu0 %v93
  %2620 = vmatpush.msra.mxu0 %v87
  %2621 = vmatpush.msra.mxu0 %v81
  %2622 = vmatpush.msra.mxu0 %v75
  %2623 = vmatpush.msra.mxu0 %v69
  %2624 = vmatpush.msra.mxu0 %v63
  %2625 = vmatpush.msra.mxu0 %v57
  %2626 = vmatpush.msra.mxu0 %v51
  %2627 = vmatpush.msra.mxu0 %v45
  %2628 = vmatmul.f32.gmra.mxu0 %v1907
  %v2629 = vpop.f32.mrf.mxu0
  %v2630 = vadd.f32 0.0, %v2629
  %2631 = vdwg.mxu0
  %2632 = vmatpush.msra.mxu0 %v231
  %2633 = vmatpush.msra.mxu0 %v225
  %2634 = vmatpush.msra.mxu0 %v219
  %2635 = vmatpush.msra.mxu0 %v213
  %2636 = vmatpush.msra.mxu0 %v207
  %2637 = vmatpush.msra.mxu0 %v201
  %2638 = vmatpush.msra.mxu0 %v195
  %2639 = vmatpush.msra.mxu0 %v189
  %2640 = vmatpush.msra.mxu0 %v183
  %2641 = vmatpush.msra.mxu0 %v177
  %2642 = vmatpush.msra.mxu0 %v171
  %2643 = vmatpush.msra.mxu0 %v165
  %2644 = vmatpush.msra.mxu0 %v159
  %2645 = vmatpush.msra.mxu0 %v153
  %2646 = vmatpush.msra.mxu0 %v147
  %2647 = vmatpush.msra.mxu0 %v141
  %2648 = vmatmul.f32.gmra.mxu0 %v1908
  %v2649 = vpop.f32.mrf.mxu0
  %v2650 = vadd.f32 %v2630, %v2649
  %2651 = vdwg.mxu0
  %2652 = vmatpush.msra.mxu0 %v136
  %2653 = vmatpush.msra.mxu0 %v130
  %2654 = vmatpush.msra.mxu0 %v124
  %2655 = vmatpush.msra.mxu0 %v118
  %2656 = vmatpush.msra.mxu0 %v112
  %2657 = vmatpush.msra.mxu0 %v106
  %2658 = vmatpush.msra.mxu0 %v100
  %2659 = vmatpush.msra.mxu0 %v94
  %2660 = vmatpush.msra.mxu0 %v88
  %2661 = vmatpush.msra.mxu0 %v82
  %2662 = vmatpush.msra.mxu0 %v76
  %2663 = vmatpush.msra.mxu0 %v70
  %2664 = vmatpush.msra.mxu0 %v64
  %2665 = vmatpush.msra.mxu0 %v58
  %2666 = vmatpush.msra.mxu0 %v52
  %2667 = vmatpush.msra.mxu0 %v46
  %2668 = vmatmul.f32.gmra.mxu0 %v1907
  %v2669 = vpop.f32.mrf.mxu0
  %v2670 = vadd.f32 0.0, %v2669
  %2671 = vdwg.mxu0
  %2672 = vmatpush.msra.mxu0 %v232
  %2673 = vmatpush.msra.mxu0 %v226
  %2674 = vmatpush.msra.mxu0 %v220
  %2675 = vmatpush.msra.mxu0 %v214
  %2676 = vmatpush.msra.mxu0 %v208
  %2677 = vmatpush.msra.mxu0 %v202
  %2678 = vmatpush.msra.mxu0 %v196
  %2679 = vmatpush.msra.mxu0 %v190
  %2680 = vmatpush.msra.mxu0 %v184
  %2681 = vmatpush.msra.mxu0 %v178
  %2682 = vmatpush.msra.mxu0 %v172
  %2683 = vmatpush.msra.mxu0 %v166
  %2684 = vmatpush.msra.mxu0 %v160
  %2685 = vmatpush.msra.mxu0 %v154
  %2686 = vmatpush.msra.mxu0 %v148
  %2687 = vmatpush.msra.mxu0 %v142
  %2688 = vmatmul.f32.gmra.mxu0 %v1908
  %v2689 = vpop.f32.mrf.mxu0
  %v2690 = vadd.f32 %v2670, %v2689
  %2691 = vdwg.mxu0
  %2692 = vmatpush.msra.mxu0 %v137
  %2693 = vmatpush.msra.mxu0 %v131
  %2694 = vmatpush.msra.mxu0 %v125
  %2695 = vmatpush.msra.mxu0 %v119
  %2696 = vmatpush.msra.mxu0 %v113
  %2697 = vmatpush.msra.mxu0 %v107
  %2698 = vmatpush.msra.mxu0 %v101
  %2699 = vmatpush.msra.mxu0 %v95
  %2700 = vmatpush.msra.mxu0 %v89
  %2701 = vmatpush.msra.mxu0 %v83
  %2702 = vmatpush.msra.mxu0 %v77
  %2703 = vmatpush.msra.mxu0 %v71
  %2704 = vmatpush.msra.mxu0 %v65
  %2705 = vmatpush.msra.mxu0 %v59
  %2706 = vmatpush.msra.mxu0 %v53
  %2707 = vmatpush.msra.mxu0 %v47
  %2708 = vmatmul.f32.gmra.mxu0 %v1907
  %v2709 = vpop.f32.mrf.mxu0
  %v2710 = vadd.f32 0.0, %v2709
  %2711 = vdwg.mxu0
  %2712 = vmatpush.msra.mxu0 %v233
  %2713 = vmatpush.msra.mxu0 %v227
  %2714 = vmatpush.msra.mxu0 %v221
  %2715 = vmatpush.msra.mxu0 %v215
  %2716 = vmatpush.msra.mxu0 %v209
  %2717 = vmatpush.msra.mxu0 %v203
  %2718 = vmatpush.msra.mxu0 %v197
  %2719 = vmatpush.msra.mxu0 %v191
  %2720 = vmatpush.msra.mxu0 %v185
  %2721 = vmatpush.msra.mxu0 %v179
  %2722 = vmatpush.msra.mxu0 %v173
  %2723 = vmatpush.msra.mxu0 %v167
  %2724 = vmatpush.msra.mxu0 %v161
  %2725 = vmatpush.msra.mxu0 %v155
  %2726 = vmatpush.msra.mxu0 %v149
  %2727 = vmatpush.msra.mxu0 %v143
  %2728 = vmatmul.f32.gmra.mxu0 %v1908
  %v2729 = vpop.f32.mrf.mxu0
  %v2730 = vadd.f32 %v2710, %v2729
  %2731 = vdwg.mxu0
  %v2732 = vadd.f32 %v2486, %v2530
  %v2733 = vadd.f32 %v2487, %v2570
  %v2734 = vxor.u32 %v2732, 2147483648
  %v2735 = vxor.u32 %v2733, 2147483648
  %v2736 = vmul.f32 %v2734, 1.442695
  %v2737 = vpow.pop %v2736
  %v2738 = vmul.f32 %v2735, 1.442695
  %v2739 = vpow.pop %v2738
  %v2740 = vadd.f32 %v2737, 1.0
  %v2741 = vadd.f32 %v2739, 1.0
  %v2742 = vrcp.pop %v2740
  %v2743 = vmul.f32 %v2740, %v2742
  %v2744 = vsub.f32 1.0, %v2743
  %v2745 = vmul.f32 %v2742, %v2744
  %v2746 = vadd.f32 %v2742, %v2745
  %vm2747 = vweird.f32 %v2740
  %vm2748 = vweird.f32 %v2742
  %vm2749 = vmor %vm2747, %vm2748
  %v2750 = vsel %vm2749, %v2742, %v2746
  %v2751 = vand.u32 2147483647, %v2740
  %vm2752 = vcmp.eq.f32.partialorder %v2751, 8.507059e+37
  %v2753 = vand.u32 %v2740, 2147483648
  %v2754 = vor.u32 1.1754944e-38, %v2753
  %v2755 = vsel %vm2752, %v2754, %v2750
  %v2756 = vmul.f32 1.0, %v2755
  %v2757 = vrcp.pop %v2741
  %v2758 = vmul.f32 %v2741, %v2757
  %v2759 = vsub.f32 1.0, %v2758
  %v2760 = vmul.f32 %v2757, %v2759
  %v2761 = vadd.f32 %v2757, %v2760
  %vm2762 = vweird.f32 %v2741
  %vm2763 = vweird.f32 %v2757
  %vm2764 = vmor %vm2762, %vm2763
  %v2765 = vsel %vm2764, %v2757, %v2761
  %v2766 = vand.u32 2147483647, %v2741
  %vm2767 = vcmp.eq.f32.partialorder %v2766, 8.507059e+37
  %v2768 = vand.u32 %v2741, 2147483648
  %v2769 = vor.u32 1.1754944e-38, %v2768
  %v2770 = vsel %vm2767, %v2769, %v2765
  %v2771 = vmul.f32 1.0, %v2770
  %v2772 = vadd.f32 %v2488, %v2610
  %v2773 = vadd.f32 %v2489, %v2650
  %v2774 = vxor.u32 %v2772, 2147483648
  %v2775 = vxor.u32 %v2773, 2147483648
  %v2776 = vmul.f32 %v2774, 1.442695
  %v2777 = vpow.pop %v2776
  %v2778 = vmul.f32 %v2775, 1.442695
  %v2779 = vpow.pop %v2778
  %v2780 = vadd.f32 %v2777, 1.0
  %v2781 = vadd.f32 %v2779, 1.0
  %v2782 = vrcp.pop %v2780
  %v2783 = vmul.f32 %v2780, %v2782
  %v2784 = vsub.f32 1.0, %v2783
  %v2785 = vmul.f32 %v2782, %v2784
  %v2786 = vadd.f32 %v2782, %v2785
  %vm2787 = vweird.f32 %v2780
  %vm2788 = vweird.f32 %v2782
  %vm2789 = vmor %vm2787, %vm2788
  %v2790 = vsel %vm2789, %v2782, %v2786
  %v2791 = vand.u32 2147483647, %v2780
  %vm2792 = vcmp.eq.f32.partialorder %v2791, 8.507059e+37
  %v2793 = vand.u32 %v2780, 2147483648
  %v2794 = vor.u32 1.1754944e-38, %v2793
  %v2795 = vsel %vm2792, %v2794, %v2790
  %v2796 = vmul.f32 1.0, %v2795
  %v2797 = vrcp.pop %v2781
  %v2798 = vmul.f32 %v2781, %v2797
  %v2799 = vsub.f32 1.0, %v2798
  %v2800 = vmul.f32 %v2797, %v2799
  %v2801 = vadd.f32 %v2797, %v2800
  %vm2802 = vweird.f32 %v2781
  %vm2803 = vweird.f32 %v2797
  %vm2804 = vmor %vm2802, %vm2803
  %v2805 = vsel %vm2804, %v2797, %v2801
  %v2806 = vand.u32 2147483647, %v2781
  %vm2807 = vcmp.eq.f32.partialorder %v2806, 8.507059e+37
  %v2808 = vand.u32 %v2781, 2147483648
  %v2809 = vor.u32 1.1754944e-38, %v2808
  %v2810 = vsel %vm2807, %v2809, %v2805
  %v2811 = vmul.f32 1.0, %v2810
  %v2812 = vadd.f32 %v2690, %v620
  %v2813 = vadd.f32 %v2730, %v621
  %v2814 = vmul.f32 %v2756, %v2812
  %v2815 = vmul.f32 %v2771, %v2813
  %v2816 = vadd.f32 %v2490, %v2814
  %v2817 = vadd.f32 %v2491, %v2815
  %v2818 = vtanh.pop %v2816
  %v2819 = vtanh.pop %v2817
  %v2820 = vsub.f32 1.0, %v2796
  %v2821 = vsub.f32 1.0, %v2811
  %v2822 = vmul.f32 %v2820, %v2818
  %v2823 = vmul.f32 %v2821, %v2819
  %v2824 = vmul.f32 %v2796, %v1907
  %v2825 = vmul.f32 %v2811, %v1908
  %v2826 = vadd.f32 %v2822, %v2824
  %v2827 = vadd.f32 %v2823, %v2825
  %2828 = vmatpush.msra.mxu0 %v324
  %2829 = vmatpush.msra.mxu0 %v318
  %2830 = vmatpush.msra.mxu0 %v312
  %2831 = vmatpush.msra.mxu0 %v306
  %2832 = vmatpush.msra.mxu0 %v300
  %2833 = vmatpush.msra.mxu0 %v294
  %2834 = vmatpush.msra.mxu0 %v288
  %2835 = vmatpush.msra.mxu0 %v282
  %2836 = vmatpush.msra.mxu0 %v276
  %2837 = vmatpush.msra.mxu0 %v270
  %2838 = vmatpush.msra.mxu0 %v264
  %2839 = vmatpush.msra.mxu0 %v258
  %2840 = vmatpush.msra.mxu0 %v252
  %2841 = vmatpush.msra.mxu0 %v246
  %2842 = vmatpush.msra.mxu0 %v240
  %2843 = vmatpush.msra.mxu0 %v234
  %2844 = vmatmul.f32.gmra.mxu0 %v2826
  %v2845 = vpop.f32.mrf.mxu0
  %v2846 = vadd.f32 %v626, %v2845
  %2847 = vdwg.mxu0
  %2848 = vmatpush.msra.mxu0 %v420
  %2849 = vmatpush.msra.mxu0 %v414
  %2850 = vmatpush.msra.mxu0 %v408
  %2851 = vmatpush.msra.mxu0 %v402
  %2852 = vmatpush.msra.mxu0 %v396
  %2853 = vmatpush.msra.mxu0 %v390
  %2854 = vmatpush.msra.mxu0 %v384
  %2855 = vmatpush.msra.mxu0 %v378
  %2856 = vmatpush.msra.mxu0 %v372
  %2857 = vmatpush.msra.mxu0 %v366
  %2858 = vmatpush.msra.mxu0 %v360
  %2859 = vmatpush.msra.mxu0 %v354
  %2860 = vmatpush.msra.mxu0 %v348
  %2861 = vmatpush.msra.mxu0 %v342
  %2862 = vmatpush.msra.mxu0 %v336
  %2863 = vmatpush.msra.mxu0 %v330
  %2864 = vmatmul.f32.gmra.mxu0 %v2827
  %v2865 = vpop.f32.mrf.mxu0
  %v2866 = vadd.f32 %v2846, %v2865
  %2867 = vdwg.mxu0
  %2868 = vmatpush.msra.mxu0 %v325
  %2869 = vmatpush.msra.mxu0 %v319
  %2870 = vmatpush.msra.mxu0 %v313
  %2871 = vmatpush.msra.mxu0 %v307
  %2872 = vmatpush.msra.mxu0 %v301
  %2873 = vmatpush.msra.mxu0 %v295
  %2874 = vmatpush.msra.mxu0 %v289
  %2875 = vmatpush.msra.mxu0 %v283
  %2876 = vmatpush.msra.mxu0 %v277
  %2877 = vmatpush.msra.mxu0 %v271
  %2878 = vmatpush.msra.mxu0 %v265
  %2879 = vmatpush.msra.mxu0 %v259
  %2880 = vmatpush.msra.mxu0 %v253
  %2881 = vmatpush.msra.mxu0 %v247
  %2882 = vmatpush.msra.mxu0 %v241
  %2883 = vmatpush.msra.mxu0 %v235
  %2884 = vmatmul.f32.gmra.mxu0 %v2826
  %v2885 = vpop.f32.mrf.mxu0
  %v2886 = vadd.f32 %v627, %v2885
  %2887 = vdwg.mxu0
  %2888 = vmatpush.msra.mxu0 %v421
  %2889 = vmatpush.msra.mxu0 %v415
  %2890 = vmatpush.msra.mxu0 %v409
  %2891 = vmatpush.msra.mxu0 %v403
  %2892 = vmatpush.msra.mxu0 %v397
  %2893 = vmatpush.msra.mxu0 %v391
  %2894 = vmatpush.msra.mxu0 %v385
  %2895 = vmatpush.msra.mxu0 %v379
  %2896 = vmatpush.msra.mxu0 %v373
  %2897 = vmatpush.msra.mxu0 %v367
  %2898 = vmatpush.msra.mxu0 %v361
  %2899 = vmatpush.msra.mxu0 %v355
  %2900 = vmatpush.msra.mxu0 %v349
  %2901 = vmatpush.msra.mxu0 %v343
  %2902 = vmatpush.msra.mxu0 %v337
  %2903 = vmatpush.msra.mxu0 %v331
  %2904 = vmatmul.f32.gmra.mxu0 %v2827
  %v2905 = vpop.f32.mrf.mxu0
  %v2906 = vadd.f32 %v2886, %v2905
  %2907 = vdwg.mxu0
  %2908 = vmatpush.msra.mxu0 %v326
  %2909 = vmatpush.msra.mxu0 %v320
  %2910 = vmatpush.msra.mxu0 %v314
  %2911 = vmatpush.msra.mxu0 %v308
  %2912 = vmatpush.msra.mxu0 %v302
  %2913 = vmatpush.msra.mxu0 %v296
  %2914 = vmatpush.msra.mxu0 %v290
  %2915 = vmatpush.msra.mxu0 %v284
  %2916 = vmatpush.msra.mxu0 %v278
  %2917 = vmatpush.msra.mxu0 %v272
  %2918 = vmatpush.msra.mxu0 %v266
  %2919 = vmatpush.msra.mxu0 %v260
  %2920 = vmatpush.msra.mxu0 %v254
  %2921 = vmatpush.msra.mxu0 %v248
  %2922 = vmatpush.msra.mxu0 %v242
  %2923 = vmatpush.msra.mxu0 %v236
  %2924 = vmatmul.f32.gmra.mxu0 %v2826
  %v2925 = vpop.f32.mrf.mxu0
  %v2926 = vadd.f32 %v628, %v2925
  %2927 = vdwg.mxu0
  %2928 = vmatpush.msra.mxu0 %v422
  %2929 = vmatpush.msra.mxu0 %v416
  %2930 = vmatpush.msra.mxu0 %v410
  %2931 = vmatpush.msra.mxu0 %v404
  %2932 = vmatpush.msra.mxu0 %v398
  %2933 = vmatpush.msra.mxu0 %v392
  %2934 = vmatpush.msra.mxu0 %v386
  %2935 = vmatpush.msra.mxu0 %v380
  %2936 = vmatpush.msra.mxu0 %v374
  %2937 = vmatpush.msra.mxu0 %v368
  %2938 = vmatpush.msra.mxu0 %v362
  %2939 = vmatpush.msra.mxu0 %v356
  %2940 = vmatpush.msra.mxu0 %v350
  %2941 = vmatpush.msra.mxu0 %v344
  %2942 = vmatpush.msra.mxu0 %v338
  %2943 = vmatpush.msra.mxu0 %v332
  %2944 = vmatmul.f32.gmra.mxu0 %v2827
  %v2945 = vpop.f32.mrf.mxu0
  %v2946 = vadd.f32 %v2926, %v2945
  %2947 = vdwg.mxu0
  %2948 = vmatpush.msra.mxu0 %v327
  %2949 = vmatpush.msra.mxu0 %v321
  %2950 = vmatpush.msra.mxu0 %v315
  %2951 = vmatpush.msra.mxu0 %v309
  %2952 = vmatpush.msra.mxu0 %v303
  %2953 = vmatpush.msra.mxu0 %v297
  %2954 = vmatpush.msra.mxu0 %v291
  %2955 = vmatpush.msra.mxu0 %v285
  %2956 = vmatpush.msra.mxu0 %v279
  %2957 = vmatpush.msra.mxu0 %v273
  %2958 = vmatpush.msra.mxu0 %v267
  %2959 = vmatpush.msra.mxu0 %v261
  %2960 = vmatpush.msra.mxu0 %v255
  %2961 = vmatpush.msra.mxu0 %v249
  %2962 = vmatpush.msra.mxu0 %v243
  %2963 = vmatpush.msra.mxu0 %v237
  %2964 = vmatmul.f32.gmra.mxu0 %v2826
  %v2965 = vpop.f32.mrf.mxu0
  %v2966 = vadd.f32 %v629, %v2965
  %2967 = vdwg.mxu0
  %2968 = vmatpush.msra.mxu0 %v423
  %2969 = vmatpush.msra.mxu0 %v417
  %2970 = vmatpush.msra.mxu0 %v411
  %2971 = vmatpush.msra.mxu0 %v405
  %2972 = vmatpush.msra.mxu0 %v399
  %2973 = vmatpush.msra.mxu0 %v393
  %2974 = vmatpush.msra.mxu0 %v387
  %2975 = vmatpush.msra.mxu0 %v381
  %2976 = vmatpush.msra.mxu0 %v375
  %2977 = vmatpush.msra.mxu0 %v369
  %2978 = vmatpush.msra.mxu0 %v363
  %2979 = vmatpush.msra.mxu0 %v357
  %2980 = vmatpush.msra.mxu0 %v351
  %2981 = vmatpush.msra.mxu0 %v345
  %2982 = vmatpush.msra.mxu0 %v339
  %2983 = vmatpush.msra.mxu0 %v333
  %2984 = vmatmul.f32.gmra.mxu0 %v2827
  %v2985 = vpop.f32.mrf.mxu0
  %v2986 = vadd.f32 %v2966, %v2985
  %2987 = vdwg.mxu0
  %2988 = vmatpush.msra.mxu0 %v328
  %2989 = vmatpush.msra.mxu0 %v322
  %2990 = vmatpush.msra.mxu0 %v316
  %2991 = vmatpush.msra.mxu0 %v310
  %2992 = vmatpush.msra.mxu0 %v304
  %2993 = vmatpush.msra.mxu0 %v298
  %2994 = vmatpush.msra.mxu0 %v292
  %2995 = vmatpush.msra.mxu0 %v286
  %2996 = vmatpush.msra.mxu0 %v280
  %2997 = vmatpush.msra.mxu0 %v274
  %2998 = vmatpush.msra.mxu0 %v268
  %2999 = vmatpush.msra.mxu0 %v262
  %3000 = vmatpush.msra.mxu0 %v256
  %3001 = vmatpush.msra.mxu0 %v250
  %3002 = vmatpush.msra.mxu0 %v244
  %3003 = vmatpush.msra.mxu0 %v238
  %3004 = vmatmul.f32.gmra.mxu0 %v2826
  %v3005 = vpop.f32.mrf.mxu0
  %v3006 = vadd.f32 %v630, %v3005
  %3007 = vdwg.mxu0
  %3008 = vmatpush.msra.mxu0 %v424
  %3009 = vmatpush.msra.mxu0 %v418
  %3010 = vmatpush.msra.mxu0 %v412
  %3011 = vmatpush.msra.mxu0 %v406
  %3012 = vmatpush.msra.mxu0 %v400
  %3013 = vmatpush.msra.mxu0 %v394
  %3014 = vmatpush.msra.mxu0 %v388
  %3015 = vmatpush.msra.mxu0 %v382
  %3016 = vmatpush.msra.mxu0 %v376
  %3017 = vmatpush.msra.mxu0 %v370
  %3018 = vmatpush.msra.mxu0 %v364
  %3019 = vmatpush.msra.mxu0 %v358
  %3020 = vmatpush.msra.mxu0 %v352
  %3021 = vmatpush.msra.mxu0 %v346
  %3022 = vmatpush.msra.mxu0 %v340
  %3023 = vmatpush.msra.mxu0 %v334
  %3024 = vmatmul.f32.gmra.mxu0 %v2827
  %v3025 = vpop.f32.mrf.mxu0
  %v3026 = vadd.f32 %v3006, %v3025
  %3027 = vdwg.mxu0
  %3028 = vmatpush.msra.mxu0 %v329
  %3029 = vmatpush.msra.mxu0 %v323
  %3030 = vmatpush.msra.mxu0 %v317
  %3031 = vmatpush.msra.mxu0 %v311
  %3032 = vmatpush.msra.mxu0 %v305
  %3033 = vmatpush.msra.mxu0 %v299
  %3034 = vmatpush.msra.mxu0 %v293
  %3035 = vmatpush.msra.mxu0 %v287
  %3036 = vmatpush.msra.mxu0 %v281
  %3037 = vmatpush.msra.mxu0 %v275
  %3038 = vmatpush.msra.mxu0 %v269
  %3039 = vmatpush.msra.mxu0 %v263
  %3040 = vmatpush.msra.mxu0 %v257
  %3041 = vmatpush.msra.mxu0 %v251
  %3042 = vmatpush.msra.mxu0 %v245
  %3043 = vmatpush.msra.mxu0 %v239
  %3044 = vmatmul.f32.gmra.mxu0 %v2826
  %v3045 = vpop.f32.mrf.mxu0
  %v3046 = vadd.f32 %v631, %v3045
  %3047 = vdwg.mxu0
  %3048 = vmatpush.msra.mxu0 %v425
  %3049 = vmatpush.msra.mxu0 %v419
  %3050 = vmatpush.msra.mxu0 %v413
  %3051 = vmatpush.msra.mxu0 %v407
  %3052 = vmatpush.msra.mxu0 %v401
  %3053 = vmatpush.msra.mxu0 %v395
  %3054 = vmatpush.msra.mxu0 %v389
  %3055 = vmatpush.msra.mxu0 %v383
  %3056 = vmatpush.msra.mxu0 %v377
  %3057 = vmatpush.msra.mxu0 %v371
  %3058 = vmatpush.msra.mxu0 %v365
  %3059 = vmatpush.msra.mxu0 %v359
  %3060 = vmatpush.msra.mxu0 %v353
  %3061 = vmatpush.msra.mxu0 %v347
  %3062 = vmatpush.msra.mxu0 %v341
  %3063 = vmatpush.msra.mxu0 %v335
  %3064 = vmatmul.f32.gmra.mxu0 %v2827
  %v3065 = vpop.f32.mrf.mxu0
  %v3066 = vadd.f32 %v3046, %v3065
  %3067 = vdwg.mxu0
  %3068 = vmatpush.msra.mxu0 %v516
  %3069 = vmatpush.msra.mxu0 %v510
  %3070 = vmatpush.msra.mxu0 %v504
  %3071 = vmatpush.msra.mxu0 %v498
  %3072 = vmatpush.msra.mxu0 %v492
  %3073 = vmatpush.msra.mxu0 %v486
  %3074 = vmatpush.msra.mxu0 %v480
  %3075 = vmatpush.msra.mxu0 %v474
  %3076 = vmatpush.msra.mxu0 %v468
  %3077 = vmatpush.msra.mxu0 %v462
  %3078 = vmatpush.msra.mxu0 %v456
  %3079 = vmatpush.msra.mxu0 %v450
  %3080 = vmatpush.msra.mxu0 %v444
  %3081 = vmatpush.msra.mxu0 %v438
  %3082 = vmatpush.msra.mxu0 %v432
  %3083 = vmatpush.msra.mxu0 %v426
  %3084 = vmatmul.f32.gmra.mxu0 %v2483
  %v3085 = vpop.f32.mrf.mxu0
  %v3086 = vadd.f32 0.0, %v3085
  %3087 = vdwg.mxu0
  %3088 = vmatpush.msra.mxu0 %v612
  %3089 = vmatpush.msra.mxu0 %v606
  %3090 = vmatpush.msra.mxu0 %v600
  %3091 = vmatpush.msra.mxu0 %v594
  %3092 = vmatpush.msra.mxu0 %v588
  %3093 = vmatpush.msra.mxu0 %v582
  %3094 = vmatpush.msra.mxu0 %v576
  %3095 = vmatpush.msra.mxu0 %v570
  %3096 = vmatpush.msra.mxu0 %v564
  %3097 = vmatpush.msra.mxu0 %v558
  %3098 = vmatpush.msra.mxu0 %v552
  %3099 = vmatpush.msra.mxu0 %v546
  %3100 = vmatpush.msra.mxu0 %v540
  %3101 = vmatpush.msra.mxu0 %v534
  %3102 = vmatpush.msra.mxu0 %v528
  %3103 = vmatpush.msra.mxu0 %v522
  %3104 = vmatmul.f32.gmra.mxu0 %v2484
  %v3105 = vpop.f32.mrf.mxu0
  %v3106 = vadd.f32 %v3086, %v3105
  %3107 = vdwg.mxu0
  %3108 = vmatpush.msra.mxu0 %v517
  %3109 = vmatpush.msra.mxu0 %v511
  %3110 = vmatpush.msra.mxu0 %v505
  %3111 = vmatpush.msra.mxu0 %v499
  %3112 = vmatpush.msra.mxu0 %v493
  %3113 = vmatpush.msra.mxu0 %v487
  %3114 = vmatpush.msra.mxu0 %v481
  %3115 = vmatpush.msra.mxu0 %v475
  %3116 = vmatpush.msra.mxu0 %v469
  %3117 = vmatpush.msra.mxu0 %v463
  %3118 = vmatpush.msra.mxu0 %v457
  %3119 = vmatpush.msra.mxu0 %v451
  %3120 = vmatpush.msra.mxu0 %v445
  %3121 = vmatpush.msra.mxu0 %v439
  %3122 = vmatpush.msra.mxu0 %v433
  %3123 = vmatpush.msra.mxu0 %v427
  %3124 = vmatmul.f32.gmra.mxu0 %v2483
  %v3125 = vpop.f32.mrf.mxu0
  %v3126 = vadd.f32 0.0, %v3125
  %3127 = vdwg.mxu0
  %3128 = vmatpush.msra.mxu0 %v613
  %3129 = vmatpush.msra.mxu0 %v607
  %3130 = vmatpush.msra.mxu0 %v601
  %3131 = vmatpush.msra.mxu0 %v595
  %3132 = vmatpush.msra.mxu0 %v589
  %3133 = vmatpush.msra.mxu0 %v583
  %3134 = vmatpush.msra.mxu0 %v577
  %3135 = vmatpush.msra.mxu0 %v571
  %3136 = vmatpush.msra.mxu0 %v565
  %3137 = vmatpush.msra.mxu0 %v559
  %3138 = vmatpush.msra.mxu0 %v553
  %3139 = vmatpush.msra.mxu0 %v547
  %3140 = vmatpush.msra.mxu0 %v541
  %3141 = vmatpush.msra.mxu0 %v535
  %3142 = vmatpush.msra.mxu0 %v529
  %3143 = vmatpush.msra.mxu0 %v523
  %3144 = vmatmul.f32.gmra.mxu0 %v2484
  %v3145 = vpop.f32.mrf.mxu0
  %v3146 = vadd.f32 %v3126, %v3145
  %3147 = vdwg.mxu0
  %3148 = vmatpush.msra.mxu0 %v518
  %3149 = vmatpush.msra.mxu0 %v512
  %3150 = vmatpush.msra.mxu0 %v506
  %3151 = vmatpush.msra.mxu0 %v500
  %3152 = vmatpush.msra.mxu0 %v494
  %3153 = vmatpush.msra.mxu0 %v488
  %3154 = vmatpush.msra.mxu0 %v482
  %3155 = vmatpush.msra.mxu0 %v476
  %3156 = vmatpush.msra.mxu0 %v470
  %3157 = vmatpush.msra.mxu0 %v464
  %3158 = vmatpush.msra.mxu0 %v458
  %3159 = vmatpush.msra.mxu0 %v452
  %3160 = vmatpush.msra.mxu0 %v446
  %3161 = vmatpush.msra.mxu0 %v440
  %3162 = vmatpush.msra.mxu0 %v434
  %3163 = vmatpush.msra.mxu0 %v428
  %3164 = vmatmul.f32.gmra.mxu0 %v2483
  %v3165 = vpop.f32.mrf.mxu0
  %v3166 = vadd.f32 0.0, %v3165
  %3167 = vdwg.mxu0
  %3168 = vmatpush.msra.mxu0 %v614
  %3169 = vmatpush.msra.mxu0 %v608
  %3170 = vmatpush.msra.mxu0 %v602
  %3171 = vmatpush.msra.mxu0 %v596
  %3172 = vmatpush.msra.mxu0 %v590
  %3173 = vmatpush.msra.mxu0 %v584
  %3174 = vmatpush.msra.mxu0 %v578
  %3175 = vmatpush.msra.mxu0 %v572
  %3176 = vmatpush.msra.mxu0 %v566
  %3177 = vmatpush.msra.mxu0 %v560
  %3178 = vmatpush.msra.mxu0 %v554
  %3179 = vmatpush.msra.mxu0 %v548
  %3180 = vmatpush.msra.mxu0 %v542
  %3181 = vmatpush.msra.mxu0 %v536
  %3182 = vmatpush.msra.mxu0 %v530
  %3183 = vmatpush.msra.mxu0 %v524
  %3184 = vmatmul.f32.gmra.mxu0 %v2484
  %v3185 = vpop.f32.mrf.mxu0
  %v3186 = vadd.f32 %v3166, %v3185
  %3187 = vdwg.mxu0
  %3188 = vmatpush.msra.mxu0 %v519
  %3189 = vmatpush.msra.mxu0 %v513
  %3190 = vmatpush.msra.mxu0 %v507
  %3191 = vmatpush.msra.mxu0 %v501
  %3192 = vmatpush.msra.mxu0 %v495
  %3193 = vmatpush.msra.mxu0 %v489
  %3194 = vmatpush.msra.mxu0 %v483
  %3195 = vmatpush.msra.mxu0 %v477
  %3196 = vmatpush.msra.mxu0 %v471
  %3197 = vmatpush.msra.mxu0 %v465
  %3198 = vmatpush.msra.mxu0 %v459
  %3199 = vmatpush.msra.mxu0 %v453
  %3200 = vmatpush.msra.mxu0 %v447
  %3201 = vmatpush.msra.mxu0 %v441
  %3202 = vmatpush.msra.mxu0 %v435
  %3203 = vmatpush.msra.mxu0 %v429
  %3204 = vmatmul.f32.gmra.mxu0 %v2483
  %v3205 = vpop.f32.mrf.mxu0
  %v3206 = vadd.f32 0.0, %v3205
  %3207 = vdwg.mxu0
  %3208 = vmatpush.msra.mxu0 %v615
  %3209 = vmatpush.msra.mxu0 %v609
  %3210 = vmatpush.msra.mxu0 %v603
  %3211 = vmatpush.msra.mxu0 %v597
  %3212 = vmatpush.msra.mxu0 %v591
  %3213 = vmatpush.msra.mxu0 %v585
  %3214 = vmatpush.msra.mxu0 %v579
  %3215 = vmatpush.msra.mxu0 %v573
  %3216 = vmatpush.msra.mxu0 %v567
  %3217 = vmatpush.msra.mxu0 %v561
  %3218 = vmatpush.msra.mxu0 %v555
  %3219 = vmatpush.msra.mxu0 %v549
  %3220 = vmatpush.msra.mxu0 %v543
  %3221 = vmatpush.msra.mxu0 %v537
  %3222 = vmatpush.msra.mxu0 %v531
  %3223 = vmatpush.msra.mxu0 %v525
  %3224 = vmatmul.f32.gmra.mxu0 %v2484
  %v3225 = vpop.f32.mrf.mxu0
  %v3226 = vadd.f32 %v3206, %v3225
  %3227 = vdwg.mxu0
  %3228 = vmatpush.msra.mxu0 %v520
  %3229 = vmatpush.msra.mxu0 %v514
  %3230 = vmatpush.msra.mxu0 %v508
  %3231 = vmatpush.msra.mxu0 %v502
  %3232 = vmatpush.msra.mxu0 %v496
  %3233 = vmatpush.msra.mxu0 %v490
  %3234 = vmatpush.msra.mxu0 %v484
  %3235 = vmatpush.msra.mxu0 %v478
  %3236 = vmatpush.msra.mxu0 %v472
  %3237 = vmatpush.msra.mxu0 %v466
  %3238 = vmatpush.msra.mxu0 %v460
  %3239 = vmatpush.msra.mxu0 %v454
  %3240 = vmatpush.msra.mxu0 %v448
  %3241 = vmatpush.msra.mxu0 %v442
  %3242 = vmatpush.msra.mxu0 %v436
  %3243 = vmatpush.msra.mxu0 %v430
  %3244 = vmatmul.f32.gmra.mxu0 %v2483
  %v3245 = vpop.f32.mrf.mxu0
  %v3246 = vadd.f32 0.0, %v3245
  %3247 = vdwg.mxu0
  %3248 = vmatpush.msra.mxu0 %v616
  %3249 = vmatpush.msra.mxu0 %v610
  %3250 = vmatpush.msra.mxu0 %v604
  %3251 = vmatpush.msra.mxu0 %v598
  %3252 = vmatpush.msra.mxu0 %v592
  %3253 = vmatpush.msra.mxu0 %v586
  %3254 = vmatpush.msra.mxu0 %v580
  %3255 = vmatpush.msra.mxu0 %v574
  %3256 = vmatpush.msra.mxu0 %v568
  %3257 = vmatpush.msra.mxu0 %v562
  %3258 = vmatpush.msra.mxu0 %v556
  %3259 = vmatpush.msra.mxu0 %v550
  %3260 = vmatpush.msra.mxu0 %v544
  %3261 = vmatpush.msra.mxu0 %v538
  %3262 = vmatpush.msra.mxu0 %v532
  %3263 = vmatpush.msra.mxu0 %v526
  %3264 = vmatmul.f32.gmra.mxu0 %v2484
  %v3265 = vpop.f32.mrf.mxu0
  %v3266 = vadd.f32 %v3246, %v3265
  %3267 = vdwg.mxu0
  %3268 = vmatpush.msra.mxu0 %v521
  %3269 = vmatpush.msra.mxu0 %v515
  %3270 = vmatpush.msra.mxu0 %v509
  %3271 = vmatpush.msra.mxu0 %v503
  %3272 = vmatpush.msra.mxu0 %v497
  %3273 = vmatpush.msra.mxu0 %v491
  %3274 = vmatpush.msra.mxu0 %v485
  %3275 = vmatpush.msra.mxu0 %v479
  %3276 = vmatpush.msra.mxu0 %v473
  %3277 = vmatpush.msra.mxu0 %v467
  %3278 = vmatpush.msra.mxu0 %v461
  %3279 = vmatpush.msra.mxu0 %v455
  %3280 = vmatpush.msra.mxu0 %v449
  %3281 = vmatpush.msra.mxu0 %v443
  %3282 = vmatpush.msra.mxu0 %v437
  %3283 = vmatpush.msra.mxu0 %v431
  %3284 = vmatmul.f32.gmra.mxu0 %v2483
  %v3285 = vpop.f32.mrf.mxu0
  %v3286 = vadd.f32 0.0, %v3285
  %3287 = vdwg.mxu0
  %3288 = vmatpush.msra.mxu0 %v617
  %3289 = vmatpush.msra.mxu0 %v611
  %3290 = vmatpush.msra.mxu0 %v605
  %3291 = vmatpush.msra.mxu0 %v599
  %3292 = vmatpush.msra.mxu0 %v593
  %3293 = vmatpush.msra.mxu0 %v587
  %3294 = vmatpush.msra.mxu0 %v581
  %3295 = vmatpush.msra.mxu0 %v575
  %3296 = vmatpush.msra.mxu0 %v569
  %3297 = vmatpush.msra.mxu0 %v563
  %3298 = vmatpush.msra.mxu0 %v557
  %3299 = vmatpush.msra.mxu0 %v551
  %3300 = vmatpush.msra.mxu0 %v545
  %3301 = vmatpush.msra.mxu0 %v539
  %3302 = vmatpush.msra.mxu0 %v533
  %3303 = vmatpush.msra.mxu0 %v527
  %3304 = vmatmul.f32.gmra.mxu0 %v2484
  %v3305 = vpop.f32.mrf.mxu0
  %v3306 = vadd.f32 %v3286, %v3305
  %3307 = vdwg.mxu0
  %v3308 = vadd.f32 %v2866, %v3106
  %v3309 = vadd.f32 %v2906, %v3146
  %v3310 = vxor.u32 %v3308, 2147483648
  %v3311 = vxor.u32 %v3309, 2147483648
  %v3312 = vmul.f32 %v3310, 1.442695
  %v3313 = vpow.pop %v3312
  %v3314 = vmul.f32 %v3311, 1.442695
  %v3315 = vpow.pop %v3314
  %v3316 = vadd.f32 %v3313, 1.0
  %v3317 = vadd.f32 %v3315, 1.0
  %v3318 = vrcp.pop %v3316
  %v3319 = vmul.f32 %v3316, %v3318
  %v3320 = vsub.f32 1.0, %v3319
  %v3321 = vmul.f32 %v3318, %v3320
  %v3322 = vadd.f32 %v3318, %v3321
  %vm3323 = vweird.f32 %v3316
  %vm3324 = vweird.f32 %v3318
  %vm3325 = vmor %vm3323, %vm3324
  %v3326 = vsel %vm3325, %v3318, %v3322
  %v3327 = vand.u32 2147483647, %v3316
  %vm3328 = vcmp.eq.f32.partialorder %v3327, 8.507059e+37
  %v3329 = vand.u32 %v3316, 2147483648
  %v3330 = vor.u32 1.1754944e-38, %v3329
  %v3331 = vsel %vm3328, %v3330, %v3326
  %v3332 = vmul.f32 1.0, %v3331
  %v3333 = vrcp.pop %v3317
  %v3334 = vmul.f32 %v3317, %v3333
  %v3335 = vsub.f32 1.0, %v3334
  %v3336 = vmul.f32 %v3333, %v3335
  %v3337 = vadd.f32 %v3333, %v3336
  %vm3338 = vweird.f32 %v3317
  %vm3339 = vweird.f32 %v3333
  %vm3340 = vmor %vm3338, %vm3339
  %v3341 = vsel %vm3340, %v3333, %v3337
  %v3342 = vand.u32 2147483647, %v3317
  %vm3343 = vcmp.eq.f32.partialorder %v3342, 8.507059e+37
  %v3344 = vand.u32 %v3317, 2147483648
  %v3345 = vor.u32 1.1754944e-38, %v3344
  %v3346 = vsel %vm3343, %v3345, %v3341
  %v3347 = vmul.f32 1.0, %v3346
  %v3348 = vadd.f32 %v2946, %v3186
  %v3349 = vadd.f32 %v2986, %v3226
  %v3350 = vxor.u32 %v3348, 2147483648
  %v3351 = vxor.u32 %v3349, 2147483648
  %v3352 = vmul.f32 %v3350, 1.442695
  %v3353 = vpow.pop %v3352
  %v3354 = vmul.f32 %v3351, 1.442695
  %v3355 = vpow.pop %v3354
  %v3356 = vadd.f32 %v3353, 1.0
  %v3357 = vadd.f32 %v3355, 1.0
  %v3358 = vrcp.pop %v3356
  %v3359 = vmul.f32 %v3356, %v3358
  %v3360 = vsub.f32 1.0, %v3359
  %v3361 = vmul.f32 %v3358, %v3360
  %v3362 = vadd.f32 %v3358, %v3361
  %vm3363 = vweird.f32 %v3356
  %vm3364 = vweird.f32 %v3358
  %vm3365 = vmor %vm3363, %vm3364
  %v3366 = vsel %vm3365, %v3358, %v3362
  %v3367 = vand.u32 2147483647, %v3356
  %vm3368 = vcmp.eq.f32.partialorder %v3367, 8.507059e+37
  %v3369 = vand.u32 %v3356, 2147483648
  %v3370 = vor.u32 1.1754944e-38, %v3369
  %v3371 = vsel %vm3368, %v3370, %v3366
  %v3372 = vmul.f32 1.0, %v3371
  %v3373 = vrcp.pop %v3357
  %v3374 = vmul.f32 %v3357, %v3373
  %v3375 = vsub.f32 1.0, %v3374
  %v3376 = vmul.f32 %v3373, %v3375
  %v3377 = vadd.f32 %v3373, %v3376
  %vm3378 = vweird.f32 %v3357
  %vm3379 = vweird.f32 %v3373
  %vm3380 = vmor %vm3378, %vm3379
  %v3381 = vsel %vm3380, %v3373, %v3377
  %v3382 = vand.u32 2147483647, %v3357
  %vm3383 = vcmp.eq.f32.partialorder %v3382, 8.507059e+37
  %v3384 = vand.u32 %v3357, 2147483648
  %v3385 = vor.u32 1.1754944e-38, %v3384
  %v3386 = vsel %vm3383, %v3385, %v3381
  %v3387 = vmul.f32 1.0, %v3386
  %v3388 = vadd.f32 %v3266, %v640
  %v3389 = vadd.f32 %v3306, %v641
  %v3390 = vmul.f32 %v3332, %v3388
  %v3391 = vmul.f32 %v3347, %v3389
  %v3392 = vadd.f32 %v3026, %v3390
  %v3393 = vadd.f32 %v3066, %v3391
  %v3394 = vtanh.pop %v3392
  %v3395 = vtanh.pop %v3393
  %v3396 = vsub.f32 1.0, %v3372
  %v3397 = vsub.f32 1.0, %v3387
  %v3398 = vmul.f32 %v3396, %v3394
  %v3399 = vmul.f32 %v3397, %v3395
  %v3400 = vmul.f32 %v3372, %v2483
  %v3401 = vmul.f32 %v3387, %v2484
  %v3402 = vadd.f32 %v3398, %v3400
  %v3403 = vadd.f32 %v3399, %v3401
  %s3404 = scalar_lea.vmem %s0, 144
  %v3405 = vld [vmem:[%s3404] sm:$0xff]
  %v3406 = vld [vmem:[%s3404 + $0x8] sm:$0xff]
  %v3407 = vld [vmem:[%s3404 + $0x10] sm:$0xff]
  %v3408 = vld [vmem:[%s3404 + $0x18] sm:$0xff]
  %v3409 = vld [vmem:[%s3404 + $0x20] sm:$0xff]
  %v3410 = vld [vmem:[%s3404 + $0x28] sm:$0xff]
  %3411 = vmatpush.msra.mxu0 %v132
  %3412 = vmatpush.msra.mxu0 %v126
  %3413 = vmatpush.msra.mxu0 %v120
  %3414 = vmatpush.msra.mxu0 %v114
  %3415 = vmatpush.msra.mxu0 %v108
  %3416 = vmatpush.msra.mxu0 %v102
  %3417 = vmatpush.msra.mxu0 %v96
  %3418 = vmatpush.msra.mxu0 %v90
  %3419 = vmatpush.msra.mxu0 %v84
  %3420 = vmatpush.msra.mxu0 %v78
  %3421 = vmatpush.msra.mxu0 %v72
  %3422 = vmatpush.msra.mxu0 %v66
  %3423 = vmatpush.msra.mxu0 %v60
  %3424 = vmatpush.msra.mxu0 %v54
  %3425 = vmatpush.msra.mxu0 %v48
  %3426 = vmatpush.msra.mxu0 %v42
  %3427 = vmatmul.f32.gmra.mxu0 %v2826
  %v3428 = vpop.f32.mrf.mxu0
  %v3429 = vadd.f32 0.0, %v3428
  %3430 = vdwg.mxu0
  %3431 = vmatpush.msra.mxu0 %v228
  %3432 = vmatpush.msra.mxu0 %v222
  %3433 = vmatpush.msra.mxu0 %v216
  %3434 = vmatpush.msra.mxu0 %v210
  %3435 = vmatpush.msra.mxu0 %v204
  %3436 = vmatpush.msra.mxu0 %v198
  %3437 = vmatpush.msra.mxu0 %v192
  %3438 = vmatpush.msra.mxu0 %v186
  %3439 = vmatpush.msra.mxu0 %v180
  %3440 = vmatpush.msra.mxu0 %v174
  %3441 = vmatpush.msra.mxu0 %v168
  %3442 = vmatpush.msra.mxu0 %v162
  %3443 = vmatpush.msra.mxu0 %v156
  %3444 = vmatpush.msra.mxu0 %v150
  %3445 = vmatpush.msra.mxu0 %v144
  %3446 = vmatpush.msra.mxu0 %v138
  %3447 = vmatmul.f32.gmra.mxu0 %v2827
  %v3448 = vpop.f32.mrf.mxu0
  %v3449 = vadd.f32 %v3429, %v3448
  %3450 = vdwg.mxu0
  %3451 = vmatpush.msra.mxu0 %v133
  %3452 = vmatpush.msra.mxu0 %v127
  %3453 = vmatpush.msra.mxu0 %v121
  %3454 = vmatpush.msra.mxu0 %v115
  %3455 = vmatpush.msra.mxu0 %v109
  %3456 = vmatpush.msra.mxu0 %v103
  %3457 = vmatpush.msra.mxu0 %v97
  %3458 = vmatpush.msra.mxu0 %v91
  %3459 = vmatpush.msra.mxu0 %v85
  %3460 = vmatpush.msra.mxu0 %v79
  %3461 = vmatpush.msra.mxu0 %v73
  %3462 = vmatpush.msra.mxu0 %v67
  %3463 = vmatpush.msra.mxu0 %v61
  %3464 = vmatpush.msra.mxu0 %v55
  %3465 = vmatpush.msra.mxu0 %v49
  %3466 = vmatpush.msra.mxu0 %v43
  %3467 = vmatmul.f32.gmra.mxu0 %v2826
  %v3468 = vpop.f32.mrf.mxu0
  %v3469 = vadd.f32 0.0, %v3468
  %3470 = vdwg.mxu0
  %3471 = vmatpush.msra.mxu0 %v229
  %3472 = vmatpush.msra.mxu0 %v223
  %3473 = vmatpush.msra.mxu0 %v217
  %3474 = vmatpush.msra.mxu0 %v211
  %3475 = vmatpush.msra.mxu0 %v205
  %3476 = vmatpush.msra.mxu0 %v199
  %3477 = vmatpush.msra.mxu0 %v193
  %3478 = vmatpush.msra.mxu0 %v187
  %3479 = vmatpush.msra.mxu0 %v181
  %3480 = vmatpush.msra.mxu0 %v175
  %3481 = vmatpush.msra.mxu0 %v169
  %3482 = vmatpush.msra.mxu0 %v163
  %3483 = vmatpush.msra.mxu0 %v157
  %3484 = vmatpush.msra.mxu0 %v151
  %3485 = vmatpush.msra.mxu0 %v145
  %3486 = vmatpush.msra.mxu0 %v139
  %3487 = vmatmul.f32.gmra.mxu0 %v2827
  %v3488 = vpop.f32.mrf.mxu0
  %v3489 = vadd.f32 %v3469, %v3488
  %3490 = vdwg.mxu0
  %3491 = vmatpush.msra.mxu0 %v134
  %3492 = vmatpush.msra.mxu0 %v128
  %3493 = vmatpush.msra.mxu0 %v122
  %3494 = vmatpush.msra.mxu0 %v116
  %3495 = vmatpush.msra.mxu0 %v110
  %3496 = vmatpush.msra.mxu0 %v104
  %3497 = vmatpush.msra.mxu0 %v98
  %3498 = vmatpush.msra.mxu0 %v92
  %3499 = vmatpush.msra.mxu0 %v86
  %3500 = vmatpush.msra.mxu0 %v80
  %3501 = vmatpush.msra.mxu0 %v74
  %3502 = vmatpush.msra.mxu0 %v68
  %3503 = vmatpush.msra.mxu0 %v62
  %3504 = vmatpush.msra.mxu0 %v56
  %3505 = vmatpush.msra.mxu0 %v50
  %3506 = vmatpush.msra.mxu0 %v44
  %3507 = vmatmul.f32.gmra.mxu0 %v2826
  %v3508 = vpop.f32.mrf.mxu0
  %v3509 = vadd.f32 0.0, %v3508
  %3510 = vdwg.mxu0
  %3511 = vmatpush.msra.mxu0 %v230
  %3512 = vmatpush.msra.mxu0 %v224
  %3513 = vmatpush.msra.mxu0 %v218
  %3514 = vmatpush.msra.mxu0 %v212
  %3515 = vmatpush.msra.mxu0 %v206
  %3516 = vmatpush.msra.mxu0 %v200
  %3517 = vmatpush.msra.mxu0 %v194
  %3518 = vmatpush.msra.mxu0 %v188
  %3519 = vmatpush.msra.mxu0 %v182
  %3520 = vmatpush.msra.mxu0 %v176
  %3521 = vmatpush.msra.mxu0 %v170
  %3522 = vmatpush.msra.mxu0 %v164
  %3523 = vmatpush.msra.mxu0 %v158
  %3524 = vmatpush.msra.mxu0 %v152
  %3525 = vmatpush.msra.mxu0 %v146
  %3526 = vmatpush.msra.mxu0 %v140
  %3527 = vmatmul.f32.gmra.mxu0 %v2827
  %v3528 = vpop.f32.mrf.mxu0
  %v3529 = vadd.f32 %v3509, %v3528
  %3530 = vdwg.mxu0
  %3531 = vmatpush.msra.mxu0 %v135
  %3532 = vmatpush.msra.mxu0 %v129
  %3533 = vmatpush.msra.mxu0 %v123
  %3534 = vmatpush.msra.mxu0 %v117
  %3535 = vmatpush.msra.mxu0 %v111
  %3536 = vmatpush.msra.mxu0 %v105
  %3537 = vmatpush.msra.mxu0 %v99
  %3538 = vmatpush.msra.mxu0 %v93
  %3539 = vmatpush.msra.mxu0 %v87
  %3540 = vmatpush.msra.mxu0 %v81
  %3541 = vmatpush.msra.mxu0 %v75
  %3542 = vmatpush.msra.mxu0 %v69
  %3543 = vmatpush.msra.mxu0 %v63
  %3544 = vmatpush.msra.mxu0 %v57
  %3545 = vmatpush.msra.mxu0 %v51
  %3546 = vmatpush.msra.mxu0 %v45
  %3547 = vmatmul.f32.gmra.mxu0 %v2826
  %v3548 = vpop.f32.mrf.mxu0
  %v3549 = vadd.f32 0.0, %v3548
  %3550 = vdwg.mxu0
  %3551 = vmatpush.msra.mxu0 %v231
  %3552 = vmatpush.msra.mxu0 %v225
  %3553 = vmatpush.msra.mxu0 %v219
  %3554 = vmatpush.msra.mxu0 %v213
  %3555 = vmatpush.msra.mxu0 %v207
  %3556 = vmatpush.msra.mxu0 %v201
  %3557 = vmatpush.msra.mxu0 %v195
  %3558 = vmatpush.msra.mxu0 %v189
  %3559 = vmatpush.msra.mxu0 %v183
  %3560 = vmatpush.msra.mxu0 %v177
  %3561 = vmatpush.msra.mxu0 %v171
  %3562 = vmatpush.msra.mxu0 %v165
  %3563 = vmatpush.msra.mxu0 %v159
  %3564 = vmatpush.msra.mxu0 %v153
  %3565 = vmatpush.msra.mxu0 %v147
  %3566 = vmatpush.msra.mxu0 %v141
  %3567 = vmatmul.f32.gmra.mxu0 %v2827
  %v3568 = vpop.f32.mrf.mxu0
  %v3569 = vadd.f32 %v3549, %v3568
  %3570 = vdwg.mxu0
  %3571 = vmatpush.msra.mxu0 %v136
  %3572 = vmatpush.msra.mxu0 %v130
  %3573 = vmatpush.msra.mxu0 %v124
  %3574 = vmatpush.msra.mxu0 %v118
  %3575 = vmatpush.msra.mxu0 %v112
  %3576 = vmatpush.msra.mxu0 %v106
  %3577 = vmatpush.msra.mxu0 %v100
  %3578 = vmatpush.msra.mxu0 %v94
  %3579 = vmatpush.msra.mxu0 %v88
  %3580 = vmatpush.msra.mxu0 %v82
  %3581 = vmatpush.msra.mxu0 %v76
  %3582 = vmatpush.msra.mxu0 %v70
  %3583 = vmatpush.msra.mxu0 %v64
  %3584 = vmatpush.msra.mxu0 %v58
  %3585 = vmatpush.msra.mxu0 %v52
  %3586 = vmatpush.msra.mxu0 %v46
  %3587 = vmatmul.f32.gmra.mxu0 %v2826
  %v3588 = vpop.f32.mrf.mxu0
  %v3589 = vadd.f32 0.0, %v3588
  %3590 = vdwg.mxu0
  %3591 = vmatpush.msra.mxu0 %v232
  %3592 = vmatpush.msra.mxu0 %v226
  %3593 = vmatpush.msra.mxu0 %v220
  %3594 = vmatpush.msra.mxu0 %v214
  %3595 = vmatpush.msra.mxu0 %v208
  %3596 = vmatpush.msra.mxu0 %v202
  %3597 = vmatpush.msra.mxu0 %v196
  %3598 = vmatpush.msra.mxu0 %v190
  %3599 = vmatpush.msra.mxu0 %v184
  %3600 = vmatpush.msra.mxu0 %v178
  %3601 = vmatpush.msra.mxu0 %v172
  %3602 = vmatpush.msra.mxu0 %v166
  %3603 = vmatpush.msra.mxu0 %v160
  %3604 = vmatpush.msra.mxu0 %v154
  %3605 = vmatpush.msra.mxu0 %v148
  %3606 = vmatpush.msra.mxu0 %v142
  %3607 = vmatmul.f32.gmra.mxu0 %v2827
  %v3608 = vpop.f32.mrf.mxu0
  %v3609 = vadd.f32 %v3589, %v3608
  %3610 = vdwg.mxu0
  %3611 = vmatpush.msra.mxu0 %v137
  %3612 = vmatpush.msra.mxu0 %v131
  %3613 = vmatpush.msra.mxu0 %v125
  %3614 = vmatpush.msra.mxu0 %v119
  %3615 = vmatpush.msra.mxu0 %v113
  %3616 = vmatpush.msra.mxu0 %v107
  %3617 = vmatpush.msra.mxu0 %v101
  %3618 = vmatpush.msra.mxu0 %v95
  %3619 = vmatpush.msra.mxu0 %v89
  %3620 = vmatpush.msra.mxu0 %v83
  %3621 = vmatpush.msra.mxu0 %v77
  %3622 = vmatpush.msra.mxu0 %v71
  %3623 = vmatpush.msra.mxu0 %v65
  %3624 = vmatpush.msra.mxu0 %v59
  %3625 = vmatpush.msra.mxu0 %v53
  %3626 = vmatpush.msra.mxu0 %v47
  %3627 = vmatmul.f32.gmra.mxu0 %v2826
  %v3628 = vpop.f32.mrf.mxu0
  %v3629 = vadd.f32 0.0, %v3628
  %3630 = vdwg.mxu0
  %3631 = vmatpush.msra.mxu0 %v233
  %3632 = vmatpush.msra.mxu0 %v227
  %3633 = vmatpush.msra.mxu0 %v221
  %3634 = vmatpush.msra.mxu0 %v215
  %3635 = vmatpush.msra.mxu0 %v209
  %3636 = vmatpush.msra.mxu0 %v203
  %3637 = vmatpush.msra.mxu0 %v197
  %3638 = vmatpush.msra.mxu0 %v191
  %3639 = vmatpush.msra.mxu0 %v185
  %3640 = vmatpush.msra.mxu0 %v179
  %3641 = vmatpush.msra.mxu0 %v173
  %3642 = vmatpush.msra.mxu0 %v167
  %3643 = vmatpush.msra.mxu0 %v161
  %3644 = vmatpush.msra.mxu0 %v155
  %3645 = vmatpush.msra.mxu0 %v149
  %3646 = vmatpush.msra.mxu0 %v143
  %3647 = vmatmul.f32.gmra.mxu0 %v2827
  %v3648 = vpop.f32.mrf.mxu0
  %v3649 = vadd.f32 %v3629, %v3648
  %3650 = vdwg.mxu0
  %v3651 = vadd.f32 %v3405, %v3449
  %v3652 = vadd.f32 %v3406, %v3489
  %v3653 = vxor.u32 %v3651, 2147483648
  %v3654 = vxor.u32 %v3652, 2147483648
  %v3655 = vmul.f32 %v3653, 1.442695
  %v3656 = vpow.pop %v3655
  %v3657 = vmul.f32 %v3654, 1.442695
  %v3658 = vpow.pop %v3657
  %v3659 = vadd.f32 %v3656, 1.0
  %v3660 = vadd.f32 %v3658, 1.0
  %v3661 = vrcp.pop %v3659
  %v3662 = vmul.f32 %v3659, %v3661
  %v3663 = vsub.f32 1.0, %v3662
  %v3664 = vmul.f32 %v3661, %v3663
  %v3665 = vadd.f32 %v3661, %v3664
  %vm3666 = vweird.f32 %v3659
  %vm3667 = vweird.f32 %v3661
  %vm3668 = vmor %vm3666, %vm3667
  %v3669 = vsel %vm3668, %v3661, %v3665
  %v3670 = vand.u32 2147483647, %v3659
  %vm3671 = vcmp.eq.f32.partialorder %v3670, 8.507059e+37
  %v3672 = vand.u32 %v3659, 2147483648
  %v3673 = vor.u32 1.1754944e-38, %v3672
  %v3674 = vsel %vm3671, %v3673, %v3669
  %v3675 = vmul.f32 1.0, %v3674
  %v3676 = vrcp.pop %v3660
  %v3677 = vmul.f32 %v3660, %v3676
  %v3678 = vsub.f32 1.0, %v3677
  %v3679 = vmul.f32 %v3676, %v3678
  %v3680 = vadd.f32 %v3676, %v3679
  %vm3681 = vweird.f32 %v3660
  %vm3682 = vweird.f32 %v3676
  %vm3683 = vmor %vm3681, %vm3682
  %v3684 = vsel %vm3683, %v3676, %v3680
  %v3685 = vand.u32 2147483647, %v3660
  %vm3686 = vcmp.eq.f32.partialorder %v3685, 8.507059e+37
  %v3687 = vand.u32 %v3660, 2147483648
  %v3688 = vor.u32 1.1754944e-38, %v3687
  %v3689 = vsel %vm3686, %v3688, %v3684
  %v3690 = vmul.f32 1.0, %v3689
  %v3691 = vadd.f32 %v3407, %v3529
  %v3692 = vadd.f32 %v3408, %v3569
  %v3693 = vxor.u32 %v3691, 2147483648
  %v3694 = vxor.u32 %v3692, 2147483648
  %v3695 = vmul.f32 %v3693, 1.442695
  %v3696 = vpow.pop %v3695
  %v3697 = vmul.f32 %v3694, 1.442695
  %v3698 = vpow.pop %v3697
  %v3699 = vadd.f32 %v3696, 1.0
  %v3700 = vadd.f32 %v3698, 1.0
  %v3701 = vrcp.pop %v3699
  %v3702 = vmul.f32 %v3699, %v3701
  %v3703 = vsub.f32 1.0, %v3702
  %v3704 = vmul.f32 %v3701, %v3703
  %v3705 = vadd.f32 %v3701, %v3704
  %vm3706 = vweird.f32 %v3699
  %vm3707 = vweird.f32 %v3701
  %vm3708 = vmor %vm3706, %vm3707
  %v3709 = vsel %vm3708, %v3701, %v3705
  %v3710 = vand.u32 2147483647, %v3699
  %vm3711 = vcmp.eq.f32.partialorder %v3710, 8.507059e+37
  %v3712 = vand.u32 %v3699, 2147483648
  %v3713 = vor.u32 1.1754944e-38, %v3712
  %v3714 = vsel %vm3711, %v3713, %v3709
  %v3715 = vmul.f32 1.0, %v3714
  %v3716 = vrcp.pop %v3700
  %v3717 = vmul.f32 %v3700, %v3716
  %v3718 = vsub.f32 1.0, %v3717
  %v3719 = vmul.f32 %v3716, %v3718
  %v3720 = vadd.f32 %v3716, %v3719
  %vm3721 = vweird.f32 %v3700
  %vm3722 = vweird.f32 %v3716
  %vm3723 = vmor %vm3721, %vm3722
  %v3724 = vsel %vm3723, %v3716, %v3720
  %v3725 = vand.u32 2147483647, %v3700
  %vm3726 = vcmp.eq.f32.partialorder %v3725, 8.507059e+37
  %v3727 = vand.u32 %v3700, 2147483648
  %v3728 = vor.u32 1.1754944e-38, %v3727
  %v3729 = vsel %vm3726, %v3728, %v3724
  %v3730 = vmul.f32 1.0, %v3729
  %v3731 = vadd.f32 %v3609, %v620
  %v3732 = vadd.f32 %v3649, %v621
  %v3733 = vmul.f32 %v3675, %v3731
  %v3734 = vmul.f32 %v3690, %v3732
  %v3735 = vadd.f32 %v3409, %v3733
  %v3736 = vadd.f32 %v3410, %v3734
  %v3737 = vtanh.pop %v3735
  %v3738 = vtanh.pop %v3736
  %v3739 = vsub.f32 1.0, %v3715
  %v3740 = vsub.f32 1.0, %v3730
  %v3741 = vmul.f32 %v3739, %v3737
  %v3742 = vmul.f32 %v3740, %v3738
  %v3743 = vmul.f32 %v3715, %v2826
  %v3744 = vmul.f32 %v3730, %v2827
  %v3745 = vadd.f32 %v3741, %v3743
  %v3746 = vadd.f32 %v3742, %v3744
  %3747 = vmatpush.msra.mxu0 %v324
  %3748 = vmatpush.msra.mxu0 %v318
  %3749 = vmatpush.msra.mxu0 %v312
  %3750 = vmatpush.msra.mxu0 %v306
  %3751 = vmatpush.msra.mxu0 %v300
  %3752 = vmatpush.msra.mxu0 %v294
  %3753 = vmatpush.msra.mxu0 %v288
  %3754 = vmatpush.msra.mxu0 %v282
  %3755 = vmatpush.msra.mxu0 %v276
  %3756 = vmatpush.msra.mxu0 %v270
  %3757 = vmatpush.msra.mxu0 %v264
  %3758 = vmatpush.msra.mxu0 %v258
  %3759 = vmatpush.msra.mxu0 %v252
  %3760 = vmatpush.msra.mxu0 %v246
  %3761 = vmatpush.msra.mxu0 %v240
  %3762 = vmatpush.msra.mxu0 %v234
  %3763 = vmatmul.f32.gmra.mxu0 %v3745
  %v3764 = vpop.f32.mrf.mxu0
  %v3765 = vadd.f32 %v626, %v3764
  %3766 = vdwg.mxu0
  %3767 = vmatpush.msra.mxu0 %v420
  %3768 = vmatpush.msra.mxu0 %v414
  %3769 = vmatpush.msra.mxu0 %v408
  %3770 = vmatpush.msra.mxu0 %v402
  %3771 = vmatpush.msra.mxu0 %v396
  %3772 = vmatpush.msra.mxu0 %v390
  %3773 = vmatpush.msra.mxu0 %v384
  %3774 = vmatpush.msra.mxu0 %v378
  %3775 = vmatpush.msra.mxu0 %v372
  %3776 = vmatpush.msra.mxu0 %v366
  %3777 = vmatpush.msra.mxu0 %v360
  %3778 = vmatpush.msra.mxu0 %v354
  %3779 = vmatpush.msra.mxu0 %v348
  %3780 = vmatpush.msra.mxu0 %v342
  %3781 = vmatpush.msra.mxu0 %v336
  %3782 = vmatpush.msra.mxu0 %v330
  %3783 = vmatmul.f32.gmra.mxu0 %v3746
  %v3784 = vpop.f32.mrf.mxu0
  %v3785 = vadd.f32 %v3765, %v3784
  %3786 = vdwg.mxu0
  %3787 = vmatpush.msra.mxu0 %v325
  %3788 = vmatpush.msra.mxu0 %v319
  %3789 = vmatpush.msra.mxu0 %v313
  %3790 = vmatpush.msra.mxu0 %v307
  %3791 = vmatpush.msra.mxu0 %v301
  %3792 = vmatpush.msra.mxu0 %v295
  %3793 = vmatpush.msra.mxu0 %v289
  %3794 = vmatpush.msra.mxu0 %v283
  %3795 = vmatpush.msra.mxu0 %v277
  %3796 = vmatpush.msra.mxu0 %v271
  %3797 = vmatpush.msra.mxu0 %v265
  %3798 = vmatpush.msra.mxu0 %v259
  %3799 = vmatpush.msra.mxu0 %v253
  %3800 = vmatpush.msra.mxu0 %v247
  %3801 = vmatpush.msra.mxu0 %v241
  %3802 = vmatpush.msra.mxu0 %v235
  %3803 = vmatmul.f32.gmra.mxu0 %v3745
  %v3804 = vpop.f32.mrf.mxu0
  %v3805 = vadd.f32 %v627, %v3804
  %3806 = vdwg.mxu0
  %3807 = vmatpush.msra.mxu0 %v421
  %3808 = vmatpush.msra.mxu0 %v415
  %3809 = vmatpush.msra.mxu0 %v409
  %3810 = vmatpush.msra.mxu0 %v403
  %3811 = vmatpush.msra.mxu0 %v397
  %3812 = vmatpush.msra.mxu0 %v391
  %3813 = vmatpush.msra.mxu0 %v385
  %3814 = vmatpush.msra.mxu0 %v379
  %3815 = vmatpush.msra.mxu0 %v373
  %3816 = vmatpush.msra.mxu0 %v367
  %3817 = vmatpush.msra.mxu0 %v361
  %3818 = vmatpush.msra.mxu0 %v355
  %3819 = vmatpush.msra.mxu0 %v349
  %3820 = vmatpush.msra.mxu0 %v343
  %3821 = vmatpush.msra.mxu0 %v337
  %3822 = vmatpush.msra.mxu0 %v331
  %3823 = vmatmul.f32.gmra.mxu0 %v3746
  %v3824 = vpop.f32.mrf.mxu0
  %v3825 = vadd.f32 %v3805, %v3824
  %3826 = vdwg.mxu0
  %3827 = vmatpush.msra.mxu0 %v326
  %3828 = vmatpush.msra.mxu0 %v320
  %3829 = vmatpush.msra.mxu0 %v314
  %3830 = vmatpush.msra.mxu0 %v308
  %3831 = vmatpush.msra.mxu0 %v302
  %3832 = vmatpush.msra.mxu0 %v296
  %3833 = vmatpush.msra.mxu0 %v290
  %3834 = vmatpush.msra.mxu0 %v284
  %3835 = vmatpush.msra.mxu0 %v278
  %3836 = vmatpush.msra.mxu0 %v272
  %3837 = vmatpush.msra.mxu0 %v266
  %3838 = vmatpush.msra.mxu0 %v260
  %3839 = vmatpush.msra.mxu0 %v254
  %3840 = vmatpush.msra.mxu0 %v248
  %3841 = vmatpush.msra.mxu0 %v242
  %3842 = vmatpush.msra.mxu0 %v236
  %3843 = vmatmul.f32.gmra.mxu0 %v3745
  %v3844 = vpop.f32.mrf.mxu0
  %v3845 = vadd.f32 %v628, %v3844
  %3846 = vdwg.mxu0
  %3847 = vmatpush.msra.mxu0 %v422
  %3848 = vmatpush.msra.mxu0 %v416
  %3849 = vmatpush.msra.mxu0 %v410
  %3850 = vmatpush.msra.mxu0 %v404
  %3851 = vmatpush.msra.mxu0 %v398
  %3852 = vmatpush.msra.mxu0 %v392
  %3853 = vmatpush.msra.mxu0 %v386
  %3854 = vmatpush.msra.mxu0 %v380
  %3855 = vmatpush.msra.mxu0 %v374
  %3856 = vmatpush.msra.mxu0 %v368
  %3857 = vmatpush.msra.mxu0 %v362
  %3858 = vmatpush.msra.mxu0 %v356
  %3859 = vmatpush.msra.mxu0 %v350
  %3860 = vmatpush.msra.mxu0 %v344
  %3861 = vmatpush.msra.mxu0 %v338
  %3862 = vmatpush.msra.mxu0 %v332
  %3863 = vmatmul.f32.gmra.mxu0 %v3746
  %v3864 = vpop.f32.mrf.mxu0
  %v3865 = vadd.f32 %v3845, %v3864
  %3866 = vdwg.mxu0
  %3867 = vmatpush.msra.mxu0 %v327
  %3868 = vmatpush.msra.mxu0 %v321
  %3869 = vmatpush.msra.mxu0 %v315
  %3870 = vmatpush.msra.mxu0 %v309
  %3871 = vmatpush.msra.mxu0 %v303
  %3872 = vmatpush.msra.mxu0 %v297
  %3873 = vmatpush.msra.mxu0 %v291
  %3874 = vmatpush.msra.mxu0 %v285
  %3875 = vmatpush.msra.mxu0 %v279
  %3876 = vmatpush.msra.mxu0 %v273
  %3877 = vmatpush.msra.mxu0 %v267
  %3878 = vmatpush.msra.mxu0 %v261
  %3879 = vmatpush.msra.mxu0 %v255
  %3880 = vmatpush.msra.mxu0 %v249
  %3881 = vmatpush.msra.mxu0 %v243
  %3882 = vmatpush.msra.mxu0 %v237
  %3883 = vmatmul.f32.gmra.mxu0 %v3745
  %v3884 = vpop.f32.mrf.mxu0
  %v3885 = vadd.f32 %v629, %v3884
  %3886 = vdwg.mxu0
  %3887 = vmatpush.msra.mxu0 %v423
  %3888 = vmatpush.msra.mxu0 %v417
  %3889 = vmatpush.msra.mxu0 %v411
  %3890 = vmatpush.msra.mxu0 %v405
  %3891 = vmatpush.msra.mxu0 %v399
  %3892 = vmatpush.msra.mxu0 %v393
  %3893 = vmatpush.msra.mxu0 %v387
  %3894 = vmatpush.msra.mxu0 %v381
  %3895 = vmatpush.msra.mxu0 %v375
  %3896 = vmatpush.msra.mxu0 %v369
  %3897 = vmatpush.msra.mxu0 %v363
  %3898 = vmatpush.msra.mxu0 %v357
  %3899 = vmatpush.msra.mxu0 %v351
  %3900 = vmatpush.msra.mxu0 %v345
  %3901 = vmatpush.msra.mxu0 %v339
  %3902 = vmatpush.msra.mxu0 %v333
  %3903 = vmatmul.f32.gmra.mxu0 %v3746
  %v3904 = vpop.f32.mrf.mxu0
  %v3905 = vadd.f32 %v3885, %v3904
  %3906 = vdwg.mxu0
  %3907 = vmatpush.msra.mxu0 %v328
  %3908 = vmatpush.msra.mxu0 %v322
  %3909 = vmatpush.msra.mxu0 %v316
  %3910 = vmatpush.msra.mxu0 %v310
  %3911 = vmatpush.msra.mxu0 %v304
  %3912 = vmatpush.msra.mxu0 %v298
  %3913 = vmatpush.msra.mxu0 %v292
  %3914 = vmatpush.msra.mxu0 %v286
  %3915 = vmatpush.msra.mxu0 %v280
  %3916 = vmatpush.msra.mxu0 %v274
  %3917 = vmatpush.msra.mxu0 %v268
  %3918 = vmatpush.msra.mxu0 %v262
  %3919 = vmatpush.msra.mxu0 %v256
  %3920 = vmatpush.msra.mxu0 %v250
  %3921 = vmatpush.msra.mxu0 %v244
  %3922 = vmatpush.msra.mxu0 %v238
  %3923 = vmatmul.f32.gmra.mxu0 %v3745
  %v3924 = vpop.f32.mrf.mxu0
  %v3925 = vadd.f32 %v630, %v3924
  %3926 = vdwg.mxu0
  %3927 = vmatpush.msra.mxu0 %v424
  %3928 = vmatpush.msra.mxu0 %v418
  %3929 = vmatpush.msra.mxu0 %v412
  %3930 = vmatpush.msra.mxu0 %v406
  %3931 = vmatpush.msra.mxu0 %v400
  %3932 = vmatpush.msra.mxu0 %v394
  %3933 = vmatpush.msra.mxu0 %v388
  %3934 = vmatpush.msra.mxu0 %v382
  %3935 = vmatpush.msra.mxu0 %v376
  %3936 = vmatpush.msra.mxu0 %v370
  %3937 = vmatpush.msra.mxu0 %v364
  %3938 = vmatpush.msra.mxu0 %v358
  %3939 = vmatpush.msra.mxu0 %v352
  %3940 = vmatpush.msra.mxu0 %v346
  %3941 = vmatpush.msra.mxu0 %v340
  %3942 = vmatpush.msra.mxu0 %v334
  %3943 = vmatmul.f32.gmra.mxu0 %v3746
  %v3944 = vpop.f32.mrf.mxu0
  %v3945 = vadd.f32 %v3925, %v3944
  %3946 = vdwg.mxu0
  %3947 = vmatpush.msra.mxu0 %v329
  %3948 = vmatpush.msra.mxu0 %v323
  %3949 = vmatpush.msra.mxu0 %v317
  %3950 = vmatpush.msra.mxu0 %v311
  %3951 = vmatpush.msra.mxu0 %v305
  %3952 = vmatpush.msra.mxu0 %v299
  %3953 = vmatpush.msra.mxu0 %v293
  %3954 = vmatpush.msra.mxu0 %v287
  %3955 = vmatpush.msra.mxu0 %v281
  %3956 = vmatpush.msra.mxu0 %v275
  %3957 = vmatpush.msra.mxu0 %v269
  %3958 = vmatpush.msra.mxu0 %v263
  %3959 = vmatpush.msra.mxu0 %v257
  %3960 = vmatpush.msra.mxu0 %v251
  %3961 = vmatpush.msra.mxu0 %v245
  %3962 = vmatpush.msra.mxu0 %v239
  %3963 = vmatmul.f32.gmra.mxu0 %v3745
  %v3964 = vpop.f32.mrf.mxu0
  %v3965 = vadd.f32 %v631, %v3964
  %3966 = vdwg.mxu0
  %3967 = vmatpush.msra.mxu0 %v425
  %3968 = vmatpush.msra.mxu0 %v419
  %3969 = vmatpush.msra.mxu0 %v413
  %3970 = vmatpush.msra.mxu0 %v407
  %3971 = vmatpush.msra.mxu0 %v401
  %3972 = vmatpush.msra.mxu0 %v395
  %3973 = vmatpush.msra.mxu0 %v389
  %3974 = vmatpush.msra.mxu0 %v383
  %3975 = vmatpush.msra.mxu0 %v377
  %3976 = vmatpush.msra.mxu0 %v371
  %3977 = vmatpush.msra.mxu0 %v365
  %3978 = vmatpush.msra.mxu0 %v359
  %3979 = vmatpush.msra.mxu0 %v353
  %3980 = vmatpush.msra.mxu0 %v347
  %3981 = vmatpush.msra.mxu0 %v341
  %3982 = vmatpush.msra.mxu0 %v335
  %3983 = vmatmul.f32.gmra.mxu0 %v3746
  %v3984 = vpop.f32.mrf.mxu0
  %v3985 = vadd.f32 %v3965, %v3984
  %3986 = vdwg.mxu0
  %3987 = vmatpush.msra.mxu0 %v516
  %3988 = vmatpush.msra.mxu0 %v510
  %3989 = vmatpush.msra.mxu0 %v504
  %3990 = vmatpush.msra.mxu0 %v498
  %3991 = vmatpush.msra.mxu0 %v492
  %3992 = vmatpush.msra.mxu0 %v486
  %3993 = vmatpush.msra.mxu0 %v480
  %3994 = vmatpush.msra.mxu0 %v474
  %3995 = vmatpush.msra.mxu0 %v468
  %3996 = vmatpush.msra.mxu0 %v462
  %3997 = vmatpush.msra.mxu0 %v456
  %3998 = vmatpush.msra.mxu0 %v450
  %3999 = vmatpush.msra.mxu0 %v444
  %4000 = vmatpush.msra.mxu0 %v438
  %4001 = vmatpush.msra.mxu0 %v432
  %4002 = vmatpush.msra.mxu0 %v426
  %4003 = vmatmul.f32.gmra.mxu0 %v3402
  %v4004 = vpop.f32.mrf.mxu0
  %v4005 = vadd.f32 0.0, %v4004
  %4006 = vdwg.mxu0
  %4007 = vmatpush.msra.mxu0 %v612
  %4008 = vmatpush.msra.mxu0 %v606
  %4009 = vmatpush.msra.mxu0 %v600
  %4010 = vmatpush.msra.mxu0 %v594
  %4011 = vmatpush.msra.mxu0 %v588
  %4012 = vmatpush.msra.mxu0 %v582
  %4013 = vmatpush.msra.mxu0 %v576
  %4014 = vmatpush.msra.mxu0 %v570
  %4015 = vmatpush.msra.mxu0 %v564
  %4016 = vmatpush.msra.mxu0 %v558
  %4017 = vmatpush.msra.mxu0 %v552
  %4018 = vmatpush.msra.mxu0 %v546
  %4019 = vmatpush.msra.mxu0 %v540
  %4020 = vmatpush.msra.mxu0 %v534
  %4021 = vmatpush.msra.mxu0 %v528
  %4022 = vmatpush.msra.mxu0 %v522
  %4023 = vmatmul.f32.gmra.mxu0 %v3403
  %v4024 = vpop.f32.mrf.mxu0
  %v4025 = vadd.f32 %v4005, %v4024
  %4026 = vdwg.mxu0
  %4027 = vmatpush.msra.mxu0 %v517
  %4028 = vmatpush.msra.mxu0 %v511
  %4029 = vmatpush.msra.mxu0 %v505
  %4030 = vmatpush.msra.mxu0 %v499
  %4031 = vmatpush.msra.mxu0 %v493
  %4032 = vmatpush.msra.mxu0 %v487
  %4033 = vmatpush.msra.mxu0 %v481
  %4034 = vmatpush.msra.mxu0 %v475
  %4035 = vmatpush.msra.mxu0 %v469
  %4036 = vmatpush.msra.mxu0 %v463
  %4037 = vmatpush.msra.mxu0 %v457
  %4038 = vmatpush.msra.mxu0 %v451
  %4039 = vmatpush.msra.mxu0 %v445
  %4040 = vmatpush.msra.mxu0 %v439
  %4041 = vmatpush.msra.mxu0 %v433
  %4042 = vmatpush.msra.mxu0 %v427
  %4043 = vmatmul.f32.gmra.mxu0 %v3402
  %v4044 = vpop.f32.mrf.mxu0
  %v4045 = vadd.f32 0.0, %v4044
  %4046 = vdwg.mxu0
  %4047 = vmatpush.msra.mxu0 %v613
  %4048 = vmatpush.msra.mxu0 %v607
  %4049 = vmatpush.msra.mxu0 %v601
  %4050 = vmatpush.msra.mxu0 %v595
  %4051 = vmatpush.msra.mxu0 %v589
  %4052 = vmatpush.msra.mxu0 %v583
  %4053 = vmatpush.msra.mxu0 %v577
  %4054 = vmatpush.msra.mxu0 %v571
  %4055 = vmatpush.msra.mxu0 %v565
  %4056 = vmatpush.msra.mxu0 %v559
  %4057 = vmatpush.msra.mxu0 %v553
  %4058 = vmatpush.msra.mxu0 %v547
  %4059 = vmatpush.msra.mxu0 %v541
  %4060 = vmatpush.msra.mxu0 %v535
  %4061 = vmatpush.msra.mxu0 %v529
  %4062 = vmatpush.msra.mxu0 %v523
  %4063 = vmatmul.f32.gmra.mxu0 %v3403
  %v4064 = vpop.f32.mrf.mxu0
  %v4065 = vadd.f32 %v4045, %v4064
  %4066 = vdwg.mxu0
  %4067 = vmatpush.msra.mxu0 %v518
  %4068 = vmatpush.msra.mxu0 %v512
  %4069 = vmatpush.msra.mxu0 %v506
  %4070 = vmatpush.msra.mxu0 %v500
  %4071 = vmatpush.msra.mxu0 %v494
  %4072 = vmatpush.msra.mxu0 %v488
  %4073 = vmatpush.msra.mxu0 %v482
  %4074 = vmatpush.msra.mxu0 %v476
  %4075 = vmatpush.msra.mxu0 %v470
  %4076 = vmatpush.msra.mxu0 %v464
  %4077 = vmatpush.msra.mxu0 %v458
  %4078 = vmatpush.msra.mxu0 %v452
  %4079 = vmatpush.msra.mxu0 %v446
  %4080 = vmatpush.msra.mxu0 %v440
  %4081 = vmatpush.msra.mxu0 %v434
  %4082 = vmatpush.msra.mxu0 %v428
  %4083 = vmatmul.f32.gmra.mxu0 %v3402
  %v4084 = vpop.f32.mrf.mxu0
  %v4085 = vadd.f32 0.0, %v4084
  %4086 = vdwg.mxu0
  %4087 = vmatpush.msra.mxu0 %v614
  %4088 = vmatpush.msra.mxu0 %v608
  %4089 = vmatpush.msra.mxu0 %v602
  %4090 = vmatpush.msra.mxu0 %v596
  %4091 = vmatpush.msra.mxu0 %v590
  %4092 = vmatpush.msra.mxu0 %v584
  %4093 = vmatpush.msra.mxu0 %v578
  %4094 = vmatpush.msra.mxu0 %v572
  %4095 = vmatpush.msra.mxu0 %v566
  %4096 = vmatpush.msra.mxu0 %v560
  %4097 = vmatpush.msra.mxu0 %v554
  %4098 = vmatpush.msra.mxu0 %v548
  %4099 = vmatpush.msra.mxu0 %v542
  %4100 = vmatpush.msra.mxu0 %v536
  %4101 = vmatpush.msra.mxu0 %v530
  %4102 = vmatpush.msra.mxu0 %v524
  %4103 = vmatmul.f32.gmra.mxu0 %v3403
  %v4104 = vpop.f32.mrf.mxu0
  %v4105 = vadd.f32 %v4085, %v4104
  %4106 = vdwg.mxu0
  %4107 = vmatpush.msra.mxu0 %v519
  %4108 = vmatpush.msra.mxu0 %v513
  %4109 = vmatpush.msra.mxu0 %v507
  %4110 = vmatpush.msra.mxu0 %v501
  %4111 = vmatpush.msra.mxu0 %v495
  %4112 = vmatpush.msra.mxu0 %v489
  %4113 = vmatpush.msra.mxu0 %v483
  %4114 = vmatpush.msra.mxu0 %v477
  %4115 = vmatpush.msra.mxu0 %v471
  %4116 = vmatpush.msra.mxu0 %v465
  %4117 = vmatpush.msra.mxu0 %v459
  %4118 = vmatpush.msra.mxu0 %v453
  %4119 = vmatpush.msra.mxu0 %v447
  %4120 = vmatpush.msra.mxu0 %v441
  %4121 = vmatpush.msra.mxu0 %v435
  %4122 = vmatpush.msra.mxu0 %v429
  %4123 = vmatmul.f32.gmra.mxu0 %v3402
  %v4124 = vpop.f32.mrf.mxu0
  %v4125 = vadd.f32 0.0, %v4124
  %4126 = vdwg.mxu0
  %4127 = vmatpush.msra.mxu0 %v615
  %4128 = vmatpush.msra.mxu0 %v609
  %4129 = vmatpush.msra.mxu0 %v603
  %4130 = vmatpush.msra.mxu0 %v597
  %4131 = vmatpush.msra.mxu0 %v591
  %4132 = vmatpush.msra.mxu0 %v585
  %4133 = vmatpush.msra.mxu0 %v579
  %4134 = vmatpush.msra.mxu0 %v573
  %4135 = vmatpush.msra.mxu0 %v567
  %4136 = vmatpush.msra.mxu0 %v561
  %4137 = vmatpush.msra.mxu0 %v555
  %4138 = vmatpush.msra.mxu0 %v549
  %4139 = vmatpush.msra.mxu0 %v543
  %4140 = vmatpush.msra.mxu0 %v537
  %4141 = vmatpush.msra.mxu0 %v531
  %4142 = vmatpush.msra.mxu0 %v525
  %4143 = vmatmul.f32.gmra.mxu0 %v3403
  %v4144 = vpop.f32.mrf.mxu0
  %v4145 = vadd.f32 %v4125, %v4144
  %4146 = vdwg.mxu0
  %4147 = vmatpush.msra.mxu0 %v520
  %4148 = vmatpush.msra.mxu0 %v514
  %4149 = vmatpush.msra.mxu0 %v508
  %4150 = vmatpush.msra.mxu0 %v502
  %4151 = vmatpush.msra.mxu0 %v496
  %4152 = vmatpush.msra.mxu0 %v490
  %4153 = vmatpush.msra.mxu0 %v484
  %4154 = vmatpush.msra.mxu0 %v478
  %4155 = vmatpush.msra.mxu0 %v472
  %4156 = vmatpush.msra.mxu0 %v466
  %4157 = vmatpush.msra.mxu0 %v460
  %4158 = vmatpush.msra.mxu0 %v454
  %4159 = vmatpush.msra.mxu0 %v448
  %4160 = vmatpush.msra.mxu0 %v442
  %4161 = vmatpush.msra.mxu0 %v436
  %4162 = vmatpush.msra.mxu0 %v430
  %4163 = vmatmul.f32.gmra.mxu0 %v3402
  %v4164 = vpop.f32.mrf.mxu0
  %v4165 = vadd.f32 0.0, %v4164
  %4166 = vdwg.mxu0
  %4167 = vmatpush.msra.mxu0 %v616
  %4168 = vmatpush.msra.mxu0 %v610
  %4169 = vmatpush.msra.mxu0 %v604
  %4170 = vmatpush.msra.mxu0 %v598
  %4171 = vmatpush.msra.mxu0 %v592
  %4172 = vmatpush.msra.mxu0 %v586
  %4173 = vmatpush.msra.mxu0 %v580
  %4174 = vmatpush.msra.mxu0 %v574
  %4175 = vmatpush.msra.mxu0 %v568
  %4176 = vmatpush.msra.mxu0 %v562
  %4177 = vmatpush.msra.mxu0 %v556
  %4178 = vmatpush.msra.mxu0 %v550
  %4179 = vmatpush.msra.mxu0 %v544
  %4180 = vmatpush.msra.mxu0 %v538
  %4181 = vmatpush.msra.mxu0 %v532
  %4182 = vmatpush.msra.mxu0 %v526
  %4183 = vmatmul.f32.gmra.mxu0 %v3403
  %v4184 = vpop.f32.mrf.mxu0
  %v4185 = vadd.f32 %v4165, %v4184
  %4186 = vdwg.mxu0
  %4187 = vmatpush.msra.mxu0 %v521
  %4188 = vmatpush.msra.mxu0 %v515
  %4189 = vmatpush.msra.mxu0 %v509
  %4190 = vmatpush.msra.mxu0 %v503
  %4191 = vmatpush.msra.mxu0 %v497
  %4192 = vmatpush.msra.mxu0 %v491
  %4193 = vmatpush.msra.mxu0 %v485
  %4194 = vmatpush.msra.mxu0 %v479
  %4195 = vmatpush.msra.mxu0 %v473
  %4196 = vmatpush.msra.mxu0 %v467
  %4197 = vmatpush.msra.mxu0 %v461
  %4198 = vmatpush.msra.mxu0 %v455
  %4199 = vmatpush.msra.mxu0 %v449
  %4200 = vmatpush.msra.mxu0 %v443
  %4201 = vmatpush.msra.mxu0 %v437
  %4202 = vmatpush.msra.mxu0 %v431
  %4203 = vmatmul.f32.gmra.mxu0 %v3402
  %v4204 = vpop.f32.mrf.mxu0
  %v4205 = vadd.f32 0.0, %v4204
  %4206 = vdwg.mxu0
  %4207 = vmatpush.msra.mxu0 %v617
  %4208 = vmatpush.msra.mxu0 %v611
  %4209 = vmatpush.msra.mxu0 %v605
  %4210 = vmatpush.msra.mxu0 %v599
  %4211 = vmatpush.msra.mxu0 %v593
  %4212 = vmatpush.msra.mxu0 %v587
  %4213 = vmatpush.msra.mxu0 %v581
  %4214 = vmatpush.msra.mxu0 %v575
  %4215 = vmatpush.msra.mxu0 %v569
  %4216 = vmatpush.msra.mxu0 %v563
  %4217 = vmatpush.msra.mxu0 %v557
  %4218 = vmatpush.msra.mxu0 %v551
  %4219 = vmatpush.msra.mxu0 %v545
  %4220 = vmatpush.msra.mxu0 %v539
  %4221 = vmatpush.msra.mxu0 %v533
  %4222 = vmatpush.msra.mxu0 %v527
  %4223 = vmatmul.f32.gmra.mxu0 %v3403
  %v4224 = vpop.f32.mrf.mxu0
  %v4225 = vadd.f32 %v4205, %v4224
  %4226 = vdwg.mxu0
  %v4227 = vadd.f32 %v3785, %v4025
  %v4228 = vadd.f32 %v3825, %v4065
  %v4229 = vxor.u32 %v4227, 2147483648
  %v4230 = vxor.u32 %v4228, 2147483648
  %v4231 = vmul.f32 %v4229, 1.442695
  %v4232 = vpow.pop %v4231
  %v4233 = vmul.f32 %v4230, 1.442695
  %v4234 = vpow.pop %v4233
  %v4235 = vadd.f32 %v4232, 1.0
  %v4236 = vadd.f32 %v4234, 1.0
  %v4237 = vrcp.pop %v4235
  %v4238 = vmul.f32 %v4235, %v4237
  %v4239 = vsub.f32 1.0, %v4238
  %v4240 = vmul.f32 %v4237, %v4239
  %v4241 = vadd.f32 %v4237, %v4240
  %vm4242 = vweird.f32 %v4235
  %vm4243 = vweird.f32 %v4237
  %vm4244 = vmor %vm4242, %vm4243
  %v4245 = vsel %vm4244, %v4237, %v4241
  %v4246 = vand.u32 2147483647, %v4235
  %vm4247 = vcmp.eq.f32.partialorder %v4246, 8.507059e+37
  %v4248 = vand.u32 %v4235, 2147483648
  %v4249 = vor.u32 1.1754944e-38, %v4248
  %v4250 = vsel %vm4247, %v4249, %v4245
  %v4251 = vmul.f32 1.0, %v4250
  %v4252 = vrcp.pop %v4236
  %v4253 = vmul.f32 %v4236, %v4252
  %v4254 = vsub.f32 1.0, %v4253
  %v4255 = vmul.f32 %v4252, %v4254
  %v4256 = vadd.f32 %v4252, %v4255
  %vm4257 = vweird.f32 %v4236
  %vm4258 = vweird.f32 %v4252
  %vm4259 = vmor %vm4257, %vm4258
  %v4260 = vsel %vm4259, %v4252, %v4256
  %v4261 = vand.u32 2147483647, %v4236
  %vm4262 = vcmp.eq.f32.partialorder %v4261, 8.507059e+37
  %v4263 = vand.u32 %v4236, 2147483648
  %v4264 = vor.u32 1.1754944e-38, %v4263
  %v4265 = vsel %vm4262, %v4264, %v4260
  %v4266 = vmul.f32 1.0, %v4265
  %v4267 = vadd.f32 %v3865, %v4105
  %v4268 = vadd.f32 %v3905, %v4145
  %v4269 = vxor.u32 %v4267, 2147483648
  %v4270 = vxor.u32 %v4268, 2147483648
  %v4271 = vmul.f32 %v4269, 1.442695
  %v4272 = vpow.pop %v4271
  %v4273 = vmul.f32 %v4270, 1.442695
  %v4274 = vpow.pop %v4273
  %v4275 = vadd.f32 %v4272, 1.0
  %v4276 = vadd.f32 %v4274, 1.0
  %v4277 = vrcp.pop %v4275
  %v4278 = vmul.f32 %v4275, %v4277
  %v4279 = vsub.f32 1.0, %v4278
  %v4280 = vmul.f32 %v4277, %v4279
  %v4281 = vadd.f32 %v4277, %v4280
  %vm4282 = vweird.f32 %v4275
  %vm4283 = vweird.f32 %v4277
  %vm4284 = vmor %vm4282, %vm4283
  %v4285 = vsel %vm4284, %v4277, %v4281
  %v4286 = vand.u32 2147483647, %v4275
  %vm4287 = vcmp.eq.f32.partialorder %v4286, 8.507059e+37
  %v4288 = vand.u32 %v4275, 2147483648
  %v4289 = vor.u32 1.1754944e-38, %v4288
  %v4290 = vsel %vm4287, %v4289, %v4285
  %v4291 = vmul.f32 1.0, %v4290
  %v4292 = vrcp.pop %v4276
  %v4293 = vmul.f32 %v4276, %v4292
  %v4294 = vsub.f32 1.0, %v4293
  %v4295 = vmul.f32 %v4292, %v4294
  %v4296 = vadd.f32 %v4292, %v4295
  %vm4297 = vweird.f32 %v4276
  %vm4298 = vweird.f32 %v4292
  %vm4299 = vmor %vm4297, %vm4298
  %v4300 = vsel %vm4299, %v4292, %v4296
  %v4301 = vand.u32 2147483647, %v4276
  %vm4302 = vcmp.eq.f32.partialorder %v4301, 8.507059e+37
  %v4303 = vand.u32 %v4276, 2147483648
  %v4304 = vor.u32 1.1754944e-38, %v4303
  %v4305 = vsel %vm4302, %v4304, %v4300
  %v4306 = vmul.f32 1.0, %v4305
  %v4307 = vadd.f32 %v4185, %v640
  %v4308 = vadd.f32 %v4225, %v641
  %v4309 = vmul.f32 %v4251, %v4307
  %v4310 = vmul.f32 %v4266, %v4308
  %v4311 = vadd.f32 %v3945, %v4309
  %v4312 = vadd.f32 %v3985, %v4310
  %v4313 = vtanh.pop %v4311
  %v4314 = vtanh.pop %v4312
  %v4315 = vsub.f32 1.0, %v4291
  %v4316 = vsub.f32 1.0, %v4306
  %v4317 = vmul.f32 %v4315, %v4313
  %v4318 = vmul.f32 %v4316, %v4314
  %v4319 = vmul.f32 %v4291, %v3402
  %v4320 = vmul.f32 %v4306, %v3403
  %v4321 = vadd.f32 %v4317, %v4319
  %v4322 = vadd.f32 %v4318, %v4320
  %s4323 = scalar_lea.vmem %s0, 192
  %v4324 = vld [vmem:[%s4323] sm:$0xff]
  %v4325 = vld [vmem:[%s4323 + $0x8] sm:$0xff]
  %v4326 = vld [vmem:[%s4323 + $0x10] sm:$0xff]
  %v4327 = vld [vmem:[%s4323 + $0x18] sm:$0xff]
  %v4328 = vld [vmem:[%s4323 + $0x20] sm:$0xff]
  %v4329 = vld [vmem:[%s4323 + $0x28] sm:$0xff]
  %4330 = vmatpush.msra.mxu0 %v132
  %4331 = vmatpush.msra.mxu0 %v126
  %4332 = vmatpush.msra.mxu0 %v120
  %4333 = vmatpush.msra.mxu0 %v114
  %4334 = vmatpush.msra.mxu0 %v108
  %4335 = vmatpush.msra.mxu0 %v102
  %4336 = vmatpush.msra.mxu0 %v96
  %4337 = vmatpush.msra.mxu0 %v90
  %4338 = vmatpush.msra.mxu0 %v84
  %4339 = vmatpush.msra.mxu0 %v78
  %4340 = vmatpush.msra.mxu0 %v72
  %4341 = vmatpush.msra.mxu0 %v66
  %4342 = vmatpush.msra.mxu0 %v60
  %4343 = vmatpush.msra.mxu0 %v54
  %4344 = vmatpush.msra.mxu0 %v48
  %4345 = vmatpush.msra.mxu0 %v42
  %4346 = vmatmul.f32.gmra.mxu0 %v3745
  %v4347 = vpop.f32.mrf.mxu0
  %v4348 = vadd.f32 0.0, %v4347
  %4349 = vdwg.mxu0
  %4350 = vmatpush.msra.mxu0 %v228
  %4351 = vmatpush.msra.mxu0 %v222
  %4352 = vmatpush.msra.mxu0 %v216
  %4353 = vmatpush.msra.mxu0 %v210
  %4354 = vmatpush.msra.mxu0 %v204
  %4355 = vmatpush.msra.mxu0 %v198
  %4356 = vmatpush.msra.mxu0 %v192
  %4357 = vmatpush.msra.mxu0 %v186
  %4358 = vmatpush.msra.mxu0 %v180
  %4359 = vmatpush.msra.mxu0 %v174
  %4360 = vmatpush.msra.mxu0 %v168
  %4361 = vmatpush.msra.mxu0 %v162
  %4362 = vmatpush.msra.mxu0 %v156
  %4363 = vmatpush.msra.mxu0 %v150
  %4364 = vmatpush.msra.mxu0 %v144
  %4365 = vmatpush.msra.mxu0 %v138
  %4366 = vmatmul.f32.gmra.mxu0 %v3746
  %v4367 = vpop.f32.mrf.mxu0
  %v4368 = vadd.f32 %v4348, %v4367
  %4369 = vdwg.mxu0
  %4370 = vmatpush.msra.mxu0 %v133
  %4371 = vmatpush.msra.mxu0 %v127
  %4372 = vmatpush.msra.mxu0 %v121
  %4373 = vmatpush.msra.mxu0 %v115
  %4374 = vmatpush.msra.mxu0 %v109
  %4375 = vmatpush.msra.mxu0 %v103
  %4376 = vmatpush.msra.mxu0 %v97
  %4377 = vmatpush.msra.mxu0 %v91
  %4378 = vmatpush.msra.mxu0 %v85
  %4379 = vmatpush.msra.mxu0 %v79
  %4380 = vmatpush.msra.mxu0 %v73
  %4381 = vmatpush.msra.mxu0 %v67
  %4382 = vmatpush.msra.mxu0 %v61
  %4383 = vmatpush.msra.mxu0 %v55
  %4384 = vmatpush.msra.mxu0 %v49
  %4385 = vmatpush.msra.mxu0 %v43
  %4386 = vmatmul.f32.gmra.mxu0 %v3745
  %v4387 = vpop.f32.mrf.mxu0
  %v4388 = vadd.f32 0.0, %v4387
  %4389 = vdwg.mxu0
  %4390 = vmatpush.msra.mxu0 %v229
  %4391 = vmatpush.msra.mxu0 %v223
  %4392 = vmatpush.msra.mxu0 %v217
  %4393 = vmatpush.msra.mxu0 %v211
  %4394 = vmatpush.msra.mxu0 %v205
  %4395 = vmatpush.msra.mxu0 %v199
  %4396 = vmatpush.msra.mxu0 %v193
  %4397 = vmatpush.msra.mxu0 %v187
  %4398 = vmatpush.msra.mxu0 %v181
  %4399 = vmatpush.msra.mxu0 %v175
  %4400 = vmatpush.msra.mxu0 %v169
  %4401 = vmatpush.msra.mxu0 %v163
  %4402 = vmatpush.msra.mxu0 %v157
  %4403 = vmatpush.msra.mxu0 %v151
  %4404 = vmatpush.msra.mxu0 %v145
  %4405 = vmatpush.msra.mxu0 %v139
  %4406 = vmatmul.f32.gmra.mxu0 %v3746
  %v4407 = vpop.f32.mrf.mxu0
  %v4408 = vadd.f32 %v4388, %v4407
  %4409 = vdwg.mxu0
  %4410 = vmatpush.msra.mxu0 %v134
  %4411 = vmatpush.msra.mxu0 %v128
  %4412 = vmatpush.msra.mxu0 %v122
  %4413 = vmatpush.msra.mxu0 %v116
  %4414 = vmatpush.msra.mxu0 %v110
  %4415 = vmatpush.msra.mxu0 %v104
  %4416 = vmatpush.msra.mxu0 %v98
  %4417 = vmatpush.msra.mxu0 %v92
  %4418 = vmatpush.msra.mxu0 %v86
  %4419 = vmatpush.msra.mxu0 %v80
  %4420 = vmatpush.msra.mxu0 %v74
  %4421 = vmatpush.msra.mxu0 %v68
  %4422 = vmatpush.msra.mxu0 %v62
  %4423 = vmatpush.msra.mxu0 %v56
  %4424 = vmatpush.msra.mxu0 %v50
  %4425 = vmatpush.msra.mxu0 %v44
  %4426 = vmatmul.f32.gmra.mxu0 %v3745
  %v4427 = vpop.f32.mrf.mxu0
  %v4428 = vadd.f32 0.0, %v4427
  %4429 = vdwg.mxu0
  %4430 = vmatpush.msra.mxu0 %v230
  %4431 = vmatpush.msra.mxu0 %v224
  %4432 = vmatpush.msra.mxu0 %v218
  %4433 = vmatpush.msra.mxu0 %v212
  %4434 = vmatpush.msra.mxu0 %v206
  %4435 = vmatpush.msra.mxu0 %v200
  %4436 = vmatpush.msra.mxu0 %v194
  %4437 = vmatpush.msra.mxu0 %v188
  %4438 = vmatpush.msra.mxu0 %v182
  %4439 = vmatpush.msra.mxu0 %v176
  %4440 = vmatpush.msra.mxu0 %v170
  %4441 = vmatpush.msra.mxu0 %v164
  %4442 = vmatpush.msra.mxu0 %v158
  %4443 = vmatpush.msra.mxu0 %v152
  %4444 = vmatpush.msra.mxu0 %v146
  %4445 = vmatpush.msra.mxu0 %v140
  %4446 = vmatmul.f32.gmra.mxu0 %v3746
  %v4447 = vpop.f32.mrf.mxu0
  %v4448 = vadd.f32 %v4428, %v4447
  %4449 = vdwg.mxu0
  %4450 = vmatpush.msra.mxu0 %v135
  %4451 = vmatpush.msra.mxu0 %v129
  %4452 = vmatpush.msra.mxu0 %v123
  %4453 = vmatpush.msra.mxu0 %v117
  %4454 = vmatpush.msra.mxu0 %v111
  %4455 = vmatpush.msra.mxu0 %v105
  %4456 = vmatpush.msra.mxu0 %v99
  %4457 = vmatpush.msra.mxu0 %v93
  %4458 = vmatpush.msra.mxu0 %v87
  %4459 = vmatpush.msra.mxu0 %v81
  %4460 = vmatpush.msra.mxu0 %v75
  %4461 = vmatpush.msra.mxu0 %v69
  %4462 = vmatpush.msra.mxu0 %v63
  %4463 = vmatpush.msra.mxu0 %v57
  %4464 = vmatpush.msra.mxu0 %v51
  %4465 = vmatpush.msra.mxu0 %v45
  %4466 = vmatmul.f32.gmra.mxu0 %v3745
  %v4467 = vpop.f32.mrf.mxu0
  %v4468 = vadd.f32 0.0, %v4467
  %4469 = vdwg.mxu0
  %4470 = vmatpush.msra.mxu0 %v231
  %4471 = vmatpush.msra.mxu0 %v225
  %4472 = vmatpush.msra.mxu0 %v219
  %4473 = vmatpush.msra.mxu0 %v213
  %4474 = vmatpush.msra.mxu0 %v207
  %4475 = vmatpush.msra.mxu0 %v201
  %4476 = vmatpush.msra.mxu0 %v195
  %4477 = vmatpush.msra.mxu0 %v189
  %4478 = vmatpush.msra.mxu0 %v183
  %4479 = vmatpush.msra.mxu0 %v177
  %4480 = vmatpush.msra.mxu0 %v171
  %4481 = vmatpush.msra.mxu0 %v165
  %4482 = vmatpush.msra.mxu0 %v159
  %4483 = vmatpush.msra.mxu0 %v153
  %4484 = vmatpush.msra.mxu0 %v147
  %4485 = vmatpush.msra.mxu0 %v141
  %4486 = vmatmul.f32.gmra.mxu0 %v3746
  %v4487 = vpop.f32.mrf.mxu0
  %v4488 = vadd.f32 %v4468, %v4487
  %4489 = vdwg.mxu0
  %4490 = vmatpush.msra.mxu0 %v136
  %4491 = vmatpush.msra.mxu0 %v130
  %4492 = vmatpush.msra.mxu0 %v124
  %4493 = vmatpush.msra.mxu0 %v118
  %4494 = vmatpush.msra.mxu0 %v112
  %4495 = vmatpush.msra.mxu0 %v106
  %4496 = vmatpush.msra.mxu0 %v100
  %4497 = vmatpush.msra.mxu0 %v94
  %4498 = vmatpush.msra.mxu0 %v88
  %4499 = vmatpush.msra.mxu0 %v82
  %4500 = vmatpush.msra.mxu0 %v76
  %4501 = vmatpush.msra.mxu0 %v70
  %4502 = vmatpush.msra.mxu0 %v64
  %4503 = vmatpush.msra.mxu0 %v58
  %4504 = vmatpush.msra.mxu0 %v52
  %4505 = vmatpush.msra.mxu0 %v46
  %4506 = vmatmul.f32.gmra.mxu0 %v3745
  %v4507 = vpop.f32.mrf.mxu0
  %v4508 = vadd.f32 0.0, %v4507
  %4509 = vdwg.mxu0
  %4510 = vmatpush.msra.mxu0 %v232
  %4511 = vmatpush.msra.mxu0 %v226
  %4512 = vmatpush.msra.mxu0 %v220
  %4513 = vmatpush.msra.mxu0 %v214
  %4514 = vmatpush.msra.mxu0 %v208
  %4515 = vmatpush.msra.mxu0 %v202
  %4516 = vmatpush.msra.mxu0 %v196
  %4517 = vmatpush.msra.mxu0 %v190
  %4518 = vmatpush.msra.mxu0 %v184
  %4519 = vmatpush.msra.mxu0 %v178
  %4520 = vmatpush.msra.mxu0 %v172
  %4521 = vmatpush.msra.mxu0 %v166
  %4522 = vmatpush.msra.mxu0 %v160
  %4523 = vmatpush.msra.mxu0 %v154
  %4524 = vmatpush.msra.mxu0 %v148
  %4525 = vmatpush.msra.mxu0 %v142
  %4526 = vmatmul.f32.gmra.mxu0 %v3746
  %v4527 = vpop.f32.mrf.mxu0
  %v4528 = vadd.f32 %v4508, %v4527
  %4529 = vdwg.mxu0
  %4530 = vmatpush.msra.mxu0 %v137
  %4531 = vmatpush.msra.mxu0 %v131
  %4532 = vmatpush.msra.mxu0 %v125
  %4533 = vmatpush.msra.mxu0 %v119
  %4534 = vmatpush.msra.mxu0 %v113
  %4535 = vmatpush.msra.mxu0 %v107
  %4536 = vmatpush.msra.mxu0 %v101
  %4537 = vmatpush.msra.mxu0 %v95
  %4538 = vmatpush.msra.mxu0 %v89
  %4539 = vmatpush.msra.mxu0 %v83
  %4540 = vmatpush.msra.mxu0 %v77
  %4541 = vmatpush.msra.mxu0 %v71
  %4542 = vmatpush.msra.mxu0 %v65
  %4543 = vmatpush.msra.mxu0 %v59
  %4544 = vmatpush.msra.mxu0 %v53
  %4545 = vmatpush.msra.mxu0 %v47
  %4546 = vmatmul.f32.gmra.mxu0 %v3745
  %v4547 = vpop.f32.mrf.mxu0
  %v4548 = vadd.f32 0.0, %v4547
  %4549 = vdwg.mxu0
  %4550 = vmatpush.msra.mxu0 %v233
  %4551 = vmatpush.msra.mxu0 %v227
  %4552 = vmatpush.msra.mxu0 %v221
  %4553 = vmatpush.msra.mxu0 %v215
  %4554 = vmatpush.msra.mxu0 %v209
  %4555 = vmatpush.msra.mxu0 %v203
  %4556 = vmatpush.msra.mxu0 %v197
  %4557 = vmatpush.msra.mxu0 %v191
  %4558 = vmatpush.msra.mxu0 %v185
  %4559 = vmatpush.msra.mxu0 %v179
  %4560 = vmatpush.msra.mxu0 %v173
  %4561 = vmatpush.msra.mxu0 %v167
  %4562 = vmatpush.msra.mxu0 %v161
  %4563 = vmatpush.msra.mxu0 %v155
  %4564 = vmatpush.msra.mxu0 %v149
  %4565 = vmatpush.msra.mxu0 %v143
  %4566 = vmatmul.f32.gmra.mxu0 %v3746
  %v4567 = vpop.f32.mrf.mxu0
  %v4568 = vadd.f32 %v4548, %v4567
  %4569 = vdwg.mxu0
  %v4570 = vadd.f32 %v4324, %v4368
  %v4571 = vadd.f32 %v4325, %v4408
  %v4572 = vxor.u32 %v4570, 2147483648
  %v4573 = vxor.u32 %v4571, 2147483648
  %v4574 = vmul.f32 %v4572, 1.442695
  %v4575 = vpow.pop %v4574
  %v4576 = vmul.f32 %v4573, 1.442695
  %v4577 = vpow.pop %v4576
  %v4578 = vadd.f32 %v4575, 1.0
  %v4579 = vadd.f32 %v4577, 1.0
  %v4580 = vrcp.pop %v4578
  %v4581 = vmul.f32 %v4578, %v4580
  %v4582 = vsub.f32 1.0, %v4581
  %v4583 = vmul.f32 %v4580, %v4582
  %v4584 = vadd.f32 %v4580, %v4583
  %vm4585 = vweird.f32 %v4578
  %vm4586 = vweird.f32 %v4580
  %vm4587 = vmor %vm4585, %vm4586
  %v4588 = vsel %vm4587, %v4580, %v4584
  %v4589 = vand.u32 2147483647, %v4578
  %vm4590 = vcmp.eq.f32.partialorder %v4589, 8.507059e+37
  %v4591 = vand.u32 %v4578, 2147483648
  %v4592 = vor.u32 1.1754944e-38, %v4591
  %v4593 = vsel %vm4590, %v4592, %v4588
  %v4594 = vmul.f32 1.0, %v4593
  %v4595 = vrcp.pop %v4579
  %v4596 = vmul.f32 %v4579, %v4595
  %v4597 = vsub.f32 1.0, %v4596
  %v4598 = vmul.f32 %v4595, %v4597
  %v4599 = vadd.f32 %v4595, %v4598
  %vm4600 = vweird.f32 %v4579
  %vm4601 = vweird.f32 %v4595
  %vm4602 = vmor %vm4600, %vm4601
  %v4603 = vsel %vm4602, %v4595, %v4599
  %v4604 = vand.u32 2147483647, %v4579
  %vm4605 = vcmp.eq.f32.partialorder %v4604, 8.507059e+37
  %v4606 = vand.u32 %v4579, 2147483648
  %v4607 = vor.u32 1.1754944e-38, %v4606
  %v4608 = vsel %vm4605, %v4607, %v4603
  %v4609 = vmul.f32 1.0, %v4608
  %v4610 = vadd.f32 %v4326, %v4448
  %v4611 = vadd.f32 %v4327, %v4488
  %v4612 = vxor.u32 %v4610, 2147483648
  %v4613 = vxor.u32 %v4611, 2147483648
  %v4614 = vmul.f32 %v4612, 1.442695
  %v4615 = vpow.pop %v4614
  %v4616 = vmul.f32 %v4613, 1.442695
  %v4617 = vpow.pop %v4616
  %v4618 = vadd.f32 %v4615, 1.0
  %v4619 = vadd.f32 %v4617, 1.0
  %v4620 = vrcp.pop %v4618
  %v4621 = vmul.f32 %v4618, %v4620
  %v4622 = vsub.f32 1.0, %v4621
  %v4623 = vmul.f32 %v4620, %v4622
  %v4624 = vadd.f32 %v4620, %v4623
  %vm4625 = vweird.f32 %v4618
  %vm4626 = vweird.f32 %v4620
  %vm4627 = vmor %vm4625, %vm4626
  %v4628 = vsel %vm4627, %v4620, %v4624
  %v4629 = vand.u32 2147483647, %v4618
  %vm4630 = vcmp.eq.f32.partialorder %v4629, 8.507059e+37
  %v4631 = vand.u32 %v4618, 2147483648
  %v4632 = vor.u32 1.1754944e-38, %v4631
  %v4633 = vsel %vm4630, %v4632, %v4628
  %v4634 = vmul.f32 1.0, %v4633
  %v4635 = vrcp.pop %v4619
  %v4636 = vmul.f32 %v4619, %v4635
  %v4637 = vsub.f32 1.0, %v4636
  %v4638 = vmul.f32 %v4635, %v4637
  %v4639 = vadd.f32 %v4635, %v4638
  %vm4640 = vweird.f32 %v4619
  %vm4641 = vweird.f32 %v4635
  %vm4642 = vmor %vm4640, %vm4641
  %v4643 = vsel %vm4642, %v4635, %v4639
  %v4644 = vand.u32 2147483647, %v4619
  %vm4645 = vcmp.eq.f32.partialorder %v4644, 8.507059e+37
  %v4646 = vand.u32 %v4619, 2147483648
  %v4647 = vor.u32 1.1754944e-38, %v4646
  %v4648 = vsel %vm4645, %v4647, %v4643
  %v4649 = vmul.f32 1.0, %v4648
  %v4650 = vadd.f32 %v4528, %v620
  %v4651 = vadd.f32 %v4568, %v621
  %v4652 = vmul.f32 %v4594, %v4650
  %v4653 = vmul.f32 %v4609, %v4651
  %v4654 = vadd.f32 %v4328, %v4652
  %v4655 = vadd.f32 %v4329, %v4653
  %v4656 = vtanh.pop %v4654
  %v4657 = vtanh.pop %v4655
  %v4658 = vsub.f32 1.0, %v4634
  %v4659 = vsub.f32 1.0, %v4649
  %v4660 = vmul.f32 %v4658, %v4656
  %v4661 = vmul.f32 %v4659, %v4657
  %v4662 = vmul.f32 %v4634, %v3745
  %v4663 = vmul.f32 %v4649, %v3746
  %v4664 = vadd.f32 %v4660, %v4662
  %v4665 = vadd.f32 %v4661, %v4663
  %4666 = vmatpush.msra.mxu0 %v324
  %4667 = vmatpush.msra.mxu0 %v318
  %4668 = vmatpush.msra.mxu0 %v312
  %4669 = vmatpush.msra.mxu0 %v306
  %4670 = vmatpush.msra.mxu0 %v300
  %4671 = vmatpush.msra.mxu0 %v294
  %4672 = vmatpush.msra.mxu0 %v288
  %4673 = vmatpush.msra.mxu0 %v282
  %4674 = vmatpush.msra.mxu0 %v276
  %4675 = vmatpush.msra.mxu0 %v270
  %4676 = vmatpush.msra.mxu0 %v264
  %4677 = vmatpush.msra.mxu0 %v258
  %4678 = vmatpush.msra.mxu0 %v252
  %4679 = vmatpush.msra.mxu0 %v246
  %4680 = vmatpush.msra.mxu0 %v240
  %4681 = vmatpush.msra.mxu0 %v234
  %4682 = vmatmul.f32.gmra.mxu0 %v4664
  %v4683 = vpop.f32.mrf.mxu0
  %v4684 = vadd.f32 %v626, %v4683
  %4685 = vdwg.mxu0
  %4686 = vmatpush.msra.mxu0 %v420
  %4687 = vmatpush.msra.mxu0 %v414
  %4688 = vmatpush.msra.mxu0 %v408
  %4689 = vmatpush.msra.mxu0 %v402
  %4690 = vmatpush.msra.mxu0 %v396
  %4691 = vmatpush.msra.mxu0 %v390
  %4692 = vmatpush.msra.mxu0 %v384
  %4693 = vmatpush.msra.mxu0 %v378
  %4694 = vmatpush.msra.mxu0 %v372
  %4695 = vmatpush.msra.mxu0 %v366
  %4696 = vmatpush.msra.mxu0 %v360
  %4697 = vmatpush.msra.mxu0 %v354
  %4698 = vmatpush.msra.mxu0 %v348
  %4699 = vmatpush.msra.mxu0 %v342
  %4700 = vmatpush.msra.mxu0 %v336
  %4701 = vmatpush.msra.mxu0 %v330
  %4702 = vmatmul.f32.gmra.mxu0 %v4665
  %v4703 = vpop.f32.mrf.mxu0
  %v4704 = vadd.f32 %v4684, %v4703
  %4705 = vdwg.mxu0
  %4706 = vmatpush.msra.mxu0 %v325
  %4707 = vmatpush.msra.mxu0 %v319
  %4708 = vmatpush.msra.mxu0 %v313
  %4709 = vmatpush.msra.mxu0 %v307
  %4710 = vmatpush.msra.mxu0 %v301
  %4711 = vmatpush.msra.mxu0 %v295
  %4712 = vmatpush.msra.mxu0 %v289
  %4713 = vmatpush.msra.mxu0 %v283
  %4714 = vmatpush.msra.mxu0 %v277
  %4715 = vmatpush.msra.mxu0 %v271
  %4716 = vmatpush.msra.mxu0 %v265
  %4717 = vmatpush.msra.mxu0 %v259
  %4718 = vmatpush.msra.mxu0 %v253
  %4719 = vmatpush.msra.mxu0 %v247
  %4720 = vmatpush.msra.mxu0 %v241
  %4721 = vmatpush.msra.mxu0 %v235
  %4722 = vmatmul.f32.gmra.mxu0 %v4664
  %v4723 = vpop.f32.mrf.mxu0
  %v4724 = vadd.f32 %v627, %v4723
  %4725 = vdwg.mxu0
  %4726 = vmatpush.msra.mxu0 %v421
  %4727 = vmatpush.msra.mxu0 %v415
  %4728 = vmatpush.msra.mxu0 %v409
  %4729 = vmatpush.msra.mxu0 %v403
  %4730 = vmatpush.msra.mxu0 %v397
  %4731 = vmatpush.msra.mxu0 %v391
  %4732 = vmatpush.msra.mxu0 %v385
  %4733 = vmatpush.msra.mxu0 %v379
  %4734 = vmatpush.msra.mxu0 %v373
  %4735 = vmatpush.msra.mxu0 %v367
  %4736 = vmatpush.msra.mxu0 %v361
  %4737 = vmatpush.msra.mxu0 %v355
  %4738 = vmatpush.msra.mxu0 %v349
  %4739 = vmatpush.msra.mxu0 %v343
  %4740 = vmatpush.msra.mxu0 %v337
  %4741 = vmatpush.msra.mxu0 %v331
  %4742 = vmatmul.f32.gmra.mxu0 %v4665
  %v4743 = vpop.f32.mrf.mxu0
  %v4744 = vadd.f32 %v4724, %v4743
  %4745 = vdwg.mxu0
  %4746 = vmatpush.msra.mxu0 %v326
  %4747 = vmatpush.msra.mxu0 %v320
  %4748 = vmatpush.msra.mxu0 %v314
  %4749 = vmatpush.msra.mxu0 %v308
  %4750 = vmatpush.msra.mxu0 %v302
  %4751 = vmatpush.msra.mxu0 %v296
  %4752 = vmatpush.msra.mxu0 %v290
  %4753 = vmatpush.msra.mxu0 %v284
  %4754 = vmatpush.msra.mxu0 %v278
  %4755 = vmatpush.msra.mxu0 %v272
  %4756 = vmatpush.msra.mxu0 %v266
  %4757 = vmatpush.msra.mxu0 %v260
  %4758 = vmatpush.msra.mxu0 %v254
  %4759 = vmatpush.msra.mxu0 %v248
  %4760 = vmatpush.msra.mxu0 %v242
  %4761 = vmatpush.msra.mxu0 %v236
  %4762 = vmatmul.f32.gmra.mxu0 %v4664
  %v4763 = vpop.f32.mrf.mxu0
  %v4764 = vadd.f32 %v628, %v4763
  %4765 = vdwg.mxu0
  %4766 = vmatpush.msra.mxu0 %v422
  %4767 = vmatpush.msra.mxu0 %v416
  %4768 = vmatpush.msra.mxu0 %v410
  %4769 = vmatpush.msra.mxu0 %v404
  %4770 = vmatpush.msra.mxu0 %v398
  %4771 = vmatpush.msra.mxu0 %v392
  %4772 = vmatpush.msra.mxu0 %v386
  %4773 = vmatpush.msra.mxu0 %v380
  %4774 = vmatpush.msra.mxu0 %v374
  %4775 = vmatpush.msra.mxu0 %v368
  %4776 = vmatpush.msra.mxu0 %v362
  %4777 = vmatpush.msra.mxu0 %v356
  %4778 = vmatpush.msra.mxu0 %v350
  %4779 = vmatpush.msra.mxu0 %v344
  %4780 = vmatpush.msra.mxu0 %v338
  %4781 = vmatpush.msra.mxu0 %v332
  %4782 = vmatmul.f32.gmra.mxu0 %v4665
  %v4783 = vpop.f32.mrf.mxu0
  %v4784 = vadd.f32 %v4764, %v4783
  %4785 = vdwg.mxu0
  %4786 = vmatpush.msra.mxu0 %v327
  %4787 = vmatpush.msra.mxu0 %v321
  %4788 = vmatpush.msra.mxu0 %v315
  %4789 = vmatpush.msra.mxu0 %v309
  %4790 = vmatpush.msra.mxu0 %v303
  %4791 = vmatpush.msra.mxu0 %v297
  %4792 = vmatpush.msra.mxu0 %v291
  %4793 = vmatpush.msra.mxu0 %v285
  %4794 = vmatpush.msra.mxu0 %v279
  %4795 = vmatpush.msra.mxu0 %v273
  %4796 = vmatpush.msra.mxu0 %v267
  %4797 = vmatpush.msra.mxu0 %v261
  %4798 = vmatpush.msra.mxu0 %v255
  %4799 = vmatpush.msra.mxu0 %v249
  %4800 = vmatpush.msra.mxu0 %v243
  %4801 = vmatpush.msra.mxu0 %v237
  %4802 = vmatmul.f32.gmra.mxu0 %v4664
  %v4803 = vpop.f32.mrf.mxu0
  %v4804 = vadd.f32 %v629, %v4803
  %4805 = vdwg.mxu0
  %4806 = vmatpush.msra.mxu0 %v423
  %4807 = vmatpush.msra.mxu0 %v417
  %4808 = vmatpush.msra.mxu0 %v411
  %4809 = vmatpush.msra.mxu0 %v405
  %4810 = vmatpush.msra.mxu0 %v399
  %4811 = vmatpush.msra.mxu0 %v393
  %4812 = vmatpush.msra.mxu0 %v387
  %4813 = vmatpush.msra.mxu0 %v381
  %4814 = vmatpush.msra.mxu0 %v375
  %4815 = vmatpush.msra.mxu0 %v369
  %4816 = vmatpush.msra.mxu0 %v363
  %4817 = vmatpush.msra.mxu0 %v357
  %4818 = vmatpush.msra.mxu0 %v351
  %4819 = vmatpush.msra.mxu0 %v345
  %4820 = vmatpush.msra.mxu0 %v339
  %4821 = vmatpush.msra.mxu0 %v333
  %4822 = vmatmul.f32.gmra.mxu0 %v4665
  %v4823 = vpop.f32.mrf.mxu0
  %v4824 = vadd.f32 %v4804, %v4823
  %4825 = vdwg.mxu0
  %4826 = vmatpush.msra.mxu0 %v328
  %4827 = vmatpush.msra.mxu0 %v322
  %4828 = vmatpush.msra.mxu0 %v316
  %4829 = vmatpush.msra.mxu0 %v310
  %4830 = vmatpush.msra.mxu0 %v304
  %4831 = vmatpush.msra.mxu0 %v298
  %4832 = vmatpush.msra.mxu0 %v292
  %4833 = vmatpush.msra.mxu0 %v286
  %4834 = vmatpush.msra.mxu0 %v280
  %4835 = vmatpush.msra.mxu0 %v274
  %4836 = vmatpush.msra.mxu0 %v268
  %4837 = vmatpush.msra.mxu0 %v262
  %4838 = vmatpush.msra.mxu0 %v256
  %4839 = vmatpush.msra.mxu0 %v250
  %4840 = vmatpush.msra.mxu0 %v244
  %4841 = vmatpush.msra.mxu0 %v238
  %4842 = vmatmul.f32.gmra.mxu0 %v4664
  %v4843 = vpop.f32.mrf.mxu0
  %v4844 = vadd.f32 %v630, %v4843
  %4845 = vdwg.mxu0
  %4846 = vmatpush.msra.mxu0 %v424
  %4847 = vmatpush.msra.mxu0 %v418
  %4848 = vmatpush.msra.mxu0 %v412
  %4849 = vmatpush.msra.mxu0 %v406
  %4850 = vmatpush.msra.mxu0 %v400
  %4851 = vmatpush.msra.mxu0 %v394
  %4852 = vmatpush.msra.mxu0 %v388
  %4853 = vmatpush.msra.mxu0 %v382
  %4854 = vmatpush.msra.mxu0 %v376
  %4855 = vmatpush.msra.mxu0 %v370
  %4856 = vmatpush.msra.mxu0 %v364
  %4857 = vmatpush.msra.mxu0 %v358
  %4858 = vmatpush.msra.mxu0 %v352
  %4859 = vmatpush.msra.mxu0 %v346
  %4860 = vmatpush.msra.mxu0 %v340
  %4861 = vmatpush.msra.mxu0 %v334
  %4862 = vmatmul.f32.gmra.mxu0 %v4665
  %v4863 = vpop.f32.mrf.mxu0
  %v4864 = vadd.f32 %v4844, %v4863
  %4865 = vdwg.mxu0
  %4866 = vmatpush.msra.mxu0 %v329
  %4867 = vmatpush.msra.mxu0 %v323
  %4868 = vmatpush.msra.mxu0 %v317
  %4869 = vmatpush.msra.mxu0 %v311
  %4870 = vmatpush.msra.mxu0 %v305
  %4871 = vmatpush.msra.mxu0 %v299
  %4872 = vmatpush.msra.mxu0 %v293
  %4873 = vmatpush.msra.mxu0 %v287
  %4874 = vmatpush.msra.mxu0 %v281
  %4875 = vmatpush.msra.mxu0 %v275
  %4876 = vmatpush.msra.mxu0 %v269
  %4877 = vmatpush.msra.mxu0 %v263
  %4878 = vmatpush.msra.mxu0 %v257
  %4879 = vmatpush.msra.mxu0 %v251
  %4880 = vmatpush.msra.mxu0 %v245
  %4881 = vmatpush.msra.mxu0 %v239
  %4882 = vmatmul.f32.gmra.mxu0 %v4664
  %v4883 = vpop.f32.mrf.mxu0
  %v4884 = vadd.f32 %v631, %v4883
  %4885 = vdwg.mxu0
  %4886 = vmatpush.msra.mxu0 %v425
  %4887 = vmatpush.msra.mxu0 %v419
  %4888 = vmatpush.msra.mxu0 %v413
  %4889 = vmatpush.msra.mxu0 %v407
  %4890 = vmatpush.msra.mxu0 %v401
  %4891 = vmatpush.msra.mxu0 %v395
  %4892 = vmatpush.msra.mxu0 %v389
  %4893 = vmatpush.msra.mxu0 %v383
  %4894 = vmatpush.msra.mxu0 %v377
  %4895 = vmatpush.msra.mxu0 %v371
  %4896 = vmatpush.msra.mxu0 %v365
  %4897 = vmatpush.msra.mxu0 %v359
  %4898 = vmatpush.msra.mxu0 %v353
  %4899 = vmatpush.msra.mxu0 %v347
  %4900 = vmatpush.msra.mxu0 %v341
  %4901 = vmatpush.msra.mxu0 %v335
  %4902 = vmatmul.f32.gmra.mxu0 %v4665
  %v4903 = vpop.f32.mrf.mxu0
  %v4904 = vadd.f32 %v4884, %v4903
  %4905 = vdwg.mxu0
  %4906 = vmatpush.msra.mxu0 %v516
  %4907 = vmatpush.msra.mxu0 %v510
  %4908 = vmatpush.msra.mxu0 %v504
  %4909 = vmatpush.msra.mxu0 %v498
  %4910 = vmatpush.msra.mxu0 %v492
  %4911 = vmatpush.msra.mxu0 %v486
  %4912 = vmatpush.msra.mxu0 %v480
  %4913 = vmatpush.msra.mxu0 %v474
  %4914 = vmatpush.msra.mxu0 %v468
  %4915 = vmatpush.msra.mxu0 %v462
  %4916 = vmatpush.msra.mxu0 %v456
  %4917 = vmatpush.msra.mxu0 %v450
  %4918 = vmatpush.msra.mxu0 %v444
  %4919 = vmatpush.msra.mxu0 %v438
  %4920 = vmatpush.msra.mxu0 %v432
  %4921 = vmatpush.msra.mxu0 %v426
  %4922 = vmatmul.f32.gmra.mxu0 %v4321
  %v4923 = vpop.f32.mrf.mxu0
  %v4924 = vadd.f32 0.0, %v4923
  %4925 = vdwg.mxu0
  %4926 = vmatpush.msra.mxu0 %v612
  %4927 = vmatpush.msra.mxu0 %v606
  %4928 = vmatpush.msra.mxu0 %v600
  %4929 = vmatpush.msra.mxu0 %v594
  %4930 = vmatpush.msra.mxu0 %v588
  %4931 = vmatpush.msra.mxu0 %v582
  %4932 = vmatpush.msra.mxu0 %v576
  %4933 = vmatpush.msra.mxu0 %v570
  %4934 = vmatpush.msra.mxu0 %v564
  %4935 = vmatpush.msra.mxu0 %v558
  %4936 = vmatpush.msra.mxu0 %v552
  %4937 = vmatpush.msra.mxu0 %v546
  %4938 = vmatpush.msra.mxu0 %v540
  %4939 = vmatpush.msra.mxu0 %v534
  %4940 = vmatpush.msra.mxu0 %v528
  %4941 = vmatpush.msra.mxu0 %v522
  %4942 = vmatmul.f32.gmra.mxu0 %v4322
  %v4943 = vpop.f32.mrf.mxu0
  %v4944 = vadd.f32 %v4924, %v4943
  %4945 = vdwg.mxu0
  %4946 = vmatpush.msra.mxu0 %v517
  %4947 = vmatpush.msra.mxu0 %v511
  %4948 = vmatpush.msra.mxu0 %v505
  %4949 = vmatpush.msra.mxu0 %v499
  %4950 = vmatpush.msra.mxu0 %v493
  %4951 = vmatpush.msra.mxu0 %v487
  %4952 = vmatpush.msra.mxu0 %v481
  %4953 = vmatpush.msra.mxu0 %v475
  %4954 = vmatpush.msra.mxu0 %v469
  %4955 = vmatpush.msra.mxu0 %v463
  %4956 = vmatpush.msra.mxu0 %v457
  %4957 = vmatpush.msra.mxu0 %v451
  %4958 = vmatpush.msra.mxu0 %v445
  %4959 = vmatpush.msra.mxu0 %v439
  %4960 = vmatpush.msra.mxu0 %v433
  %4961 = vmatpush.msra.mxu0 %v427
  %4962 = vmatmul.f32.gmra.mxu0 %v4321
  %v4963 = vpop.f32.mrf.mxu0
  %v4964 = vadd.f32 0.0, %v4963
  %4965 = vdwg.mxu0
  %4966 = vmatpush.msra.mxu0 %v613
  %4967 = vmatpush.msra.mxu0 %v607
  %4968 = vmatpush.msra.mxu0 %v601
  %4969 = vmatpush.msra.mxu0 %v595
  %4970 = vmatpush.msra.mxu0 %v589
  %4971 = vmatpush.msra.mxu0 %v583
  %4972 = vmatpush.msra.mxu0 %v577
  %4973 = vmatpush.msra.mxu0 %v571
  %4974 = vmatpush.msra.mxu0 %v565
  %4975 = vmatpush.msra.mxu0 %v559
  %4976 = vmatpush.msra.mxu0 %v553
  %4977 = vmatpush.msra.mxu0 %v547
  %4978 = vmatpush.msra.mxu0 %v541
  %4979 = vmatpush.msra.mxu0 %v535
  %4980 = vmatpush.msra.mxu0 %v529
  %4981 = vmatpush.msra.mxu0 %v523
  %4982 = vmatmul.f32.gmra.mxu0 %v4322
  %v4983 = vpop.f32.mrf.mxu0
  %v4984 = vadd.f32 %v4964, %v4983
  %4985 = vdwg.mxu0
  %4986 = vmatpush.msra.mxu0 %v518
  %4987 = vmatpush.msra.mxu0 %v512
  %4988 = vmatpush.msra.mxu0 %v506
  %4989 = vmatpush.msra.mxu0 %v500
  %4990 = vmatpush.msra.mxu0 %v494
  %4991 = vmatpush.msra.mxu0 %v488
  %4992 = vmatpush.msra.mxu0 %v482
  %4993 = vmatpush.msra.mxu0 %v476
  %4994 = vmatpush.msra.mxu0 %v470
  %4995 = vmatpush.msra.mxu0 %v464
  %4996 = vmatpush.msra.mxu0 %v458
  %4997 = vmatpush.msra.mxu0 %v452
  %4998 = vmatpush.msra.mxu0 %v446
  %4999 = vmatpush.msra.mxu0 %v440
  %5000 = vmatpush.msra.mxu0 %v434
  %5001 = vmatpush.msra.mxu0 %v428
  %5002 = vmatmul.f32.gmra.mxu0 %v4321
  %v5003 = vpop.f32.mrf.mxu0
  %v5004 = vadd.f32 0.0, %v5003
  %5005 = vdwg.mxu0
  %5006 = vmatpush.msra.mxu0 %v614
  %5007 = vmatpush.msra.mxu0 %v608
  %5008 = vmatpush.msra.mxu0 %v602
  %5009 = vmatpush.msra.mxu0 %v596
  %5010 = vmatpush.msra.mxu0 %v590
  %5011 = vmatpush.msra.mxu0 %v584
  %5012 = vmatpush.msra.mxu0 %v578
  %5013 = vmatpush.msra.mxu0 %v572
  %5014 = vmatpush.msra.mxu0 %v566
  %5015 = vmatpush.msra.mxu0 %v560
  %5016 = vmatpush.msra.mxu0 %v554
  %5017 = vmatpush.msra.mxu0 %v548
  %5018 = vmatpush.msra.mxu0 %v542
  %5019 = vmatpush.msra.mxu0 %v536
  %5020 = vmatpush.msra.mxu0 %v530
  %5021 = vmatpush.msra.mxu0 %v524
  %5022 = vmatmul.f32.gmra.mxu0 %v4322
  %v5023 = vpop.f32.mrf.mxu0
  %v5024 = vadd.f32 %v5004, %v5023
  %5025 = vdwg.mxu0
  %5026 = vmatpush.msra.mxu0 %v519
  %5027 = vmatpush.msra.mxu0 %v513
  %5028 = vmatpush.msra.mxu0 %v507
  %5029 = vmatpush.msra.mxu0 %v501
  %5030 = vmatpush.msra.mxu0 %v495
  %5031 = vmatpush.msra.mxu0 %v489
  %5032 = vmatpush.msra.mxu0 %v483
  %5033 = vmatpush.msra.mxu0 %v477
  %5034 = vmatpush.msra.mxu0 %v471
  %5035 = vmatpush.msra.mxu0 %v465
  %5036 = vmatpush.msra.mxu0 %v459
  %5037 = vmatpush.msra.mxu0 %v453
  %5038 = vmatpush.msra.mxu0 %v447
  %5039 = vmatpush.msra.mxu0 %v441
  %5040 = vmatpush.msra.mxu0 %v435
  %5041 = vmatpush.msra.mxu0 %v429
  %5042 = vmatmul.f32.gmra.mxu0 %v4321
  %v5043 = vpop.f32.mrf.mxu0
  %v5044 = vadd.f32 0.0, %v5043
  %5045 = vdwg.mxu0
  %5046 = vmatpush.msra.mxu0 %v615
  %5047 = vmatpush.msra.mxu0 %v609
  %5048 = vmatpush.msra.mxu0 %v603
  %5049 = vmatpush.msra.mxu0 %v597
  %5050 = vmatpush.msra.mxu0 %v591
  %5051 = vmatpush.msra.mxu0 %v585
  %5052 = vmatpush.msra.mxu0 %v579
  %5053 = vmatpush.msra.mxu0 %v573
  %5054 = vmatpush.msra.mxu0 %v567
  %5055 = vmatpush.msra.mxu0 %v561
  %5056 = vmatpush.msra.mxu0 %v555
  %5057 = vmatpush.msra.mxu0 %v549
  %5058 = vmatpush.msra.mxu0 %v543
  %5059 = vmatpush.msra.mxu0 %v537
  %5060 = vmatpush.msra.mxu0 %v531
  %5061 = vmatpush.msra.mxu0 %v525
  %5062 = vmatmul.f32.gmra.mxu0 %v4322
  %v5063 = vpop.f32.mrf.mxu0
  %v5064 = vadd.f32 %v5044, %v5063
  %5065 = vdwg.mxu0
  %5066 = vmatpush.msra.mxu0 %v520
  %5067 = vmatpush.msra.mxu0 %v514
  %5068 = vmatpush.msra.mxu0 %v508
  %5069 = vmatpush.msra.mxu0 %v502
  %5070 = vmatpush.msra.mxu0 %v496
  %5071 = vmatpush.msra.mxu0 %v490
  %5072 = vmatpush.msra.mxu0 %v484
  %5073 = vmatpush.msra.mxu0 %v478
  %5074 = vmatpush.msra.mxu0 %v472
  %5075 = vmatpush.msra.mxu0 %v466
  %5076 = vmatpush.msra.mxu0 %v460
  %5077 = vmatpush.msra.mxu0 %v454
  %5078 = vmatpush.msra.mxu0 %v448
  %5079 = vmatpush.msra.mxu0 %v442
  %5080 = vmatpush.msra.mxu0 %v436
  %5081 = vmatpush.msra.mxu0 %v430
  %5082 = vmatmul.f32.gmra.mxu0 %v4321
  %v5083 = vpop.f32.mrf.mxu0
  %v5084 = vadd.f32 0.0, %v5083
  %5085 = vdwg.mxu0
  %5086 = vmatpush.msra.mxu0 %v616
  %5087 = vmatpush.msra.mxu0 %v610
  %5088 = vmatpush.msra.mxu0 %v604
  %5089 = vmatpush.msra.mxu0 %v598
  %5090 = vmatpush.msra.mxu0 %v592
  %5091 = vmatpush.msra.mxu0 %v586
  %5092 = vmatpush.msra.mxu0 %v580
  %5093 = vmatpush.msra.mxu0 %v574
  %5094 = vmatpush.msra.mxu0 %v568
  %5095 = vmatpush.msra.mxu0 %v562
  %5096 = vmatpush.msra.mxu0 %v556
  %5097 = vmatpush.msra.mxu0 %v550
  %5098 = vmatpush.msra.mxu0 %v544
  %5099 = vmatpush.msra.mxu0 %v538
  %5100 = vmatpush.msra.mxu0 %v532
  %5101 = vmatpush.msra.mxu0 %v526
  %5102 = vmatmul.f32.gmra.mxu0 %v4322
  %v5103 = vpop.f32.mrf.mxu0
  %v5104 = vadd.f32 %v5084, %v5103
  %5105 = vdwg.mxu0
  %5106 = vmatpush.msra.mxu0 %v521
  %5107 = vmatpush.msra.mxu0 %v515
  %5108 = vmatpush.msra.mxu0 %v509
  %5109 = vmatpush.msra.mxu0 %v503
  %5110 = vmatpush.msra.mxu0 %v497
  %5111 = vmatpush.msra.mxu0 %v491
  %5112 = vmatpush.msra.mxu0 %v485
  %5113 = vmatpush.msra.mxu0 %v479
  %5114 = vmatpush.msra.mxu0 %v473
  %5115 = vmatpush.msra.mxu0 %v467
  %5116 = vmatpush.msra.mxu0 %v461
  %5117 = vmatpush.msra.mxu0 %v455
  %5118 = vmatpush.msra.mxu0 %v449
  %5119 = vmatpush.msra.mxu0 %v443
  %5120 = vmatpush.msra.mxu0 %v437
  %5121 = vmatpush.msra.mxu0 %v431
  %5122 = vmatmul.f32.gmra.mxu0 %v4321
  %v5123 = vpop.f32.mrf.mxu0
  %v5124 = vadd.f32 0.0, %v5123
  %5125 = vdwg.mxu0
  %5126 = vmatpush.msra.mxu0 %v617
  %5127 = vmatpush.msra.mxu0 %v611
  %5128 = vmatpush.msra.mxu0 %v605
  %5129 = vmatpush.msra.mxu0 %v599
  %5130 = vmatpush.msra.mxu0 %v593
  %5131 = vmatpush.msra.mxu0 %v587
  %5132 = vmatpush.msra.mxu0 %v581
  %5133 = vmatpush.msra.mxu0 %v575
  %5134 = vmatpush.msra.mxu0 %v569
  %5135 = vmatpush.msra.mxu0 %v563
  %5136 = vmatpush.msra.mxu0 %v557
  %5137 = vmatpush.msra.mxu0 %v551
  %5138 = vmatpush.msra.mxu0 %v545
  %5139 = vmatpush.msra.mxu0 %v539
  %5140 = vmatpush.msra.mxu0 %v533
  %5141 = vmatpush.msra.mxu0 %v527
  %5142 = vmatmul.f32.gmra.mxu0 %v4322
  %v5143 = vpop.f32.mrf.mxu0
  %v5144 = vadd.f32 %v5124, %v5143
  %5145 = vdwg.mxu0
  %v5146 = vadd.f32 %v4704, %v4944
  %v5147 = vadd.f32 %v4744, %v4984
  %v5148 = vxor.u32 %v5146, 2147483648
  %v5149 = vxor.u32 %v5147, 2147483648
  %v5150 = vmul.f32 %v5148, 1.442695
  %v5151 = vpow.pop %v5150
  %v5152 = vmul.f32 %v5149, 1.442695
  %v5153 = vpow.pop %v5152
  %v5154 = vadd.f32 %v5151, 1.0
  %v5155 = vadd.f32 %v5153, 1.0
  %v5156 = vrcp.pop %v5154
  %v5157 = vmul.f32 %v5154, %v5156
  %v5158 = vsub.f32 1.0, %v5157
  %v5159 = vmul.f32 %v5156, %v5158
  %v5160 = vadd.f32 %v5156, %v5159
  %vm5161 = vweird.f32 %v5154
  %vm5162 = vweird.f32 %v5156
  %vm5163 = vmor %vm5161, %vm5162
  %v5164 = vsel %vm5163, %v5156, %v5160
  %v5165 = vand.u32 2147483647, %v5154
  %vm5166 = vcmp.eq.f32.partialorder %v5165, 8.507059e+37
  %v5167 = vand.u32 %v5154, 2147483648
  %v5168 = vor.u32 1.1754944e-38, %v5167
  %v5169 = vsel %vm5166, %v5168, %v5164
  %v5170 = vmul.f32 1.0, %v5169
  %v5171 = vrcp.pop %v5155
  %v5172 = vmul.f32 %v5155, %v5171
  %v5173 = vsub.f32 1.0, %v5172
  %v5174 = vmul.f32 %v5171, %v5173
  %v5175 = vadd.f32 %v5171, %v5174
  %vm5176 = vweird.f32 %v5155
  %vm5177 = vweird.f32 %v5171
  %vm5178 = vmor %vm5176, %vm5177
  %v5179 = vsel %vm5178, %v5171, %v5175
  %v5180 = vand.u32 2147483647, %v5155
  %vm5181 = vcmp.eq.f32.partialorder %v5180, 8.507059e+37
  %v5182 = vand.u32 %v5155, 2147483648
  %v5183 = vor.u32 1.1754944e-38, %v5182
  %v5184 = vsel %vm5181, %v5183, %v5179
  %v5185 = vmul.f32 1.0, %v5184
  %v5186 = vadd.f32 %v4784, %v5024
  %v5187 = vadd.f32 %v4824, %v5064
  %v5188 = vxor.u32 %v5186, 2147483648
  %v5189 = vxor.u32 %v5187, 2147483648
  %v5190 = vmul.f32 %v5188, 1.442695
  %v5191 = vpow.pop %v5190
  %v5192 = vmul.f32 %v5189, 1.442695
  %v5193 = vpow.pop %v5192
  %v5194 = vadd.f32 %v5191, 1.0
  %v5195 = vadd.f32 %v5193, 1.0
  %v5196 = vrcp.pop %v5194
  %v5197 = vmul.f32 %v5194, %v5196
  %v5198 = vsub.f32 1.0, %v5197
  %v5199 = vmul.f32 %v5196, %v5198
  %v5200 = vadd.f32 %v5196, %v5199
  %vm5201 = vweird.f32 %v5194
  %vm5202 = vweird.f32 %v5196
  %vm5203 = vmor %vm5201, %vm5202
  %v5204 = vsel %vm5203, %v5196, %v5200
  %v5205 = vand.u32 2147483647, %v5194
  %vm5206 = vcmp.eq.f32.partialorder %v5205, 8.507059e+37
  %v5207 = vand.u32 %v5194, 2147483648
  %v5208 = vor.u32 1.1754944e-38, %v5207
  %v5209 = vsel %vm5206, %v5208, %v5204
  %v5210 = vmul.f32 1.0, %v5209
  %v5211 = vrcp.pop %v5195
  %v5212 = vmul.f32 %v5195, %v5211
  %v5213 = vsub.f32 1.0, %v5212
  %v5214 = vmul.f32 %v5211, %v5213
  %v5215 = vadd.f32 %v5211, %v5214
  %vm5216 = vweird.f32 %v5195
  %vm5217 = vweird.f32 %v5211
  %vm5218 = vmor %vm5216, %vm5217
  %v5219 = vsel %vm5218, %v5211, %v5215
  %v5220 = vand.u32 2147483647, %v5195
  %vm5221 = vcmp.eq.f32.partialorder %v5220, 8.507059e+37
  %v5222 = vand.u32 %v5195, 2147483648
  %v5223 = vor.u32 1.1754944e-38, %v5222
  %v5224 = vsel %vm5221, %v5223, %v5219
  %v5225 = vmul.f32 1.0, %v5224
  %v5226 = vadd.f32 %v5104, %v640
  %v5227 = vadd.f32 %v5144, %v641
  %v5228 = vmul.f32 %v5170, %v5226
  %v5229 = vmul.f32 %v5185, %v5227
  %v5230 = vadd.f32 %v4864, %v5228
  %v5231 = vadd.f32 %v4904, %v5229
  %v5232 = vtanh.pop %v5230
  %v5233 = vtanh.pop %v5231
  %v5234 = vsub.f32 1.0, %v5210
  %v5235 = vsub.f32 1.0, %v5225
  %v5236 = vmul.f32 %v5234, %v5232
  %v5237 = vmul.f32 %v5235, %v5233
  %v5238 = vmul.f32 %v5210, %v4321
  %v5239 = vmul.f32 %v5225, %v4322
  %v5240 = vadd.f32 %v5236, %v5238
  %v5241 = vadd.f32 %v5237, %v5239
  %s5242 = scalar_lea.vmem %s0, 240
  %v5243 = vld [vmem:[%s5242] sm:$0xff]
  %v5244 = vld [vmem:[%s5242 + $0x8] sm:$0xff]
  %v5245 = vld [vmem:[%s5242 + $0x10] sm:$0xff]
  %v5246 = vld [vmem:[%s5242 + $0x18] sm:$0xff]
  %v5247 = vld [vmem:[%s5242 + $0x20] sm:$0xff]
  %v5248 = vld [vmem:[%s5242 + $0x28] sm:$0xff]
  %5249 = vmatpush.msra.mxu0 %v132
  %5250 = vmatpush.msra.mxu0 %v126
  %5251 = vmatpush.msra.mxu0 %v120
  %5252 = vmatpush.msra.mxu0 %v114
  %5253 = vmatpush.msra.mxu0 %v108
  %5254 = vmatpush.msra.mxu0 %v102
  %5255 = vmatpush.msra.mxu0 %v96
  %5256 = vmatpush.msra.mxu0 %v90
  %5257 = vmatpush.msra.mxu0 %v84
  %5258 = vmatpush.msra.mxu0 %v78
  %5259 = vmatpush.msra.mxu0 %v72
  %5260 = vmatpush.msra.mxu0 %v66
  %5261 = vmatpush.msra.mxu0 %v60
  %5262 = vmatpush.msra.mxu0 %v54
  %5263 = vmatpush.msra.mxu0 %v48
  %5264 = vmatpush.msra.mxu0 %v42
  %5265 = vmatmul.f32.gmra.mxu0 %v4664
  %v5266 = vpop.f32.mrf.mxu0
  %v5267 = vadd.f32 0.0, %v5266
  %5268 = vdwg.mxu0
  %5269 = vmatpush.msra.mxu0 %v228
  %5270 = vmatpush.msra.mxu0 %v222
  %5271 = vmatpush.msra.mxu0 %v216
  %5272 = vmatpush.msra.mxu0 %v210
  %5273 = vmatpush.msra.mxu0 %v204
  %5274 = vmatpush.msra.mxu0 %v198
  %5275 = vmatpush.msra.mxu0 %v192
  %5276 = vmatpush.msra.mxu0 %v186
  %5277 = vmatpush.msra.mxu0 %v180
  %5278 = vmatpush.msra.mxu0 %v174
  %5279 = vmatpush.msra.mxu0 %v168
  %5280 = vmatpush.msra.mxu0 %v162
  %5281 = vmatpush.msra.mxu0 %v156
  %5282 = vmatpush.msra.mxu0 %v150
  %5283 = vmatpush.msra.mxu0 %v144
  %5284 = vmatpush.msra.mxu0 %v138
  %5285 = vmatmul.f32.gmra.mxu0 %v4665
  %v5286 = vpop.f32.mrf.mxu0
  %v5287 = vadd.f32 %v5267, %v5286
  %5288 = vdwg.mxu0
  %5289 = vmatpush.msra.mxu0 %v133
  %5290 = vmatpush.msra.mxu0 %v127
  %5291 = vmatpush.msra.mxu0 %v121
  %5292 = vmatpush.msra.mxu0 %v115
  %5293 = vmatpush.msra.mxu0 %v109
  %5294 = vmatpush.msra.mxu0 %v103
  %5295 = vmatpush.msra.mxu0 %v97
  %5296 = vmatpush.msra.mxu0 %v91
  %5297 = vmatpush.msra.mxu0 %v85
  %5298 = vmatpush.msra.mxu0 %v79
  %5299 = vmatpush.msra.mxu0 %v73
  %5300 = vmatpush.msra.mxu0 %v67
  %5301 = vmatpush.msra.mxu0 %v61
  %5302 = vmatpush.msra.mxu0 %v55
  %5303 = vmatpush.msra.mxu0 %v49
  %5304 = vmatpush.msra.mxu0 %v43
  %5305 = vmatmul.f32.gmra.mxu0 %v4664
  %v5306 = vpop.f32.mrf.mxu0
  %v5307 = vadd.f32 0.0, %v5306
  %5308 = vdwg.mxu0
  %5309 = vmatpush.msra.mxu0 %v229
  %5310 = vmatpush.msra.mxu0 %v223
  %5311 = vmatpush.msra.mxu0 %v217
  %5312 = vmatpush.msra.mxu0 %v211
  %5313 = vmatpush.msra.mxu0 %v205
  %5314 = vmatpush.msra.mxu0 %v199
  %5315 = vmatpush.msra.mxu0 %v193
  %5316 = vmatpush.msra.mxu0 %v187
  %5317 = vmatpush.msra.mxu0 %v181
  %5318 = vmatpush.msra.mxu0 %v175
  %5319 = vmatpush.msra.mxu0 %v169
  %5320 = vmatpush.msra.mxu0 %v163
  %5321 = vmatpush.msra.mxu0 %v157
  %5322 = vmatpush.msra.mxu0 %v151
  %5323 = vmatpush.msra.mxu0 %v145
  %5324 = vmatpush.msra.mxu0 %v139
  %5325 = vmatmul.f32.gmra.mxu0 %v4665
  %v5326 = vpop.f32.mrf.mxu0
  %v5327 = vadd.f32 %v5307, %v5326
  %5328 = vdwg.mxu0
  %5329 = vmatpush.msra.mxu0 %v134
  %5330 = vmatpush.msra.mxu0 %v128
  %5331 = vmatpush.msra.mxu0 %v122
  %5332 = vmatpush.msra.mxu0 %v116
  %5333 = vmatpush.msra.mxu0 %v110
  %5334 = vmatpush.msra.mxu0 %v104
  %5335 = vmatpush.msra.mxu0 %v98
  %5336 = vmatpush.msra.mxu0 %v92
  %5337 = vmatpush.msra.mxu0 %v86
  %5338 = vmatpush.msra.mxu0 %v80
  %5339 = vmatpush.msra.mxu0 %v74
  %5340 = vmatpush.msra.mxu0 %v68
  %5341 = vmatpush.msra.mxu0 %v62
  %5342 = vmatpush.msra.mxu0 %v56
  %5343 = vmatpush.msra.mxu0 %v50
  %5344 = vmatpush.msra.mxu0 %v44
  %5345 = vmatmul.f32.gmra.mxu0 %v4664
  %v5346 = vpop.f32.mrf.mxu0
  %v5347 = vadd.f32 0.0, %v5346
  %5348 = vdwg.mxu0
  %5349 = vmatpush.msra.mxu0 %v230
  %5350 = vmatpush.msra.mxu0 %v224
  %5351 = vmatpush.msra.mxu0 %v218
  %5352 = vmatpush.msra.mxu0 %v212
  %5353 = vmatpush.msra.mxu0 %v206
  %5354 = vmatpush.msra.mxu0 %v200
  %5355 = vmatpush.msra.mxu0 %v194
  %5356 = vmatpush.msra.mxu0 %v188
  %5357 = vmatpush.msra.mxu0 %v182
  %5358 = vmatpush.msra.mxu0 %v176
  %5359 = vmatpush.msra.mxu0 %v170
  %5360 = vmatpush.msra.mxu0 %v164
  %5361 = vmatpush.msra.mxu0 %v158
  %5362 = vmatpush.msra.mxu0 %v152
  %5363 = vmatpush.msra.mxu0 %v146
  %5364 = vmatpush.msra.mxu0 %v140
  %5365 = vmatmul.f32.gmra.mxu0 %v4665
  %v5366 = vpop.f32.mrf.mxu0
  %v5367 = vadd.f32 %v5347, %v5366
  %5368 = vdwg.mxu0
  %5369 = vmatpush.msra.mxu0 %v135
  %5370 = vmatpush.msra.mxu0 %v129
  %5371 = vmatpush.msra.mxu0 %v123
  %5372 = vmatpush.msra.mxu0 %v117
  %5373 = vmatpush.msra.mxu0 %v111
  %5374 = vmatpush.msra.mxu0 %v105
  %5375 = vmatpush.msra.mxu0 %v99
  %5376 = vmatpush.msra.mxu0 %v93
  %5377 = vmatpush.msra.mxu0 %v87
  %5378 = vmatpush.msra.mxu0 %v81
  %5379 = vmatpush.msra.mxu0 %v75
  %5380 = vmatpush.msra.mxu0 %v69
  %5381 = vmatpush.msra.mxu0 %v63
  %5382 = vmatpush.msra.mxu0 %v57
  %5383 = vmatpush.msra.mxu0 %v51
  %5384 = vmatpush.msra.mxu0 %v45
  %5385 = vmatmul.f32.gmra.mxu0 %v4664
  %v5386 = vpop.f32.mrf.mxu0
  %v5387 = vadd.f32 0.0, %v5386
  %5388 = vdwg.mxu0
  %5389 = vmatpush.msra.mxu0 %v231
  %5390 = vmatpush.msra.mxu0 %v225
  %5391 = vmatpush.msra.mxu0 %v219
  %5392 = vmatpush.msra.mxu0 %v213
  %5393 = vmatpush.msra.mxu0 %v207
  %5394 = vmatpush.msra.mxu0 %v201
  %5395 = vmatpush.msra.mxu0 %v195
  %5396 = vmatpush.msra.mxu0 %v189
  %5397 = vmatpush.msra.mxu0 %v183
  %5398 = vmatpush.msra.mxu0 %v177
  %5399 = vmatpush.msra.mxu0 %v171
  %5400 = vmatpush.msra.mxu0 %v165
  %5401 = vmatpush.msra.mxu0 %v159
  %5402 = vmatpush.msra.mxu0 %v153
  %5403 = vmatpush.msra.mxu0 %v147
  %5404 = vmatpush.msra.mxu0 %v141
  %5405 = vmatmul.f32.gmra.mxu0 %v4665
  %v5406 = vpop.f32.mrf.mxu0
  %v5407 = vadd.f32 %v5387, %v5406
  %5408 = vdwg.mxu0
  %5409 = vmatpush.msra.mxu0 %v136
  %5410 = vmatpush.msra.mxu0 %v130
  %5411 = vmatpush.msra.mxu0 %v124
  %5412 = vmatpush.msra.mxu0 %v118
  %5413 = vmatpush.msra.mxu0 %v112
  %5414 = vmatpush.msra.mxu0 %v106
  %5415 = vmatpush.msra.mxu0 %v100
  %5416 = vmatpush.msra.mxu0 %v94
  %5417 = vmatpush.msra.mxu0 %v88
  %5418 = vmatpush.msra.mxu0 %v82
  %5419 = vmatpush.msra.mxu0 %v76
  %5420 = vmatpush.msra.mxu0 %v70
  %5421 = vmatpush.msra.mxu0 %v64
  %5422 = vmatpush.msra.mxu0 %v58
  %5423 = vmatpush.msra.mxu0 %v52
  %5424 = vmatpush.msra.mxu0 %v46
  %5425 = vmatmul.f32.gmra.mxu0 %v4664
  %v5426 = vpop.f32.mrf.mxu0
  %v5427 = vadd.f32 0.0, %v5426
  %5428 = vdwg.mxu0
  %5429 = vmatpush.msra.mxu0 %v232
  %5430 = vmatpush.msra.mxu0 %v226
  %5431 = vmatpush.msra.mxu0 %v220
  %5432 = vmatpush.msra.mxu0 %v214
  %5433 = vmatpush.msra.mxu0 %v208
  %5434 = vmatpush.msra.mxu0 %v202
  %5435 = vmatpush.msra.mxu0 %v196
  %5436 = vmatpush.msra.mxu0 %v190
  %5437 = vmatpush.msra.mxu0 %v184
  %5438 = vmatpush.msra.mxu0 %v178
  %5439 = vmatpush.msra.mxu0 %v172
  %5440 = vmatpush.msra.mxu0 %v166
  %5441 = vmatpush.msra.mxu0 %v160
  %5442 = vmatpush.msra.mxu0 %v154
  %5443 = vmatpush.msra.mxu0 %v148
  %5444 = vmatpush.msra.mxu0 %v142
  %5445 = vmatmul.f32.gmra.mxu0 %v4665
  %v5446 = vpop.f32.mrf.mxu0
  %v5447 = vadd.f32 %v5427, %v5446
  %5448 = vdwg.mxu0
  %5449 = vmatpush.msra.mxu0 %v137
  %5450 = vmatpush.msra.mxu0 %v131
  %5451 = vmatpush.msra.mxu0 %v125
  %5452 = vmatpush.msra.mxu0 %v119
  %5453 = vmatpush.msra.mxu0 %v113
  %5454 = vmatpush.msra.mxu0 %v107
  %5455 = vmatpush.msra.mxu0 %v101
  %5456 = vmatpush.msra.mxu0 %v95
  %5457 = vmatpush.msra.mxu0 %v89
  %5458 = vmatpush.msra.mxu0 %v83
  %5459 = vmatpush.msra.mxu0 %v77
  %5460 = vmatpush.msra.mxu0 %v71
  %5461 = vmatpush.msra.mxu0 %v65
  %5462 = vmatpush.msra.mxu0 %v59
  %5463 = vmatpush.msra.mxu0 %v53
  %5464 = vmatpush.msra.mxu0 %v47
  %5465 = vmatmul.f32.gmra.mxu0 %v4664
  %v5466 = vpop.f32.mrf.mxu0
  %v5467 = vadd.f32 0.0, %v5466
  %5468 = vdwg.mxu0
  %5469 = vmatpush.msra.mxu0 %v233
  %5470 = vmatpush.msra.mxu0 %v227
  %5471 = vmatpush.msra.mxu0 %v221
  %5472 = vmatpush.msra.mxu0 %v215
  %5473 = vmatpush.msra.mxu0 %v209
  %5474 = vmatpush.msra.mxu0 %v203
  %5475 = vmatpush.msra.mxu0 %v197
  %5476 = vmatpush.msra.mxu0 %v191
  %5477 = vmatpush.msra.mxu0 %v185
  %5478 = vmatpush.msra.mxu0 %v179
  %5479 = vmatpush.msra.mxu0 %v173
  %5480 = vmatpush.msra.mxu0 %v167
  %5481 = vmatpush.msra.mxu0 %v161
  %5482 = vmatpush.msra.mxu0 %v155
  %5483 = vmatpush.msra.mxu0 %v149
  %5484 = vmatpush.msra.mxu0 %v143
  %5485 = vmatmul.f32.gmra.mxu0 %v4665
  %v5486 = vpop.f32.mrf.mxu0
  %v5487 = vadd.f32 %v5467, %v5486
  %5488 = vdwg.mxu0
  %v5489 = vadd.f32 %v5243, %v5287
  %v5490 = vadd.f32 %v5244, %v5327
  %v5491 = vxor.u32 %v5489, 2147483648
  %v5492 = vxor.u32 %v5490, 2147483648
  %v5493 = vmul.f32 %v5491, 1.442695
  %v5494 = vpow.pop %v5493
  %v5495 = vmul.f32 %v5492, 1.442695
  %v5496 = vpow.pop %v5495
  %v5497 = vadd.f32 %v5494, 1.0
  %v5498 = vadd.f32 %v5496, 1.0
  %v5499 = vrcp.pop %v5497
  %v5500 = vmul.f32 %v5497, %v5499
  %v5501 = vsub.f32 1.0, %v5500
  %v5502 = vmul.f32 %v5499, %v5501
  %v5503 = vadd.f32 %v5499, %v5502
  %vm5504 = vweird.f32 %v5497
  %vm5505 = vweird.f32 %v5499
  %vm5506 = vmor %vm5504, %vm5505
  %v5507 = vsel %vm5506, %v5499, %v5503
  %v5508 = vand.u32 2147483647, %v5497
  %vm5509 = vcmp.eq.f32.partialorder %v5508, 8.507059e+37
  %v5510 = vand.u32 %v5497, 2147483648
  %v5511 = vor.u32 1.1754944e-38, %v5510
  %v5512 = vsel %vm5509, %v5511, %v5507
  %v5513 = vmul.f32 1.0, %v5512
  %v5514 = vrcp.pop %v5498
  %v5515 = vmul.f32 %v5498, %v5514
  %v5516 = vsub.f32 1.0, %v5515
  %v5517 = vmul.f32 %v5514, %v5516
  %v5518 = vadd.f32 %v5514, %v5517
  %vm5519 = vweird.f32 %v5498
  %vm5520 = vweird.f32 %v5514
  %vm5521 = vmor %vm5519, %vm5520
  %v5522 = vsel %vm5521, %v5514, %v5518
  %v5523 = vand.u32 2147483647, %v5498
  %vm5524 = vcmp.eq.f32.partialorder %v5523, 8.507059e+37
  %v5525 = vand.u32 %v5498, 2147483648
  %v5526 = vor.u32 1.1754944e-38, %v5525
  %v5527 = vsel %vm5524, %v5526, %v5522
  %v5528 = vmul.f32 1.0, %v5527
  %v5529 = vadd.f32 %v5245, %v5367
  %v5530 = vadd.f32 %v5246, %v5407
  %v5531 = vxor.u32 %v5529, 2147483648
  %v5532 = vxor.u32 %v5530, 2147483648
  %v5533 = vmul.f32 %v5531, 1.442695
  %v5534 = vpow.pop %v5533
  %v5535 = vmul.f32 %v5532, 1.442695
  %v5536 = vpow.pop %v5535
  %v5537 = vadd.f32 %v5534, 1.0
  %v5538 = vadd.f32 %v5536, 1.0
  %v5539 = vrcp.pop %v5537
  %v5540 = vmul.f32 %v5537, %v5539
  %v5541 = vsub.f32 1.0, %v5540
  %v5542 = vmul.f32 %v5539, %v5541
  %v5543 = vadd.f32 %v5539, %v5542
  %vm5544 = vweird.f32 %v5537
  %vm5545 = vweird.f32 %v5539
  %vm5546 = vmor %vm5544, %vm5545
  %v5547 = vsel %vm5546, %v5539, %v5543
  %v5548 = vand.u32 2147483647, %v5537
  %vm5549 = vcmp.eq.f32.partialorder %v5548, 8.507059e+37
  %v5550 = vand.u32 %v5537, 2147483648
  %v5551 = vor.u32 1.1754944e-38, %v5550
  %v5552 = vsel %vm5549, %v5551, %v5547
  %v5553 = vmul.f32 1.0, %v5552
  %v5554 = vrcp.pop %v5538
  %v5555 = vmul.f32 %v5538, %v5554
  %v5556 = vsub.f32 1.0, %v5555
  %v5557 = vmul.f32 %v5554, %v5556
  %v5558 = vadd.f32 %v5554, %v5557
  %vm5559 = vweird.f32 %v5538
  %vm5560 = vweird.f32 %v5554
  %vm5561 = vmor %vm5559, %vm5560
  %v5562 = vsel %vm5561, %v5554, %v5558
  %v5563 = vand.u32 2147483647, %v5538
  %vm5564 = vcmp.eq.f32.partialorder %v5563, 8.507059e+37
  %v5565 = vand.u32 %v5538, 2147483648
  %v5566 = vor.u32 1.1754944e-38, %v5565
  %v5567 = vsel %vm5564, %v5566, %v5562
  %v5568 = vmul.f32 1.0, %v5567
  %v5569 = vadd.f32 %v5447, %v620
  %v5570 = vadd.f32 %v5487, %v621
  %v5571 = vmul.f32 %v5513, %v5569
  %v5572 = vmul.f32 %v5528, %v5570
  %v5573 = vadd.f32 %v5247, %v5571
  %v5574 = vadd.f32 %v5248, %v5572
  %v5575 = vtanh.pop %v5573
  %v5576 = vtanh.pop %v5574
  %v5577 = vsub.f32 1.0, %v5553
  %v5578 = vsub.f32 1.0, %v5568
  %v5579 = vmul.f32 %v5577, %v5575
  %v5580 = vmul.f32 %v5578, %v5576
  %v5581 = vmul.f32 %v5553, %v4664
  %v5582 = vmul.f32 %v5568, %v4665
  %v5583 = vadd.f32 %v5579, %v5581
  %v5584 = vadd.f32 %v5580, %v5582
  %5585 = vmatpush.msra.mxu0 %v324
  %5586 = vmatpush.msra.mxu0 %v318
  %5587 = vmatpush.msra.mxu0 %v312
  %5588 = vmatpush.msra.mxu0 %v306
  %5589 = vmatpush.msra.mxu0 %v300
  %5590 = vmatpush.msra.mxu0 %v294
  %5591 = vmatpush.msra.mxu0 %v288
  %5592 = vmatpush.msra.mxu0 %v282
  %5593 = vmatpush.msra.mxu0 %v276
  %5594 = vmatpush.msra.mxu0 %v270
  %5595 = vmatpush.msra.mxu0 %v264
  %5596 = vmatpush.msra.mxu0 %v258
  %5597 = vmatpush.msra.mxu0 %v252
  %5598 = vmatpush.msra.mxu0 %v246
  %5599 = vmatpush.msra.mxu0 %v240
  %5600 = vmatpush.msra.mxu0 %v234
  %5601 = vmatmul.f32.gmra.mxu0 %v5583
  %v5602 = vpop.f32.mrf.mxu0
  %v5603 = vadd.f32 %v626, %v5602
  %5604 = vdwg.mxu0
  %5605 = vmatpush.msra.mxu0 %v420
  %5606 = vmatpush.msra.mxu0 %v414
  %5607 = vmatpush.msra.mxu0 %v408
  %5608 = vmatpush.msra.mxu0 %v402
  %5609 = vmatpush.msra.mxu0 %v396
  %5610 = vmatpush.msra.mxu0 %v390
  %5611 = vmatpush.msra.mxu0 %v384
  %5612 = vmatpush.msra.mxu0 %v378
  %5613 = vmatpush.msra.mxu0 %v372
  %5614 = vmatpush.msra.mxu0 %v366
  %5615 = vmatpush.msra.mxu0 %v360
  %5616 = vmatpush.msra.mxu0 %v354
  %5617 = vmatpush.msra.mxu0 %v348
  %5618 = vmatpush.msra.mxu0 %v342
  %5619 = vmatpush.msra.mxu0 %v336
  %5620 = vmatpush.msra.mxu0 %v330
  %5621 = vmatmul.f32.gmra.mxu0 %v5584
  %v5622 = vpop.f32.mrf.mxu0
  %v5623 = vadd.f32 %v5603, %v5622
  %5624 = vdwg.mxu0
  %5625 = vmatpush.msra.mxu0 %v325
  %5626 = vmatpush.msra.mxu0 %v319
  %5627 = vmatpush.msra.mxu0 %v313
  %5628 = vmatpush.msra.mxu0 %v307
  %5629 = vmatpush.msra.mxu0 %v301
  %5630 = vmatpush.msra.mxu0 %v295
  %5631 = vmatpush.msra.mxu0 %v289
  %5632 = vmatpush.msra.mxu0 %v283
  %5633 = vmatpush.msra.mxu0 %v277
  %5634 = vmatpush.msra.mxu0 %v271
  %5635 = vmatpush.msra.mxu0 %v265
  %5636 = vmatpush.msra.mxu0 %v259
  %5637 = vmatpush.msra.mxu0 %v253
  %5638 = vmatpush.msra.mxu0 %v247
  %5639 = vmatpush.msra.mxu0 %v241
  %5640 = vmatpush.msra.mxu0 %v235
  %5641 = vmatmul.f32.gmra.mxu0 %v5583
  %v5642 = vpop.f32.mrf.mxu0
  %v5643 = vadd.f32 %v627, %v5642
  %5644 = vdwg.mxu0
  %5645 = vmatpush.msra.mxu0 %v421
  %5646 = vmatpush.msra.mxu0 %v415
  %5647 = vmatpush.msra.mxu0 %v409
  %5648 = vmatpush.msra.mxu0 %v403
  %5649 = vmatpush.msra.mxu0 %v397
  %5650 = vmatpush.msra.mxu0 %v391
  %5651 = vmatpush.msra.mxu0 %v385
  %5652 = vmatpush.msra.mxu0 %v379
  %5653 = vmatpush.msra.mxu0 %v373
  %5654 = vmatpush.msra.mxu0 %v367
  %5655 = vmatpush.msra.mxu0 %v361
  %5656 = vmatpush.msra.mxu0 %v355
  %5657 = vmatpush.msra.mxu0 %v349
  %5658 = vmatpush.msra.mxu0 %v343
  %5659 = vmatpush.msra.mxu0 %v337
  %5660 = vmatpush.msra.mxu0 %v331
  %5661 = vmatmul.f32.gmra.mxu0 %v5584
  %v5662 = vpop.f32.mrf.mxu0
  %v5663 = vadd.f32 %v5643, %v5662
  %5664 = vdwg.mxu0
  %5665 = vmatpush.msra.mxu0 %v326
  %5666 = vmatpush.msra.mxu0 %v320
  %5667 = vmatpush.msra.mxu0 %v314
  %5668 = vmatpush.msra.mxu0 %v308
  %5669 = vmatpush.msra.mxu0 %v302
  %5670 = vmatpush.msra.mxu0 %v296
  %5671 = vmatpush.msra.mxu0 %v290
  %5672 = vmatpush.msra.mxu0 %v284
  %5673 = vmatpush.msra.mxu0 %v278
  %5674 = vmatpush.msra.mxu0 %v272
  %5675 = vmatpush.msra.mxu0 %v266
  %5676 = vmatpush.msra.mxu0 %v260
  %5677 = vmatpush.msra.mxu0 %v254
  %5678 = vmatpush.msra.mxu0 %v248
  %5679 = vmatpush.msra.mxu0 %v242
  %5680 = vmatpush.msra.mxu0 %v236
  %5681 = vmatmul.f32.gmra.mxu0 %v5583
  %v5682 = vpop.f32.mrf.mxu0
  %v5683 = vadd.f32 %v628, %v5682
  %5684 = vdwg.mxu0
  %5685 = vmatpush.msra.mxu0 %v422
  %5686 = vmatpush.msra.mxu0 %v416
  %5687 = vmatpush.msra.mxu0 %v410
  %5688 = vmatpush.msra.mxu0 %v404
  %5689 = vmatpush.msra.mxu0 %v398
  %5690 = vmatpush.msra.mxu0 %v392
  %5691 = vmatpush.msra.mxu0 %v386
  %5692 = vmatpush.msra.mxu0 %v380
  %5693 = vmatpush.msra.mxu0 %v374
  %5694 = vmatpush.msra.mxu0 %v368
  %5695 = vmatpush.msra.mxu0 %v362
  %5696 = vmatpush.msra.mxu0 %v356
  %5697 = vmatpush.msra.mxu0 %v350
  %5698 = vmatpush.msra.mxu0 %v344
  %5699 = vmatpush.msra.mxu0 %v338
  %5700 = vmatpush.msra.mxu0 %v332
  %5701 = vmatmul.f32.gmra.mxu0 %v5584
  %v5702 = vpop.f32.mrf.mxu0
  %v5703 = vadd.f32 %v5683, %v5702
  %5704 = vdwg.mxu0
  %5705 = vmatpush.msra.mxu0 %v327
  %5706 = vmatpush.msra.mxu0 %v321
  %5707 = vmatpush.msra.mxu0 %v315
  %5708 = vmatpush.msra.mxu0 %v309
  %5709 = vmatpush.msra.mxu0 %v303
  %5710 = vmatpush.msra.mxu0 %v297
  %5711 = vmatpush.msra.mxu0 %v291
  %5712 = vmatpush.msra.mxu0 %v285
  %5713 = vmatpush.msra.mxu0 %v279
  %5714 = vmatpush.msra.mxu0 %v273
  %5715 = vmatpush.msra.mxu0 %v267
  %5716 = vmatpush.msra.mxu0 %v261
  %5717 = vmatpush.msra.mxu0 %v255
  %5718 = vmatpush.msra.mxu0 %v249
  %5719 = vmatpush.msra.mxu0 %v243
  %5720 = vmatpush.msra.mxu0 %v237
  %5721 = vmatmul.f32.gmra.mxu0 %v5583
  %v5722 = vpop.f32.mrf.mxu0
  %v5723 = vadd.f32 %v629, %v5722
  %5724 = vdwg.mxu0
  %5725 = vmatpush.msra.mxu0 %v423
  %5726 = vmatpush.msra.mxu0 %v417
  %5727 = vmatpush.msra.mxu0 %v411
  %5728 = vmatpush.msra.mxu0 %v405
  %5729 = vmatpush.msra.mxu0 %v399
  %5730 = vmatpush.msra.mxu0 %v393
  %5731 = vmatpush.msra.mxu0 %v387
  %5732 = vmatpush.msra.mxu0 %v381
  %5733 = vmatpush.msra.mxu0 %v375
  %5734 = vmatpush.msra.mxu0 %v369
  %5735 = vmatpush.msra.mxu0 %v363
  %5736 = vmatpush.msra.mxu0 %v357
  %5737 = vmatpush.msra.mxu0 %v351
  %5738 = vmatpush.msra.mxu0 %v345
  %5739 = vmatpush.msra.mxu0 %v339
  %5740 = vmatpush.msra.mxu0 %v333
  %5741 = vmatmul.f32.gmra.mxu0 %v5584
  %v5742 = vpop.f32.mrf.mxu0
  %v5743 = vadd.f32 %v5723, %v5742
  %5744 = vdwg.mxu0
  %5745 = vmatpush.msra.mxu0 %v328
  %5746 = vmatpush.msra.mxu0 %v322
  %5747 = vmatpush.msra.mxu0 %v316
  %5748 = vmatpush.msra.mxu0 %v310
  %5749 = vmatpush.msra.mxu0 %v304
  %5750 = vmatpush.msra.mxu0 %v298
  %5751 = vmatpush.msra.mxu0 %v292
  %5752 = vmatpush.msra.mxu0 %v286
  %5753 = vmatpush.msra.mxu0 %v280
  %5754 = vmatpush.msra.mxu0 %v274
  %5755 = vmatpush.msra.mxu0 %v268
  %5756 = vmatpush.msra.mxu0 %v262
  %5757 = vmatpush.msra.mxu0 %v256
  %5758 = vmatpush.msra.mxu0 %v250
  %5759 = vmatpush.msra.mxu0 %v244
  %5760 = vmatpush.msra.mxu0 %v238
  %5761 = vmatmul.f32.gmra.mxu0 %v5583
  %v5762 = vpop.f32.mrf.mxu0
  %v5763 = vadd.f32 %v630, %v5762
  %5764 = vdwg.mxu0
  %5765 = vmatpush.msra.mxu0 %v424
  %5766 = vmatpush.msra.mxu0 %v418
  %5767 = vmatpush.msra.mxu0 %v412
  %5768 = vmatpush.msra.mxu0 %v406
  %5769 = vmatpush.msra.mxu0 %v400
  %5770 = vmatpush.msra.mxu0 %v394
  %5771 = vmatpush.msra.mxu0 %v388
  %5772 = vmatpush.msra.mxu0 %v382
  %5773 = vmatpush.msra.mxu0 %v376
  %5774 = vmatpush.msra.mxu0 %v370
  %5775 = vmatpush.msra.mxu0 %v364
  %5776 = vmatpush.msra.mxu0 %v358
  %5777 = vmatpush.msra.mxu0 %v352
  %5778 = vmatpush.msra.mxu0 %v346
  %5779 = vmatpush.msra.mxu0 %v340
  %5780 = vmatpush.msra.mxu0 %v334
  %5781 = vmatmul.f32.gmra.mxu0 %v5584
  %v5782 = vpop.f32.mrf.mxu0
  %v5783 = vadd.f32 %v5763, %v5782
  %5784 = vdwg.mxu0
  %5785 = vmatpush.msra.mxu0 %v329
  %5786 = vmatpush.msra.mxu0 %v323
  %5787 = vmatpush.msra.mxu0 %v317
  %5788 = vmatpush.msra.mxu0 %v311
  %5789 = vmatpush.msra.mxu0 %v305
  %5790 = vmatpush.msra.mxu0 %v299
  %5791 = vmatpush.msra.mxu0 %v293
  %5792 = vmatpush.msra.mxu0 %v287
  %5793 = vmatpush.msra.mxu0 %v281
  %5794 = vmatpush.msra.mxu0 %v275
  %5795 = vmatpush.msra.mxu0 %v269
  %5796 = vmatpush.msra.mxu0 %v263
  %5797 = vmatpush.msra.mxu0 %v257
  %5798 = vmatpush.msra.mxu0 %v251
  %5799 = vmatpush.msra.mxu0 %v245
  %5800 = vmatpush.msra.mxu0 %v239
  %5801 = vmatmul.f32.gmra.mxu0 %v5583
  %v5802 = vpop.f32.mrf.mxu0
  %v5803 = vadd.f32 %v631, %v5802
  %5804 = vdwg.mxu0
  %5805 = vmatpush.msra.mxu0 %v425
  %5806 = vmatpush.msra.mxu0 %v419
  %5807 = vmatpush.msra.mxu0 %v413
  %5808 = vmatpush.msra.mxu0 %v407
  %5809 = vmatpush.msra.mxu0 %v401
  %5810 = vmatpush.msra.mxu0 %v395
  %5811 = vmatpush.msra.mxu0 %v389
  %5812 = vmatpush.msra.mxu0 %v383
  %5813 = vmatpush.msra.mxu0 %v377
  %5814 = vmatpush.msra.mxu0 %v371
  %5815 = vmatpush.msra.mxu0 %v365
  %5816 = vmatpush.msra.mxu0 %v359
  %5817 = vmatpush.msra.mxu0 %v353
  %5818 = vmatpush.msra.mxu0 %v347
  %5819 = vmatpush.msra.mxu0 %v341
  %5820 = vmatpush.msra.mxu0 %v335
  %5821 = vmatmul.f32.gmra.mxu0 %v5584
  %v5822 = vpop.f32.mrf.mxu0
  %v5823 = vadd.f32 %v5803, %v5822
  %5824 = vdwg.mxu0
  %5825 = vmatpush.msra.mxu0 %v516
  %5826 = vmatpush.msra.mxu0 %v510
  %5827 = vmatpush.msra.mxu0 %v504
  %5828 = vmatpush.msra.mxu0 %v498
  %5829 = vmatpush.msra.mxu0 %v492
  %5830 = vmatpush.msra.mxu0 %v486
  %5831 = vmatpush.msra.mxu0 %v480
  %5832 = vmatpush.msra.mxu0 %v474
  %5833 = vmatpush.msra.mxu0 %v468
  %5834 = vmatpush.msra.mxu0 %v462
  %5835 = vmatpush.msra.mxu0 %v456
  %5836 = vmatpush.msra.mxu0 %v450
  %5837 = vmatpush.msra.mxu0 %v444
  %5838 = vmatpush.msra.mxu0 %v438
  %5839 = vmatpush.msra.mxu0 %v432
  %5840 = vmatpush.msra.mxu0 %v426
  %5841 = vmatmul.f32.gmra.mxu0 %v5240
  %v5842 = vpop.f32.mrf.mxu0
  %v5843 = vadd.f32 0.0, %v5842
  %5844 = vdwg.mxu0
  %5845 = vmatpush.msra.mxu0 %v612
  %5846 = vmatpush.msra.mxu0 %v606
  %5847 = vmatpush.msra.mxu0 %v600
  %5848 = vmatpush.msra.mxu0 %v594
  %5849 = vmatpush.msra.mxu0 %v588
  %5850 = vmatpush.msra.mxu0 %v582
  %5851 = vmatpush.msra.mxu0 %v576
  %5852 = vmatpush.msra.mxu0 %v570
  %5853 = vmatpush.msra.mxu0 %v564
  %5854 = vmatpush.msra.mxu0 %v558
  %5855 = vmatpush.msra.mxu0 %v552
  %5856 = vmatpush.msra.mxu0 %v546
  %5857 = vmatpush.msra.mxu0 %v540
  %5858 = vmatpush.msra.mxu0 %v534
  %5859 = vmatpush.msra.mxu0 %v528
  %5860 = vmatpush.msra.mxu0 %v522
  %5861 = vmatmul.f32.gmra.mxu0 %v5241
  %v5862 = vpop.f32.mrf.mxu0
  %v5863 = vadd.f32 %v5843, %v5862
  %5864 = vdwg.mxu0
  %5865 = vmatpush.msra.mxu0 %v517
  %5866 = vmatpush.msra.mxu0 %v511
  %5867 = vmatpush.msra.mxu0 %v505
  %5868 = vmatpush.msra.mxu0 %v499
  %5869 = vmatpush.msra.mxu0 %v493
  %5870 = vmatpush.msra.mxu0 %v487
  %5871 = vmatpush.msra.mxu0 %v481
  %5872 = vmatpush.msra.mxu0 %v475
  %5873 = vmatpush.msra.mxu0 %v469
  %5874 = vmatpush.msra.mxu0 %v463
  %5875 = vmatpush.msra.mxu0 %v457
  %5876 = vmatpush.msra.mxu0 %v451
  %5877 = vmatpush.msra.mxu0 %v445
  %5878 = vmatpush.msra.mxu0 %v439
  %5879 = vmatpush.msra.mxu0 %v433
  %5880 = vmatpush.msra.mxu0 %v427
  %5881 = vmatmul.f32.gmra.mxu0 %v5240
  %v5882 = vpop.f32.mrf.mxu0
  %v5883 = vadd.f32 0.0, %v5882
  %5884 = vdwg.mxu0
  %5885 = vmatpush.msra.mxu0 %v613
  %5886 = vmatpush.msra.mxu0 %v607
  %5887 = vmatpush.msra.mxu0 %v601
  %5888 = vmatpush.msra.mxu0 %v595
  %5889 = vmatpush.msra.mxu0 %v589
  %5890 = vmatpush.msra.mxu0 %v583
  %5891 = vmatpush.msra.mxu0 %v577
  %5892 = vmatpush.msra.mxu0 %v571
  %5893 = vmatpush.msra.mxu0 %v565
  %5894 = vmatpush.msra.mxu0 %v559
  %5895 = vmatpush.msra.mxu0 %v553
  %5896 = vmatpush.msra.mxu0 %v547
  %5897 = vmatpush.msra.mxu0 %v541
  %5898 = vmatpush.msra.mxu0 %v535
  %5899 = vmatpush.msra.mxu0 %v529
  %5900 = vmatpush.msra.mxu0 %v523
  %5901 = vmatmul.f32.gmra.mxu0 %v5241
  %v5902 = vpop.f32.mrf.mxu0
  %v5903 = vadd.f32 %v5883, %v5902
  %5904 = vdwg.mxu0
  %5905 = vmatpush.msra.mxu0 %v518
  %5906 = vmatpush.msra.mxu0 %v512
  %5907 = vmatpush.msra.mxu0 %v506
  %5908 = vmatpush.msra.mxu0 %v500
  %5909 = vmatpush.msra.mxu0 %v494
  %5910 = vmatpush.msra.mxu0 %v488
  %5911 = vmatpush.msra.mxu0 %v482
  %5912 = vmatpush.msra.mxu0 %v476
  %5913 = vmatpush.msra.mxu0 %v470
  %5914 = vmatpush.msra.mxu0 %v464
  %5915 = vmatpush.msra.mxu0 %v458
  %5916 = vmatpush.msra.mxu0 %v452
  %5917 = vmatpush.msra.mxu0 %v446
  %5918 = vmatpush.msra.mxu0 %v440
  %5919 = vmatpush.msra.mxu0 %v434
  %5920 = vmatpush.msra.mxu0 %v428
  %5921 = vmatmul.f32.gmra.mxu0 %v5240
  %v5922 = vpop.f32.mrf.mxu0
  %v5923 = vadd.f32 0.0, %v5922
  %5924 = vdwg.mxu0
  %5925 = vmatpush.msra.mxu0 %v614
  %5926 = vmatpush.msra.mxu0 %v608
  %5927 = vmatpush.msra.mxu0 %v602
  %5928 = vmatpush.msra.mxu0 %v596
  %5929 = vmatpush.msra.mxu0 %v590
  %5930 = vmatpush.msra.mxu0 %v584
  %5931 = vmatpush.msra.mxu0 %v578
  %5932 = vmatpush.msra.mxu0 %v572
  %5933 = vmatpush.msra.mxu0 %v566
  %5934 = vmatpush.msra.mxu0 %v560
  %5935 = vmatpush.msra.mxu0 %v554
  %5936 = vmatpush.msra.mxu0 %v548
  %5937 = vmatpush.msra.mxu0 %v542
  %5938 = vmatpush.msra.mxu0 %v536
  %5939 = vmatpush.msra.mxu0 %v530
  %5940 = vmatpush.msra.mxu0 %v524
  %5941 = vmatmul.f32.gmra.mxu0 %v5241
  %v5942 = vpop.f32.mrf.mxu0
  %v5943 = vadd.f32 %v5923, %v5942
  %5944 = vdwg.mxu0
  %5945 = vmatpush.msra.mxu0 %v519
  %5946 = vmatpush.msra.mxu0 %v513
  %5947 = vmatpush.msra.mxu0 %v507
  %5948 = vmatpush.msra.mxu0 %v501
  %5949 = vmatpush.msra.mxu0 %v495
  %5950 = vmatpush.msra.mxu0 %v489
  %5951 = vmatpush.msra.mxu0 %v483
  %5952 = vmatpush.msra.mxu0 %v477
  %5953 = vmatpush.msra.mxu0 %v471
  %5954 = vmatpush.msra.mxu0 %v465
  %5955 = vmatpush.msra.mxu0 %v459
  %5956 = vmatpush.msra.mxu0 %v453
  %5957 = vmatpush.msra.mxu0 %v447
  %5958 = vmatpush.msra.mxu0 %v441
  %5959 = vmatpush.msra.mxu0 %v435
  %5960 = vmatpush.msra.mxu0 %v429
  %5961 = vmatmul.f32.gmra.mxu0 %v5240
  %v5962 = vpop.f32.mrf.mxu0
  %v5963 = vadd.f32 0.0, %v5962
  %5964 = vdwg.mxu0
  %5965 = vmatpush.msra.mxu0 %v615
  %5966 = vmatpush.msra.mxu0 %v609
  %5967 = vmatpush.msra.mxu0 %v603
  %5968 = vmatpush.msra.mxu0 %v597
  %5969 = vmatpush.msra.mxu0 %v591
  %5970 = vmatpush.msra.mxu0 %v585
  %5971 = vmatpush.msra.mxu0 %v579
  %5972 = vmatpush.msra.mxu0 %v573
  %5973 = vmatpush.msra.mxu0 %v567
  %5974 = vmatpush.msra.mxu0 %v561
  %5975 = vmatpush.msra.mxu0 %v555
  %5976 = vmatpush.msra.mxu0 %v549
  %5977 = vmatpush.msra.mxu0 %v543
  %5978 = vmatpush.msra.mxu0 %v537
  %5979 = vmatpush.msra.mxu0 %v531
  %5980 = vmatpush.msra.mxu0 %v525
  %5981 = vmatmul.f32.gmra.mxu0 %v5241
  %v5982 = vpop.f32.mrf.mxu0
  %v5983 = vadd.f32 %v5963, %v5982
  %5984 = vdwg.mxu0
  %5985 = vmatpush.msra.mxu0 %v520
  %5986 = vmatpush.msra.mxu0 %v514
  %5987 = vmatpush.msra.mxu0 %v508
  %5988 = vmatpush.msra.mxu0 %v502
  %5989 = vmatpush.msra.mxu0 %v496
  %5990 = vmatpush.msra.mxu0 %v490
  %5991 = vmatpush.msra.mxu0 %v484
  %5992 = vmatpush.msra.mxu0 %v478
  %5993 = vmatpush.msra.mxu0 %v472
  %5994 = vmatpush.msra.mxu0 %v466
  %5995 = vmatpush.msra.mxu0 %v460
  %5996 = vmatpush.msra.mxu0 %v454
  %5997 = vmatpush.msra.mxu0 %v448
  %5998 = vmatpush.msra.mxu0 %v442
  %5999 = vmatpush.msra.mxu0 %v436
  %6000 = vmatpush.msra.mxu0 %v430
  %6001 = vmatmul.f32.gmra.mxu0 %v5240
  %v6002 = vpop.f32.mrf.mxu0
  %v6003 = vadd.f32 0.0, %v6002
  %6004 = vdwg.mxu0
  %6005 = vmatpush.msra.mxu0 %v616
  %6006 = vmatpush.msra.mxu0 %v610
  %6007 = vmatpush.msra.mxu0 %v604
  %6008 = vmatpush.msra.mxu0 %v598
  %6009 = vmatpush.msra.mxu0 %v592
  %6010 = vmatpush.msra.mxu0 %v586
  %6011 = vmatpush.msra.mxu0 %v580
  %6012 = vmatpush.msra.mxu0 %v574
  %6013 = vmatpush.msra.mxu0 %v568
  %6014 = vmatpush.msra.mxu0 %v562
  %6015 = vmatpush.msra.mxu0 %v556
  %6016 = vmatpush.msra.mxu0 %v550
  %6017 = vmatpush.msra.mxu0 %v544
  %6018 = vmatpush.msra.mxu0 %v538
  %6019 = vmatpush.msra.mxu0 %v532
  %6020 = vmatpush.msra.mxu0 %v526
  %6021 = vmatmul.f32.gmra.mxu0 %v5241
  %v6022 = vpop.f32.mrf.mxu0
  %v6023 = vadd.f32 %v6003, %v6022
  %6024 = vdwg.mxu0
  %6025 = vmatpush.msra.mxu0 %v521
  %6026 = vmatpush.msra.mxu0 %v515
  %6027 = vmatpush.msra.mxu0 %v509
  %6028 = vmatpush.msra.mxu0 %v503
  %6029 = vmatpush.msra.mxu0 %v497
  %6030 = vmatpush.msra.mxu0 %v491
  %6031 = vmatpush.msra.mxu0 %v485
  %6032 = vmatpush.msra.mxu0 %v479
  %6033 = vmatpush.msra.mxu0 %v473
  %6034 = vmatpush.msra.mxu0 %v467
  %6035 = vmatpush.msra.mxu0 %v461
  %6036 = vmatpush.msra.mxu0 %v455
  %6037 = vmatpush.msra.mxu0 %v449
  %6038 = vmatpush.msra.mxu0 %v443
  %6039 = vmatpush.msra.mxu0 %v437
  %6040 = vmatpush.msra.mxu0 %v431
  %6041 = vmatmul.f32.gmra.mxu0 %v5240
  %v6042 = vpop.f32.mrf.mxu0
  %v6043 = vadd.f32 0.0, %v6042
  %6044 = vdwg.mxu0
  %6045 = vmatpush.msra.mxu0 %v617
  %6046 = vmatpush.msra.mxu0 %v611
  %6047 = vmatpush.msra.mxu0 %v605
  %6048 = vmatpush.msra.mxu0 %v599
  %6049 = vmatpush.msra.mxu0 %v593
  %6050 = vmatpush.msra.mxu0 %v587
  %6051 = vmatpush.msra.mxu0 %v581
  %6052 = vmatpush.msra.mxu0 %v575
  %6053 = vmatpush.msra.mxu0 %v569
  %6054 = vmatpush.msra.mxu0 %v563
  %6055 = vmatpush.msra.mxu0 %v557
  %6056 = vmatpush.msra.mxu0 %v551
  %6057 = vmatpush.msra.mxu0 %v545
  %6058 = vmatpush.msra.mxu0 %v539
  %6059 = vmatpush.msra.mxu0 %v533
  %6060 = vmatpush.msra.mxu0 %v527
  %6061 = vmatmul.f32.gmra.mxu0 %v5241
  %v6062 = vpop.f32.mrf.mxu0
  %v6063 = vadd.f32 %v6043, %v6062
  %6064 = vdwg.mxu0
  %v6065 = vadd.f32 %v5623, %v5863
  %v6066 = vadd.f32 %v5663, %v5903
  %v6067 = vxor.u32 %v6065, 2147483648
  %v6068 = vxor.u32 %v6066, 2147483648
  %v6069 = vmul.f32 %v6067, 1.442695
  %v6070 = vpow.pop %v6069
  %v6071 = vmul.f32 %v6068, 1.442695
  %v6072 = vpow.pop %v6071
  %v6073 = vadd.f32 %v6070, 1.0
  %v6074 = vadd.f32 %v6072, 1.0
  %v6075 = vrcp.pop %v6073
  %v6076 = vmul.f32 %v6073, %v6075
  %v6077 = vsub.f32 1.0, %v6076
  %v6078 = vmul.f32 %v6075, %v6077
  %v6079 = vadd.f32 %v6075, %v6078
  %vm6080 = vweird.f32 %v6073
  %vm6081 = vweird.f32 %v6075
  %vm6082 = vmor %vm6080, %vm6081
  %v6083 = vsel %vm6082, %v6075, %v6079
  %v6084 = vand.u32 2147483647, %v6073
  %vm6085 = vcmp.eq.f32.partialorder %v6084, 8.507059e+37
  %v6086 = vand.u32 %v6073, 2147483648
  %v6087 = vor.u32 1.1754944e-38, %v6086
  %v6088 = vsel %vm6085, %v6087, %v6083
  %v6089 = vmul.f32 1.0, %v6088
  %v6090 = vrcp.pop %v6074
  %v6091 = vmul.f32 %v6074, %v6090
  %v6092 = vsub.f32 1.0, %v6091
  %v6093 = vmul.f32 %v6090, %v6092
  %v6094 = vadd.f32 %v6090, %v6093
  %vm6095 = vweird.f32 %v6074
  %vm6096 = vweird.f32 %v6090
  %vm6097 = vmor %vm6095, %vm6096
  %v6098 = vsel %vm6097, %v6090, %v6094
  %v6099 = vand.u32 2147483647, %v6074
  %vm6100 = vcmp.eq.f32.partialorder %v6099, 8.507059e+37
  %v6101 = vand.u32 %v6074, 2147483648
  %v6102 = vor.u32 1.1754944e-38, %v6101
  %v6103 = vsel %vm6100, %v6102, %v6098
  %v6104 = vmul.f32 1.0, %v6103
  %v6105 = vadd.f32 %v5703, %v5943
  %v6106 = vadd.f32 %v5743, %v5983
  %v6107 = vxor.u32 %v6105, 2147483648
  %v6108 = vxor.u32 %v6106, 2147483648
  %v6109 = vmul.f32 %v6107, 1.442695
  %v6110 = vpow.pop %v6109
  %v6111 = vmul.f32 %v6108, 1.442695
  %v6112 = vpow.pop %v6111
  %v6113 = vadd.f32 %v6110, 1.0
  %v6114 = vadd.f32 %v6112, 1.0
  %v6115 = vrcp.pop %v6113
  %v6116 = vmul.f32 %v6113, %v6115
  %v6117 = vsub.f32 1.0, %v6116
  %v6118 = vmul.f32 %v6115, %v6117
  %v6119 = vadd.f32 %v6115, %v6118
  %vm6120 = vweird.f32 %v6113
  %vm6121 = vweird.f32 %v6115
  %vm6122 = vmor %vm6120, %vm6121
  %v6123 = vsel %vm6122, %v6115, %v6119
  %v6124 = vand.u32 2147483647, %v6113
  %vm6125 = vcmp.eq.f32.partialorder %v6124, 8.507059e+37
  %v6126 = vand.u32 %v6113, 2147483648
  %v6127 = vor.u32 1.1754944e-38, %v6126
  %v6128 = vsel %vm6125, %v6127, %v6123
  %v6129 = vmul.f32 1.0, %v6128
  %v6130 = vrcp.pop %v6114
  %v6131 = vmul.f32 %v6114, %v6130
  %v6132 = vsub.f32 1.0, %v6131
  %v6133 = vmul.f32 %v6130, %v6132
  %v6134 = vadd.f32 %v6130, %v6133
  %vm6135 = vweird.f32 %v6114
  %vm6136 = vweird.f32 %v6130
  %vm6137 = vmor %vm6135, %vm6136
  %v6138 = vsel %vm6137, %v6130, %v6134
  %v6139 = vand.u32 2147483647, %v6114
  %vm6140 = vcmp.eq.f32.partialorder %v6139, 8.507059e+37
  %v6141 = vand.u32 %v6114, 2147483648
  %v6142 = vor.u32 1.1754944e-38, %v6141
  %v6143 = vsel %vm6140, %v6142, %v6138
  %v6144 = vmul.f32 1.0, %v6143
  %v6145 = vadd.f32 %v6023, %v640
  %v6146 = vadd.f32 %v6063, %v641
  %v6147 = vmul.f32 %v6089, %v6145
  %v6148 = vmul.f32 %v6104, %v6146
  %v6149 = vadd.f32 %v5783, %v6147
  %v6150 = vadd.f32 %v5823, %v6148
  %v6151 = vtanh.pop %v6149
  %v6152 = vtanh.pop %v6150
  %v6153 = vsub.f32 1.0, %v6129
  %v6154 = vsub.f32 1.0, %v6144
  %v6155 = vmul.f32 %v6153, %v6151
  %v6156 = vmul.f32 %v6154, %v6152
  %v6157 = vmul.f32 %v6129, %v5240
  %v6158 = vmul.f32 %v6144, %v5241
  %v6159 = vadd.f32 %v6155, %v6157
  %v6160 = vadd.f32 %v6156, %v6158
  %s6161 = scalar_lea.vmem %s0, 288
  %v6162 = vld [vmem:[%s6161] sm:$0xff]
  %v6163 = vld [vmem:[%s6161 + $0x8] sm:$0xff]
  %v6164 = vld [vmem:[%s6161 + $0x10] sm:$0xff]
  %v6165 = vld [vmem:[%s6161 + $0x18] sm:$0xff]
  %v6166 = vld [vmem:[%s6161 + $0x20] sm:$0xff]
  %v6167 = vld [vmem:[%s6161 + $0x28] sm:$0xff]
  %6168 = vmatpush.msra.mxu0 %v132
  %6169 = vmatpush.msra.mxu0 %v126
  %6170 = vmatpush.msra.mxu0 %v120
  %6171 = vmatpush.msra.mxu0 %v114
  %6172 = vmatpush.msra.mxu0 %v108
  %6173 = vmatpush.msra.mxu0 %v102
  %6174 = vmatpush.msra.mxu0 %v96
  %6175 = vmatpush.msra.mxu0 %v90
  %6176 = vmatpush.msra.mxu0 %v84
  %6177 = vmatpush.msra.mxu0 %v78
  %6178 = vmatpush.msra.mxu0 %v72
  %6179 = vmatpush.msra.mxu0 %v66
  %6180 = vmatpush.msra.mxu0 %v60
  %6181 = vmatpush.msra.mxu0 %v54
  %6182 = vmatpush.msra.mxu0 %v48
  %6183 = vmatpush.msra.mxu0 %v42
  %6184 = vmatmul.f32.gmra.mxu0 %v5583
  %v6185 = vpop.f32.mrf.mxu0
  %v6186 = vadd.f32 0.0, %v6185
  %6187 = vdwg.mxu0
  %6188 = vmatpush.msra.mxu0 %v228
  %6189 = vmatpush.msra.mxu0 %v222
  %6190 = vmatpush.msra.mxu0 %v216
  %6191 = vmatpush.msra.mxu0 %v210
  %6192 = vmatpush.msra.mxu0 %v204
  %6193 = vmatpush.msra.mxu0 %v198
  %6194 = vmatpush.msra.mxu0 %v192
  %6195 = vmatpush.msra.mxu0 %v186
  %6196 = vmatpush.msra.mxu0 %v180
  %6197 = vmatpush.msra.mxu0 %v174
  %6198 = vmatpush.msra.mxu0 %v168
  %6199 = vmatpush.msra.mxu0 %v162
  %6200 = vmatpush.msra.mxu0 %v156
  %6201 = vmatpush.msra.mxu0 %v150
  %6202 = vmatpush.msra.mxu0 %v144
  %6203 = vmatpush.msra.mxu0 %v138
  %6204 = vmatmul.f32.gmra.mxu0 %v5584
  %v6205 = vpop.f32.mrf.mxu0
  %v6206 = vadd.f32 %v6186, %v6205
  %6207 = vdwg.mxu0
  %6208 = vmatpush.msra.mxu0 %v133
  %6209 = vmatpush.msra.mxu0 %v127
  %6210 = vmatpush.msra.mxu0 %v121
  %6211 = vmatpush.msra.mxu0 %v115
  %6212 = vmatpush.msra.mxu0 %v109
  %6213 = vmatpush.msra.mxu0 %v103
  %6214 = vmatpush.msra.mxu0 %v97
  %6215 = vmatpush.msra.mxu0 %v91
  %6216 = vmatpush.msra.mxu0 %v85
  %6217 = vmatpush.msra.mxu0 %v79
  %6218 = vmatpush.msra.mxu0 %v73
  %6219 = vmatpush.msra.mxu0 %v67
  %6220 = vmatpush.msra.mxu0 %v61
  %6221 = vmatpush.msra.mxu0 %v55
  %6222 = vmatpush.msra.mxu0 %v49
  %6223 = vmatpush.msra.mxu0 %v43
  %6224 = vmatmul.f32.gmra.mxu0 %v5583
  %v6225 = vpop.f32.mrf.mxu0
  %v6226 = vadd.f32 0.0, %v6225
  %6227 = vdwg.mxu0
  %6228 = vmatpush.msra.mxu0 %v229
  %6229 = vmatpush.msra.mxu0 %v223
  %6230 = vmatpush.msra.mxu0 %v217
  %6231 = vmatpush.msra.mxu0 %v211
  %6232 = vmatpush.msra.mxu0 %v205
  %6233 = vmatpush.msra.mxu0 %v199
  %6234 = vmatpush.msra.mxu0 %v193
  %6235 = vmatpush.msra.mxu0 %v187
  %6236 = vmatpush.msra.mxu0 %v181
  %6237 = vmatpush.msra.mxu0 %v175
  %6238 = vmatpush.msra.mxu0 %v169
  %6239 = vmatpush.msra.mxu0 %v163
  %6240 = vmatpush.msra.mxu0 %v157
  %6241 = vmatpush.msra.mxu0 %v151
  %6242 = vmatpush.msra.mxu0 %v145
  %6243 = vmatpush.msra.mxu0 %v139
  %6244 = vmatmul.f32.gmra.mxu0 %v5584
  %v6245 = vpop.f32.mrf.mxu0
  %v6246 = vadd.f32 %v6226, %v6245
  %6247 = vdwg.mxu0
  %6248 = vmatpush.msra.mxu0 %v134
  %6249 = vmatpush.msra.mxu0 %v128
  %6250 = vmatpush.msra.mxu0 %v122
  %6251 = vmatpush.msra.mxu0 %v116
  %6252 = vmatpush.msra.mxu0 %v110
  %6253 = vmatpush.msra.mxu0 %v104
  %6254 = vmatpush.msra.mxu0 %v98
  %6255 = vmatpush.msra.mxu0 %v92
  %6256 = vmatpush.msra.mxu0 %v86
  %6257 = vmatpush.msra.mxu0 %v80
  %6258 = vmatpush.msra.mxu0 %v74
  %6259 = vmatpush.msra.mxu0 %v68
  %6260 = vmatpush.msra.mxu0 %v62
  %6261 = vmatpush.msra.mxu0 %v56
  %6262 = vmatpush.msra.mxu0 %v50
  %6263 = vmatpush.msra.mxu0 %v44
  %6264 = vmatmul.f32.gmra.mxu0 %v5583
  %v6265 = vpop.f32.mrf.mxu0
  %v6266 = vadd.f32 0.0, %v6265
  %6267 = vdwg.mxu0
  %6268 = vmatpush.msra.mxu0 %v230
  %6269 = vmatpush.msra.mxu0 %v224
  %6270 = vmatpush.msra.mxu0 %v218
  %6271 = vmatpush.msra.mxu0 %v212
  %6272 = vmatpush.msra.mxu0 %v206
  %6273 = vmatpush.msra.mxu0 %v200
  %6274 = vmatpush.msra.mxu0 %v194
  %6275 = vmatpush.msra.mxu0 %v188
  %6276 = vmatpush.msra.mxu0 %v182
  %6277 = vmatpush.msra.mxu0 %v176
  %6278 = vmatpush.msra.mxu0 %v170
  %6279 = vmatpush.msra.mxu0 %v164
  %6280 = vmatpush.msra.mxu0 %v158
  %6281 = vmatpush.msra.mxu0 %v152
  %6282 = vmatpush.msra.mxu0 %v146
  %6283 = vmatpush.msra.mxu0 %v140
  %6284 = vmatmul.f32.gmra.mxu0 %v5584
  %v6285 = vpop.f32.mrf.mxu0
  %v6286 = vadd.f32 %v6266, %v6285
  %6287 = vdwg.mxu0
  %6288 = vmatpush.msra.mxu0 %v135
  %6289 = vmatpush.msra.mxu0 %v129
  %6290 = vmatpush.msra.mxu0 %v123
  %6291 = vmatpush.msra.mxu0 %v117
  %6292 = vmatpush.msra.mxu0 %v111
  %6293 = vmatpush.msra.mxu0 %v105
  %6294 = vmatpush.msra.mxu0 %v99
  %6295 = vmatpush.msra.mxu0 %v93
  %6296 = vmatpush.msra.mxu0 %v87
  %6297 = vmatpush.msra.mxu0 %v81
  %6298 = vmatpush.msra.mxu0 %v75
  %6299 = vmatpush.msra.mxu0 %v69
  %6300 = vmatpush.msra.mxu0 %v63
  %6301 = vmatpush.msra.mxu0 %v57
  %6302 = vmatpush.msra.mxu0 %v51
  %6303 = vmatpush.msra.mxu0 %v45
  %6304 = vmatmul.f32.gmra.mxu0 %v5583
  %v6305 = vpop.f32.mrf.mxu0
  %v6306 = vadd.f32 0.0, %v6305
  %6307 = vdwg.mxu0
  %6308 = vmatpush.msra.mxu0 %v231
  %6309 = vmatpush.msra.mxu0 %v225
  %6310 = vmatpush.msra.mxu0 %v219
  %6311 = vmatpush.msra.mxu0 %v213
  %6312 = vmatpush.msra.mxu0 %v207
  %6313 = vmatpush.msra.mxu0 %v201
  %6314 = vmatpush.msra.mxu0 %v195
  %6315 = vmatpush.msra.mxu0 %v189
  %6316 = vmatpush.msra.mxu0 %v183
  %6317 = vmatpush.msra.mxu0 %v177
  %6318 = vmatpush.msra.mxu0 %v171
  %6319 = vmatpush.msra.mxu0 %v165
  %6320 = vmatpush.msra.mxu0 %v159
  %6321 = vmatpush.msra.mxu0 %v153
  %6322 = vmatpush.msra.mxu0 %v147
  %6323 = vmatpush.msra.mxu0 %v141
  %6324 = vmatmul.f32.gmra.mxu0 %v5584
  %v6325 = vpop.f32.mrf.mxu0
  %v6326 = vadd.f32 %v6306, %v6325
  %6327 = vdwg.mxu0
  %6328 = vmatpush.msra.mxu0 %v136
  %6329 = vmatpush.msra.mxu0 %v130
  %6330 = vmatpush.msra.mxu0 %v124
  %6331 = vmatpush.msra.mxu0 %v118
  %6332 = vmatpush.msra.mxu0 %v112
  %6333 = vmatpush.msra.mxu0 %v106
  %6334 = vmatpush.msra.mxu0 %v100
  %6335 = vmatpush.msra.mxu0 %v94
  %6336 = vmatpush.msra.mxu0 %v88
  %6337 = vmatpush.msra.mxu0 %v82
  %6338 = vmatpush.msra.mxu0 %v76
  %6339 = vmatpush.msra.mxu0 %v70
  %6340 = vmatpush.msra.mxu0 %v64
  %6341 = vmatpush.msra.mxu0 %v58
  %6342 = vmatpush.msra.mxu0 %v52
  %6343 = vmatpush.msra.mxu0 %v46
  %6344 = vmatmul.f32.gmra.mxu0 %v5583
  %v6345 = vpop.f32.mrf.mxu0
  %v6346 = vadd.f32 0.0, %v6345
  %6347 = vdwg.mxu0
  %6348 = vmatpush.msra.mxu0 %v232
  %6349 = vmatpush.msra.mxu0 %v226
  %6350 = vmatpush.msra.mxu0 %v220
  %6351 = vmatpush.msra.mxu0 %v214
  %6352 = vmatpush.msra.mxu0 %v208
  %6353 = vmatpush.msra.mxu0 %v202
  %6354 = vmatpush.msra.mxu0 %v196
  %6355 = vmatpush.msra.mxu0 %v190
  %6356 = vmatpush.msra.mxu0 %v184
  %6357 = vmatpush.msra.mxu0 %v178
  %6358 = vmatpush.msra.mxu0 %v172
  %6359 = vmatpush.msra.mxu0 %v166
  %6360 = vmatpush.msra.mxu0 %v160
  %6361 = vmatpush.msra.mxu0 %v154
  %6362 = vmatpush.msra.mxu0 %v148
  %6363 = vmatpush.msra.mxu0 %v142
  %6364 = vmatmul.f32.gmra.mxu0 %v5584
  %v6365 = vpop.f32.mrf.mxu0
  %v6366 = vadd.f32 %v6346, %v6365
  %6367 = vdwg.mxu0
  %6368 = vmatpush.msra.mxu0 %v137
  %6369 = vmatpush.msra.mxu0 %v131
  %6370 = vmatpush.msra.mxu0 %v125
  %6371 = vmatpush.msra.mxu0 %v119
  %6372 = vmatpush.msra.mxu0 %v113
  %6373 = vmatpush.msra.mxu0 %v107
  %6374 = vmatpush.msra.mxu0 %v101
  %6375 = vmatpush.msra.mxu0 %v95
  %6376 = vmatpush.msra.mxu0 %v89
  %6377 = vmatpush.msra.mxu0 %v83
  %6378 = vmatpush.msra.mxu0 %v77
  %6379 = vmatpush.msra.mxu0 %v71
  %6380 = vmatpush.msra.mxu0 %v65
  %6381 = vmatpush.msra.mxu0 %v59
  %6382 = vmatpush.msra.mxu0 %v53
  %6383 = vmatpush.msra.mxu0 %v47
  %6384 = vmatmul.f32.gmra.mxu0 %v5583
  %v6385 = vpop.f32.mrf.mxu0
  %v6386 = vadd.f32 0.0, %v6385
  %6387 = vdwg.mxu0
  %6388 = vmatpush.msra.mxu0 %v233
  %6389 = vmatpush.msra.mxu0 %v227
  %6390 = vmatpush.msra.mxu0 %v221
  %6391 = vmatpush.msra.mxu0 %v215
  %6392 = vmatpush.msra.mxu0 %v209
  %6393 = vmatpush.msra.mxu0 %v203
  %6394 = vmatpush.msra.mxu0 %v197
  %6395 = vmatpush.msra.mxu0 %v191
  %6396 = vmatpush.msra.mxu0 %v185
  %6397 = vmatpush.msra.mxu0 %v179
  %6398 = vmatpush.msra.mxu0 %v173
  %6399 = vmatpush.msra.mxu0 %v167
  %6400 = vmatpush.msra.mxu0 %v161
  %6401 = vmatpush.msra.mxu0 %v155
  %6402 = vmatpush.msra.mxu0 %v149
  %6403 = vmatpush.msra.mxu0 %v143
  %6404 = vmatmul.f32.gmra.mxu0 %v5584
  %v6405 = vpop.f32.mrf.mxu0
  %v6406 = vadd.f32 %v6386, %v6405
  %6407 = vdwg.mxu0
  %v6408 = vadd.f32 %v6162, %v6206
  %v6409 = vadd.f32 %v6163, %v6246
  %v6410 = vxor.u32 %v6408, 2147483648
  %v6411 = vxor.u32 %v6409, 2147483648
  %v6412 = vmul.f32 %v6410, 1.442695
  %v6413 = vpow.pop %v6412
  %v6414 = vmul.f32 %v6411, 1.442695
  %v6415 = vpow.pop %v6414
  %v6416 = vadd.f32 %v6413, 1.0
  %v6417 = vadd.f32 %v6415, 1.0
  %v6418 = vrcp.pop %v6416
  %v6419 = vmul.f32 %v6416, %v6418
  %v6420 = vsub.f32 1.0, %v6419
  %v6421 = vmul.f32 %v6418, %v6420
  %v6422 = vadd.f32 %v6418, %v6421
  %vm6423 = vweird.f32 %v6416
  %vm6424 = vweird.f32 %v6418
  %vm6425 = vmor %vm6423, %vm6424
  %v6426 = vsel %vm6425, %v6418, %v6422
  %v6427 = vand.u32 2147483647, %v6416
  %vm6428 = vcmp.eq.f32.partialorder %v6427, 8.507059e+37
  %v6429 = vand.u32 %v6416, 2147483648
  %v6430 = vor.u32 1.1754944e-38, %v6429
  %v6431 = vsel %vm6428, %v6430, %v6426
  %v6432 = vmul.f32 1.0, %v6431
  %v6433 = vrcp.pop %v6417
  %v6434 = vmul.f32 %v6417, %v6433
  %v6435 = vsub.f32 1.0, %v6434
  %v6436 = vmul.f32 %v6433, %v6435
  %v6437 = vadd.f32 %v6433, %v6436
  %vm6438 = vweird.f32 %v6417
  %vm6439 = vweird.f32 %v6433
  %vm6440 = vmor %vm6438, %vm6439
  %v6441 = vsel %vm6440, %v6433, %v6437
  %v6442 = vand.u32 2147483647, %v6417
  %vm6443 = vcmp.eq.f32.partialorder %v6442, 8.507059e+37
  %v6444 = vand.u32 %v6417, 2147483648
  %v6445 = vor.u32 1.1754944e-38, %v6444
  %v6446 = vsel %vm6443, %v6445, %v6441
  %v6447 = vmul.f32 1.0, %v6446
  %v6448 = vadd.f32 %v6164, %v6286
  %v6449 = vadd.f32 %v6165, %v6326
  %v6450 = vxor.u32 %v6448, 2147483648
  %v6451 = vxor.u32 %v6449, 2147483648
  %v6452 = vmul.f32 %v6450, 1.442695
  %v6453 = vpow.pop %v6452
  %v6454 = vmul.f32 %v6451, 1.442695
  %v6455 = vpow.pop %v6454
  %v6456 = vadd.f32 %v6453, 1.0
  %v6457 = vadd.f32 %v6455, 1.0
  %v6458 = vrcp.pop %v6456
  %v6459 = vmul.f32 %v6456, %v6458
  %v6460 = vsub.f32 1.0, %v6459
  %v6461 = vmul.f32 %v6458, %v6460
  %v6462 = vadd.f32 %v6458, %v6461
  %vm6463 = vweird.f32 %v6456
  %vm6464 = vweird.f32 %v6458
  %vm6465 = vmor %vm6463, %vm6464
  %v6466 = vsel %vm6465, %v6458, %v6462
  %v6467 = vand.u32 2147483647, %v6456
  %vm6468 = vcmp.eq.f32.partialorder %v6467, 8.507059e+37
  %v6469 = vand.u32 %v6456, 2147483648
  %v6470 = vor.u32 1.1754944e-38, %v6469
  %v6471 = vsel %vm6468, %v6470, %v6466
  %v6472 = vmul.f32 1.0, %v6471
  %v6473 = vrcp.pop %v6457
  %v6474 = vmul.f32 %v6457, %v6473
  %v6475 = vsub.f32 1.0, %v6474
  %v6476 = vmul.f32 %v6473, %v6475
  %v6477 = vadd.f32 %v6473, %v6476
  %vm6478 = vweird.f32 %v6457
  %vm6479 = vweird.f32 %v6473
  %vm6480 = vmor %vm6478, %vm6479
  %v6481 = vsel %vm6480, %v6473, %v6477
  %v6482 = vand.u32 2147483647, %v6457
  %vm6483 = vcmp.eq.f32.partialorder %v6482, 8.507059e+37
  %v6484 = vand.u32 %v6457, 2147483648
  %v6485 = vor.u32 1.1754944e-38, %v6484
  %v6486 = vsel %vm6483, %v6485, %v6481
  %v6487 = vmul.f32 1.0, %v6486
  %v6488 = vadd.f32 %v6366, %v620
  %v6489 = vadd.f32 %v6406, %v621
  %v6490 = vmul.f32 %v6432, %v6488
  %v6491 = vmul.f32 %v6447, %v6489
  %v6492 = vadd.f32 %v6166, %v6490
  %v6493 = vadd.f32 %v6167, %v6491
  %v6494 = vtanh.pop %v6492
  %v6495 = vtanh.pop %v6493
  %v6496 = vsub.f32 1.0, %v6472
  %v6497 = vsub.f32 1.0, %v6487
  %v6498 = vmul.f32 %v6496, %v6494
  %v6499 = vmul.f32 %v6497, %v6495
  %v6500 = vmul.f32 %v6472, %v5583
  %v6501 = vmul.f32 %v6487, %v5584
  %v6502 = vadd.f32 %v6498, %v6500
  %v6503 = vadd.f32 %v6499, %v6501
  %6504 = vmatpush.msra.mxu0 %v324
  %6505 = vmatpush.msra.mxu0 %v318
  %6506 = vmatpush.msra.mxu0 %v312
  %6507 = vmatpush.msra.mxu0 %v306
  %6508 = vmatpush.msra.mxu0 %v300
  %6509 = vmatpush.msra.mxu0 %v294
  %6510 = vmatpush.msra.mxu0 %v288
  %6511 = vmatpush.msra.mxu0 %v282
  %6512 = vmatpush.msra.mxu0 %v276
  %6513 = vmatpush.msra.mxu0 %v270
  %6514 = vmatpush.msra.mxu0 %v264
  %6515 = vmatpush.msra.mxu0 %v258
  %6516 = vmatpush.msra.mxu0 %v252
  %6517 = vmatpush.msra.mxu0 %v246
  %6518 = vmatpush.msra.mxu0 %v240
  %6519 = vmatpush.msra.mxu0 %v234
  %6520 = vmatmul.f32.gmra.mxu0 %v6502
  %v6521 = vpop.f32.mrf.mxu0
  %v6522 = vadd.f32 %v626, %v6521
  %6523 = vdwg.mxu0
  %6524 = vmatpush.msra.mxu0 %v420
  %6525 = vmatpush.msra.mxu0 %v414
  %6526 = vmatpush.msra.mxu0 %v408
  %6527 = vmatpush.msra.mxu0 %v402
  %6528 = vmatpush.msra.mxu0 %v396
  %6529 = vmatpush.msra.mxu0 %v390
  %6530 = vmatpush.msra.mxu0 %v384
  %6531 = vmatpush.msra.mxu0 %v378
  %6532 = vmatpush.msra.mxu0 %v372
  %6533 = vmatpush.msra.mxu0 %v366
  %6534 = vmatpush.msra.mxu0 %v360
  %6535 = vmatpush.msra.mxu0 %v354
  %6536 = vmatpush.msra.mxu0 %v348
  %6537 = vmatpush.msra.mxu0 %v342
  %6538 = vmatpush.msra.mxu0 %v336
  %6539 = vmatpush.msra.mxu0 %v330
  %6540 = vmatmul.f32.gmra.mxu0 %v6503
  %v6541 = vpop.f32.mrf.mxu0
  %v6542 = vadd.f32 %v6522, %v6541
  %6543 = vdwg.mxu0
  %6544 = vmatpush.msra.mxu0 %v325
  %6545 = vmatpush.msra.mxu0 %v319
  %6546 = vmatpush.msra.mxu0 %v313
  %6547 = vmatpush.msra.mxu0 %v307
  %6548 = vmatpush.msra.mxu0 %v301
  %6549 = vmatpush.msra.mxu0 %v295
  %6550 = vmatpush.msra.mxu0 %v289
  %6551 = vmatpush.msra.mxu0 %v283
  %6552 = vmatpush.msra.mxu0 %v277
  %6553 = vmatpush.msra.mxu0 %v271
  %6554 = vmatpush.msra.mxu0 %v265
  %6555 = vmatpush.msra.mxu0 %v259
  %6556 = vmatpush.msra.mxu0 %v253
  %6557 = vmatpush.msra.mxu0 %v247
  %6558 = vmatpush.msra.mxu0 %v241
  %6559 = vmatpush.msra.mxu0 %v235
  %6560 = vmatmul.f32.gmra.mxu0 %v6502
  %v6561 = vpop.f32.mrf.mxu0
  %v6562 = vadd.f32 %v627, %v6561
  %6563 = vdwg.mxu0
  %6564 = vmatpush.msra.mxu0 %v421
  %6565 = vmatpush.msra.mxu0 %v415
  %6566 = vmatpush.msra.mxu0 %v409
  %6567 = vmatpush.msra.mxu0 %v403
  %6568 = vmatpush.msra.mxu0 %v397
  %6569 = vmatpush.msra.mxu0 %v391
  %6570 = vmatpush.msra.mxu0 %v385
  %6571 = vmatpush.msra.mxu0 %v379
  %6572 = vmatpush.msra.mxu0 %v373
  %6573 = vmatpush.msra.mxu0 %v367
  %6574 = vmatpush.msra.mxu0 %v361
  %6575 = vmatpush.msra.mxu0 %v355
  %6576 = vmatpush.msra.mxu0 %v349
  %6577 = vmatpush.msra.mxu0 %v343
  %6578 = vmatpush.msra.mxu0 %v337
  %6579 = vmatpush.msra.mxu0 %v331
  %6580 = vmatmul.f32.gmra.mxu0 %v6503
  %v6581 = vpop.f32.mrf.mxu0
  %v6582 = vadd.f32 %v6562, %v6581
  %6583 = vdwg.mxu0
  %6584 = vmatpush.msra.mxu0 %v326
  %6585 = vmatpush.msra.mxu0 %v320
  %6586 = vmatpush.msra.mxu0 %v314
  %6587 = vmatpush.msra.mxu0 %v308
  %6588 = vmatpush.msra.mxu0 %v302
  %6589 = vmatpush.msra.mxu0 %v296
  %6590 = vmatpush.msra.mxu0 %v290
  %6591 = vmatpush.msra.mxu0 %v284
  %6592 = vmatpush.msra.mxu0 %v278
  %6593 = vmatpush.msra.mxu0 %v272
  %6594 = vmatpush.msra.mxu0 %v266
  %6595 = vmatpush.msra.mxu0 %v260
  %6596 = vmatpush.msra.mxu0 %v254
  %6597 = vmatpush.msra.mxu0 %v248
  %6598 = vmatpush.msra.mxu0 %v242
  %6599 = vmatpush.msra.mxu0 %v236
  %6600 = vmatmul.f32.gmra.mxu0 %v6502
  %v6601 = vpop.f32.mrf.mxu0
  %v6602 = vadd.f32 %v628, %v6601
  %6603 = vdwg.mxu0
  %6604 = vmatpush.msra.mxu0 %v422
  %6605 = vmatpush.msra.mxu0 %v416
  %6606 = vmatpush.msra.mxu0 %v410
  %6607 = vmatpush.msra.mxu0 %v404
  %6608 = vmatpush.msra.mxu0 %v398
  %6609 = vmatpush.msra.mxu0 %v392
  %6610 = vmatpush.msra.mxu0 %v386
  %6611 = vmatpush.msra.mxu0 %v380
  %6612 = vmatpush.msra.mxu0 %v374
  %6613 = vmatpush.msra.mxu0 %v368
  %6614 = vmatpush.msra.mxu0 %v362
  %6615 = vmatpush.msra.mxu0 %v356
  %6616 = vmatpush.msra.mxu0 %v350
  %6617 = vmatpush.msra.mxu0 %v344
  %6618 = vmatpush.msra.mxu0 %v338
  %6619 = vmatpush.msra.mxu0 %v332
  %6620 = vmatmul.f32.gmra.mxu0 %v6503
  %v6621 = vpop.f32.mrf.mxu0
  %v6622 = vadd.f32 %v6602, %v6621
  %6623 = vdwg.mxu0
  %6624 = vmatpush.msra.mxu0 %v327
  %6625 = vmatpush.msra.mxu0 %v321
  %6626 = vmatpush.msra.mxu0 %v315
  %6627 = vmatpush.msra.mxu0 %v309
  %6628 = vmatpush.msra.mxu0 %v303
  %6629 = vmatpush.msra.mxu0 %v297
  %6630 = vmatpush.msra.mxu0 %v291
  %6631 = vmatpush.msra.mxu0 %v285
  %6632 = vmatpush.msra.mxu0 %v279
  %6633 = vmatpush.msra.mxu0 %v273
  %6634 = vmatpush.msra.mxu0 %v267
  %6635 = vmatpush.msra.mxu0 %v261
  %6636 = vmatpush.msra.mxu0 %v255
  %6637 = vmatpush.msra.mxu0 %v249
  %6638 = vmatpush.msra.mxu0 %v243
  %6639 = vmatpush.msra.mxu0 %v237
  %6640 = vmatmul.f32.gmra.mxu0 %v6502
  %v6641 = vpop.f32.mrf.mxu0
  %v6642 = vadd.f32 %v629, %v6641
  %6643 = vdwg.mxu0
  %6644 = vmatpush.msra.mxu0 %v423
  %6645 = vmatpush.msra.mxu0 %v417
  %6646 = vmatpush.msra.mxu0 %v411
  %6647 = vmatpush.msra.mxu0 %v405
  %6648 = vmatpush.msra.mxu0 %v399
  %6649 = vmatpush.msra.mxu0 %v393
  %6650 = vmatpush.msra.mxu0 %v387
  %6651 = vmatpush.msra.mxu0 %v381
  %6652 = vmatpush.msra.mxu0 %v375
  %6653 = vmatpush.msra.mxu0 %v369
  %6654 = vmatpush.msra.mxu0 %v363
  %6655 = vmatpush.msra.mxu0 %v357
  %6656 = vmatpush.msra.mxu0 %v351
  %6657 = vmatpush.msra.mxu0 %v345
  %6658 = vmatpush.msra.mxu0 %v339
  %6659 = vmatpush.msra.mxu0 %v333
  %6660 = vmatmul.f32.gmra.mxu0 %v6503
  %v6661 = vpop.f32.mrf.mxu0
  %v6662 = vadd.f32 %v6642, %v6661
  %6663 = vdwg.mxu0
  %6664 = vmatpush.msra.mxu0 %v328
  %6665 = vmatpush.msra.mxu0 %v322
  %6666 = vmatpush.msra.mxu0 %v316
  %6667 = vmatpush.msra.mxu0 %v310
  %6668 = vmatpush.msra.mxu0 %v304
  %6669 = vmatpush.msra.mxu0 %v298
  %6670 = vmatpush.msra.mxu0 %v292
  %6671 = vmatpush.msra.mxu0 %v286
  %6672 = vmatpush.msra.mxu0 %v280
  %6673 = vmatpush.msra.mxu0 %v274
  %6674 = vmatpush.msra.mxu0 %v268
  %6675 = vmatpush.msra.mxu0 %v262
  %6676 = vmatpush.msra.mxu0 %v256
  %6677 = vmatpush.msra.mxu0 %v250
  %6678 = vmatpush.msra.mxu0 %v244
  %6679 = vmatpush.msra.mxu0 %v238
  %6680 = vmatmul.f32.gmra.mxu0 %v6502
  %v6681 = vpop.f32.mrf.mxu0
  %v6682 = vadd.f32 %v630, %v6681
  %6683 = vdwg.mxu0
  %6684 = vmatpush.msra.mxu0 %v424
  %6685 = vmatpush.msra.mxu0 %v418
  %6686 = vmatpush.msra.mxu0 %v412
  %6687 = vmatpush.msra.mxu0 %v406
  %6688 = vmatpush.msra.mxu0 %v400
  %6689 = vmatpush.msra.mxu0 %v394
  %6690 = vmatpush.msra.mxu0 %v388
  %6691 = vmatpush.msra.mxu0 %v382
  %6692 = vmatpush.msra.mxu0 %v376
  %6693 = vmatpush.msra.mxu0 %v370
  %6694 = vmatpush.msra.mxu0 %v364
  %6695 = vmatpush.msra.mxu0 %v358
  %6696 = vmatpush.msra.mxu0 %v352
  %6697 = vmatpush.msra.mxu0 %v346
  %6698 = vmatpush.msra.mxu0 %v340
  %6699 = vmatpush.msra.mxu0 %v334
  %6700 = vmatmul.f32.gmra.mxu0 %v6503
  %v6701 = vpop.f32.mrf.mxu0
  %v6702 = vadd.f32 %v6682, %v6701
  %6703 = vdwg.mxu0
  %6704 = vmatpush.msra.mxu0 %v329
  %6705 = vmatpush.msra.mxu0 %v323
  %6706 = vmatpush.msra.mxu0 %v317
  %6707 = vmatpush.msra.mxu0 %v311
  %6708 = vmatpush.msra.mxu0 %v305
  %6709 = vmatpush.msra.mxu0 %v299
  %6710 = vmatpush.msra.mxu0 %v293
  %6711 = vmatpush.msra.mxu0 %v287
  %6712 = vmatpush.msra.mxu0 %v281
  %6713 = vmatpush.msra.mxu0 %v275
  %6714 = vmatpush.msra.mxu0 %v269
  %6715 = vmatpush.msra.mxu0 %v263
  %6716 = vmatpush.msra.mxu0 %v257
  %6717 = vmatpush.msra.mxu0 %v251
  %6718 = vmatpush.msra.mxu0 %v245
  %6719 = vmatpush.msra.mxu0 %v239
  %6720 = vmatmul.f32.gmra.mxu0 %v6502
  %v6721 = vpop.f32.mrf.mxu0
  %v6722 = vadd.f32 %v631, %v6721
  %6723 = vdwg.mxu0
  %6724 = vmatpush.msra.mxu0 %v425
  %6725 = vmatpush.msra.mxu0 %v419
  %6726 = vmatpush.msra.mxu0 %v413
  %6727 = vmatpush.msra.mxu0 %v407
  %6728 = vmatpush.msra.mxu0 %v401
  %6729 = vmatpush.msra.mxu0 %v395
  %6730 = vmatpush.msra.mxu0 %v389
  %6731 = vmatpush.msra.mxu0 %v383
  %6732 = vmatpush.msra.mxu0 %v377
  %6733 = vmatpush.msra.mxu0 %v371
  %6734 = vmatpush.msra.mxu0 %v365
  %6735 = vmatpush.msra.mxu0 %v359
  %6736 = vmatpush.msra.mxu0 %v353
  %6737 = vmatpush.msra.mxu0 %v347
  %6738 = vmatpush.msra.mxu0 %v341
  %6739 = vmatpush.msra.mxu0 %v335
  %6740 = vmatmul.f32.gmra.mxu0 %v6503
  %v6741 = vpop.f32.mrf.mxu0
  %v6742 = vadd.f32 %v6722, %v6741
  %6743 = vdwg.mxu0
  %6744 = vmatpush.msra.mxu0 %v516
  %6745 = vmatpush.msra.mxu0 %v510
  %6746 = vmatpush.msra.mxu0 %v504
  %6747 = vmatpush.msra.mxu0 %v498
  %6748 = vmatpush.msra.mxu0 %v492
  %6749 = vmatpush.msra.mxu0 %v486
  %6750 = vmatpush.msra.mxu0 %v480
  %6751 = vmatpush.msra.mxu0 %v474
  %6752 = vmatpush.msra.mxu0 %v468
  %6753 = vmatpush.msra.mxu0 %v462
  %6754 = vmatpush.msra.mxu0 %v456
  %6755 = vmatpush.msra.mxu0 %v450
  %6756 = vmatpush.msra.mxu0 %v444
  %6757 = vmatpush.msra.mxu0 %v438
  %6758 = vmatpush.msra.mxu0 %v432
  %6759 = vmatpush.msra.mxu0 %v426
  %6760 = vmatmul.f32.gmra.mxu0 %v6159
  %v6761 = vpop.f32.mrf.mxu0
  %v6762 = vadd.f32 0.0, %v6761
  %6763 = vdwg.mxu0
  %6764 = vmatpush.msra.mxu0 %v612
  %6765 = vmatpush.msra.mxu0 %v606
  %6766 = vmatpush.msra.mxu0 %v600
  %6767 = vmatpush.msra.mxu0 %v594
  %6768 = vmatpush.msra.mxu0 %v588
  %6769 = vmatpush.msra.mxu0 %v582
  %6770 = vmatpush.msra.mxu0 %v576
  %6771 = vmatpush.msra.mxu0 %v570
  %6772 = vmatpush.msra.mxu0 %v564
  %6773 = vmatpush.msra.mxu0 %v558
  %6774 = vmatpush.msra.mxu0 %v552
  %6775 = vmatpush.msra.mxu0 %v546
  %6776 = vmatpush.msra.mxu0 %v540
  %6777 = vmatpush.msra.mxu0 %v534
  %6778 = vmatpush.msra.mxu0 %v528
  %6779 = vmatpush.msra.mxu0 %v522
  %6780 = vmatmul.f32.gmra.mxu0 %v6160
  %v6781 = vpop.f32.mrf.mxu0
  %v6782 = vadd.f32 %v6762, %v6781
  %6783 = vdwg.mxu0
  %6784 = vmatpush.msra.mxu0 %v517
  %6785 = vmatpush.msra.mxu0 %v511
  %6786 = vmatpush.msra.mxu0 %v505
  %6787 = vmatpush.msra.mxu0 %v499
  %6788 = vmatpush.msra.mxu0 %v493
  %6789 = vmatpush.msra.mxu0 %v487
  %6790 = vmatpush.msra.mxu0 %v481
  %6791 = vmatpush.msra.mxu0 %v475
  %6792 = vmatpush.msra.mxu0 %v469
  %6793 = vmatpush.msra.mxu0 %v463
  %6794 = vmatpush.msra.mxu0 %v457
  %6795 = vmatpush.msra.mxu0 %v451
  %6796 = vmatpush.msra.mxu0 %v445
  %6797 = vmatpush.msra.mxu0 %v439
  %6798 = vmatpush.msra.mxu0 %v433
  %6799 = vmatpush.msra.mxu0 %v427
  %6800 = vmatmul.f32.gmra.mxu0 %v6159
  %v6801 = vpop.f32.mrf.mxu0
  %v6802 = vadd.f32 0.0, %v6801
  %6803 = vdwg.mxu0
  %6804 = vmatpush.msra.mxu0 %v613
  %6805 = vmatpush.msra.mxu0 %v607
  %6806 = vmatpush.msra.mxu0 %v601
  %6807 = vmatpush.msra.mxu0 %v595
  %6808 = vmatpush.msra.mxu0 %v589
  %6809 = vmatpush.msra.mxu0 %v583
  %6810 = vmatpush.msra.mxu0 %v577
  %6811 = vmatpush.msra.mxu0 %v571
  %6812 = vmatpush.msra.mxu0 %v565
  %6813 = vmatpush.msra.mxu0 %v559
  %6814 = vmatpush.msra.mxu0 %v553
  %6815 = vmatpush.msra.mxu0 %v547
  %6816 = vmatpush.msra.mxu0 %v541
  %6817 = vmatpush.msra.mxu0 %v535
  %6818 = vmatpush.msra.mxu0 %v529
  %6819 = vmatpush.msra.mxu0 %v523
  %6820 = vmatmul.f32.gmra.mxu0 %v6160
  %v6821 = vpop.f32.mrf.mxu0
  %v6822 = vadd.f32 %v6802, %v6821
  %6823 = vdwg.mxu0
  %6824 = vmatpush.msra.mxu0 %v518
  %6825 = vmatpush.msra.mxu0 %v512
  %6826 = vmatpush.msra.mxu0 %v506
  %6827 = vmatpush.msra.mxu0 %v500
  %6828 = vmatpush.msra.mxu0 %v494
  %6829 = vmatpush.msra.mxu0 %v488
  %6830 = vmatpush.msra.mxu0 %v482
  %6831 = vmatpush.msra.mxu0 %v476
  %6832 = vmatpush.msra.mxu0 %v470
  %6833 = vmatpush.msra.mxu0 %v464
  %6834 = vmatpush.msra.mxu0 %v458
  %6835 = vmatpush.msra.mxu0 %v452
  %6836 = vmatpush.msra.mxu0 %v446
  %6837 = vmatpush.msra.mxu0 %v440
  %6838 = vmatpush.msra.mxu0 %v434
  %6839 = vmatpush.msra.mxu0 %v428
  %6840 = vmatmul.f32.gmra.mxu0 %v6159
  %v6841 = vpop.f32.mrf.mxu0
  %v6842 = vadd.f32 0.0, %v6841
  %6843 = vdwg.mxu0
  %6844 = vmatpush.msra.mxu0 %v614
  %6845 = vmatpush.msra.mxu0 %v608
  %6846 = vmatpush.msra.mxu0 %v602
  %6847 = vmatpush.msra.mxu0 %v596
  %6848 = vmatpush.msra.mxu0 %v590
  %6849 = vmatpush.msra.mxu0 %v584
  %6850 = vmatpush.msra.mxu0 %v578
  %6851 = vmatpush.msra.mxu0 %v572
  %6852 = vmatpush.msra.mxu0 %v566
  %6853 = vmatpush.msra.mxu0 %v560
  %6854 = vmatpush.msra.mxu0 %v554
  %6855 = vmatpush.msra.mxu0 %v548
  %6856 = vmatpush.msra.mxu0 %v542
  %6857 = vmatpush.msra.mxu0 %v536
  %6858 = vmatpush.msra.mxu0 %v530
  %6859 = vmatpush.msra.mxu0 %v524
  %6860 = vmatmul.f32.gmra.mxu0 %v6160
  %v6861 = vpop.f32.mrf.mxu0
  %v6862 = vadd.f32 %v6842, %v6861
  %6863 = vdwg.mxu0
  %6864 = vmatpush.msra.mxu0 %v519
  %6865 = vmatpush.msra.mxu0 %v513
  %6866 = vmatpush.msra.mxu0 %v507
  %6867 = vmatpush.msra.mxu0 %v501
  %6868 = vmatpush.msra.mxu0 %v495
  %6869 = vmatpush.msra.mxu0 %v489
  %6870 = vmatpush.msra.mxu0 %v483
  %6871 = vmatpush.msra.mxu0 %v477
  %6872 = vmatpush.msra.mxu0 %v471
  %6873 = vmatpush.msra.mxu0 %v465
  %6874 = vmatpush.msra.mxu0 %v459
  %6875 = vmatpush.msra.mxu0 %v453
  %6876 = vmatpush.msra.mxu0 %v447
  %6877 = vmatpush.msra.mxu0 %v441
  %6878 = vmatpush.msra.mxu0 %v435
  %6879 = vmatpush.msra.mxu0 %v429
  %6880 = vmatmul.f32.gmra.mxu0 %v6159
  %v6881 = vpop.f32.mrf.mxu0
  %v6882 = vadd.f32 0.0, %v6881
  %6883 = vdwg.mxu0
  %6884 = vmatpush.msra.mxu0 %v615
  %6885 = vmatpush.msra.mxu0 %v609
  %6886 = vmatpush.msra.mxu0 %v603
  %6887 = vmatpush.msra.mxu0 %v597
  %6888 = vmatpush.msra.mxu0 %v591
  %6889 = vmatpush.msra.mxu0 %v585
  %6890 = vmatpush.msra.mxu0 %v579
  %6891 = vmatpush.msra.mxu0 %v573
  %6892 = vmatpush.msra.mxu0 %v567
  %6893 = vmatpush.msra.mxu0 %v561
  %6894 = vmatpush.msra.mxu0 %v555
  %6895 = vmatpush.msra.mxu0 %v549
  %6896 = vmatpush.msra.mxu0 %v543
  %6897 = vmatpush.msra.mxu0 %v537
  %6898 = vmatpush.msra.mxu0 %v531
  %6899 = vmatpush.msra.mxu0 %v525
  %6900 = vmatmul.f32.gmra.mxu0 %v6160
  %v6901 = vpop.f32.mrf.mxu0
  %v6902 = vadd.f32 %v6882, %v6901
  %6903 = vdwg.mxu0
  %6904 = vmatpush.msra.mxu0 %v520
  %6905 = vmatpush.msra.mxu0 %v514
  %6906 = vmatpush.msra.mxu0 %v508
  %6907 = vmatpush.msra.mxu0 %v502
  %6908 = vmatpush.msra.mxu0 %v496
  %6909 = vmatpush.msra.mxu0 %v490
  %6910 = vmatpush.msra.mxu0 %v484
  %6911 = vmatpush.msra.mxu0 %v478
  %6912 = vmatpush.msra.mxu0 %v472
  %6913 = vmatpush.msra.mxu0 %v466
  %6914 = vmatpush.msra.mxu0 %v460
  %6915 = vmatpush.msra.mxu0 %v454
  %6916 = vmatpush.msra.mxu0 %v448
  %6917 = vmatpush.msra.mxu0 %v442
  %6918 = vmatpush.msra.mxu0 %v436
  %6919 = vmatpush.msra.mxu0 %v430
  %6920 = vmatmul.f32.gmra.mxu0 %v6159
  %v6921 = vpop.f32.mrf.mxu0
  %v6922 = vadd.f32 0.0, %v6921
  %6923 = vdwg.mxu0
  %6924 = vmatpush.msra.mxu0 %v616
  %6925 = vmatpush.msra.mxu0 %v610
  %6926 = vmatpush.msra.mxu0 %v604
  %6927 = vmatpush.msra.mxu0 %v598
  %6928 = vmatpush.msra.mxu0 %v592
  %6929 = vmatpush.msra.mxu0 %v586
  %6930 = vmatpush.msra.mxu0 %v580
  %6931 = vmatpush.msra.mxu0 %v574
  %6932 = vmatpush.msra.mxu0 %v568
  %6933 = vmatpush.msra.mxu0 %v562
  %6934 = vmatpush.msra.mxu0 %v556
  %6935 = vmatpush.msra.mxu0 %v550
  %6936 = vmatpush.msra.mxu0 %v544
  %6937 = vmatpush.msra.mxu0 %v538
  %6938 = vmatpush.msra.mxu0 %v532
  %6939 = vmatpush.msra.mxu0 %v526
  %6940 = vmatmul.f32.gmra.mxu0 %v6160
  %v6941 = vpop.f32.mrf.mxu0
  %v6942 = vadd.f32 %v6922, %v6941
  %6943 = vdwg.mxu0
  %6944 = vmatpush.msra.mxu0 %v521
  %6945 = vmatpush.msra.mxu0 %v515
  %6946 = vmatpush.msra.mxu0 %v509
  %6947 = vmatpush.msra.mxu0 %v503
  %6948 = vmatpush.msra.mxu0 %v497
  %6949 = vmatpush.msra.mxu0 %v491
  %6950 = vmatpush.msra.mxu0 %v485
  %6951 = vmatpush.msra.mxu0 %v479
  %6952 = vmatpush.msra.mxu0 %v473
  %6953 = vmatpush.msra.mxu0 %v467
  %6954 = vmatpush.msra.mxu0 %v461
  %6955 = vmatpush.msra.mxu0 %v455
  %6956 = vmatpush.msra.mxu0 %v449
  %6957 = vmatpush.msra.mxu0 %v443
  %6958 = vmatpush.msra.mxu0 %v437
  %6959 = vmatpush.msra.mxu0 %v431
  %6960 = vmatmul.f32.gmra.mxu0 %v6159
  %v6961 = vpop.f32.mrf.mxu0
  %v6962 = vadd.f32 0.0, %v6961
  %6963 = vdwg.mxu0
  %6964 = vmatpush.msra.mxu0 %v617
  %6965 = vmatpush.msra.mxu0 %v611
  %6966 = vmatpush.msra.mxu0 %v605
  %6967 = vmatpush.msra.mxu0 %v599
  %6968 = vmatpush.msra.mxu0 %v593
  %6969 = vmatpush.msra.mxu0 %v587
  %6970 = vmatpush.msra.mxu0 %v581
  %6971 = vmatpush.msra.mxu0 %v575
  %6972 = vmatpush.msra.mxu0 %v569
  %6973 = vmatpush.msra.mxu0 %v563
  %6974 = vmatpush.msra.mxu0 %v557
  %6975 = vmatpush.msra.mxu0 %v551
  %6976 = vmatpush.msra.mxu0 %v545
  %6977 = vmatpush.msra.mxu0 %v539
  %6978 = vmatpush.msra.mxu0 %v533
  %6979 = vmatpush.msra.mxu0 %v527
  %6980 = vmatmul.f32.gmra.mxu0 %v6160
  %v6981 = vpop.f32.mrf.mxu0
  %v6982 = vadd.f32 %v6962, %v6981
  %6983 = vdwg.mxu0
  %v6984 = vadd.f32 %v6542, %v6782
  %v6985 = vadd.f32 %v6582, %v6822
  %v6986 = vxor.u32 %v6984, 2147483648
  %v6987 = vxor.u32 %v6985, 2147483648
  %v6988 = vmul.f32 %v6986, 1.442695
  %v6989 = vpow.pop %v6988
  %v6990 = vmul.f32 %v6987, 1.442695
  %v6991 = vpow.pop %v6990
  %v6992 = vadd.f32 %v6989, 1.0
  %v6993 = vadd.f32 %v6991, 1.0
  %v6994 = vrcp.pop %v6992
  %v6995 = vmul.f32 %v6992, %v6994
  %v6996 = vsub.f32 1.0, %v6995
  %v6997 = vmul.f32 %v6994, %v6996
  %v6998 = vadd.f32 %v6994, %v6997
  %vm6999 = vweird.f32 %v6992
  %vm7000 = vweird.f32 %v6994
  %vm7001 = vmor %vm6999, %vm7000
  %v7002 = vsel %vm7001, %v6994, %v6998
  %v7003 = vand.u32 2147483647, %v6992
  %vm7004 = vcmp.eq.f32.partialorder %v7003, 8.507059e+37
  %v7005 = vand.u32 %v6992, 2147483648
  %v7006 = vor.u32 1.1754944e-38, %v7005
  %v7007 = vsel %vm7004, %v7006, %v7002
  %v7008 = vmul.f32 1.0, %v7007
  %v7009 = vrcp.pop %v6993
  %v7010 = vmul.f32 %v6993, %v7009
  %v7011 = vsub.f32 1.0, %v7010
  %v7012 = vmul.f32 %v7009, %v7011
  %v7013 = vadd.f32 %v7009, %v7012
  %vm7014 = vweird.f32 %v6993
  %vm7015 = vweird.f32 %v7009
  %vm7016 = vmor %vm7014, %vm7015
  %v7017 = vsel %vm7016, %v7009, %v7013
  %v7018 = vand.u32 2147483647, %v6993
  %vm7019 = vcmp.eq.f32.partialorder %v7018, 8.507059e+37
  %v7020 = vand.u32 %v6993, 2147483648
  %v7021 = vor.u32 1.1754944e-38, %v7020
  %v7022 = vsel %vm7019, %v7021, %v7017
  %v7023 = vmul.f32 1.0, %v7022
  %v7024 = vadd.f32 %v6622, %v6862
  %v7025 = vadd.f32 %v6662, %v6902
  %v7026 = vxor.u32 %v7024, 2147483648
  %v7027 = vxor.u32 %v7025, 2147483648
  %v7028 = vmul.f32 %v7026, 1.442695
  %v7029 = vpow.pop %v7028
  %v7030 = vmul.f32 %v7027, 1.442695
  %v7031 = vpow.pop %v7030
  %v7032 = vadd.f32 %v7029, 1.0
  %v7033 = vadd.f32 %v7031, 1.0
  %v7034 = vrcp.pop %v7032
  %v7035 = vmul.f32 %v7032, %v7034
  %v7036 = vsub.f32 1.0, %v7035
  %v7037 = vmul.f32 %v7034, %v7036
  %v7038 = vadd.f32 %v7034, %v7037
  %vm7039 = vweird.f32 %v7032
  %vm7040 = vweird.f32 %v7034
  %vm7041 = vmor %vm7039, %vm7040
  %v7042 = vsel %vm7041, %v7034, %v7038
  %v7043 = vand.u32 2147483647, %v7032
  %vm7044 = vcmp.eq.f32.partialorder %v7043, 8.507059e+37
  %v7045 = vand.u32 %v7032, 2147483648
  %v7046 = vor.u32 1.1754944e-38, %v7045
  %v7047 = vsel %vm7044, %v7046, %v7042
  %v7048 = vmul.f32 1.0, %v7047
  %v7049 = vrcp.pop %v7033
  %v7050 = vmul.f32 %v7033, %v7049
  %v7051 = vsub.f32 1.0, %v7050
  %v7052 = vmul.f32 %v7049, %v7051
  %v7053 = vadd.f32 %v7049, %v7052
  %vm7054 = vweird.f32 %v7033
  %vm7055 = vweird.f32 %v7049
  %vm7056 = vmor %vm7054, %vm7055
  %v7057 = vsel %vm7056, %v7049, %v7053
  %v7058 = vand.u32 2147483647, %v7033
  %vm7059 = vcmp.eq.f32.partialorder %v7058, 8.507059e+37
  %v7060 = vand.u32 %v7033, 2147483648
  %v7061 = vor.u32 1.1754944e-38, %v7060
  %v7062 = vsel %vm7059, %v7061, %v7057
  %v7063 = vmul.f32 1.0, %v7062
  %v7064 = vadd.f32 %v6942, %v640
  %v7065 = vadd.f32 %v6982, %v641
  %v7066 = vmul.f32 %v7008, %v7064
  %v7067 = vmul.f32 %v7023, %v7065
  %v7068 = vadd.f32 %v6702, %v7066
  %v7069 = vadd.f32 %v6742, %v7067
  %v7070 = vtanh.pop %v7068
  %v7071 = vtanh.pop %v7069
  %v7072 = vsub.f32 1.0, %v7048
  %v7073 = vsub.f32 1.0, %v7063
  %v7074 = vmul.f32 %v7072, %v7070
  %v7075 = vmul.f32 %v7073, %v7071
  %v7076 = vmul.f32 %v7048, %v6159
  %v7077 = vmul.f32 %v7063, %v6160
  %v7078 = vadd.f32 %v7074, %v7076
  %v7079 = vadd.f32 %v7075, %v7077
  %s7080 = scalar_lea.vmem %s0, 336
  %v7081 = vld [vmem:[%s7080] sm:$0xff]
  %v7082 = vld [vmem:[%s7080 + $0x8] sm:$0xff]
  %v7083 = vld [vmem:[%s7080 + $0x10] sm:$0xff]
  %v7084 = vld [vmem:[%s7080 + $0x18] sm:$0xff]
  %v7085 = vld [vmem:[%s7080 + $0x20] sm:$0xff]
  %v7086 = vld [vmem:[%s7080 + $0x28] sm:$0xff]
  %7087 = vmatpush.msra.mxu0 %v132
  %7088 = vmatpush.msra.mxu0 %v126
  %7089 = vmatpush.msra.mxu0 %v120
  %7090 = vmatpush.msra.mxu0 %v114
  %7091 = vmatpush.msra.mxu0 %v108
  %7092 = vmatpush.msra.mxu0 %v102
  %7093 = vmatpush.msra.mxu0 %v96
  %7094 = vmatpush.msra.mxu0 %v90
  %7095 = vmatpush.msra.mxu0 %v84
  %7096 = vmatpush.msra.mxu0 %v78
  %7097 = vmatpush.msra.mxu0 %v72
  %7098 = vmatpush.msra.mxu0 %v66
  %7099 = vmatpush.msra.mxu0 %v60
  %7100 = vmatpush.msra.mxu0 %v54
  %7101 = vmatpush.msra.mxu0 %v48
  %7102 = vmatpush.msra.mxu0 %v42
  %7103 = vmatmul.f32.gmra.mxu0 %v6502
  %v7104 = vpop.f32.mrf.mxu0
  %v7105 = vadd.f32 0.0, %v7104
  %7106 = vdwg.mxu0
  %7107 = vmatpush.msra.mxu0 %v228
  %7108 = vmatpush.msra.mxu0 %v222
  %7109 = vmatpush.msra.mxu0 %v216
  %7110 = vmatpush.msra.mxu0 %v210
  %7111 = vmatpush.msra.mxu0 %v204
  %7112 = vmatpush.msra.mxu0 %v198
  %7113 = vmatpush.msra.mxu0 %v192
  %7114 = vmatpush.msra.mxu0 %v186
  %7115 = vmatpush.msra.mxu0 %v180
  %7116 = vmatpush.msra.mxu0 %v174
  %7117 = vmatpush.msra.mxu0 %v168
  %7118 = vmatpush.msra.mxu0 %v162
  %7119 = vmatpush.msra.mxu0 %v156
  %7120 = vmatpush.msra.mxu0 %v150
  %7121 = vmatpush.msra.mxu0 %v144
  %7122 = vmatpush.msra.mxu0 %v138
  %7123 = vmatmul.f32.gmra.mxu0 %v6503
  %v7124 = vpop.f32.mrf.mxu0
  %v7125 = vadd.f32 %v7105, %v7124
  %7126 = vdwg.mxu0
  %7127 = vmatpush.msra.mxu0 %v133
  %7128 = vmatpush.msra.mxu0 %v127
  %7129 = vmatpush.msra.mxu0 %v121
  %7130 = vmatpush.msra.mxu0 %v115
  %7131 = vmatpush.msra.mxu0 %v109
  %7132 = vmatpush.msra.mxu0 %v103
  %7133 = vmatpush.msra.mxu0 %v97
  %7134 = vmatpush.msra.mxu0 %v91
  %7135 = vmatpush.msra.mxu0 %v85
  %7136 = vmatpush.msra.mxu0 %v79
  %7137 = vmatpush.msra.mxu0 %v73
  %7138 = vmatpush.msra.mxu0 %v67
  %7139 = vmatpush.msra.mxu0 %v61
  %7140 = vmatpush.msra.mxu0 %v55
  %7141 = vmatpush.msra.mxu0 %v49
  %7142 = vmatpush.msra.mxu0 %v43
  %7143 = vmatmul.f32.gmra.mxu0 %v6502
  %v7144 = vpop.f32.mrf.mxu0
  %v7145 = vadd.f32 0.0, %v7144
  %7146 = vdwg.mxu0
  %7147 = vmatpush.msra.mxu0 %v229
  %7148 = vmatpush.msra.mxu0 %v223
  %7149 = vmatpush.msra.mxu0 %v217
  %7150 = vmatpush.msra.mxu0 %v211
  %7151 = vmatpush.msra.mxu0 %v205
  %7152 = vmatpush.msra.mxu0 %v199
  %7153 = vmatpush.msra.mxu0 %v193
  %7154 = vmatpush.msra.mxu0 %v187
  %7155 = vmatpush.msra.mxu0 %v181
  %7156 = vmatpush.msra.mxu0 %v175
  %7157 = vmatpush.msra.mxu0 %v169
  %7158 = vmatpush.msra.mxu0 %v163
  %7159 = vmatpush.msra.mxu0 %v157
  %7160 = vmatpush.msra.mxu0 %v151
  %7161 = vmatpush.msra.mxu0 %v145
  %7162 = vmatpush.msra.mxu0 %v139
  %7163 = vmatmul.f32.gmra.mxu0 %v6503
  %v7164 = vpop.f32.mrf.mxu0
  %v7165 = vadd.f32 %v7145, %v7164
  %7166 = vdwg.mxu0
  %7167 = vmatpush.msra.mxu0 %v134
  %7168 = vmatpush.msra.mxu0 %v128
  %7169 = vmatpush.msra.mxu0 %v122
  %7170 = vmatpush.msra.mxu0 %v116
  %7171 = vmatpush.msra.mxu0 %v110
  %7172 = vmatpush.msra.mxu0 %v104
  %7173 = vmatpush.msra.mxu0 %v98
  %7174 = vmatpush.msra.mxu0 %v92
  %7175 = vmatpush.msra.mxu0 %v86
  %7176 = vmatpush.msra.mxu0 %v80
  %7177 = vmatpush.msra.mxu0 %v74
  %7178 = vmatpush.msra.mxu0 %v68
  %7179 = vmatpush.msra.mxu0 %v62
  %7180 = vmatpush.msra.mxu0 %v56
  %7181 = vmatpush.msra.mxu0 %v50
  %7182 = vmatpush.msra.mxu0 %v44
  %7183 = vmatmul.f32.gmra.mxu0 %v6502
  %v7184 = vpop.f32.mrf.mxu0
  %v7185 = vadd.f32 0.0, %v7184
  %7186 = vdwg.mxu0
  %7187 = vmatpush.msra.mxu0 %v230
  %7188 = vmatpush.msra.mxu0 %v224
  %7189 = vmatpush.msra.mxu0 %v218
  %7190 = vmatpush.msra.mxu0 %v212
  %7191 = vmatpush.msra.mxu0 %v206
  %7192 = vmatpush.msra.mxu0 %v200
  %7193 = vmatpush.msra.mxu0 %v194
  %7194 = vmatpush.msra.mxu0 %v188
  %7195 = vmatpush.msra.mxu0 %v182
  %7196 = vmatpush.msra.mxu0 %v176
  %7197 = vmatpush.msra.mxu0 %v170
  %7198 = vmatpush.msra.mxu0 %v164
  %7199 = vmatpush.msra.mxu0 %v158
  %7200 = vmatpush.msra.mxu0 %v152
  %7201 = vmatpush.msra.mxu0 %v146
  %7202 = vmatpush.msra.mxu0 %v140
  %7203 = vmatmul.f32.gmra.mxu0 %v6503
  %v7204 = vpop.f32.mrf.mxu0
  %v7205 = vadd.f32 %v7185, %v7204
  %7206 = vdwg.mxu0
  %7207 = vmatpush.msra.mxu0 %v135
  %7208 = vmatpush.msra.mxu0 %v129
  %7209 = vmatpush.msra.mxu0 %v123
  %7210 = vmatpush.msra.mxu0 %v117
  %7211 = vmatpush.msra.mxu0 %v111
  %7212 = vmatpush.msra.mxu0 %v105
  %7213 = vmatpush.msra.mxu0 %v99
  %7214 = vmatpush.msra.mxu0 %v93
  %7215 = vmatpush.msra.mxu0 %v87
  %7216 = vmatpush.msra.mxu0 %v81
  %7217 = vmatpush.msra.mxu0 %v75
  %7218 = vmatpush.msra.mxu0 %v69
  %7219 = vmatpush.msra.mxu0 %v63
  %7220 = vmatpush.msra.mxu0 %v57
  %7221 = vmatpush.msra.mxu0 %v51
  %7222 = vmatpush.msra.mxu0 %v45
  %7223 = vmatmul.f32.gmra.mxu0 %v6502
  %v7224 = vpop.f32.mrf.mxu0
  %v7225 = vadd.f32 0.0, %v7224
  %7226 = vdwg.mxu0
  %7227 = vmatpush.msra.mxu0 %v231
  %7228 = vmatpush.msra.mxu0 %v225
  %7229 = vmatpush.msra.mxu0 %v219
  %7230 = vmatpush.msra.mxu0 %v213
  %7231 = vmatpush.msra.mxu0 %v207
  %7232 = vmatpush.msra.mxu0 %v201
  %7233 = vmatpush.msra.mxu0 %v195
  %7234 = vmatpush.msra.mxu0 %v189
  %7235 = vmatpush.msra.mxu0 %v183
  %7236 = vmatpush.msra.mxu0 %v177
  %7237 = vmatpush.msra.mxu0 %v171
  %7238 = vmatpush.msra.mxu0 %v165
  %7239 = vmatpush.msra.mxu0 %v159
  %7240 = vmatpush.msra.mxu0 %v153
  %7241 = vmatpush.msra.mxu0 %v147
  %7242 = vmatpush.msra.mxu0 %v141
  %7243 = vmatmul.f32.gmra.mxu0 %v6503
  %v7244 = vpop.f32.mrf.mxu0
  %v7245 = vadd.f32 %v7225, %v7244
  %7246 = vdwg.mxu0
  %7247 = vmatpush.msra.mxu0 %v136
  %7248 = vmatpush.msra.mxu0 %v130
  %7249 = vmatpush.msra.mxu0 %v124
  %7250 = vmatpush.msra.mxu0 %v118
  %7251 = vmatpush.msra.mxu0 %v112
  %7252 = vmatpush.msra.mxu0 %v106
  %7253 = vmatpush.msra.mxu0 %v100
  %7254 = vmatpush.msra.mxu0 %v94
  %7255 = vmatpush.msra.mxu0 %v88
  %7256 = vmatpush.msra.mxu0 %v82
  %7257 = vmatpush.msra.mxu0 %v76
  %7258 = vmatpush.msra.mxu0 %v70
  %7259 = vmatpush.msra.mxu0 %v64
  %7260 = vmatpush.msra.mxu0 %v58
  %7261 = vmatpush.msra.mxu0 %v52
  %7262 = vmatpush.msra.mxu0 %v46
  %7263 = vmatmul.f32.gmra.mxu0 %v6502
  %v7264 = vpop.f32.mrf.mxu0
  %v7265 = vadd.f32 0.0, %v7264
  %7266 = vdwg.mxu0
  %7267 = vmatpush.msra.mxu0 %v232
  %7268 = vmatpush.msra.mxu0 %v226
  %7269 = vmatpush.msra.mxu0 %v220
  %7270 = vmatpush.msra.mxu0 %v214
  %7271 = vmatpush.msra.mxu0 %v208
  %7272 = vmatpush.msra.mxu0 %v202
  %7273 = vmatpush.msra.mxu0 %v196
  %7274 = vmatpush.msra.mxu0 %v190
  %7275 = vmatpush.msra.mxu0 %v184
  %7276 = vmatpush.msra.mxu0 %v178
  %7277 = vmatpush.msra.mxu0 %v172
  %7278 = vmatpush.msra.mxu0 %v166
  %7279 = vmatpush.msra.mxu0 %v160
  %7280 = vmatpush.msra.mxu0 %v154
  %7281 = vmatpush.msra.mxu0 %v148
  %7282 = vmatpush.msra.mxu0 %v142
  %7283 = vmatmul.f32.gmra.mxu0 %v6503
  %v7284 = vpop.f32.mrf.mxu0
  %v7285 = vadd.f32 %v7265, %v7284
  %7286 = vdwg.mxu0
  %7287 = vmatpush.msra.mxu0 %v137
  %7288 = vmatpush.msra.mxu0 %v131
  %7289 = vmatpush.msra.mxu0 %v125
  %7290 = vmatpush.msra.mxu0 %v119
  %7291 = vmatpush.msra.mxu0 %v113
  %7292 = vmatpush.msra.mxu0 %v107
  %7293 = vmatpush.msra.mxu0 %v101
  %7294 = vmatpush.msra.mxu0 %v95
  %7295 = vmatpush.msra.mxu0 %v89
  %7296 = vmatpush.msra.mxu0 %v83
  %7297 = vmatpush.msra.mxu0 %v77
  %7298 = vmatpush.msra.mxu0 %v71
  %7299 = vmatpush.msra.mxu0 %v65
  %7300 = vmatpush.msra.mxu0 %v59
  %7301 = vmatpush.msra.mxu0 %v53
  %7302 = vmatpush.msra.mxu0 %v47
  %7303 = vmatmul.f32.gmra.mxu0 %v6502
  %v7304 = vpop.f32.mrf.mxu0
  %v7305 = vadd.f32 0.0, %v7304
  %7306 = vdwg.mxu0
  %7307 = vmatpush.msra.mxu0 %v233
  %7308 = vmatpush.msra.mxu0 %v227
  %7309 = vmatpush.msra.mxu0 %v221
  %7310 = vmatpush.msra.mxu0 %v215
  %7311 = vmatpush.msra.mxu0 %v209
  %7312 = vmatpush.msra.mxu0 %v203
  %7313 = vmatpush.msra.mxu0 %v197
  %7314 = vmatpush.msra.mxu0 %v191
  %7315 = vmatpush.msra.mxu0 %v185
  %7316 = vmatpush.msra.mxu0 %v179
  %7317 = vmatpush.msra.mxu0 %v173
  %7318 = vmatpush.msra.mxu0 %v167
  %7319 = vmatpush.msra.mxu0 %v161
  %7320 = vmatpush.msra.mxu0 %v155
  %7321 = vmatpush.msra.mxu0 %v149
  %7322 = vmatpush.msra.mxu0 %v143
  %7323 = vmatmul.f32.gmra.mxu0 %v6503
  %v7324 = vpop.f32.mrf.mxu0
  %v7325 = vadd.f32 %v7305, %v7324
  %7326 = vdwg.mxu0
  %v7327 = vadd.f32 %v7081, %v7125
  %v7328 = vadd.f32 %v7082, %v7165
  %v7329 = vxor.u32 %v7327, 2147483648
  %v7330 = vxor.u32 %v7328, 2147483648
  %v7331 = vmul.f32 %v7329, 1.442695
  %v7332 = vpow.pop %v7331
  %v7333 = vmul.f32 %v7330, 1.442695
  %v7334 = vpow.pop %v7333
  %v7335 = vadd.f32 %v7332, 1.0
  %v7336 = vadd.f32 %v7334, 1.0
  %v7337 = vrcp.pop %v7335
  %v7338 = vmul.f32 %v7335, %v7337
  %v7339 = vsub.f32 1.0, %v7338
  %v7340 = vmul.f32 %v7337, %v7339
  %v7341 = vadd.f32 %v7337, %v7340
  %vm7342 = vweird.f32 %v7335
  %vm7343 = vweird.f32 %v7337
  %vm7344 = vmor %vm7342, %vm7343
  %v7345 = vsel %vm7344, %v7337, %v7341
  %v7346 = vand.u32 2147483647, %v7335
  %vm7347 = vcmp.eq.f32.partialorder %v7346, 8.507059e+37
  %v7348 = vand.u32 %v7335, 2147483648
  %v7349 = vor.u32 1.1754944e-38, %v7348
  %v7350 = vsel %vm7347, %v7349, %v7345
  %v7351 = vmul.f32 1.0, %v7350
  %v7352 = vrcp.pop %v7336
  %v7353 = vmul.f32 %v7336, %v7352
  %v7354 = vsub.f32 1.0, %v7353
  %v7355 = vmul.f32 %v7352, %v7354
  %v7356 = vadd.f32 %v7352, %v7355
  %vm7357 = vweird.f32 %v7336
  %vm7358 = vweird.f32 %v7352
  %vm7359 = vmor %vm7357, %vm7358
  %v7360 = vsel %vm7359, %v7352, %v7356
  %v7361 = vand.u32 2147483647, %v7336
  %vm7362 = vcmp.eq.f32.partialorder %v7361, 8.507059e+37
  %v7363 = vand.u32 %v7336, 2147483648
  %v7364 = vor.u32 1.1754944e-38, %v7363
  %v7365 = vsel %vm7362, %v7364, %v7360
  %v7366 = vmul.f32 1.0, %v7365
  %v7367 = vadd.f32 %v7083, %v7205
  %v7368 = vadd.f32 %v7084, %v7245
  %v7369 = vxor.u32 %v7367, 2147483648
  %v7370 = vxor.u32 %v7368, 2147483648
  %v7371 = vmul.f32 %v7369, 1.442695
  %v7372 = vpow.pop %v7371
  %v7373 = vmul.f32 %v7370, 1.442695
  %v7374 = vpow.pop %v7373
  %v7375 = vadd.f32 %v7372, 1.0
  %v7376 = vadd.f32 %v7374, 1.0
  %v7377 = vrcp.pop %v7375
  %v7378 = vmul.f32 %v7375, %v7377
  %v7379 = vsub.f32 1.0, %v7378
  %v7380 = vmul.f32 %v7377, %v7379
  %v7381 = vadd.f32 %v7377, %v7380
  %vm7382 = vweird.f32 %v7375
  %vm7383 = vweird.f32 %v7377
  %vm7384 = vmor %vm7382, %vm7383
  %v7385 = vsel %vm7384, %v7377, %v7381
  %v7386 = vand.u32 2147483647, %v7375
  %vm7387 = vcmp.eq.f32.partialorder %v7386, 8.507059e+37
  %v7388 = vand.u32 %v7375, 2147483648
  %v7389 = vor.u32 1.1754944e-38, %v7388
  %v7390 = vsel %vm7387, %v7389, %v7385
  %v7391 = vmul.f32 1.0, %v7390
  %v7392 = vrcp.pop %v7376
  %v7393 = vmul.f32 %v7376, %v7392
  %v7394 = vsub.f32 1.0, %v7393
  %v7395 = vmul.f32 %v7392, %v7394
  %v7396 = vadd.f32 %v7392, %v7395
  %vm7397 = vweird.f32 %v7376
  %vm7398 = vweird.f32 %v7392
  %vm7399 = vmor %vm7397, %vm7398
  %v7400 = vsel %vm7399, %v7392, %v7396
  %v7401 = vand.u32 2147483647, %v7376
  %vm7402 = vcmp.eq.f32.partialorder %v7401, 8.507059e+37
  %v7403 = vand.u32 %v7376, 2147483648
  %v7404 = vor.u32 1.1754944e-38, %v7403
  %v7405 = vsel %vm7402, %v7404, %v7400
  %v7406 = vmul.f32 1.0, %v7405
  %v7407 = vadd.f32 %v7285, %v620
  %v7408 = vadd.f32 %v7325, %v621
  %v7409 = vmul.f32 %v7351, %v7407
  %v7410 = vmul.f32 %v7366, %v7408
  %v7411 = vadd.f32 %v7085, %v7409
  %v7412 = vadd.f32 %v7086, %v7410
  %v7413 = vtanh.pop %v7411
  %v7414 = vtanh.pop %v7412
  %v7415 = vsub.f32 1.0, %v7391
  %v7416 = vsub.f32 1.0, %v7406
  %v7417 = vmul.f32 %v7415, %v7413
  %v7418 = vmul.f32 %v7416, %v7414
  %v7419 = vmul.f32 %v7391, %v6502
  %v7420 = vmul.f32 %v7406, %v6503
  %v7421 = vadd.f32 %v7417, %v7419
  %v7422 = vadd.f32 %v7418, %v7420
  %7423 = vmatpush.msra.mxu0 %v324
  %7424 = vmatpush.msra.mxu0 %v318
  %7425 = vmatpush.msra.mxu0 %v312
  %7426 = vmatpush.msra.mxu0 %v306
  %7427 = vmatpush.msra.mxu0 %v300
  %7428 = vmatpush.msra.mxu0 %v294
  %7429 = vmatpush.msra.mxu0 %v288
  %7430 = vmatpush.msra.mxu0 %v282
  %7431 = vmatpush.msra.mxu0 %v276
  %7432 = vmatpush.msra.mxu0 %v270
  %7433 = vmatpush.msra.mxu0 %v264
  %7434 = vmatpush.msra.mxu0 %v258
  %7435 = vmatpush.msra.mxu0 %v252
  %7436 = vmatpush.msra.mxu0 %v246
  %7437 = vmatpush.msra.mxu0 %v240
  %7438 = vmatpush.msra.mxu0 %v234
  %7439 = vmatmul.f32.gmra.mxu0 %v7421
  %v7440 = vpop.f32.mrf.mxu0
  %v7441 = vadd.f32 %v626, %v7440
  %7442 = vdwg.mxu0
  %7443 = vmatpush.msra.mxu0 %v420
  %7444 = vmatpush.msra.mxu0 %v414
  %7445 = vmatpush.msra.mxu0 %v408
  %7446 = vmatpush.msra.mxu0 %v402
  %7447 = vmatpush.msra.mxu0 %v396
  %7448 = vmatpush.msra.mxu0 %v390
  %7449 = vmatpush.msra.mxu0 %v384
  %7450 = vmatpush.msra.mxu0 %v378
  %7451 = vmatpush.msra.mxu0 %v372
  %7452 = vmatpush.msra.mxu0 %v366
  %7453 = vmatpush.msra.mxu0 %v360
  %7454 = vmatpush.msra.mxu0 %v354
  %7455 = vmatpush.msra.mxu0 %v348
  %7456 = vmatpush.msra.mxu0 %v342
  %7457 = vmatpush.msra.mxu0 %v336
  %7458 = vmatpush.msra.mxu0 %v330
  %7459 = vmatmul.f32.gmra.mxu0 %v7422
  %v7460 = vpop.f32.mrf.mxu0
  %v7461 = vadd.f32 %v7441, %v7460
  %7462 = vdwg.mxu0
  %7463 = vmatpush.msra.mxu0 %v325
  %7464 = vmatpush.msra.mxu0 %v319
  %7465 = vmatpush.msra.mxu0 %v313
  %7466 = vmatpush.msra.mxu0 %v307
  %7467 = vmatpush.msra.mxu0 %v301
  %7468 = vmatpush.msra.mxu0 %v295
  %7469 = vmatpush.msra.mxu0 %v289
  %7470 = vmatpush.msra.mxu0 %v283
  %7471 = vmatpush.msra.mxu0 %v277
  %7472 = vmatpush.msra.mxu0 %v271
  %7473 = vmatpush.msra.mxu0 %v265
  %7474 = vmatpush.msra.mxu0 %v259
  %7475 = vmatpush.msra.mxu0 %v253
  %7476 = vmatpush.msra.mxu0 %v247
  %7477 = vmatpush.msra.mxu0 %v241
  %7478 = vmatpush.msra.mxu0 %v235
  %7479 = vmatmul.f32.gmra.mxu0 %v7421
  %v7480 = vpop.f32.mrf.mxu0
  %v7481 = vadd.f32 %v627, %v7480
  %7482 = vdwg.mxu0
  %7483 = vmatpush.msra.mxu0 %v421
  %7484 = vmatpush.msra.mxu0 %v415
  %7485 = vmatpush.msra.mxu0 %v409
  %7486 = vmatpush.msra.mxu0 %v403
  %7487 = vmatpush.msra.mxu0 %v397
  %7488 = vmatpush.msra.mxu0 %v391
  %7489 = vmatpush.msra.mxu0 %v385
  %7490 = vmatpush.msra.mxu0 %v379
  %7491 = vmatpush.msra.mxu0 %v373
  %7492 = vmatpush.msra.mxu0 %v367
  %7493 = vmatpush.msra.mxu0 %v361
  %7494 = vmatpush.msra.mxu0 %v355
  %7495 = vmatpush.msra.mxu0 %v349
  %7496 = vmatpush.msra.mxu0 %v343
  %7497 = vmatpush.msra.mxu0 %v337
  %7498 = vmatpush.msra.mxu0 %v331
  %7499 = vmatmul.f32.gmra.mxu0 %v7422
  %v7500 = vpop.f32.mrf.mxu0
  %v7501 = vadd.f32 %v7481, %v7500
  %7502 = vdwg.mxu0
  %7503 = vmatpush.msra.mxu0 %v326
  %7504 = vmatpush.msra.mxu0 %v320
  %7505 = vmatpush.msra.mxu0 %v314
  %7506 = vmatpush.msra.mxu0 %v308
  %7507 = vmatpush.msra.mxu0 %v302
  %7508 = vmatpush.msra.mxu0 %v296
  %7509 = vmatpush.msra.mxu0 %v290
  %7510 = vmatpush.msra.mxu0 %v284
  %7511 = vmatpush.msra.mxu0 %v278
  %7512 = vmatpush.msra.mxu0 %v272
  %7513 = vmatpush.msra.mxu0 %v266
  %7514 = vmatpush.msra.mxu0 %v260
  %7515 = vmatpush.msra.mxu0 %v254
  %7516 = vmatpush.msra.mxu0 %v248
  %7517 = vmatpush.msra.mxu0 %v242
  %7518 = vmatpush.msra.mxu0 %v236
  %7519 = vmatmul.f32.gmra.mxu0 %v7421
  %v7520 = vpop.f32.mrf.mxu0
  %v7521 = vadd.f32 %v628, %v7520
  %7522 = vdwg.mxu0
  %7523 = vmatpush.msra.mxu0 %v422
  %7524 = vmatpush.msra.mxu0 %v416
  %7525 = vmatpush.msra.mxu0 %v410
  %7526 = vmatpush.msra.mxu0 %v404
  %7527 = vmatpush.msra.mxu0 %v398
  %7528 = vmatpush.msra.mxu0 %v392
  %7529 = vmatpush.msra.mxu0 %v386
  %7530 = vmatpush.msra.mxu0 %v380
  %7531 = vmatpush.msra.mxu0 %v374
  %7532 = vmatpush.msra.mxu0 %v368
  %7533 = vmatpush.msra.mxu0 %v362
  %7534 = vmatpush.msra.mxu0 %v356
  %7535 = vmatpush.msra.mxu0 %v350
  %7536 = vmatpush.msra.mxu0 %v344
  %7537 = vmatpush.msra.mxu0 %v338
  %7538 = vmatpush.msra.mxu0 %v332
  %7539 = vmatmul.f32.gmra.mxu0 %v7422
  %v7540 = vpop.f32.mrf.mxu0
  %v7541 = vadd.f32 %v7521, %v7540
  %7542 = vdwg.mxu0
  %7543 = vmatpush.msra.mxu0 %v327
  %7544 = vmatpush.msra.mxu0 %v321
  %7545 = vmatpush.msra.mxu0 %v315
  %7546 = vmatpush.msra.mxu0 %v309
  %7547 = vmatpush.msra.mxu0 %v303
  %7548 = vmatpush.msra.mxu0 %v297
  %7549 = vmatpush.msra.mxu0 %v291
  %7550 = vmatpush.msra.mxu0 %v285
  %7551 = vmatpush.msra.mxu0 %v279
  %7552 = vmatpush.msra.mxu0 %v273
  %7553 = vmatpush.msra.mxu0 %v267
  %7554 = vmatpush.msra.mxu0 %v261
  %7555 = vmatpush.msra.mxu0 %v255
  %7556 = vmatpush.msra.mxu0 %v249
  %7557 = vmatpush.msra.mxu0 %v243
  %7558 = vmatpush.msra.mxu0 %v237
  %7559 = vmatmul.f32.gmra.mxu0 %v7421
  %v7560 = vpop.f32.mrf.mxu0
  %v7561 = vadd.f32 %v629, %v7560
  %7562 = vdwg.mxu0
  %7563 = vmatpush.msra.mxu0 %v423
  %7564 = vmatpush.msra.mxu0 %v417
  %7565 = vmatpush.msra.mxu0 %v411
  %7566 = vmatpush.msra.mxu0 %v405
  %7567 = vmatpush.msra.mxu0 %v399
  %7568 = vmatpush.msra.mxu0 %v393
  %7569 = vmatpush.msra.mxu0 %v387
  %7570 = vmatpush.msra.mxu0 %v381
  %7571 = vmatpush.msra.mxu0 %v375
  %7572 = vmatpush.msra.mxu0 %v369
  %7573 = vmatpush.msra.mxu0 %v363
  %7574 = vmatpush.msra.mxu0 %v357
  %7575 = vmatpush.msra.mxu0 %v351
  %7576 = vmatpush.msra.mxu0 %v345
  %7577 = vmatpush.msra.mxu0 %v339
  %7578 = vmatpush.msra.mxu0 %v333
  %7579 = vmatmul.f32.gmra.mxu0 %v7422
  %v7580 = vpop.f32.mrf.mxu0
  %v7581 = vadd.f32 %v7561, %v7580
  %7582 = vdwg.mxu0
  %7583 = vmatpush.msra.mxu0 %v328
  %7584 = vmatpush.msra.mxu0 %v322
  %7585 = vmatpush.msra.mxu0 %v316
  %7586 = vmatpush.msra.mxu0 %v310
  %7587 = vmatpush.msra.mxu0 %v304
  %7588 = vmatpush.msra.mxu0 %v298
  %7589 = vmatpush.msra.mxu0 %v292
  %7590 = vmatpush.msra.mxu0 %v286
  %7591 = vmatpush.msra.mxu0 %v280
  %7592 = vmatpush.msra.mxu0 %v274
  %7593 = vmatpush.msra.mxu0 %v268
  %7594 = vmatpush.msra.mxu0 %v262
  %7595 = vmatpush.msra.mxu0 %v256
  %7596 = vmatpush.msra.mxu0 %v250
  %7597 = vmatpush.msra.mxu0 %v244
  %7598 = vmatpush.msra.mxu0 %v238
  %7599 = vmatmul.f32.gmra.mxu0 %v7421
  %v7600 = vpop.f32.mrf.mxu0
  %v7601 = vadd.f32 %v630, %v7600
  %7602 = vdwg.mxu0
  %7603 = vmatpush.msra.mxu0 %v424
  %7604 = vmatpush.msra.mxu0 %v418
  %7605 = vmatpush.msra.mxu0 %v412
  %7606 = vmatpush.msra.mxu0 %v406
  %7607 = vmatpush.msra.mxu0 %v400
  %7608 = vmatpush.msra.mxu0 %v394
  %7609 = vmatpush.msra.mxu0 %v388
  %7610 = vmatpush.msra.mxu0 %v382
  %7611 = vmatpush.msra.mxu0 %v376
  %7612 = vmatpush.msra.mxu0 %v370
  %7613 = vmatpush.msra.mxu0 %v364
  %7614 = vmatpush.msra.mxu0 %v358
  %7615 = vmatpush.msra.mxu0 %v352
  %7616 = vmatpush.msra.mxu0 %v346
  %7617 = vmatpush.msra.mxu0 %v340
  %7618 = vmatpush.msra.mxu0 %v334
  %7619 = vmatmul.f32.gmra.mxu0 %v7422
  %v7620 = vpop.f32.mrf.mxu0
  %v7621 = vadd.f32 %v7601, %v7620
  %7622 = vdwg.mxu0
  %7623 = vmatpush.msra.mxu0 %v329
  %7624 = vmatpush.msra.mxu0 %v323
  %7625 = vmatpush.msra.mxu0 %v317
  %7626 = vmatpush.msra.mxu0 %v311
  %7627 = vmatpush.msra.mxu0 %v305
  %7628 = vmatpush.msra.mxu0 %v299
  %7629 = vmatpush.msra.mxu0 %v293
  %7630 = vmatpush.msra.mxu0 %v287
  %7631 = vmatpush.msra.mxu0 %v281
  %7632 = vmatpush.msra.mxu0 %v275
  %7633 = vmatpush.msra.mxu0 %v269
  %7634 = vmatpush.msra.mxu0 %v263
  %7635 = vmatpush.msra.mxu0 %v257
  %7636 = vmatpush.msra.mxu0 %v251
  %7637 = vmatpush.msra.mxu0 %v245
  %7638 = vmatpush.msra.mxu0 %v239
  %7639 = vmatmul.f32.gmra.mxu0 %v7421
  %v7640 = vpop.f32.mrf.mxu0
  %v7641 = vadd.f32 %v631, %v7640
  %7642 = vdwg.mxu0
  %7643 = vmatpush.msra.mxu0 %v425
  %7644 = vmatpush.msra.mxu0 %v419
  %7645 = vmatpush.msra.mxu0 %v413
  %7646 = vmatpush.msra.mxu0 %v407
  %7647 = vmatpush.msra.mxu0 %v401
  %7648 = vmatpush.msra.mxu0 %v395
  %7649 = vmatpush.msra.mxu0 %v389
  %7650 = vmatpush.msra.mxu0 %v383
  %7651 = vmatpush.msra.mxu0 %v377
  %7652 = vmatpush.msra.mxu0 %v371
  %7653 = vmatpush.msra.mxu0 %v365
  %7654 = vmatpush.msra.mxu0 %v359
  %7655 = vmatpush.msra.mxu0 %v353
  %7656 = vmatpush.msra.mxu0 %v347
  %7657 = vmatpush.msra.mxu0 %v341
  %7658 = vmatpush.msra.mxu0 %v335
  %7659 = vmatmul.f32.gmra.mxu0 %v7422
  %v7660 = vpop.f32.mrf.mxu0
  %v7661 = vadd.f32 %v7641, %v7660
  %7662 = vdwg.mxu0
  %7663 = vmatpush.msra.mxu0 %v516
  %7664 = vmatpush.msra.mxu0 %v510
  %7665 = vmatpush.msra.mxu0 %v504
  %7666 = vmatpush.msra.mxu0 %v498
  %7667 = vmatpush.msra.mxu0 %v492
  %7668 = vmatpush.msra.mxu0 %v486
  %7669 = vmatpush.msra.mxu0 %v480
  %7670 = vmatpush.msra.mxu0 %v474
  %7671 = vmatpush.msra.mxu0 %v468
  %7672 = vmatpush.msra.mxu0 %v462
  %7673 = vmatpush.msra.mxu0 %v456
  %7674 = vmatpush.msra.mxu0 %v450
  %7675 = vmatpush.msra.mxu0 %v444
  %7676 = vmatpush.msra.mxu0 %v438
  %7677 = vmatpush.msra.mxu0 %v432
  %7678 = vmatpush.msra.mxu0 %v426
  %7679 = vmatmul.f32.gmra.mxu0 %v7078
  %v7680 = vpop.f32.mrf.mxu0
  %v7681 = vadd.f32 0.0, %v7680
  %7682 = vdwg.mxu0
  %7683 = vmatpush.msra.mxu0 %v612
  %7684 = vmatpush.msra.mxu0 %v606
  %7685 = vmatpush.msra.mxu0 %v600
  %7686 = vmatpush.msra.mxu0 %v594
  %7687 = vmatpush.msra.mxu0 %v588
  %7688 = vmatpush.msra.mxu0 %v582
  %7689 = vmatpush.msra.mxu0 %v576
  %7690 = vmatpush.msra.mxu0 %v570
  %7691 = vmatpush.msra.mxu0 %v564
  %7692 = vmatpush.msra.mxu0 %v558
  %7693 = vmatpush.msra.mxu0 %v552
  %7694 = vmatpush.msra.mxu0 %v546
  %7695 = vmatpush.msra.mxu0 %v540
  %7696 = vmatpush.msra.mxu0 %v534
  %7697 = vmatpush.msra.mxu0 %v528
  %7698 = vmatpush.msra.mxu0 %v522
  %7699 = vmatmul.f32.gmra.mxu0 %v7079
  %v7700 = vpop.f32.mrf.mxu0
  %v7701 = vadd.f32 %v7681, %v7700
  %7702 = vdwg.mxu0
  %7703 = vmatpush.msra.mxu0 %v517
  %7704 = vmatpush.msra.mxu0 %v511
  %7705 = vmatpush.msra.mxu0 %v505
  %7706 = vmatpush.msra.mxu0 %v499
  %7707 = vmatpush.msra.mxu0 %v493
  %7708 = vmatpush.msra.mxu0 %v487
  %7709 = vmatpush.msra.mxu0 %v481
  %7710 = vmatpush.msra.mxu0 %v475
  %7711 = vmatpush.msra.mxu0 %v469
  %7712 = vmatpush.msra.mxu0 %v463
  %7713 = vmatpush.msra.mxu0 %v457
  %7714 = vmatpush.msra.mxu0 %v451
  %7715 = vmatpush.msra.mxu0 %v445
  %7716 = vmatpush.msra.mxu0 %v439
  %7717 = vmatpush.msra.mxu0 %v433
  %7718 = vmatpush.msra.mxu0 %v427
  %7719 = vmatmul.f32.gmra.mxu0 %v7078
  %v7720 = vpop.f32.mrf.mxu0
  %v7721 = vadd.f32 0.0, %v7720
  %7722 = vdwg.mxu0
  %7723 = vmatpush.msra.mxu0 %v613
  %7724 = vmatpush.msra.mxu0 %v607
  %7725 = vmatpush.msra.mxu0 %v601
  %7726 = vmatpush.msra.mxu0 %v595
  %7727 = vmatpush.msra.mxu0 %v589
  %7728 = vmatpush.msra.mxu0 %v583
  %7729 = vmatpush.msra.mxu0 %v577
  %7730 = vmatpush.msra.mxu0 %v571
  %7731 = vmatpush.msra.mxu0 %v565
  %7732 = vmatpush.msra.mxu0 %v559
  %7733 = vmatpush.msra.mxu0 %v553
  %7734 = vmatpush.msra.mxu0 %v547
  %7735 = vmatpush.msra.mxu0 %v541
  %7736 = vmatpush.msra.mxu0 %v535
  %7737 = vmatpush.msra.mxu0 %v529
  %7738 = vmatpush.msra.mxu0 %v523
  %7739 = vmatmul.f32.gmra.mxu0 %v7079
  %v7740 = vpop.f32.mrf.mxu0
  %v7741 = vadd.f32 %v7721, %v7740
  %7742 = vdwg.mxu0
  %7743 = vmatpush.msra.mxu0 %v518
  %7744 = vmatpush.msra.mxu0 %v512
  %7745 = vmatpush.msra.mxu0 %v506
  %7746 = vmatpush.msra.mxu0 %v500
  %7747 = vmatpush.msra.mxu0 %v494
  %7748 = vmatpush.msra.mxu0 %v488
  %7749 = vmatpush.msra.mxu0 %v482
  %7750 = vmatpush.msra.mxu0 %v476
  %7751 = vmatpush.msra.mxu0 %v470
  %7752 = vmatpush.msra.mxu0 %v464
  %7753 = vmatpush.msra.mxu0 %v458
  %7754 = vmatpush.msra.mxu0 %v452
  %7755 = vmatpush.msra.mxu0 %v446
  %7756 = vmatpush.msra.mxu0 %v440
  %7757 = vmatpush.msra.mxu0 %v434
  %7758 = vmatpush.msra.mxu0 %v428
  %7759 = vmatmul.f32.gmra.mxu0 %v7078
  %v7760 = vpop.f32.mrf.mxu0
  %v7761 = vadd.f32 0.0, %v7760
  %7762 = vdwg.mxu0
  %7763 = vmatpush.msra.mxu0 %v614
  %7764 = vmatpush.msra.mxu0 %v608
  %7765 = vmatpush.msra.mxu0 %v602
  %7766 = vmatpush.msra.mxu0 %v596
  %7767 = vmatpush.msra.mxu0 %v590
  %7768 = vmatpush.msra.mxu0 %v584
  %7769 = vmatpush.msra.mxu0 %v578
  %7770 = vmatpush.msra.mxu0 %v572
  %7771 = vmatpush.msra.mxu0 %v566
  %7772 = vmatpush.msra.mxu0 %v560
  %7773 = vmatpush.msra.mxu0 %v554
  %7774 = vmatpush.msra.mxu0 %v548
  %7775 = vmatpush.msra.mxu0 %v542
  %7776 = vmatpush.msra.mxu0 %v536
  %7777 = vmatpush.msra.mxu0 %v530
  %7778 = vmatpush.msra.mxu0 %v524
  %7779 = vmatmul.f32.gmra.mxu0 %v7079
  %v7780 = vpop.f32.mrf.mxu0
  %v7781 = vadd.f32 %v7761, %v7780
  %7782 = vdwg.mxu0
  %7783 = vmatpush.msra.mxu0 %v519
  %7784 = vmatpush.msra.mxu0 %v513
  %7785 = vmatpush.msra.mxu0 %v507
  %7786 = vmatpush.msra.mxu0 %v501
  %7787 = vmatpush.msra.mxu0 %v495
  %7788 = vmatpush.msra.mxu0 %v489
  %7789 = vmatpush.msra.mxu0 %v483
  %7790 = vmatpush.msra.mxu0 %v477
  %7791 = vmatpush.msra.mxu0 %v471
  %7792 = vmatpush.msra.mxu0 %v465
  %7793 = vmatpush.msra.mxu0 %v459
  %7794 = vmatpush.msra.mxu0 %v453
  %7795 = vmatpush.msra.mxu0 %v447
  %7796 = vmatpush.msra.mxu0 %v441
  %7797 = vmatpush.msra.mxu0 %v435
  %7798 = vmatpush.msra.mxu0 %v429
  %7799 = vmatmul.f32.gmra.mxu0 %v7078
  %v7800 = vpop.f32.mrf.mxu0
  %v7801 = vadd.f32 0.0, %v7800
  %7802 = vdwg.mxu0
  %7803 = vmatpush.msra.mxu0 %v615
  %7804 = vmatpush.msra.mxu0 %v609
  %7805 = vmatpush.msra.mxu0 %v603
  %7806 = vmatpush.msra.mxu0 %v597
  %7807 = vmatpush.msra.mxu0 %v591
  %7808 = vmatpush.msra.mxu0 %v585
  %7809 = vmatpush.msra.mxu0 %v579
  %7810 = vmatpush.msra.mxu0 %v573
  %7811 = vmatpush.msra.mxu0 %v567
  %7812 = vmatpush.msra.mxu0 %v561
  %7813 = vmatpush.msra.mxu0 %v555
  %7814 = vmatpush.msra.mxu0 %v549
  %7815 = vmatpush.msra.mxu0 %v543
  %7816 = vmatpush.msra.mxu0 %v537
  %7817 = vmatpush.msra.mxu0 %v531
  %7818 = vmatpush.msra.mxu0 %v525
  %7819 = vmatmul.f32.gmra.mxu0 %v7079
  %v7820 = vpop.f32.mrf.mxu0
  %v7821 = vadd.f32 %v7801, %v7820
  %7822 = vdwg.mxu0
  %7823 = vmatpush.msra.mxu0 %v520
  %7824 = vmatpush.msra.mxu0 %v514
  %7825 = vmatpush.msra.mxu0 %v508
  %7826 = vmatpush.msra.mxu0 %v502
  %7827 = vmatpush.msra.mxu0 %v496
  %7828 = vmatpush.msra.mxu0 %v490
  %7829 = vmatpush.msra.mxu0 %v484
  %7830 = vmatpush.msra.mxu0 %v478
  %7831 = vmatpush.msra.mxu0 %v472
  %7832 = vmatpush.msra.mxu0 %v466
  %7833 = vmatpush.msra.mxu0 %v460
  %7834 = vmatpush.msra.mxu0 %v454
  %7835 = vmatpush.msra.mxu0 %v448
  %7836 = vmatpush.msra.mxu0 %v442
  %7837 = vmatpush.msra.mxu0 %v436
  %7838 = vmatpush.msra.mxu0 %v430
  %7839 = vmatmul.f32.gmra.mxu0 %v7078
  %v7840 = vpop.f32.mrf.mxu0
  %v7841 = vadd.f32 0.0, %v7840
  %7842 = vdwg.mxu0
  %7843 = vmatpush.msra.mxu0 %v616
  %7844 = vmatpush.msra.mxu0 %v610
  %7845 = vmatpush.msra.mxu0 %v604
  %7846 = vmatpush.msra.mxu0 %v598
  %7847 = vmatpush.msra.mxu0 %v592
  %7848 = vmatpush.msra.mxu0 %v586
  %7849 = vmatpush.msra.mxu0 %v580
  %7850 = vmatpush.msra.mxu0 %v574
  %7851 = vmatpush.msra.mxu0 %v568
  %7852 = vmatpush.msra.mxu0 %v562
  %7853 = vmatpush.msra.mxu0 %v556
  %7854 = vmatpush.msra.mxu0 %v550
  %7855 = vmatpush.msra.mxu0 %v544
  %7856 = vmatpush.msra.mxu0 %v538
  %7857 = vmatpush.msra.mxu0 %v532
  %7858 = vmatpush.msra.mxu0 %v526
  %7859 = vmatmul.f32.gmra.mxu0 %v7079
  %v7860 = vpop.f32.mrf.mxu0
  %v7861 = vadd.f32 %v7841, %v7860
  %7862 = vdwg.mxu0
  %7863 = vmatpush.msra.mxu0 %v521
  %7864 = vmatpush.msra.mxu0 %v515
  %7865 = vmatpush.msra.mxu0 %v509
  %7866 = vmatpush.msra.mxu0 %v503
  %7867 = vmatpush.msra.mxu0 %v497
  %7868 = vmatpush.msra.mxu0 %v491
  %7869 = vmatpush.msra.mxu0 %v485
  %7870 = vmatpush.msra.mxu0 %v479
  %7871 = vmatpush.msra.mxu0 %v473
  %7872 = vmatpush.msra.mxu0 %v467
  %7873 = vmatpush.msra.mxu0 %v461
  %7874 = vmatpush.msra.mxu0 %v455
  %7875 = vmatpush.msra.mxu0 %v449
  %7876 = vmatpush.msra.mxu0 %v443
  %7877 = vmatpush.msra.mxu0 %v437
  %7878 = vmatpush.msra.mxu0 %v431
  %7879 = vmatmul.f32.gmra.mxu0 %v7078
  %v7880 = vpop.f32.mrf.mxu0
  %v7881 = vadd.f32 0.0, %v7880
  %7882 = vdwg.mxu0
  %7883 = vmatpush.msra.mxu0 %v617
  %7884 = vmatpush.msra.mxu0 %v611
  %7885 = vmatpush.msra.mxu0 %v605
  %7886 = vmatpush.msra.mxu0 %v599
  %7887 = vmatpush.msra.mxu0 %v593
  %7888 = vmatpush.msra.mxu0 %v587
  %7889 = vmatpush.msra.mxu0 %v581
  %7890 = vmatpush.msra.mxu0 %v575
  %7891 = vmatpush.msra.mxu0 %v569
  %7892 = vmatpush.msra.mxu0 %v563
  %7893 = vmatpush.msra.mxu0 %v557
  %7894 = vmatpush.msra.mxu0 %v551
  %7895 = vmatpush.msra.mxu0 %v545
  %7896 = vmatpush.msra.mxu0 %v539
  %7897 = vmatpush.msra.mxu0 %v533
  %7898 = vmatpush.msra.mxu0 %v527
  %7899 = vmatmul.f32.gmra.mxu0 %v7079
  %v7900 = vpop.f32.mrf.mxu0
  %v7901 = vadd.f32 %v7881, %v7900
  %7902 = vdwg.mxu0
  %v7903 = vadd.f32 %v7461, %v7701
  %v7904 = vadd.f32 %v7501, %v7741
  %v7905 = vxor.u32 %v7903, 2147483648
  %v7906 = vxor.u32 %v7904, 2147483648
  %v7907 = vmul.f32 %v7905, 1.442695
  %v7908 = vpow.pop %v7907
  %v7909 = vmul.f32 %v7906, 1.442695
  %v7910 = vpow.pop %v7909
  %v7911 = vadd.f32 %v7908, 1.0
  %v7912 = vadd.f32 %v7910, 1.0
  %v7913 = vrcp.pop %v7911
  %v7914 = vmul.f32 %v7911, %v7913
  %v7915 = vsub.f32 1.0, %v7914
  %v7916 = vmul.f32 %v7913, %v7915
  %v7917 = vadd.f32 %v7913, %v7916
  %vm7918 = vweird.f32 %v7911
  %vm7919 = vweird.f32 %v7913
  %vm7920 = vmor %vm7918, %vm7919
  %v7921 = vsel %vm7920, %v7913, %v7917
  %v7922 = vand.u32 2147483647, %v7911
  %vm7923 = vcmp.eq.f32.partialorder %v7922, 8.507059e+37
  %v7924 = vand.u32 %v7911, 2147483648
  %v7925 = vor.u32 1.1754944e-38, %v7924
  %v7926 = vsel %vm7923, %v7925, %v7921
  %v7927 = vmul.f32 1.0, %v7926
  %v7928 = vrcp.pop %v7912
  %v7929 = vmul.f32 %v7912, %v7928
  %v7930 = vsub.f32 1.0, %v7929
  %v7931 = vmul.f32 %v7928, %v7930
  %v7932 = vadd.f32 %v7928, %v7931
  %vm7933 = vweird.f32 %v7912
  %vm7934 = vweird.f32 %v7928
  %vm7935 = vmor %vm7933, %vm7934
  %v7936 = vsel %vm7935, %v7928, %v7932
  %v7937 = vand.u32 2147483647, %v7912
  %vm7938 = vcmp.eq.f32.partialorder %v7937, 8.507059e+37
  %v7939 = vand.u32 %v7912, 2147483648
  %v7940 = vor.u32 1.1754944e-38, %v7939
  %v7941 = vsel %vm7938, %v7940, %v7936
  %v7942 = vmul.f32 1.0, %v7941
  %v7943 = vadd.f32 %v7541, %v7781
  %v7944 = vadd.f32 %v7581, %v7821
  %v7945 = vxor.u32 %v7943, 2147483648
  %v7946 = vxor.u32 %v7944, 2147483648
  %v7947 = vmul.f32 %v7945, 1.442695
  %v7948 = vpow.pop %v7947
  %v7949 = vmul.f32 %v7946, 1.442695
  %v7950 = vpow.pop %v7949
  %v7951 = vadd.f32 %v7948, 1.0
  %v7952 = vadd.f32 %v7950, 1.0
  %v7953 = vrcp.pop %v7951
  %v7954 = vmul.f32 %v7951, %v7953
  %v7955 = vsub.f32 1.0, %v7954
  %v7956 = vmul.f32 %v7953, %v7955
  %v7957 = vadd.f32 %v7953, %v7956
  %vm7958 = vweird.f32 %v7951
  %vm7959 = vweird.f32 %v7953
  %vm7960 = vmor %vm7958, %vm7959
  %v7961 = vsel %vm7960, %v7953, %v7957
  %v7962 = vand.u32 2147483647, %v7951
  %vm7963 = vcmp.eq.f32.partialorder %v7962, 8.507059e+37
  %v7964 = vand.u32 %v7951, 2147483648
  %v7965 = vor.u32 1.1754944e-38, %v7964
  %v7966 = vsel %vm7963, %v7965, %v7961
  %v7967 = vmul.f32 1.0, %v7966
  %v7968 = vrcp.pop %v7952
  %v7969 = vmul.f32 %v7952, %v7968
  %v7970 = vsub.f32 1.0, %v7969
  %v7971 = vmul.f32 %v7968, %v7970
  %v7972 = vadd.f32 %v7968, %v7971
  %vm7973 = vweird.f32 %v7952
  %vm7974 = vweird.f32 %v7968
  %vm7975 = vmor %vm7973, %vm7974
  %v7976 = vsel %vm7975, %v7968, %v7972
  %v7977 = vand.u32 2147483647, %v7952
  %vm7978 = vcmp.eq.f32.partialorder %v7977, 8.507059e+37
  %v7979 = vand.u32 %v7952, 2147483648
  %v7980 = vor.u32 1.1754944e-38, %v7979
  %v7981 = vsel %vm7978, %v7980, %v7976
  %v7982 = vmul.f32 1.0, %v7981
  %v7983 = vadd.f32 %v7861, %v640
  %v7984 = vadd.f32 %v7901, %v641
  %v7985 = vmul.f32 %v7927, %v7983
  %v7986 = vmul.f32 %v7942, %v7984
  %v7987 = vadd.f32 %v7621, %v7985
  %v7988 = vadd.f32 %v7661, %v7986
  %v7989 = vtanh.pop %v7987
  %v7990 = vtanh.pop %v7988
  %v7991 = vsub.f32 1.0, %v7967
  %v7992 = vsub.f32 1.0, %v7982
  %v7993 = vmul.f32 %v7991, %v7989
  %v7994 = vmul.f32 %v7992, %v7990
  %v7995 = vmul.f32 %v7967, %v7078
  %v7996 = vmul.f32 %v7982, %v7079
  %v7997 = vadd.f32 %v7993, %v7995
  %v7998 = vadd.f32 %v7994, %v7996
  %7999 = vst [vmem:[#allocation2] sm:$0xff] %v7421
  %8000 = vst [vmem:[#allocation2 + $0x8] sm:$0xff] %v7422
  %8001 = vst [vmem:[#allocation3] sm:$0xff] %v7997
  %8002 = vst [vmem:[#allocation3 + $0x8] sm:$0xff] %v7998
  // Predicated region
  $region42: #{gru_net_forward.1} parent=0 // pred_check
    %p8003 = pneg %p34
  $region43: #{gru_net_forward.1} parent=0 // pred_check_branch
    %8005 = sbr.rel (%p8003) target = $region45
  $region44: #{gru_net_forward.1} parent=0 // pred_region
    %v8006 = vld [vmem:[%s7] sm:$0xff]
    %v8007 = vld [vmem:[%s7 + $0x8] sm:$0xff]
    %v8008 = vld [vmem:[%s7 + $0x10] sm:$0xff]
    %v8009 = vld [vmem:[%s7 + $0x18] sm:$0xff]
    %v8010 = vld [vmem:[%s7 + $0x20] sm:$0xff]
    %v8011 = vld [vmem:[%s7 + $0x28] sm:$0xff]
    %v8012 = vld [vmem:[%s7 + $0x30] sm:$0xff]
    %v8013 = vld [vmem:[%s7 + $0x38] sm:$0xff]
    %v8014 = vld [vmem:[%s7 + $0x40] sm:$0xff]
    %v8015 = vld [vmem:[%s7 + $0x48] sm:$0xff]
    %v8016 = vld [vmem:[%s7 + $0x50] sm:$0xff]
    %v8017 = vld [vmem:[%s7 + $0x58] sm:$0xff]
    %v8018 = vld [vmem:[%s7 + $0x60] sm:$0xff]
    %v8019 = vld [vmem:[%s7 + $0x68] sm:$0xff]
    %v8020 = vld [vmem:[%s7 + $0x70] sm:$0xff]
    %v8021 = vld [vmem:[%s7 + $0x78] sm:$0xff]
    %v8022 = vld [vmem:[%s7 + $0x80] sm:$0xff]
    %v8023 = vld [vmem:[%s7 + $0x88] sm:$0xff]
    %v8024 = vld [vmem:[%s7 + $0x90] sm:$0xff]
    %v8025 = vld [vmem:[%s7 + $0x98] sm:$0xff]
    %v8026 = vld [vmem:[%s7 + $0xa0] sm:$0xff]
    %v8027 = vld [vmem:[%s7 + $0xa8] sm:$0xff]
    %v8028 = vld [vmem:[%s7 + $0xb0] sm:$0xff]
    %v8029 = vld [vmem:[%s7 + $0xb8] sm:$0xff]
    %v8030 = vld [vmem:[%s7 + $0xc0] sm:$0xff]
    %v8031 = vld [vmem:[%s7 + $0xc8] sm:$0xff]
    %v8032 = vld [vmem:[%s7 + $0xd0] sm:$0xff]
    %v8033 = vld [vmem:[%s7 + $0xd8] sm:$0xff]
    %v8034 = vld [vmem:[%s7 + $0xe0] sm:$0xff]
    %v8035 = vld [vmem:[%s7 + $0xe8] sm:$0xff]
    %v8036 = vld [vmem:[%s7 + $0xf0] sm:$0xff]
    %v8037 = vld [vmem:[%s7 + $0xf8] sm:$0xff]
    %v8038 = vld [vmem:[#allocation4] sm:$0x1]
    %v8040 = vperm.slane %v8038, 0
    %8042 = vmatpush.msra.mxu0 %v8021
    %8043 = vmatpush.msra.mxu0 %v8020
    %8044 = vmatpush.msra.mxu0 %v8019
    %8045 = vmatpush.msra.mxu0 %v8018
    %8046 = vmatpush.msra.mxu0 %v8017
    %8047 = vmatpush.msra.mxu0 %v8016
    %8048 = vmatpush.msra.mxu0 %v8015
    %8049 = vmatpush.msra.mxu0 %v8014
    %8050 = vmatpush.msra.mxu0 %v8013
    %8051 = vmatpush.msra.mxu0 %v8012
    %8052 = vmatpush.msra.mxu0 %v8011
    %8053 = vmatpush.msra.mxu0 %v8010
    %8054 = vmatpush.msra.mxu0 %v8009
    %8055 = vmatpush.msra.mxu0 %v8008
    %8056 = vmatpush.msra.mxu0 %v8007
    %8057 = vmatpush.msra.mxu0 %v8006
    %8058 = vmatmul.f32.gmra.mxu0 %v7997
    %v8059 = vpop.f32.mrf.mxu0
    %v8060 = vadd.f32 %v8040, %v8059
    %8061 = vdwg.mxu0
    %8062 = vmatpush.msra.mxu0 %v8037
    %8063 = vmatpush.msra.mxu0 %v8036
    %8064 = vmatpush.msra.mxu0 %v8035
    %8065 = vmatpush.msra.mxu0 %v8034
    %8066 = vmatpush.msra.mxu0 %v8033
    %8067 = vmatpush.msra.mxu0 %v8032
    %8068 = vmatpush.msra.mxu0 %v8031
    %8069 = vmatpush.msra.mxu0 %v8030
    %8070 = vmatpush.msra.mxu0 %v8029
    %8071 = vmatpush.msra.mxu0 %v8028
    %8072 = vmatpush.msra.mxu0 %v8027
    %8073 = vmatpush.msra.mxu0 %v8026
    %8074 = vmatpush.msra.mxu0 %v8025
    %8075 = vmatpush.msra.mxu0 %v8024
    %8076 = vmatpush.msra.mxu0 %v8023
    %8077 = vmatpush.msra.mxu0 %v8022
    %8078 = vmatmul.f32.gmra.mxu0 %v7998
    %v8079 = vpop.f32.mrf.mxu0
    %v8080 = vadd.f32 %v8060, %v8079
    %8081 = vdwg.mxu0
    %vm8082 = vcmask 7168
    %8083 = vst.msk [vmem:[%s9] sm:$0xff] %vm8082, %v8080
  $region45: #{gru_net_forward.1} parent=0 // pred_fallthru
    _
  // Predicated region
  $region46: #{gru_net_forward.1} parent=0 // pred_check
    _
  $region47: #{gru_net_forward.1} parent=0 // pred_check_branch
    %8085 = sbr.rel (0) target = $region49
  $region48: #{gru_net_forward.1} parent=0 // pred_region
    _
  $region49: #{gru_net_forward.1} parent=0 // pred_fallthru
    _
  // Predicated region
  $region50: #{gru_net_forward.1} parent=0 // pred_check
    _
  $region51: #{gru_net_forward.1} parent=0 // pred_check_branch
    %8087 = sbr.rel (0) target = $region53
  $region52: #{gru_net_forward.1} parent=0 // pred_region
    _
  $region53: #{gru_net_forward.1} parent=0 // pred_fallthru
    _

</llo_original>
